<compile_context>
chip_gen: v7x
topology: tpu7x:2x2x1
jax: 0.10.0
libtpu: 0.0.40
codegen_flags: <defaults>
</compile_context>

<pallas_src>
import math
import functools

import jax
import jax.numpy as jnp
from jax.experimental import pallas as pl
from jax.experimental.pallas import tpu as pltpu

LRELU_SLOPE = 0.2
BN_EPS = 1e-5


def _round_up(x, m):
    return (x + m - 1) // m * m


def _row_tile(n, cap=256):
    """Largest row tile <= cap that divides n and is a multiple of 8."""
    if n <= cap:
        return n
    for t in range(cap, 7, -1):
        if n % t == 0 and t % 8 == 0:
            return t
    return n


def _default_vmem_limit():
    """Generation-aware scoped-VMEM budget (v5e/v6e 128 MiB, v7x 64 MiB/TC)."""
    cap = None
    try:
        cap = getattr(pltpu.get_tpu_info(), "vmem_capacity_bytes", None)
    except Exception:
        cap = None
    if not cap:
        cap = 64 * 1024 * 1024                # conservative: v7x per-TC
    return max(32 * 1024 * 1024, int(cap * 0.5))


_VMEM_LIMIT = _default_vmem_limit()


# ---------------- Kernel 1: kNN scores (rank-equivalent to -||xi-xj||^2) ----
def _pdist_kernel(xq_ref, xa_ref, sqa_ref, o_ref):
    inner = jax.lax.dot_general(xq_ref[0], xa_ref[0], (((1,), (1,)), ((), ())),
                                preferred_element_type=jnp.float32)   # (tq, N)
    # score = 2<xi,xj> - ||xj||^2 ; the -||xi||^2 row constant is dropped
    # (never changes the per-row top_k ranking).
    o_ref[0] = 2.0 * inner - sqa_ref[0]


def pairwise_scores(x_t):
    """x_t: (B, N, C) f32 -> (B, N, N) scores, rank-equivalent to -dist^2."""
    B, N, C = x_t.shape
    tq = _row_tile(N, 256)
    x_bf = x_t.astype(jnp.bfloat16)
    sqa = jnp.sum(x_t * x_t, axis=-1)[:, None, :]                     # (B,1,N)
    return pl.pallas_call(
        _pdist_kernel,
        out_shape=jax.ShapeDtypeStruct((B, N, N), jnp.float32),
        grid=(B, N // tq),
        in_specs=[pl.BlockSpec((1, tq, C), lambda b, i: (b, i, 0)),
                  pl.BlockSpec((1, N, C), lambda b, i: (b, 0, 0)),
                  pl.BlockSpec((1, 1, N), lambda b, i: (b, 0, 0))],
        out_specs=pl.BlockSpec((1, tq, N), lambda b, i: (b, i, 0)),
        compiler_params=pltpu.CompilerParams(
            dimension_semantics=("parallel", "parallel"),
            vmem_limit_bytes=_VMEM_LIMIT),
    )(x_bf, x_bf, sqa)


# ------ Kernel 2: fused edge conv (1x1 Conv2d) + BN stats + k-extrema --------
# edge @ W == feat @ W_top + center @ (W_bot - W_top); the centre term is
# computed once per point tile and reused for all k neighbours.  kj neighbours
# are processed per grid step; sum / sum-of-squares are accumulated in VMEM
# scratch and reduced once at the last step.
def _edge_conv_stats_kernel(x_ref, feat_ref, wa_ref, wd_ref,
                            maxo_ref, mino_ref, psum_ref, pssq_ref,
                            center_ref, sum_ref, ssq_ref):
    jb = pl.program_id(1)
    kj = feat_ref.shape[0]

    @pl.when(jb == 0)
    def _():
        center_ref[...] = jnp.dot(x_ref[...], wd_ref[...],
                                  preferred_element_type=jnp.float32)

    center = center_ref[...]
    mx = mn = sy = sq = None
    for n in range(kj):                      # unrolled (kj small, static)
        y = jnp.dot(feat_ref[n], wa_ref[...],
                    preferred_element_type=jnp.float32) + center
        if n == 0:
            mx, mn, sy, sq = y, y, y, y * y
        else:
            mx = jnp.maximum(mx, y)
            mn = jnp.minimum(mn, y)
            sy = sy + y
            sq = sq + y * y

    @pl.when(jb == 0)
    def _():
        maxo_ref[...] = mx
        mino_ref[...] = mn
        sum_ref[...] = sy
        ssq_ref[...] = sq

    @pl.when(jb > 0)
    def _():
        maxo_ref[...] = jnp.maximum(maxo_ref[...], mx)
        mino_ref[...] = jnp.minimum(mino_ref[...], mn)
        sum_ref[...] = sum_ref[...] + sy
        ssq_ref[...] = ssq_ref[...] + sq

    @pl.when(jb == pl.num_programs(1) - 1)
    def _():
        cout = psum_ref.shape[-1]
        psum_ref[0] = jnp.broadcast_to(
            jnp.sum(sum_ref[...], axis=0, keepdims=True), (8, cout))
        pssq_ref[0] = jnp.broadcast_to(
            jnp.sum(ssq_ref[...], axis=0, keepdims=True), (8, cout))


def edge_conv_stats(x2d, featT, wa, wd, *, tp, kj):
    k, P_pad, C = featT.shape
    Cout = wa.shape[1]
    nt = P_pad // tp
    nk = k // kj
    out_shape = (
        jax.ShapeDtypeStruct((P_pad, Cout), jnp.float32),   # max over k
        jax.ShapeDtypeStruct((P_pad, Cout), jnp.float32),   # min over k
        jax.ShapeDtypeStruct((nt, 8, Cout), jnp.float32),   # per-tile sum   (row 0)
        jax.ShapeDtypeStruct((nt, 8, Cout), jnp.float32),   # per-tile sumsq (row 0)
    )
    return pl.pallas_call(
        _edge_conv_stats_kernel,
        out_shape=out_shape,
        grid=(nt, nk),
        in_specs=[
            pl.BlockSpec((tp, C), lambda i, j: (i, 0)),
            pl.BlockSpec((kj, tp, C), lambda i, j: (j, i, 0)),
            pl.BlockSpec((C, Cout), lambda i, j: (0, 0)),
            pl.BlockSpec((C, Cout), lambda i, j: (0, 0)),
        ],
        out_specs=(
            pl.BlockSpec((tp, Cout), lambda i, j: (i, 0)),
            pl.BlockSpec((tp, Cout), lambda i, j: (i, 0)),
            pl.BlockSpec((1, 8, Cout), lambda i, j: (i, 0, 0)),
            pl.BlockSpec((1, 8, Cout), lambda i, j: (i, 0, 0)),
        ),
        scratch_shapes=[pltpu.VMEM((tp, Cout), jnp.float32),
                        pltpu.VMEM((tp, Cout), jnp.float32),
                        pltpu.VMEM((tp, Cout), jnp.float32)],
        compiler_params=pltpu.CompilerParams(
            dimension_semantics=("parallel", "arbitrary"),
            vmem_limit_bytes=_VMEM_LIMIT),
    )(x2d, featT, wa, wd)


# ------ Kernel 3: BN affine + LeakyReLU + extremum-select, fused projection --
# Produces: net (residual, f32), hv = [h_a | h_b | 0] (bf16, width 256) and
# fg = [f | g] (bf16, width 64) from one packed 128->320 matmul.
def _bn_project_kernel(maxo_ref, mino_ref, scale_ref, shift_ref,
                       wall_ref, ball_ref, net_ref, hv_ref, fg_ref):
    scale = scale_ref[...]
    shift = shift_ref[...]
    # max_k LeakyReLU(scale*y + shift) == LeakyReLU(scale*extremum(y) + shift),
    # extremum = max for scale >= 0, min for scale < 0 (monotone transforms).
    y = jnp.where(scale >= 0.0, maxo_ref[0], mino_ref[0]) * scale + shift
    net = jnp.where(y >= 0.0, y, LRELU_SLOPE * y)
    net_ref[0] = net
    proj = jnp.dot(net.astype(jnp.bfloat16), wall_ref[...],
                   preferred_element_type=jnp.float32) + ball_ref[...]
    proj = jnp.maximum(proj, 0.0)
    hvw = hv_ref.shape[-1]
    hv_ref[0] = proj[:, 0:hvw].astype(jnp.bfloat16)
    fg_ref[0] = proj[:, hvw:].astype(jnp.bfloat16)


def attn_project(maxo_v, mino_v, scale_rows, shift_rows, wall, ball, *, tm, hvw):
    B, M, Cn = maxo_v.shape
    W = wall.shape[1]
    fgw = W - hvw
    nt = M // tm
    out_shape = (jax.ShapeDtypeStruct((B, M, Cn), jnp.float32),
                 jax.ShapeDtypeStruct((B, M, hvw), jnp.bfloat16),
                 jax.ShapeDtypeStruct((B, M, fgw), jnp.bfloat16))
    return pl.pallas_call(
        _bn_project_kernel,
        out_shape=out_shape,
        grid=(B, nt),
        in_specs=[pl.BlockSpec((1, tm, Cn), lambda b, i: (b, i, 0)),
                  pl.BlockSpec((1, tm, Cn), lambda b, i: (b, i, 0)),
                  pl.BlockSpec((tm, Cn), lambda b, i: (i, 0)),
                  pl.BlockSpec((tm, Cn), lambda b, i: (i, 0)),
                  pl.BlockSpec((Cn, W), lambda b, i: (0, 0)),
                  pl.BlockSpec((tm, W), lambda b, i: (i, 0))],
        out_specs=(pl.BlockSpec((1, tm, Cn), lambda b, i: (b, i, 0)),
                   pl.BlockSpec((1, tm, hvw), lambda b, i: (b, i, 0)),
                   pl.BlockSpec((1, tm, fgw), lambda b, i: (b, i, 0))),
        compiler_params=pltpu.CompilerParams(
            dimension_semantics=("parallel", "parallel"),
            vmem_limit_bytes=_VMEM_LIMIT),
    )(maxo_v, mino_v, scale_rows, shift_rows, wall, ball)


# ------ Kernel 4: flash-style softmax row statistics (pass 1) ----------------
def _attn_stats_kernel(fgi_ref, fgj_ref, stats_ref, m_scr, l_scr):
    j = pl.program_id(2)

    @pl.when(j == 0)
    def _():
        m_scr[...] = jnp.full_like(m_scr, -1e30)
        l_scr[...] = jnp.zeros_like(l_scr)

    half = fgi_ref.shape[-1] // 2
    g = fgi_ref[0][:, half:]                                          # (ti, 32)
    f = fgj_ref[0][:, :half]                                          # (tj, 32)
    s = jax.lax.dot_general(g, f, (((1,), (1,)), ((), ())),
                            preferred_element_type=jnp.float32)       # (ti, tj)
    m_prev = m_scr[...]
    m_new = jnp.maximum(m_prev, jnp.max(s, axis=-1, keepdims=True))
    l_scr[...] = (jnp.exp(m_prev - m_new) * l_scr[...]
                  + jnp.sum(jnp.exp(s - m_new), axis=-1, keepdims=True))
    m_scr[...] = m_new

    @pl.when(j == pl.num_programs(2) - 1)
    def _():
        stats_ref[0] = jnp.concatenate([m_scr[...], 1.0 / l_scr[...]], axis=-1)


def attn_stats(fg, *, tm):
    B, M, fgw = fg.shape
    nt = M // tm
    return pl.pallas_call(
        _attn_stats_kernel,
        out_shape=jax.ShapeDtypeStruct((B, M, 2), jnp.float32),
        grid=(B, nt, nt),
        in_specs=[pl.BlockSpec((1, tm, fgw), lambda b, i, j: (b, i, 0)),
                  pl.BlockSpec((1, tm, fgw), lambda b, i, j: (b, j, 0))],
        out_specs=pl.BlockSpec((1, tm, 2), lambda b, i, j: (b, i, 0)),
        scratch_shapes=[pltpu.VMEM((tm, 1), jnp.float32),
                        pltpu.VMEM((tm, 1), jnp.float32)],
        compiler_params=pltpu.CompilerParams(
            dimension_semantics=("parallel", "parallel", "arbitrary"),
            vmem_limit_bytes=_VMEM_LIMIT),
    )(fg, fg)


# ------ Kernel 5: attention output (pass 2, tiled over i) + conv1 + conv2 ----
def _attn_out_kernel(fgj_ref, fgi_ref, hvi_ref, stati_ref, netj_ref, gridj_ref,
                     gamma_ref, w1a_ref, w1b_ref, b1_ref, w2_ref, b2_ref,
                     o_ref, acc_ref):
    i = pl.program_id(2)

    @pl.when(i == 0)
    def _():
        acc_ref[...] = jnp.zeros_like(acc_ref)

    half = fgi_ref.shape[-1] // 2
    g = fgi_ref[0][:, half:]                                          # (ti, 32)
    f = fgj_ref[0][:, :half]                                          # (tj, 32)
    s = jax.lax.dot_general(g, f, (((1,), (1,)), ((), ())),
                            preferred_element_type=jnp.float32)       # (ti, tj)
    m_i = stati_ref[0][:, 0:1]
    inv_l = stati_ref[0][:, 1:2]
    p = jnp.exp(s - m_i) * inv_l                                      # beta rows
    # o[j, :] += sum_i beta[i, j] * h[i, :]   (transposed-softmax attention)
    acc_ref[...] += jax.lax.dot_general(
        p.astype(jnp.bfloat16), hvi_ref[0],
        (((0,), (0,)), ((), ())), preferred_element_type=jnp.float32)

    @pl.when(i == pl.num_programs(2) - 1)
    def _():
        cn = netj_ref.shape[-1]
        gamma = gamma_ref[...]                                        # (1, 1)
        acc = acc_ref[...]
        xa = gamma * acc[:, 0:cn] + netj_ref[0]                       # (tj, 128)
        xb = gamma * acc[:, cn:cn + 2] + gridj_ref[...]               # (tj, 2)
        y1 = (jnp.dot(xa.astype(jnp.bfloat16), w1a_ref[...],
                      preferred_element_type=jnp.float32)
              + xb[:, 0:1] * w1b_ref[0:1, :]
              + xb[:, 1:2] * w1b_ref[1:2, :]
              + b1_ref[...])
        y1 = jnp.maximum(y1, 0.0)                                     # (tj, 256)
        y2 = jnp.maximum(
            jnp.dot(y1.astype(jnp.bfloat16), w2_ref[...],
                    preferred_element_type=jnp.float32) + b2_ref[...], 0.0)
        o_ref[0] = y2


def attn_out_mlp(fg, hv, stats, net, grid2, gamma, w1a, w1b, b1, w2, b2, *, tm):
    B, M, Cn = net.shape
    fgw = fg.shape[-1]
    hvw = hv.shape[-1]
    C2 = w2.shape[1]
    nt = M // tm

    def const(a):
        return pl.BlockSpec(a.shape, lambda b, j, i, _n=a.ndim: (0,) * _n)

    return pl.pallas_call(
        _attn_out_kernel,
        out_shape=jax.ShapeDtypeStruct((B, M, C2), jnp.float32),
        grid=(B, nt, nt),
        in_specs=[pl.BlockSpec((1, tm, fgw), lambda b, j, i: (b, j, 0)),
                  pl.BlockSpec((1, tm, fgw), lambda b, j, i: (b, i, 0)),
                  pl.BlockSpec((1, tm, hvw), lambda b, j, i: (b, i, 0)),
                  pl.BlockSpec((1, tm, 2), lambda b, j, i: (b, i, 0)),
                  pl.BlockSpec((1, tm, Cn), lambda b, j, i: (b, j, 0)),
                  pl.BlockSpec((tm, 2), lambda b, j, i: (j, 0)),
                  const(gamma), const(w1a), const(w1b), const(b1),
                  const(w2), const(b2)],
        out_specs=pl.BlockSpec((1, tm, C2), lambda b, j, i: (b, j, 0)),
        scratch_shapes=[pltpu.VMEM((tm, hvw), jnp.float32)],
        compiler_params=pltpu.CompilerParams(
            dimension_semantics=("parallel", "parallel", "arbitrary"),
            vmem_limit_bytes=_VMEM_LIMIT),
    )(fg, fg, hv, stats, net, grid2, gamma, w1a, w1b, b1, w2, b2)


# ---------------------------- plain-JAX glue ---------------------------------
def gen_grid(up_ratio):
    sqrted = int(math.sqrt(up_ratio)) + 1
    num_x = num_y = 1
    for i in reversed(range(1, sqrted + 1)):
        if up_ratio % i == 0:
            num_x = i
            num_y = up_ratio // i
            break
    gx = jnp.linspace(-0.2, 0.2, num_x)
    gy = jnp.linspace(-0.2, 0.2, num_y)
    xg, yg = jnp.meshgrid(gx, gy, indexing="ij")
    return jnp.stack([xg, yg], axis=-1).reshape(-1, 2).astype(jnp.float32)


def up_block_forward(inputs, params, idx=None, *, k=20, up_ratio=4,
                     attn_tile=None, edge_tile=None):
    """inputs: (B, C, N) float32 (torch NCL). Returns (B, 128, N*up_ratio)."""
    B, C, N = inputs.shape
    x_t = jnp.transpose(inputs, (0, 2, 1)).astype(jnp.float32)        # (B, N, C)

    if idx is None:
        scores = pairwise_scores(x_t)                                 # (B, N, N)
        _, idx = jax.lax.top_k(scores, k)                             # (B, N, k)

    # TODO(synk): stream this gather through a scalar-prefetched Pallas DMA
    # gather so featT never round-trips HBM.
    x_bf = x_t.astype(jnp.bfloat16)
    idx_t = jnp.transpose(idx, (2, 0, 1))                             # (k, B, N)
    featT = x_bf[jnp.arange(B)[None, :, None], idx_t]                 # (k,B,N,C)
    P = B * N
    featT = featT.reshape(k, P, C)
    x2d = x_bf.reshape(P, C)

    tp = edge_tile if edge_tile is not None else min(512, _round_up(P, 8))
    P_pad = _round_up(P, tp)
    if P_pad != P:        # zero rows do not perturb the accumulated statistics
        featT = jnp.pad(featT, ((0, 0), (0, P_pad - P), (0, 0)))
        x2d = jnp.pad(x2d, ((0, P_pad - P), (0, 0)))
    kj = next(q for q in (4, 2, 1) if k % q == 0)

    # ---- fused edge conv: edge @ W == feat @ W_top + center @ (W_bot-W_top) --
    w_edge = params["w_edge"]
    wa = w_edge[:C].astype(jnp.bfloat16)
    wd = (w_edge[C:] - w_edge[:C]).astype(jnp.bfloat16)
    Cout = w_edge.shape[1]
    maxo, mino, psum, pssq = edge_conv_stats(x2d, featT, wa, wd, tp=tp, kj=kj)

    # ---- BatchNorm2d training-mode batch statistics (per channel) ----
    count = jnp.float32(P * k)
    tot_sum = jnp.sum(psum[:, 0, :], axis=0)
    tot_ssq = jnp.sum(pssq[:, 0, :], axis=0)
    mean = tot_sum / count
    var = jnp.maximum(tot_ssq / count - mean * mean, 0.0)
    inv = jax.lax.rsqrt(var + BN_EPS)
    scale = params["bn_g"][0] * inv                                   # (Cout,)
    shift = params["bn_b"][0] - mean * scale

    # ---- upsample reshape + per-row BN pattern + fused attention weights ----
    M = N * up_ratio
    Cn = Cout // up_ratio                                             # 128
    maxo_v = maxo[:P].reshape(B, M, Cn)                               # contiguous view
    mino_v = mino[:P].reshape(B, M, Cn)
    scale_rows = jnp.tile(scale.reshape(up_ratio, Cn), (N, 1))        # (M, Cn)
    shift_rows = jnp.tile(shift.reshape(up_ratio, Cn), (N, 1))

    grid2 = jnp.repeat(gen_grid(up_ratio), N, axis=0)                 # (M, 2)

    wf, bf = params["wf"], params["bf"]
    wg, bg = params["wg"], params["bg"]
    wh, bh = params["wh"], params["bh"]
    w1 = params["w1"]

    fqc = (Cn + 2) // 4                      # convF/convG width (32)
    hvw = _round_up(Cn + 2, 128)             # 256
    W = hvw + 2 * fqc                        # 320
    wall = jnp.zeros((Cn, W), jnp.float32)
    wall = wall.at[:, 0:Cn].set(wh[:Cn, :Cn])
    wall = wall.at[:, Cn:Cn + 2].set(wh[:Cn, Cn:])
    wall = wall.at[:, hvw:hvw + fqc].set(wf[:Cn])
    wall = wall.at[:, hvw + fqc:].set(wg[:Cn])
    ball = jnp.zeros((M, W), jnp.float32)
    ball = ball.at[:, 0:Cn].set(grid2 @ wh[Cn:, :Cn] + bh[:, :Cn])
    ball = ball.at[:, Cn:Cn + 2].set(grid2 @ wh[Cn:, Cn:] + bh[:, Cn:])
    ball = ball.at[:, hvw:hvw + fqc].set(grid2 @ wf[Cn:] + bf)
    ball = ball.at[:, hvw + fqc:].set(grid2 @ wg[Cn:] + bg)

    tm = attn_tile if attn_tile is not None else _row_tile(M, 256)
    net, hv, fg = attn_project(maxo_v, mino_v, scale_rows, shift_rows,
                               wall.astype(jnp.bfloat16), ball, tm=tm, hvw=hvw)
    stats = attn_stats(fg, tm=tm)
    out = attn_out_mlp(fg, hv, stats, net, grid2, params["gamma"],
                       w1[:Cn].astype(jnp.bfloat16), w1[Cn:], params["b1"],
                       params["w2"].astype(jnp.bfloat16), params["b2"], tm=tm)
    return jnp.transpose(out, (0, 2, 1))                              # (B,128,M)


def up_block_reference(inputs, params, idx=None, *, k=20, up_ratio=4):
    """Pure-JAX reference mirroring the PyTorch module (high matmul precision)."""
    hp = jax.lax.Precision.HIGHEST
    B, C, N = inputs.shape
    x_t = jnp.transpose(inputs, (0, 2, 1)).astype(jnp.float32)

    if idx is None:
        inner = jnp.einsum("bnc,bmc->bnm", x_t, x_t, precision=hp)
        sq = jnp.sum(x_t * x_t, axis=-1)
        pd = 2.0 * inner - sq[:, :, None] - sq[:, None, :]
        idx = jax.lax.top_k(pd, k)[1]
    feat = x_t[jnp.arange(B)[:, None, None], idx]                     # (B,N,k,C)
    center = x_t[:, :, None, :]
    edge = jnp.concatenate([feat - center,
                            jnp.broadcast_to(center, feat.shape)], axis=-1)
    y = jnp.einsum("bnkc,cd->bnkd", edge, params["w_edge"], precision=hp)
    mean = jnp.mean(y, axis=(0, 1, 2))
    var = jnp.mean(jnp.square(y - mean), axis=(0, 1, 2))
    z = (y - mean) * jax.lax.rsqrt(var + BN_EPS) * params["bn_g"][0] \
        + params["bn_b"][0]
    z = jnp.where(z >= 0.0, z, LRELU_SLOPE * z)
    maxed = jnp.max(z, axis=2)                                        # (B,N,Cout)
    Cout = maxed.shape[-1]
    M = N * up_ratio
    net = maxed.reshape(B, M, Cout // up_ratio)
    grid_rows = gen_grid(up_ratio)
    gridf = jnp.broadcast_to(jnp.repeat(grid_rows, N, axis=0)[None], (B, M, 2))
    xcat = jnp.concatenate([net, gridf], axis=-1)                     # (B,M,130)

    def lin(t, w, b):
        return jnp.einsum("bmc,cd->bmd", t, w, precision=hp) + b

    f = jax.nn.relu(lin(xcat, params["wf"], params["bf"]))
    g = jax.nn.relu(lin(xcat, params["wg"], params["bg"]))
    h = jax.nn.relu(lin(xcat, params["wh"], params["bh"]))
    s = jnp.einsum("bic,bjc->bij", g, f, precision=hp)
    beta = jax.nn.softmax(s, axis=-1)
    o = jnp.einsum("bjm,bjc->bmc", beta, h, precision=hp)
    xatt = params["gamma"][0, 0] * o + xcat
    y1 = jax.nn.relu(lin(xatt, params["w1"], params["b1"]))
    y2 = jax.nn.relu(lin(y1, params["w2"], params["b2"]))
    return jnp.transpose(y2, (0, 2, 1))


def init_params(key, in_channels=128, up_ratio=4):
    attn_c = in_channels + 2
    c_edge_in = 2 * in_channels
    c_edge_out = in_channels * up_ratio
    keys = jax.random.split(key, 14)

    def w(kk, shape):                     # weights stored (in, out)
        return (jax.random.normal(kk, shape, jnp.float32)
                / jnp.sqrt(jnp.float32(shape[0])))

    def b(kk, n):
        return 0.1 * jax.random.normal(kk, (1, n), jnp.float32)

    return dict(
        w_edge=w(keys[0], (c_edge_in, c_edge_out)),                   # no bias
        bn_g=1.0 + 0.1 * jax.random.normal(keys[1], (1, c_edge_out), jnp.float32),
        bn_b=0.1 * jax.random.normal(keys[2], (1, c_edge_out), jnp.float32),
        wf=w(keys[3], (attn_c, attn_c // 4)), bf=b(keys[4], attn_c // 4),
        wg=w(keys[5], (attn_c, attn_c // 4)), bg=b(keys[6], attn_c // 4),
        wh=w(keys[7], (attn_c, attn_c)),      bh=b(keys[8], attn_c),
        # torch initialises gamma to 0 (attention output == input); use a
        # nonzero deterministic value so the attention path is exercised.
        gamma=jnp.full((1, 1), 0.1, jnp.float32),
        w1=w(keys[9], (attn_c, 256)),  b1=b(keys[10], 256),
        w2=w(keys[11], (256, 128)),    b2=b(keys[12], 128),
    )


if __name__ == "__main__":
    B, C, N = 2, 128, 32          # edge_conv expects 128*2 input channels
    up_ratio, k = 4, 20
    key = jax.random.PRNGKey(0)
    kx, kp = jax.random.split(key)
    inputs = jax.random.normal(kx, (B, C, N), jnp.float32)
    params = init_params(kp, in_channels=C, up_ratio=up_ratio)

    fwd = jax.jit(functools.partial(up_block_forward, k=k, up_ratio=up_ratio))

    # Full kernel path (Pallas knn + fused edge conv/BN + flash attention MLP).
    out = jax.block_until_ready(fwd(inputs, params))
    assert out.shape == (B, 128, N * up_ratio), out.shape
    assert bool(jnp.all(jnp.isfinite(out)))

    # Correctness: kNN score kernel vs f32 formula (the kernel drops the
    # per-query constant -||xi||^2, which never changes the top_k ranking).
    x_t = jnp.transpose(inputs, (0, 2, 1)).astype(jnp.float32)
    sc_pal = jax.block_until_ready(jax.jit(pairwise_scores)(x_t))
    inner = jnp.einsum("bnc,bmc->bnm", x_t, x_t,
                       precision=jax.lax.Precision.HIGHEST)
    sq = jnp.sum(x_t * x_t, axis=-1)
    sc_ref = 2.0 * inner - sq[:, None, :]
    assert bool(jnp.allclose(sc_pal, sc_ref, rtol=2e-2, atol=2.0)), (
        float(jnp.max(jnp.abs(sc_pal - sc_ref))))

    # Correctness: end-to-end vs pure-JAX f32 reference with shared neighbour
    # indices (so near-tied top-k picks cannot flip).  MXU operands are bf16,
    # so check a loose per-element bound plus a tight mean-error bound.
    pd_full = sc_ref - sq[:, :, None]
    idx_shared = jax.lax.top_k(pd_full, k)[1]
    ref = up_block_reference(inputs, params, idx_shared, k=k, up_ratio=up_ratio)
    for tiles in ((None, None), (32, 32)):   # default, and forced multi-tile
        run = jax.jit(functools.partial(up_block_forward, k=k, up_ratio=up_ratio,
                                        attn_tile=tiles[0], edge_tile=tiles[1]))
        out_shared = jax.block_until_ready(run(inputs, params, idx_shared))
        diff = jnp.abs(out_shared - ref)
        max_rel = float(jnp.max(diff / jnp.maximum(jnp.abs(ref), 1.0)))
        mean_err = float(jnp.mean(diff))
        assert max_rel < 0.1 and mean_err < 1.5e-2, (tiles, max_rel, mean_err)

    print("KERNEL_OK")
</pallas_src>

<mosaic_0001>
module attributes {stable_mosaic.version = 11 : i64} {
  func.func @_pdist_kernel(%arg0: i32, %arg1: i32, %arg2: memref<1x32x128xbf16, #tpu.memory_space<vmem>>, %arg3: memref<1x32x128xbf16, #tpu.memory_space<vmem>>, %arg4: memref<1x1x32xf32, #tpu.memory_space<vmem>>, %arg5: memref<1x32x32xf32, #tpu.memory_space<vmem>>) attributes {dimension_semantics = [#tpu.dimension_semantics<parallel>, #tpu.dimension_semantics<parallel>], iteration_bounds = array<i64: 2, 1>, scalar_prefetch = 0 : i64, scratch_operands = 0 : i64, tpu.core_type = #tpu.core_type<tc>, window_params = [{transform_indices = @transform_0, window_bounds = array<i64: 1, 32, 128>}, {transform_indices = @transform_1, window_bounds = array<i64: 1, 32, 128>}, {transform_indices = @transform_2, window_bounds = array<i64: 1, 1, 32>}, {transform_indices = @transform_3, window_bounds = array<i64: 1, 32, 32>}]} {
    %c0 = arith.constant 0 : index
    %c0_0 = arith.constant 0 : index
    %c0_1 = arith.constant 0 : index
    %0 = vector.load %arg2[%c0, %c0_0, %c0_1] : memref<1x32x128xbf16, #tpu.memory_space<vmem>>, vector<1x32x128xbf16>
    %1 = vector.shape_cast %0 : vector<1x32x128xbf16> to vector<32x128xbf16>
    %c0_2 = arith.constant 0 : index
    %c0_3 = arith.constant 0 : index
    %c0_4 = arith.constant 0 : index
    %2 = vector.load %arg3[%c0_2, %c0_3, %c0_4] : memref<1x32x128xbf16, #tpu.memory_space<vmem>>, vector<1x32x128xbf16>
    %3 = vector.shape_cast %2 : vector<1x32x128xbf16> to vector<32x128xbf16>
    %cst = arith.constant dense<0.000000e+00> : vector<32x32xf32>
    %4 = tpu.matmul %1, %3, %cst {dimension_numbers = #tpu.dot_dimension_numbers<[1], [1], [0], [0], [0, 0, 1, 0], [], []>} : vector<32x128xbf16>, vector<32x128xbf16>, vector<32x32xf32> -> vector<32x32xf32>
    %cst_5 = arith.constant 2.000000e+00 : f32
    %5 = vector.broadcast %cst_5 : f32 to vector<32x32xf32>
    %6 = arith.mulf %5, %4 : vector<32x32xf32>
    %c0_6 = arith.constant 0 : index
    %c0_7 = arith.constant 0 : index
    %c0_8 = arith.constant 0 : index
    %7 = vector.load %arg4[%c0_6, %c0_7, %c0_8] : memref<1x1x32xf32, #tpu.memory_space<vmem>>, vector<1x1x32xf32>
    %8 = vector.shape_cast %7 : vector<1x1x32xf32> to vector<1x32xf32>
    %9 = vector.broadcast %8 : vector<1x32xf32> to vector<32x32xf32>
    %10 = arith.subf %6, %9 : vector<32x32xf32>
    %c0_9 = arith.constant 0 : index
    %c0_10 = arith.constant 0 : index
    %c0_11 = arith.constant 0 : index
    %11 = vector.load %arg5[%c0_9, %c0_10, %c0_11] : memref<1x32x32xf32, #tpu.memory_space<vmem>>, vector<1x32x32xf32>
    %12 = vector.shape_cast %11 : vector<1x32x32xf32> to vector<32x32xf32>
    %13 = vector.shape_cast %10 : vector<32x32xf32> to vector<1x32x32xf32>
    tpu.vector_store %arg5[%c0_9, %c0_10, %c0_11], %13 {strides = array<i32>} : memref<1x32x32xf32, #tpu.memory_space<vmem>>, vector<1x32x32xf32>,
    return
  }
  func.func @transform_0(%arg0: i32, %arg1: i32) -> (i32, i32, i32) {
    %c0_i32 = arith.constant 0 : i32
    %c0_i32_0 = arith.constant 0 : i32
    return %arg0, %arg1, %c0_i32 : i32, i32, i32
  }
  func.func @transform_1(%arg0: i32, %arg1: i32) -> (i32, i32, i32) {
    %c0_i32 = arith.constant 0 : i32
    %c0_i32_0 = arith.constant 0 : i32
    %c0_i32_1 = arith.constant 0 : i32
    return %arg0, %c0_i32, %c0_i32_0 : i32, i32, i32
  }
  func.func @transform_2(%arg0: i32, %arg1: i32) -> (i32, i32, i32) {
    %c0_i32 = arith.constant 0 : i32
    %c0_i32_0 = arith.constant 0 : i32
    %c0_i32_1 = arith.constant 0 : i32
    return %arg0, %c0_i32, %c0_i32_0 : i32, i32, i32
  }
  func.func @transform_3(%arg0: i32, %arg1: i32) -> (i32, i32, i32) {
    %c0_i32 = arith.constant 0 : i32
    %c0_i32_0 = arith.constant 0 : i32
    return %arg0, %arg1, %c0_i32 : i32, i32, i32
  }
}

module attributes {stable_mosaic.version = 11 : i64} {
  func.func @_edge_conv_stats_kernel(%arg0: i32, %arg1: i32, %arg2: memref<64x128xbf16, #tpu.memory_space<vmem>>, %arg3: memref<4x64x128xbf16, #tpu.memory_space<vmem>>, %arg4: memref<128x512xbf16, #tpu.memory_space<vmem>>, %arg5: memref<128x512xbf16, #tpu.memory_space<vmem>>, %arg6: memref<64x512xf32, #tpu.memory_space<vmem>>, %arg7: memref<64x512xf32, #tpu.memory_space<vmem>>, %arg8: memref<1x8x512xf32, #tpu.memory_space<vmem>>, %arg9: memref<1x8x512xf32, #tpu.memory_space<vmem>>, %arg10: memref<64x512xf32, #tpu.memory_space<vmem>>, %arg11: memref<64x512xf32, #tpu.memory_space<vmem>>, %arg12: memref<64x512xf32, #tpu.memory_space<vmem>>) attributes {dimension_semantics = [#tpu.dimension_semantics<parallel>, #tpu.dimension_semantics<arbitrary>], iteration_bounds = array<i64: 1, 5>, scalar_prefetch = 0 : i64, scratch_operands = 3 : i64, tpu.core_type = #tpu.core_type<tc>, window_params = [{transform_indices = @transform_0, window_bounds = array<i64: 64, 128>}, {transform_indices = @transform_1, window_bounds = array<i64: 4, 64, 128>}, {pipeline_mode = #tpu.pipeline_mode<synchronous>, transform_indices = @transform_2, window_bounds = array<i64: 128, 512>}, {pipeline_mode = #tpu.pipeline_mode<synchronous>, transform_indices = @transform_3, window_bounds = array<i64: 128, 512>}, {transform_indices = @transform_4, window_bounds = array<i64: 64, 512>}, {transform_indices = @transform_5, window_bounds = array<i64: 64, 512>}, {transform_indices = @transform_6, window_bounds = array<i64: 1, 8, 512>}, {transform_indices = @transform_7, window_bounds = array<i64: 1, 8, 512>}]} {
    %c0_i32 = arith.constant 0 : i32
    %0 = arith.cmpi eq, %arg1, %c0_i32 : i32
    %1 = arith.extui %0 : i1 to i32
    %c0_i32_0 = arith.constant 0 : i32
    %2 = arith.cmpi ne, %1, %c0_i32_0 : i32
    scf.if %2 {
      %c0_27 = arith.constant 0 : index
      %c0_28 = arith.constant 0 : index
      %49 = vector.load %arg2[%c0_27, %c0_28] : memref<64x128xbf16, #tpu.memory_space<vmem>>, vector<64x128xbf16>
      %c0_29 = arith.constant 0 : index
      %c0_30 = arith.constant 0 : index
      %50 = vector.load %arg5[%c0_29, %c0_30] : memref<128x512xbf16, #tpu.memory_space<vmem>>, vector<128x512xbf16>
      %cst_31 = arith.constant dense<0.000000e+00> : vector<64x512xf32>
      %51 = tpu.matmul %49, %50, %cst_31 {dimension_numbers = #tpu.dot_dimension_numbers<[1], [0], [0], [1], [0, 0, 1, 1], [], []>} : vector<64x128xbf16>, vector<128x512xbf16>, vector<64x512xf32> -> vector<64x512xf32>
      %c0_32 = arith.constant 0 : index
      %c0_33 = arith.constant 0 : index
      %52 = vector.load %arg10[%c0_32, %c0_33] : memref<64x512xf32, #tpu.memory_space<vmem>>, vector<64x512xf32>
      tpu.vector_store %arg10[%c0_32, %c0_33], %51 {strides = array<i32>} : memref<64x512xf32, #tpu.memory_space<vmem>>, vector<64x512xf32>,
    } else {
    }
    %c0 = arith.constant 0 : index
    %c0_1 = arith.constant 0 : index
    %3 = vector.load %arg10[%c0, %c0_1] : memref<64x512xf32, #tpu.memory_space<vmem>>, vector<64x512xf32>
    %c0_2 = arith.constant 0 : index
    %c0_3 = arith.constant 0 : index
    %c0_4 = arith.constant 0 : index
    %4 = vector.load %arg3[%c0_2, %c0_3, %c0_4] : memref<4x64x128xbf16, #tpu.memory_space<vmem>>, vector<1x64x128xbf16>
    %5 = vector.shape_cast %4 : vector<1x64x128xbf16> to vector<64x128xbf16>
    %c0_5 = arith.constant 0 : index
    %c0_6 = arith.constant 0 : index
    %6 = vector.load %arg4[%c0_5, %c0_6] : memref<128x512xbf16, #tpu.memory_space<vmem>>, vector<128x512xbf16>
    %cst = arith.constant dense<0.000000e+00> : vector<64x512xf32>
    %7 = tpu.matmul %5, %6, %cst {dimension_numbers = #tpu.dot_dimension_numbers<[1], [0], [0], [1], [0, 0, 1, 1], [], []>} : vector<64x128xbf16>, vector<128x512xbf16>, vector<64x512xf32> -> vector<64x512xf32>
    %8 = arith.addf %7, %3 : vector<64x512xf32>
    %9 = arith.mulf %8, %8 : vector<64x512xf32>
    %c1 = arith.constant 1 : index
    %c0_7 = arith.constant 0 : index
    %c0_8 = arith.constant 0 : index
    %10 = vector.load %arg3[%c1, %c0_7, %c0_8] : memref<4x64x128xbf16, #tpu.memory_space<vmem>>, vector<1x64x128xbf16>
    %11 = vector.shape_cast %10 : vector<1x64x128xbf16> to vector<64x128xbf16>
    %c0_9 = arith.constant 0 : index
    %c0_10 = arith.constant 0 : index
    %12 = vector.load %arg4[%c0_9, %c0_10] : memref<128x512xbf16, #tpu.memory_space<vmem>>, vector<128x512xbf16>
    %cst_11 = arith.constant dense<0.000000e+00> : vector<64x512xf32>
    %13 = tpu.matmul %11, %12, %cst_11 {dimension_numbers = #tpu.dot_dimension_numbers<[1], [0], [0], [1], [0, 0, 1, 1], [], []>} : vector<64x128xbf16>, vector<128x512xbf16>, vector<64x512xf32> -> vector<64x512xf32>
    %14 = arith.addf %13, %3 : vector<64x512xf32>
    %15 = arith.maximumf %8, %14 : vector<64x512xf32>
    %16 = arith.minimumf %8, %14 : vector<64x512xf32>
    %17 = arith.addf %8, %14 : vector<64x512xf32>
    %18 = arith.mulf %14, %14 : vector<64x512xf32>
    %19 = arith.addf %9, %18 : vector<64x512xf32>
    %c2 = arith.constant 2 : index
    %c0_12 = arith.constant 0 : index
    %c0_13 = arith.constant 0 : index
    %20 = vector.load %arg3[%c2, %c0_12, %c0_13] : memref<4x64x128xbf16, #tpu.memory_space<vmem>>, vector<1x64x128xbf16>
    %21 = vector.shape_cast %20 : vector<1x64x128xbf16> to vector<64x128xbf16>
    %c0_14 = arith.constant 0 : index
    %c0_15 = arith.constant 0 : index
    %22 = vector.load %arg4[%c0_14, %c0_15] : memref<128x512xbf16, #tpu.memory_space<vmem>>, vector<128x512xbf16>
    %cst_16 = arith.constant dense<0.000000e+00> : vector<64x512xf32>
    %23 = tpu.matmul %21, %22, %cst_16 {dimension_numbers = #tpu.dot_dimension_numbers<[1], [0], [0], [1], [0, 0, 1, 1], [], []>} : vector<64x128xbf16>, vector<128x512xbf16>, vector<64x512xf32> -> vector<64x512xf32>
    %24 = arith.addf %23, %3 : vector<64x512xf32>
    %25 = arith.maximumf %15, %24 : vector<64x512xf32>
    %26 = arith.minimumf %16, %24 : vector<64x512xf32>
    %27 = arith.addf %17, %24 : vector<64x512xf32>
    %28 = arith.mulf %24, %24 : vector<64x512xf32>
    %29 = arith.addf %19, %28 : vector<64x512xf32>
    %c3 = arith.constant 3 : index
    %c0_17 = arith.constant 0 : index
    %c0_18 = arith.constant 0 : index
    %30 = vector.load %arg3[%c3, %c0_17, %c0_18] : memref<4x64x128xbf16, #tpu.memory_space<vmem>>, vector<1x64x128xbf16>
    %31 = vector.shape_cast %30 : vector<1x64x128xbf16> to vector<64x128xbf16>
    %c0_19 = arith.constant 0 : index
    %c0_20 = arith.constant 0 : index
    %32 = vector.load %arg4[%c0_19, %c0_20] : memref<128x512xbf16, #tpu.memory_space<vmem>>, vector<128x512xbf16>
    %cst_21 = arith.constant dense<0.000000e+00> : vector<64x512xf32>
    %33 = tpu.matmul %31, %32, %cst_21 {dimension_numbers = #tpu.dot_dimension_numbers<[1], [0], [0], [1], [0, 0, 1, 1], [], []>} : vector<64x128xbf16>, vector<128x512xbf16>, vector<64x512xf32> -> vector<64x512xf32>
    %34 = arith.addf %33, %3 : vector<64x512xf32>
    %35 = arith.maximumf %25, %34 : vector<64x512xf32>
    %36 = arith.minimumf %26, %34 : vector<64x512xf32>
    %37 = arith.addf %27, %34 : vector<64x512xf32>
    %38 = arith.mulf %34, %34 : vector<64x512xf32>
    %39 = arith.addf %29, %38 : vector<64x512xf32>
    %c0_i32_22 = arith.constant 0 : i32
    %40 = arith.cmpi eq, %arg1, %c0_i32_22 : i32
    %41 = arith.extui %40 : i1 to i32
    %c0_i32_23 = arith.constant 0 : i32
    %42 = arith.cmpi ne, %41, %c0_i32_23 : i32
    scf.if %42 {
      %c0_27 = arith.constant 0 : index
      %c0_28 = arith.constant 0 : index
      %49 = vector.load %arg6[%c0_27, %c0_28] : memref<64x512xf32, #tpu.memory_space<vmem>>, vector<64x512xf32>
      tpu.vector_store %arg6[%c0_27, %c0_28], %35 {strides = array<i32>} : memref<64x512xf32, #tpu.memory_space<vmem>>, vector<64x512xf32>,
      %c0_29 = arith.constant 0 : index
      %c0_30 = arith.constant 0 : index
      %50 = vector.load %arg7[%c0_29, %c0_30] : memref<64x512xf32, #tpu.memory_space<vmem>>, vector<64x512xf32>
      tpu.vector_store %arg7[%c0_29, %c0_30], %36 {strides = array<i32>} : memref<64x512xf32, #tpu.memory_space<vmem>>, vector<64x512xf32>,
      %c0_31 = arith.constant 0 : index
      %c0_32 = arith.constant 0 : index
      %51 = vector.load %arg11[%c0_31, %c0_32] : memref<64x512xf32, #tpu.memory_space<vmem>>, vector<64x512xf32>
      tpu.vector_store %arg11[%c0_31, %c0_32], %37 {strides = array<i32>} : memref<64x512xf32, #tpu.memory_space<vmem>>, vector<64x512xf32>,
      %c0_33 = arith.constant 0 : index
      %c0_34 = arith.constant 0 : index
      %52 = vector.load %arg12[%c0_33, %c0_34] : memref<64x512xf32, #tpu.memory_space<vmem>>, vector<64x512xf32>
      tpu.vector_store %arg12[%c0_33, %c0_34], %39 {strides = array<i32>} : memref<64x512xf32, #tpu.memory_space<vmem>>, vector<64x512xf32>,
    } else {
    }
    %c0_i32_24 = arith.constant 0 : i32
    %43 = arith.cmpi sgt, %arg1, %c0_i32_24 : i32
    %44 = arith.extui %43 : i1 to i32
    %c0_i32_25 = arith.constant 0 : i32
    %45 = arith.cmpi ne, %44, %c0_i32_25 : i32
    scf.if %45 {
      %c0_27 = arith.constant 0 : index
      %c0_28 = arith.constant 0 : index
      %49 = vector.load %arg6[%c0_27, %c0_28] : memref<64x512xf32, #tpu.memory_space<vmem>>, vector<64x512xf32>
      %50 = arith.maximumf %49, %35 : vector<64x512xf32>
      %c0_29 = arith.constant 0 : index
      %c0_30 = arith.constant 0 : index
      %51 = vector.load %arg6[%c0_29, %c0_30] : memref<64x512xf32, #tpu.memory_space<vmem>>, vector<64x512xf32>
      tpu.vector_store %arg6[%c0_29, %c0_30], %50 {strides = array<i32>} : memref<64x512xf32, #tpu.memory_space<vmem>>, vector<64x512xf32>,
      %c0_31 = arith.constant 0 : index
      %c0_32 = arith.constant 0 : index
      %52 = vector.load %arg7[%c0_31, %c0_32] : memref<64x512xf32, #tpu.memory_space<vmem>>, vector<64x512xf32>
      %53 = arith.minimumf %52, %36 : vector<64x512xf32>
      %c0_33 = arith.constant 0 : index
      %c0_34 = arith.constant 0 : index
      %54 = vector.load %arg7[%c0_33, %c0_34] : memref<64x512xf32, #tpu.memory_space<vmem>>, vector<64x512xf32>
      tpu.vector_store %arg7[%c0_33, %c0_34], %53 {strides = array<i32>} : memref<64x512xf32, #tpu.memory_space<vmem>>, vector<64x512xf32>,
      %c0_35 = arith.constant 0 : index
      %c0_36 = arith.constant 0 : index
      %55 = vector.load %arg11[%c0_35, %c0_36] : memref<64x512xf32, #tpu.memory_space<vmem>>, vector<64x512xf32>
      %56 = arith.addf %55, %37 : vector<64x512xf32>
      %c0_37 = arith.constant 0 : index
      %c0_38 = arith.constant 0 : index
      %57 = vector.load %arg11[%c0_37, %c0_38] : memref<64x512xf32, #tpu.memory_space<vmem>>, vector<64x512xf32>
      tpu.vector_store %arg11[%c0_37, %c0_38], %56 {strides = array<i32>} : memref<64x512xf32, #tpu.memory_space<vmem>>, vector<64x512xf32>,
      %c0_39 = arith.constant 0 : index
      %c0_40 = arith.constant 0 : index
      %58 = vector.load %arg12[%c0_39, %c0_40] : memref<64x512xf32, #tpu.memory_space<vmem>>, vector<64x512xf32>
      %59 = arith.addf %58, %39 : vector<64x512xf32>
      %c0_41 = arith.constant 0 : index
      %c0_42 = arith.constant 0 : index
      %60 = vector.load %arg12[%c0_41, %c0_42] : memref<64x512xf32, #tpu.memory_space<vmem>>, vector<64x512xf32>
      tpu.vector_store %arg12[%c0_41, %c0_42], %59 {strides = array<i32>} : memref<64x512xf32, #tpu.memory_space<vmem>>, vector<64x512xf32>,
    } else {
    }
    %c4_i32 = arith.constant 4 : i32
    %46 = arith.cmpi eq, %arg1, %c4_i32 : i32
    %47 = arith.extui %46 : i1 to i32
    %c0_i32_26 = arith.constant 0 : i32
    %48 = arith.cmpi ne, %47, %c0_i32_26 : i32
    scf.if %48 {
      %c0_27 = arith.constant 0 : index
      %c0_28 = arith.constant 0 : index
      %49 = vector.load %arg11[%c0_27, %c0_28] : memref<64x512xf32, #tpu.memory_space<vmem>>, vector<64x512xf32>
      %cst_29 = arith.constant dense<0.000000e+00> : vector<512xf32>
      %50 = vector.multi_reduction <add>, %49, %cst_29 [0] : vector<64x512xf32> to vector<512xf32>
      %51 = vector.shape_cast %50 : vector<512xf32> to vector<1x512xf32>
      %52 = vector.shape_cast %51 : vector<1x512xf32> to vector<1x512xf32>
      %53 = vector.broadcast %52 : vector<1x512xf32> to vector<8x512xf32>
      %c0_30 = arith.constant 0 : index
      %c0_31 = arith.constant 0 : index
      %c0_32 = arith.constant 0 : index
      %54 = vector.load %arg8[%c0_30, %c0_31, %c0_32] : memref<1x8x512xf32, #tpu.memory_space<vmem>>, vector<1x8x512xf32>
      %55 = vector.shape_cast %54 : vector<1x8x512xf32> to vector<8x512xf32>
      %56 = vector.shape_cast %53 : vector<8x512xf32> to vector<1x8x512xf32>
      tpu.vector_store %arg8[%c0_30, %c0_31, %c0_32], %56 {strides = array<i32>} : memref<1x8x512xf32, #tpu.memory_space<vmem>>, vector<1x8x512xf32>,
      %c0_33 = arith.constant 0 : index
      %c0_34 = arith.constant 0 : index
      %57 = vector.load %arg12[%c0_33, %c0_34] : memref<64x512xf32, #tpu.memory_space<vmem>>, vector<64x512xf32>
      %cst_35 = arith.constant dense<0.000000e+00> : vector<512xf32>
      %58 = vector.multi_reduction <add>, %57, %cst_35 [0] : vector<64x512xf32> to vector<512xf32>
      %59 = vector.shape_cast %58 : vector<512xf32> to vector<1x512xf32>
      %60 = vector.shape_cast %59 : vector<1x512xf32> to vector<1x512xf32>
      %61 = vector.broadcast %60 : vector<1x512xf32> to vector<8x512xf32>
      %c0_36 = arith.constant 0 : index
      %c0_37 = arith.constant 0 : index
      %c0_38 = arith.constant 0 : index
      %62 = vector.load %arg9[%c0_36, %c0_37, %c0_38] : memref<1x8x512xf32, #tpu.memory_space<vmem>>, vector<1x8x512xf32>
      %63 = vector.shape_cast %62 : vector<1x8x512xf32> to vector<8x512xf32>
      %64 = vector.shape_cast %61 : vector<8x512xf32> to vector<1x8x512xf32>
      tpu.vector_store %arg9[%c0_36, %c0_37, %c0_38], %64 {strides = array<i32>} : memref<1x8x512xf32, #tpu.memory_space<vmem>>, vector<1x8x512xf32>,
    } else {
    }
    return
  }
  func.func @transform_0(%arg0: i32, %arg1: i32) -> (i32, i32) {
    %c0_i32 = arith.constant 0 : i32
    %c0_i32_0 = arith.constant 0 : i32
    return %arg0, %c0_i32 : i32, i32
  }
  func.func @transform_1(%arg0: i32, %arg1: i32) -> (i32, i32, i32) {
    %c0_i32 = arith.constant 0 : i32
    %c0_i32_0 = arith.constant 0 : i32
    return %arg1, %arg0, %c0_i32 : i32, i32, i32
  }
  func.func @transform_2(%arg0: i32, %arg1: i32) -> (i32, i32) {
    %c0_i32 = arith.constant 0 : i32
    %c0_i32_0 = arith.constant 0 : i32
    %c0_i32_1 = arith.constant 0 : i32
    return %c0_i32, %c0_i32_0 : i32, i32
  }
  func.func @transform_3(%arg0: i32, %arg1: i32) -> (i32, i32) {
    %c0_i32 = arith.constant 0 : i32
    %c0_i32_0 = arith.constant 0 : i32
    %c0_i32_1 = arith.constant 0 : i32
    return %c0_i32, %c0_i32_0 : i32, i32
  }
  func.func @transform_4(%arg0: i32, %arg1: i32) -> (i32, i32) {
    %c0_i32 = arith.constant 0 : i32
    %c0_i32_0 = arith.constant 0 : i32
    return %arg0, %c0_i32 : i32, i32
  }
  func.func @transform_5(%arg0: i32, %arg1: i32) -> (i32, i32) {
    %c0_i32 = arith.constant 0 : i32
    %c0_i32_0 = arith.constant 0 : i32
    return %arg0, %c0_i32 : i32, i32
  }
  func.func @transform_6(%arg0: i32, %arg1: i32) -> (i32, i32, i32) {
    %c0_i32 = arith.constant 0 : i32
    %c0_i32_0 = arith.constant 0 : i32
    %c0_i32_1 = arith.constant 0 : i32
    return %arg0, %c0_i32, %c0_i32_0 : i32, i32, i32
  }
  func.func @transform_7(%arg0: i32, %arg1: i32) -> (i32, i32, i32) {
    %c0_i32 = arith.constant 0 : i32
    %c0_i32_0 = arith.constant 0 : i32
    %c0_i32_1 = arith.constant 0 : i32
    return %arg0, %c0_i32, %c0_i32_0 : i32, i32, i32
  }
}

module attributes {stable_mosaic.version = 11 : i64} {
  func.func @_bn_project_kernel(%arg0: i32, %arg1: i32, %arg2: memref<1x128x128xf32, #tpu.memory_space<vmem>>, %arg3: memref<1x128x128xf32, #tpu.memory_space<vmem>>, %arg4: memref<128x128xf32, #tpu.memory_space<vmem>>, %arg5: memref<128x128xf32, #tpu.memory_space<vmem>>, %arg6: memref<128x320xbf16, #tpu.memory_space<vmem>>, %arg7: memref<128x320xf32, #tpu.memory_space<vmem>>, %arg8: memref<1x128x128xf32, #tpu.memory_space<vmem>>, %arg9: memref<1x128x256xbf16, #tpu.memory_space<vmem>>, %arg10: memref<1x128x64xbf16, #tpu.memory_space<vmem>>) attributes {dimension_semantics = [#tpu.dimension_semantics<parallel>, #tpu.dimension_semantics<parallel>], iteration_bounds = array<i64: 2, 1>, scalar_prefetch = 0 : i64, scratch_operands = 0 : i64, tpu.core_type = #tpu.core_type<tc>, window_params = [{transform_indices = @transform_0, window_bounds = array<i64: 1, 128, 128>}, {transform_indices = @transform_1, window_bounds = array<i64: 1, 128, 128>}, {transform_indices = @transform_2, window_bounds = array<i64: 128, 128>}, {transform_indices = @transform_3, window_bounds = array<i64: 128, 128>}, {pipeline_mode = #tpu.pipeline_mode<synchronous>, transform_indices = @transform_4, window_bounds = array<i64: 128, 320>}, {transform_indices = @transform_5, window_bounds = array<i64: 128, 320>}, {transform_indices = @transform_6, window_bounds = array<i64: 1, 128, 128>}, {transform_indices = @transform_7, window_bounds = array<i64: 1, 128, 256>}, {transform_indices = @transform_8, window_bounds = array<i64: 1, 128, 64>}]} {
    %c0 = arith.constant 0 : index
    %c0_0 = arith.constant 0 : index
    %0 = vector.load %arg4[%c0, %c0_0] : memref<128x128xf32, #tpu.memory_space<vmem>>, vector<128x128xf32>
    %c0_1 = arith.constant 0 : index
    %c0_2 = arith.constant 0 : index
    %1 = vector.load %arg5[%c0_1, %c0_2] : memref<128x128xf32, #tpu.memory_space<vmem>>, vector<128x128xf32>
    %cst = arith.constant 0.000000e+00 : f32
    %2 = vector.broadcast %cst : f32 to vector<128x128xf32>
    %3 = arith.cmpf oge, %0, %2 : vector<128x128xf32>
    %c0_3 = arith.constant 0 : index
    %c0_4 = arith.constant 0 : index
    %c0_5 = arith.constant 0 : index
    %4 = vector.load %arg2[%c0_3, %c0_4, %c0_5] : memref<1x128x128xf32, #tpu.memory_space<vmem>>, vector<1x128x128xf32>
    %5 = vector.shape_cast %4 : vector<1x128x128xf32> to vector<128x128xf32>
    %c0_6 = arith.constant 0 : index
    %c0_7 = arith.constant 0 : index
    %c0_8 = arith.constant 0 : index
    %6 = vector.load %arg3[%c0_6, %c0_7, %c0_8] : memref<1x128x128xf32, #tpu.memory_space<vmem>>, vector<1x128x128xf32>
    %7 = vector.shape_cast %6 : vector<1x128x128xf32> to vector<128x128xf32>
    %8 = arith.select %3, %5, %7 : vector<128x128xi1>, vector<128x128xf32>
    %9 = arith.mulf %8, %0 : vector<128x128xf32>
    %10 = arith.addf %9, %1 : vector<128x128xf32>
    %cst_9 = arith.constant 0.000000e+00 : f32
    %11 = vector.broadcast %cst_9 : f32 to vector<128x128xf32>
    %12 = arith.cmpf oge, %10, %11 : vector<128x128xf32>
    %cst_10 = arith.constant 2.000000e-01 : f32
    %13 = vector.broadcast %cst_10 : f32 to vector<128x128xf32>
    %14 = arith.mulf %13, %10 : vector<128x128xf32>
    %15 = arith.select %12, %10, %14 : vector<128x128xi1>, vector<128x128xf32>
    %c0_11 = arith.constant 0 : index
    %c0_12 = arith.constant 0 : index
    %c0_13 = arith.constant 0 : index
    %16 = vector.load %arg8[%c0_11, %c0_12, %c0_13] : memref<1x128x128xf32, #tpu.memory_space<vmem>>, vector<1x128x128xf32>
    %17 = vector.shape_cast %16 : vector<1x128x128xf32> to vector<128x128xf32>
    %18 = vector.shape_cast %15 : vector<128x128xf32> to vector<1x128x128xf32>
    tpu.vector_store %arg8[%c0_11, %c0_12, %c0_13], %18 {strides = array<i32>} : memref<1x128x128xf32, #tpu.memory_space<vmem>>, vector<1x128x128xf32>,
    %19 = arith.truncf %15 : vector<128x128xf32> to vector<128x128xbf16>
    %c0_14 = arith.constant 0 : index
    %c0_15 = arith.constant 0 : index
    %20 = vector.load %arg6[%c0_14, %c0_15] : memref<128x320xbf16, #tpu.memory_space<vmem>>, vector<128x320xbf16>
    %cst_16 = arith.constant dense<0.000000e+00> : vector<128x320xf32>
    %21 = tpu.matmul %19, %20, %cst_16 {dimension_numbers = #tpu.dot_dimension_numbers<[1], [0], [0], [1], [0, 0, 1, 1], [], []>} : vector<128x128xbf16>, vector<128x320xbf16>, vector<128x320xf32> -> vector<128x320xf32>
    %c0_17 = arith.constant 0 : index
    %c0_18 = arith.constant 0 : index
    %22 = vector.load %arg7[%c0_17, %c0_18] : memref<128x320xf32, #tpu.memory_space<vmem>>, vector<128x320xf32>
    %23 = arith.addf %21, %22 : vector<128x320xf32>
    %cst_19 = arith.constant 0.000000e+00 : f32
    %24 = vector.broadcast %cst_19 : f32 to vector<128x320xf32>
    %25 = arith.maximumf %23, %24 : vector<128x320xf32>
    %26 = vector.extract_strided_slice %25 {offsets = [0, 0], sizes = [128, 256], strides = [1, 1]} : vector<128x320xf32> to vector<128x256xf32>
    %27 = arith.truncf %26 : vector<128x256xf32> to vector<128x256xbf16>
    %c0_20 = arith.constant 0 : index
    %c0_21 = arith.constant 0 : index
    %c0_22 = arith.constant 0 : index
    %28 = vector.load %arg9[%c0_20, %c0_21, %c0_22] : memref<1x128x256xbf16, #tpu.memory_space<vmem>>, vector<1x128x256xbf16>
    %29 = vector.shape_cast %28 : vector<1x128x256xbf16> to vector<128x256xbf16>
    %30 = vector.shape_cast %27 : vector<128x256xbf16> to vector<1x128x256xbf16>
    tpu.vector_store %arg9[%c0_20, %c0_21, %c0_22], %30 {strides = array<i32>} : memref<1x128x256xbf16, #tpu.memory_space<vmem>>, vector<1x128x256xbf16>,
    %31 = vector.extract_strided_slice %25 {offsets = [0, 256], sizes = [128, 64], strides = [1, 1]} : vector<128x320xf32> to vector<128x64xf32>
    %32 = arith.truncf %31 : vector<128x64xf32> to vector<128x64xbf16>
    %c0_23 = arith.constant 0 : index
    %c0_24 = arith.constant 0 : index
    %c0_25 = arith.constant 0 : index
    %33 = vector.load %arg10[%c0_23, %c0_24, %c0_25] : memref<1x128x64xbf16, #tpu.memory_space<vmem>>, vector<1x128x64xbf16>
    %34 = vector.shape_cast %33 : vector<1x128x64xbf16> to vector<128x64xbf16>
    %35 = vector.shape_cast %32 : vector<128x64xbf16> to vector<1x128x64xbf16>
    tpu.vector_store %arg10[%c0_23, %c0_24, %c0_25], %35 {strides = array<i32>} : memref<1x128x64xbf16, #tpu.memory_space<vmem>>, vector<1x128x64xbf16>,
    return
  }
  func.func @transform_0(%arg0: i32, %arg1: i32) -> (i32, i32, i32) {
    %c0_i32 = arith.constant 0 : i32
    %c0_i32_0 = arith.constant 0 : i32
    return %arg0, %arg1, %c0_i32 : i32, i32, i32
  }
  func.func @transform_1(%arg0: i32, %arg1: i32) -> (i32, i32, i32) {
    %c0_i32 = arith.constant 0 : i32
    %c0_i32_0 = arith.constant 0 : i32
    return %arg0, %arg1, %c0_i32 : i32, i32, i32
  }
  func.func @transform_2(%arg0: i32, %arg1: i32) -> (i32, i32) {
    %c0_i32 = arith.constant 0 : i32
    %c0_i32_0 = arith.constant 0 : i32
    return %arg1, %c0_i32 : i32, i32
  }
  func.func @transform_3(%arg0: i32, %arg1: i32) -> (i32, i32) {
    %c0_i32 = arith.constant 0 : i32
    %c0_i32_0 = arith.constant 0 : i32
    return %arg1, %c0_i32 : i32, i32
  }
  func.func @transform_4(%arg0: i32, %arg1: i32) -> (i32, i32) {
    %c0_i32 = arith.constant 0 : i32
    %c0_i32_0 = arith.constant 0 : i32
    %c0_i32_1 = arith.constant 0 : i32
    return %c0_i32, %c0_i32_0 : i32, i32
  }
  func.func @transform_5(%arg0: i32, %arg1: i32) -> (i32, i32) {
    %c0_i32 = arith.constant 0 : i32
    %c0_i32_0 = arith.constant 0 : i32
    return %arg1, %c0_i32 : i32, i32
  }
  func.func @transform_6(%arg0: i32, %arg1: i32) -> (i32, i32, i32) {
    %c0_i32 = arith.constant 0 : i32
    %c0_i32_0 = arith.constant 0 : i32
    return %arg0, %arg1, %c0_i32 : i32, i32, i32
  }
  func.func @transform_7(%arg0: i32, %arg1: i32) -> (i32, i32, i32) {
    %c0_i32 = arith.constant 0 : i32
    %c0_i32_0 = arith.constant 0 : i32
    return %arg0, %arg1, %c0_i32 : i32, i32, i32
  }
  func.func @transform_8(%arg0: i32, %arg1: i32) -> (i32, i32, i32) {
    %c0_i32 = arith.constant 0 : i32
    %c0_i32_0 = arith.constant 0 : i32
    return %arg0, %arg1, %c0_i32 : i32, i32, i32
  }
}

module attributes {stable_mosaic.version = 11 : i64} {
  func.func @_attn_stats_kernel(%arg0: i32, %arg1: i32, %arg2: i32, %arg3: memref<1x128x64xbf16, #tpu.memory_space<vmem>>, %arg4: memref<1x128x64xbf16, #tpu.memory_space<vmem>>, %arg5: memref<1x128x2xf32, #tpu.memory_space<vmem>>, %arg6: memref<128x1xf32, #tpu.memory_space<vmem>>, %arg7: memref<128x1xf32, #tpu.memory_space<vmem>>) attributes {dimension_semantics = [#tpu.dimension_semantics<parallel>, #tpu.dimension_semantics<parallel>, #tpu.dimension_semantics<arbitrary>], iteration_bounds = array<i64: 2, 1, 1>, scalar_prefetch = 0 : i64, scratch_operands = 2 : i64, tpu.core_type = #tpu.core_type<tc>, window_params = [{transform_indices = @transform_0, window_bounds = array<i64: 1, 128, 64>}, {transform_indices = @transform_1, window_bounds = array<i64: 1, 128, 64>}, {transform_indices = @transform_2, window_bounds = array<i64: 1, 128, 2>}]} {
    %c0_i32 = arith.constant 0 : i32
    %0 = arith.cmpi eq, %arg2, %c0_i32 : i32
    %1 = arith.extui %0 : i1 to i32
    %c0_i32_0 = arith.constant 0 : i32
    %2 = arith.cmpi ne, %1, %c0_i32_0 : i32
    scf.if %2 {
      %cst_18 = arith.constant -1.000000e+30 : f32
      %29 = vector.broadcast %cst_18 : f32 to vector<128x1xf32>
      %c0_19 = arith.constant 0 : index
      %c0_20 = arith.constant 0 : index
      %30 = vector.load %arg6[%c0_19, %c0_20] : memref<128x1xf32, #tpu.memory_space<vmem>>, vector<128x1xf32>
      tpu.vector_store %arg6[%c0_19, %c0_20], %29 {strides = array<i32>} : memref<128x1xf32, #tpu.memory_space<vmem>>, vector<128x1xf32>,
      %cst_21 = arith.constant 0.000000e+00 : f32
      %31 = vector.broadcast %cst_21 : f32 to vector<128x1xf32>
      %c0_22 = arith.constant 0 : index
      %c0_23 = arith.constant 0 : index
      %32 = vector.load %arg7[%c0_22, %c0_23] : memref<128x1xf32, #tpu.memory_space<vmem>>, vector<128x1xf32>
      tpu.vector_store %arg7[%c0_22, %c0_23], %31 {strides = array<i32>} : memref<128x1xf32, #tpu.memory_space<vmem>>, vector<128x1xf32>,
    } else {
    }
    %c0 = arith.constant 0 : index
    %c0_1 = arith.constant 0 : index
    %c0_2 = arith.constant 0 : index
    %3 = vector.load %arg3[%c0, %c0_1, %c0_2] : memref<1x128x64xbf16, #tpu.memory_space<vmem>>, vector<1x128x64xbf16>
    %4 = vector.shape_cast %3 : vector<1x128x64xbf16> to vector<128x64xbf16>
    %5 = vector.extract_strided_slice %4 {offsets = [0, 32], sizes = [128, 32], strides = [1, 1]} : vector<128x64xbf16> to vector<128x32xbf16>
    %c0_3 = arith.constant 0 : index
    %c0_4 = arith.constant 0 : index
    %c0_5 = arith.constant 0 : index
    %6 = vector.load %arg4[%c0_3, %c0_4, %c0_5] : memref<1x128x64xbf16, #tpu.memory_space<vmem>>, vector<1x128x64xbf16>
    %7 = vector.shape_cast %6 : vector<1x128x64xbf16> to vector<128x64xbf16>
    %8 = vector.extract_strided_slice %7 {offsets = [0, 0], sizes = [128, 32], strides = [1, 1]} : vector<128x64xbf16> to vector<128x32xbf16>
    %cst = arith.constant dense<0.000000e+00> : vector<128x128xf32>
    %9 = tpu.matmul %5, %8, %cst {dimension_numbers = #tpu.dot_dimension_numbers<[1], [1], [0], [0], [0, 0, 1, 0], [], []>} : vector<128x32xbf16>, vector<128x32xbf16>, vector<128x128xf32> -> vector<128x128xf32>
    %c0_6 = arith.constant 0 : index
    %c0_7 = arith.constant 0 : index
    %10 = vector.load %arg6[%c0_6, %c0_7] : memref<128x1xf32, #tpu.memory_space<vmem>>, vector<128x1xf32>
    %cst_8 = arith.constant dense<0xFF800000> : vector<128xf32>
    %11 = vector.multi_reduction <maximumf>, %9, %cst_8 [1] : vector<128x128xf32> to vector<128xf32>
    %12 = vector.shape_cast %11 : vector<128xf32> to vector<128x1xf32>
    %13 = arith.maximumf %10, %12 : vector<128x1xf32>
    %14 = arith.subf %10, %13 : vector<128x1xf32>
    %15 = math.exp %14 : vector<128x1xf32>
    %c0_9 = arith.constant 0 : index
    %c0_10 = arith.constant 0 : index
    %16 = vector.load %arg7[%c0_9, %c0_10] : memref<128x1xf32, #tpu.memory_space<vmem>>, vector<128x1xf32>
    %17 = arith.mulf %15, %16 : vector<128x1xf32>
    %18 = vector.broadcast %13 : vector<128x1xf32> to vector<128x128xf32>
    %19 = arith.subf %9, %18 : vector<128x128xf32>
    %20 = math.exp %19 : vector<128x128xf32>
    %cst_11 = arith.constant dense<0.000000e+00> : vector<128xf32>
    %21 = vector.multi_reduction <add>, %20, %cst_11 [1] : vector<128x128xf32> to vector<128xf32>
    %22 = vector.shape_cast %21 : vector<128xf32> to vector<128x1xf32>
    %23 = arith.addf %17, %22 : vector<128x1xf32>
    %c0_12 = arith.constant 0 : index
    %c0_13 = arith.constant 0 : index
    %24 = vector.load %arg7[%c0_12, %c0_13] : memref<128x1xf32, #tpu.memory_space<vmem>>, vector<128x1xf32>
    tpu.vector_store %arg7[%c0_12, %c0_13], %23 {strides = array<i32>} : memref<128x1xf32, #tpu.memory_space<vmem>>, vector<128x1xf32>,
    %c0_14 = arith.constant 0 : index
    %c0_15 = arith.constant 0 : index
    %25 = vector.load %arg6[%c0_14, %c0_15] : memref<128x1xf32, #tpu.memory_space<vmem>>, vector<128x1xf32>
    tpu.vector_store %arg6[%c0_14, %c0_15], %13 {strides = array<i32>} : memref<128x1xf32, #tpu.memory_space<vmem>>, vector<128x1xf32>,
    %c0_i32_16 = arith.constant 0 : i32
    %26 = arith.cmpi eq, %arg2, %c0_i32_16 : i32
    %27 = arith.extui %26 : i1 to i32
    %c0_i32_17 = arith.constant 0 : i32
    %28 = arith.cmpi ne, %27, %c0_i32_17 : i32
    scf.if %28 {
      %c0_18 = arith.constant 0 : index
      %c0_19 = arith.constant 0 : index
      %29 = vector.load %arg6[%c0_18, %c0_19] : memref<128x1xf32, #tpu.memory_space<vmem>>, vector<128x1xf32>
      %c0_20 = arith.constant 0 : index
      %c0_21 = arith.constant 0 : index
      %30 = vector.load %arg7[%c0_20, %c0_21] : memref<128x1xf32, #tpu.memory_space<vmem>>, vector<128x1xf32>
      %cst_22 = arith.constant 1.000000e+00 : f32
      %31 = vector.broadcast %cst_22 : f32 to vector<128x1xf32>
      %32 = arith.divf %31, %30 : vector<128x1xf32>
      %33 = tpu.concatenate %29, %32 in 1 : vector<128x1xf32>, vector<128x1xf32> -> vector<128x2xf32>
      %c0_23 = arith.constant 0 : index
      %c0_24 = arith.constant 0 : index
      %c0_25 = arith.constant 0 : index
      %34 = vector.load %arg5[%c0_23, %c0_24, %c0_25] : memref<1x128x2xf32, #tpu.memory_space<vmem>>, vector<1x128x2xf32>
      %35 = vector.shape_cast %34 : vector<1x128x2xf32> to vector<128x2xf32>
      %36 = vector.shape_cast %33 : vector<128x2xf32> to vector<1x128x2xf32>
      tpu.vector_store %arg5[%c0_23, %c0_24, %c0_25], %36 {strides = array<i32>} : memref<1x128x2xf32, #tpu.memory_space<vmem>>, vector<1x128x2xf32>,
    } else {
    }
    return
  }
  func.func @transform_0(%arg0: i32, %arg1: i32, %arg2: i32) -> (i32, i32, i32) {
    %c0_i32 = arith.constant 0 : i32
    %c0_i32_0 = arith.constant 0 : i32
    return %arg0, %arg1, %c0_i32 : i32, i32, i32
  }
  func.func @transform_1(%arg0: i32, %arg1: i32, %arg2: i32) -> (i32, i32, i32) {
    %c0_i32 = arith.constant 0 : i32
    %c0_i32_0 = arith.constant 0 : i32
    return %arg0, %arg2, %c0_i32 : i32, i32, i32
  }
  func.func @transform_2(%arg0: i32, %arg1: i32, %arg2: i32) -> (i32, i32, i32) {
    %c0_i32 = arith.constant 0 : i32
    %c0_i32_0 = arith.constant 0 : i32
    return %arg0, %arg1, %c0_i32 : i32, i32, i32
  }
}

module attributes {stable_mosaic.version = 11 : i64} {
  func.func @_attn_out_kernel(%arg0: i32, %arg1: i32, %arg2: i32, %arg3: memref<1x128x64xbf16, #tpu.memory_space<vmem>>, %arg4: memref<1x128x64xbf16, #tpu.memory_space<vmem>>, %arg5: memref<1x128x256xbf16, #tpu.memory_space<vmem>>, %arg6: memref<1x128x2xf32, #tpu.memory_space<vmem>>, %arg7: memref<1x128x128xf32, #tpu.memory_space<vmem>>, %arg8: memref<128x2xf32, #tpu.memory_space<vmem>>, %arg9: memref<1x1xf32, #tpu.memory_space<vmem>>, %arg10: memref<128x256xbf16, #tpu.memory_space<vmem>>, %arg11: memref<2x256xf32, #tpu.memory_space<vmem>>, %arg12: memref<1x256xf32, #tpu.memory_space<vmem>>, %arg13: memref<256x128xbf16, #tpu.memory_space<vmem>>, %arg14: memref<1x128xf32, #tpu.memory_space<vmem>>, %arg15: memref<1x128x128xf32, #tpu.memory_space<vmem>>, %arg16: memref<128x256xf32, #tpu.memory_space<vmem>>) attributes {dimension_semantics = [#tpu.dimension_semantics<parallel>, #tpu.dimension_semantics<parallel>, #tpu.dimension_semantics<arbitrary>], iteration_bounds = array<i64: 2, 1, 1>, scalar_prefetch = 0 : i64, scratch_operands = 1 : i64, tpu.core_type = #tpu.core_type<tc>, window_params = [{transform_indices = @transform_0, window_bounds = array<i64: 1, 128, 64>}, {transform_indices = @transform_1, window_bounds = array<i64: 1, 128, 64>}, {transform_indices = @transform_2, window_bounds = array<i64: 1, 128, 256>}, {transform_indices = @transform_3, window_bounds = array<i64: 1, 128, 2>}, {transform_indices = @transform_4, window_bounds = array<i64: 1, 128, 128>}, {transform_indices = @transform_5, window_bounds = array<i64: 128, 2>}, {pipeline_mode = #tpu.pipeline_mode<synchronous>, transform_indices = @transform_6, window_bounds = array<i64: 1, 1>}, {pipeline_mode = #tpu.pipeline_mode<synchronous>, transform_indices = @transform_7, window_bounds = array<i64: 128, 256>}, {pipeline_mode = #tpu.pipeline_mode<synchronous>, transform_indices = @transform_8, window_bounds = array<i64: 2, 256>}, {pipeline_mode = #tpu.pipeline_mode<synchronous>, transform_indices = @transform_9, window_bounds = array<i64: 1, 256>}, {pipeline_mode = #tpu.pipeline_mode<synchronous>, transform_indices = @transform_10, window_bounds = array<i64: 256, 128>}, {pipeline_mode = #tpu.pipeline_mode<synchronous>, transform_indices = @transform_11, window_bounds = array<i64: 1, 128>}, {transform_indices = @transform_12, window_bounds = array<i64: 1, 128, 128>}]} {
    %c0_i32 = arith.constant 0 : i32
    %0 = arith.cmpi eq, %arg2, %c0_i32 : i32
    %1 = arith.extui %0 : i1 to i32
    %c0_i32_0 = arith.constant 0 : i32
    %2 = arith.cmpi ne, %1, %c0_i32_0 : i32
    scf.if %2 {
      %cst_22 = arith.constant 0.000000e+00 : f32
      %31 = vector.broadcast %cst_22 : f32 to vector<128x256xf32>
      %c0_23 = arith.constant 0 : index
      %c0_24 = arith.constant 0 : index
      %32 = vector.load %arg16[%c0_23, %c0_24] : memref<128x256xf32, #tpu.memory_space<vmem>>, vector<128x256xf32>
      tpu.vector_store %arg16[%c0_23, %c0_24], %31 {strides = array<i32>} : memref<128x256xf32, #tpu.memory_space<vmem>>, vector<128x256xf32>,
    } else {
    }
    %c0 = arith.constant 0 : index
    %c0_1 = arith.constant 0 : index
    %c0_2 = arith.constant 0 : index
    %3 = vector.load %arg4[%c0, %c0_1, %c0_2] : memref<1x128x64xbf16, #tpu.memory_space<vmem>>, vector<1x128x64xbf16>
    %4 = vector.shape_cast %3 : vector<1x128x64xbf16> to vector<128x64xbf16>
    %5 = vector.extract_strided_slice %4 {offsets = [0, 32], sizes = [128, 32], strides = [1, 1]} : vector<128x64xbf16> to vector<128x32xbf16>
    %c0_3 = arith.constant 0 : index
    %c0_4 = arith.constant 0 : index
    %c0_5 = arith.constant 0 : index
    %6 = vector.load %arg3[%c0_3, %c0_4, %c0_5] : memref<1x128x64xbf16, #tpu.memory_space<vmem>>, vector<1x128x64xbf16>
    %7 = vector.shape_cast %6 : vector<1x128x64xbf16> to vector<128x64xbf16>
    %8 = vector.extract_strided_slice %7 {offsets = [0, 0], sizes = [128, 32], strides = [1, 1]} : vector<128x64xbf16> to vector<128x32xbf16>
    %cst = arith.constant dense<0.000000e+00> : vector<128x128xf32>
    %9 = tpu.matmul %5, %8, %cst {dimension_numbers = #tpu.dot_dimension_numbers<[1], [1], [0], [0], [0, 0, 1, 0], [], []>} : vector<128x32xbf16>, vector<128x32xbf16>, vector<128x128xf32> -> vector<128x128xf32>
    %c0_6 = arith.constant 0 : index
    %c0_7 = arith.constant 0 : index
    %c0_8 = arith.constant 0 : index
    %10 = vector.load %arg6[%c0_6, %c0_7, %c0_8] : memref<1x128x2xf32, #tpu.memory_space<vmem>>, vector<1x128x2xf32>
    %11 = vector.shape_cast %10 : vector<1x128x2xf32> to vector<128x2xf32>
    %12 = vector.extract_strided_slice %11 {offsets = [0, 0], sizes = [128, 1], strides = [1, 1]} : vector<128x2xf32> to vector<128x1xf32>
    %c0_9 = arith.constant 0 : index
    %c0_10 = arith.constant 0 : index
    %c0_11 = arith.constant 0 : index
    %13 = vector.load %arg6[%c0_9, %c0_10, %c0_11] : memref<1x128x2xf32, #tpu.memory_space<vmem>>, vector<1x128x2xf32>
    %14 = vector.shape_cast %13 : vector<1x128x2xf32> to vector<128x2xf32>
    %15 = vector.extract_strided_slice %14 {offsets = [0, 1], sizes = [128, 1], strides = [1, 1]} : vector<128x2xf32> to vector<128x1xf32>
    %16 = vector.broadcast %12 : vector<128x1xf32> to vector<128x128xf32>
    %17 = arith.subf %9, %16 : vector<128x128xf32>
    %18 = math.exp %17 : vector<128x128xf32>
    %19 = vector.broadcast %15 : vector<128x1xf32> to vector<128x128xf32>
    %20 = arith.mulf %18, %19 : vector<128x128xf32>
    %c0_12 = arith.constant 0 : index
    %c0_13 = arith.constant 0 : index
    %21 = vector.load %arg16[%c0_12, %c0_13] : memref<128x256xf32, #tpu.memory_space<vmem>>, vector<128x256xf32>
    %22 = arith.truncf %20 : vector<128x128xf32> to vector<128x128xbf16>
    %c0_14 = arith.constant 0 : index
    %c0_15 = arith.constant 0 : index
    %c0_16 = arith.constant 0 : index
    %23 = vector.load %arg5[%c0_14, %c0_15, %c0_16] : memref<1x128x256xbf16, #tpu.memory_space<vmem>>, vector<1x128x256xbf16>
    %24 = vector.shape_cast %23 : vector<1x128x256xbf16> to vector<128x256xbf16>
    %cst_17 = arith.constant dense<0.000000e+00> : vector<128x256xf32>
    %25 = tpu.matmul %22, %24, %cst_17 {dimension_numbers = #tpu.dot_dimension_numbers<[0], [0], [1], [1], [0, 1, 1, 1], [], []>} : vector<128x128xbf16>, vector<128x256xbf16>, vector<128x256xf32> -> vector<128x256xf32>
    %26 = arith.addf %21, %25 : vector<128x256xf32>
    %c0_18 = arith.constant 0 : index
    %c0_19 = arith.constant 0 : index
    %27 = vector.load %arg16[%c0_18, %c0_19] : memref<128x256xf32, #tpu.memory_space<vmem>>, vector<128x256xf32>
    tpu.vector_store %arg16[%c0_18, %c0_19], %26 {strides = array<i32>} : memref<128x256xf32, #tpu.memory_space<vmem>>, vector<128x256xf32>,
    %c0_i32_20 = arith.constant 0 : i32
    %28 = arith.cmpi eq, %arg2, %c0_i32_20 : i32
    %29 = arith.extui %28 : i1 to i32
    %c0_i32_21 = arith.constant 0 : i32
    %30 = arith.cmpi ne, %29, %c0_i32_21 : i32
    scf.if %30 {
      %c0_22 = arith.constant 0 : index
      %c0_23 = arith.constant 0 : index
      %31 = vector.load %arg9[%c0_22, %c0_23] : memref<1x1xf32, #tpu.memory_space<vmem>>, vector<1x1xf32>
      %c0_24 = arith.constant 0 : index
      %c0_25 = arith.constant 0 : index
      %32 = vector.load %arg16[%c0_24, %c0_25] : memref<128x256xf32, #tpu.memory_space<vmem>>, vector<128x256xf32>
      %33 = vector.extract_strided_slice %32 {offsets = [0, 0], sizes = [128, 128], strides = [1, 1]} : vector<128x256xf32> to vector<128x128xf32>
      %34 = vector.broadcast %31 : vector<1x1xf32> to vector<128x128xf32>
      %35 = arith.mulf %34, %33 : vector<128x128xf32>
      %c0_26 = arith.constant 0 : index
      %c0_27 = arith.constant 0 : index
      %c0_28 = arith.constant 0 : index
      %36 = vector.load %arg7[%c0_26, %c0_27, %c0_28] : memref<1x128x128xf32, #tpu.memory_space<vmem>>, vector<1x128x128xf32>
      %37 = vector.shape_cast %36 : vector<1x128x128xf32> to vector<128x128xf32>
      %38 = arith.addf %35, %37 : vector<128x128xf32>
      %39 = vector.extract_strided_slice %32 {offsets = [0, 128], sizes = [128, 2], strides = [1, 1]} : vector<128x256xf32> to vector<128x2xf32>
      %40 = vector.broadcast %31 : vector<1x1xf32> to vector<128x2xf32>
      %41 = arith.mulf %40, %39 : vector<128x2xf32>
      %c0_29 = arith.constant 0 : index
      %c0_30 = arith.constant 0 : index
      %42 = vector.load %arg8[%c0_29, %c0_30] : memref<128x2xf32, #tpu.memory_space<vmem>>, vector<128x2xf32>
      %43 = arith.addf %41, %42 : vector<128x2xf32>
      %44 = arith.truncf %38 : vector<128x128xf32> to vector<128x128xbf16>
      %c0_31 = arith.constant 0 : index
      %c0_32 = arith.constant 0 : index
      %45 = vector.load %arg10[%c0_31, %c0_32] : memref<128x256xbf16, #tpu.memory_space<vmem>>, vector<128x256xbf16>
      %cst_33 = arith.constant dense<0.000000e+00> : vector<128x256xf32>
      %46 = tpu.matmul %44, %45, %cst_33 {dimension_numbers = #tpu.dot_dimension_numbers<[1], [0], [0], [1], [0, 0, 1, 1], [], []>} : vector<128x128xbf16>, vector<128x256xbf16>, vector<128x256xf32> -> vector<128x256xf32>
      %47 = vector.extract_strided_slice %43 {offsets = [0, 0], sizes = [128, 1], strides = [1, 1]} : vector<128x2xf32> to vector<128x1xf32>
      %c0_34 = arith.constant 0 : index
      %c0_35 = arith.constant 0 : index
      %48 = vector.load %arg11[%c0_34, %c0_35] : memref<2x256xf32, #tpu.memory_space<vmem>>, vector<1x256xf32>
      %49 = vector.broadcast %47 : vector<128x1xf32> to vector<128x256xf32>
      %50 = vector.broadcast %48 : vector<1x256xf32> to vector<128x256xf32>
      %51 = arith.mulf %49, %50 : vector<128x256xf32>
      %52 = arith.addf %46, %51 : vector<128x256xf32>
      %53 = vector.extract_strided_slice %43 {offsets = [0, 1], sizes = [128, 1], strides = [1, 1]} : vector<128x2xf32> to vector<128x1xf32>
      %c1 = arith.constant 1 : index
      %c0_36 = arith.constant 0 : index
      %54 = vector.load %arg11[%c1, %c0_36] : memref<2x256xf32, #tpu.memory_space<vmem>>, vector<1x256xf32>
      %55 = vector.broadcast %53 : vector<128x1xf32> to vector<128x256xf32>
      %56 = vector.broadcast %54 : vector<1x256xf32> to vector<128x256xf32>
      %57 = arith.mulf %55, %56 : vector<128x256xf32>
      %58 = arith.addf %52, %57 : vector<128x256xf32>
      %c0_37 = arith.constant 0 : index
      %c0_38 = arith.constant 0 : index
      %59 = vector.load %arg12[%c0_37, %c0_38] : memref<1x256xf32, #tpu.memory_space<vmem>>, vector<1x256xf32>
      %60 = vector.broadcast %59 : vector<1x256xf32> to vector<128x256xf32>
      %61 = arith.addf %58, %60 : vector<128x256xf32>
      %cst_39 = arith.constant 0.000000e+00 : f32
      %62 = vector.broadcast %cst_39 : f32 to vector<128x256xf32>
      %63 = arith.maximumf %61, %62 : vector<128x256xf32>
      %64 = arith.truncf %63 : vector<128x256xf32> to vector<128x256xbf16>
      %c0_40 = arith.constant 0 : index
      %c0_41 = arith.constant 0 : index
      %65 = vector.load %arg13[%c0_40, %c0_41] : memref<256x128xbf16, #tpu.memory_space<vmem>>, vector<256x128xbf16>
      %cst_42 = arith.constant dense<0.000000e+00> : vector<128x128xf32>
      %66 = tpu.matmul %64, %65, %cst_42 {dimension_numbers = #tpu.dot_dimension_numbers<[1], [0], [0], [1], [0, 0, 1, 1], [], []>} : vector<128x256xbf16>, vector<256x128xbf16>, vector<128x128xf32> -> vector<128x128xf32>
      %c0_43 = arith.constant 0 : index
      %c0_44 = arith.constant 0 : index
      %67 = vector.load %arg14[%c0_43, %c0_44] : memref<1x128xf32, #tpu.memory_space<vmem>>, vector<1x128xf32>
      %68 = vector.broadcast %67 : vector<1x128xf32> to vector<128x128xf32>
      %69 = arith.addf %66, %68 : vector<128x128xf32>
      %cst_45 = arith.constant 0.000000e+00 : f32
      %70 = vector.broadcast %cst_45 : f32 to vector<128x128xf32>
      %71 = arith.maximumf %69, %70 : vector<128x128xf32>
      %c0_46 = arith.constant 0 : index
      %c0_47 = arith.constant 0 : index
      %c0_48 = arith.constant 0 : index
      %72 = vector.load %arg15[%c0_46, %c0_47, %c0_48] : memref<1x128x128xf32, #tpu.memory_space<vmem>>, vector<1x128x128xf32>
      %73 = vector.shape_cast %72 : vector<1x128x128xf32> to vector<128x128xf32>
      %74 = vector.shape_cast %71 : vector<128x128xf32> to vector<1x128x128xf32>
      tpu.vector_store %arg15[%c0_46, %c0_47, %c0_48], %74 {strides = array<i32>} : memref<1x128x128xf32, #tpu.memory_space<vmem>>, vector<1x128x128xf32>,
    } else {
    }
    return
  }
  func.func @transform_0(%arg0: i32, %arg1: i32, %arg2: i32) -> (i32, i32, i32) {
    %c0_i32 = arith.constant 0 : i32
    %c0_i32_0 = arith.constant 0 : i32
    return %arg0, %arg1, %c0_i32 : i32, i32, i32
  }
  func.func @transform_1(%arg0: i32, %arg1: i32, %arg2: i32) -> (i32, i32, i32) {
    %c0_i32 = arith.constant 0 : i32
    %c0_i32_0 = arith.constant 0 : i32
    return %arg0, %arg2, %c0_i32 : i32, i32, i32
  }
  func.func @transform_2(%arg0: i32, %arg1: i32, %arg2: i32) -> (i32, i32, i32) {
    %c0_i32 = arith.constant 0 : i32
    %c0_i32_0 = arith.constant 0 : i32
    return %arg0, %arg2, %c0_i32 : i32, i32, i32
  }
  func.func @transform_3(%arg0: i32, %arg1: i32, %arg2: i32) -> (i32, i32, i32) {
    %c0_i32 = arith.constant 0 : i32
    %c0_i32_0 = arith.constant 0 : i32
    return %arg0, %arg2, %c0_i32 : i32, i32, i32
  }
  func.func @transform_4(%arg0: i32, %arg1: i32, %arg2: i32) -> (i32, i32, i32) {
    %c0_i32 = arith.constant 0 : i32
    %c0_i32_0 = arith.constant 0 : i32
    return %arg0, %arg1, %c0_i32 : i32, i32, i32
  }
  func.func @transform_5(%arg0: i32, %arg1: i32, %arg2: i32) -> (i32, i32) {
    %c0_i32 = arith.constant 0 : i32
    %c0_i32_0 = arith.constant 0 : i32
    return %arg1, %c0_i32 : i32, i32
  }
  func.func @transform_6(%arg0: i32, %arg1: i32, %arg2: i32) -> (i32, i32) {
    %c0_i32 = arith.constant 0 : i32
    %c0_i32_0 = arith.constant 0 : i32
    %c0_i32_1 = arith.constant 0 : i32
    return %c0_i32, %c0_i32_0 : i32, i32
  }
  func.func @transform_7(%arg0: i32, %arg1: i32, %arg2: i32) -> (i32, i32) {
    %c0_i32 = arith.constant 0 : i32
    %c0_i32_0 = arith.constant 0 : i32
    %c0_i32_1 = arith.constant 0 : i32
    return %c0_i32, %c0_i32_0 : i32, i32
  }
  func.func @transform_8(%arg0: i32, %arg1: i32, %arg2: i32) -> (i32, i32) {
    %c0_i32 = arith.constant 0 : i32
    %c0_i32_0 = arith.constant 0 : i32
    %c0_i32_1 = arith.constant 0 : i32
    return %c0_i32, %c0_i32_0 : i32, i32
  }
  func.func @transform_9(%arg0: i32, %arg1: i32, %arg2: i32) -> (i32, i32) {
    %c0_i32 = arith.constant 0 : i32
    %c0_i32_0 = arith.constant 0 : i32
    %c0_i32_1 = arith.constant 0 : i32
    return %c0_i32, %c0_i32_0 : i32, i32
  }
  func.func @transform_10(%arg0: i32, %arg1: i32, %arg2: i32) -> (i32, i32) {
    %c0_i32 = arith.constant 0 : i32
    %c0_i32_0 = arith.constant 0 : i32
    %c0_i32_1 = arith.constant 0 : i32
    return %c0_i32, %c0_i32_0 : i32, i32
  }
  func.func @transform_11(%arg0: i32, %arg1: i32, %arg2: i32) -> (i32, i32) {
    %c0_i32 = arith.constant 0 : i32
    %c0_i32_0 = arith.constant 0 : i32
    %c0_i32_1 = arith.constant 0 : i32
    return %c0_i32, %c0_i32_0 : i32, i32
  }
  func.func @transform_12(%arg0: i32, %arg1: i32, %arg2: i32) -> (i32, i32, i32) {
    %c0_i32 = arith.constant 0 : i32
    %c0_i32_0 = arith.constant 0 : i32
    return %arg0, %arg1, %c0_i32 : i32, i32, i32
  }
}

</mosaic_0001>

<llo_original>
// kernel: up_block_forward.5
$region0: #{up_block_forward.5}
  #allocation0 [shape = 'u32[]', space=smem, size = 0x4, offset = 0x4, fixed_abs, tag = 'smem constant byte address 0x4 - core index']
  #allocation1 [shape = 'u32[144,128]{1,0:T(1,128)}', space=vmem, size = 0x12000, scoped, tag = 'internal scratch']
  %s0 = inlined_call_operand.vmem [shape: bf16[2,32,128], index: 0, kind: input, shape index: {}, may-alias: {0,1}]
  %s1 = inlined_call_operand.vmem [shape: bf16[2,32,128], index: 1, kind: input, shape index: {}, may-alias: {0,1}]
  %s2 = inlined_call_operand.vmem [shape: f32[2,1,32], index: 2, kind: input, shape index: {}]
  %s3 = inlined_call_operand.vmem [shape: f32[2,32,32], index: 3, kind: output, shape index: {}]
  %s4 = sld [smem:[#allocation0]]
  $region45: #{up_block_forward.5} parent=0
    _
  %s6 = ssub.s32 1, %s4
  %s7 = scalar_select 0, %s6, %s4
  loop: start=0, step=1, limit=4
  $region2: #{up_block_forward.5} parent=0 // loop_pre_header
    _
  $region3: #{up_block_forward.5} parent=0 // loop_header
    %s9 = sphi 0, %s13
    %p10 = scmp.ge.s32.totalorder %s9, 4
    %s16 = sphi 0, %s28
    %s17 = sphi 0, %s24
    %s18 = sphi 0, %s16
    %s19 = sphi 0, %s17
    %s20 = sphi 0, %s18
    %s21 = sphi 0, %s19
    %s33 = sphi 0, %s35
    %s36 = sphi 0, %s33
    %s37 = sphi 0, %s36
    %s53 = sphi 0, %s37
    %s59 = sphi 0, %s61
    %s62 = sphi 0, %s59
    %s63 = sphi 0, %s62
    %s79 = sphi 0, %s63
    %s85 = sphi 0, %s87
    %s88 = sphi 0, %s85
    %s89 = sphi 0, %s88
    %s105 = sphi 0, %s89
    %s113 = sphi 0, %s115
    %s116 = sphi 0, %s113
    %s117 = sphi 0, %s116
    %s133 = sphi 0, %s117
  $region4: #{up_block_forward.5} parent=0 // loop_header_branch
    %12 = sbr.rel (%p10) target = $region8
  $region5: #{up_block_forward.5} parent=0 // loop_body
    %s14 = ssub.s32 %s9, 1
    %s15 = ssub.s32 %s9, 2
    %s22 = sadd.s32 1, %s17
    %p23 = scmp.ge.s32.totalorder %s22, 1
    %s24 = scalar_select %p23, 0, %s22
    %s25 = sadd.s32 1, %s16
    %s26 = scalar_select %p23, %s25, %s16
    %p27 = scmp.ge.s32.totalorder %s26, 2
    %s28 = scalar_select %p27, 0, %s26
    %s29 = ssub.s32 %s16, %s28
    %s30 = ssub.s32 %s17, %s24
    %s31 = sor.u32 %s29, %s30
    %p32 = scmp.eq.s32.totalorder %s31, 0
    %s34 = sadd.s32 %s33, 1
    %s35 = scalar_select %p32, %s33, %s34
    %p38 = pneg %p32
    %p39 = scmp.eq.s32.totalorder %s9, 1
    %p40 = por %p38, %p39
    %p41 = scmp.ne.s32.totalorder %s33, %s36
    %p42 = scmp.eq.s32.totalorder %s9, 0
    %p43 = por %p41, %p42
    %p44 = scmp.ne.s32.totalorder %s33, %s36
    %p45 = scmp.eq.s32.totalorder %s14, 1
    %p46 = por %p44, %p45
    %p47 = scmp.ne.s32.totalorder %s36, %s37
    %p48 = scmp.eq.s32.totalorder %s14, 0
    %p49 = por %p47, %p48
    %p50 = scmp.ne.s32.totalorder %s36, %s37
    %p51 = scmp.eq.s32.totalorder %s15, 1
    %p52 = por %p50, %p51
    %p54 = scmp.ne.s32.totalorder %s37, %s53
    %p55 = scmp.eq.s32.totalorder %s15, 0
    %p56 = por %p54, %p55
    %s57 = ssub.s32 %s16, %s28
    %p58 = scmp.eq.s32.totalorder %s57, 0
    %s60 = sadd.s32 %s59, 1
    %s61 = scalar_select %p58, %s59, %s60
    %p64 = pneg %p58
    %p65 = scmp.eq.s32.totalorder %s9, 1
    %p66 = por %p64, %p65
    %p67 = scmp.ne.s32.totalorder %s59, %s62
    %p68 = scmp.eq.s32.totalorder %s9, 0
    %p69 = por %p67, %p68
    %p70 = scmp.ne.s32.totalorder %s59, %s62
    %p71 = scmp.eq.s32.totalorder %s14, 1
    %p72 = por %p70, %p71
    %p73 = scmp.ne.s32.totalorder %s62, %s63
    %p74 = scmp.eq.s32.totalorder %s14, 0
    %p75 = por %p73, %p74
    %p76 = scmp.ne.s32.totalorder %s62, %s63
    %p77 = scmp.eq.s32.totalorder %s15, 1
    %p78 = por %p76, %p77
    %p80 = scmp.ne.s32.totalorder %s63, %s79
    %p81 = scmp.eq.s32.totalorder %s15, 0
    %p82 = por %p80, %p81
    %s83 = ssub.s32 %s16, %s28
    %p84 = scmp.eq.s32.totalorder %s83, 0
    %s86 = sadd.s32 %s85, 1
    %s87 = scalar_select %p84, %s85, %s86
    %p90 = pneg %p84
    %p91 = scmp.eq.s32.totalorder %s9, 1
    %p92 = por %p90, %p91
    %p93 = scmp.ne.s32.totalorder %s85, %s88
    %p94 = scmp.eq.s32.totalorder %s9, 0
    %p95 = por %p93, %p94
    %p96 = scmp.ne.s32.totalorder %s85, %s88
    %p97 = scmp.eq.s32.totalorder %s14, 1
    %p98 = por %p96, %p97
    %p99 = scmp.ne.s32.totalorder %s88, %s89
    %p100 = scmp.eq.s32.totalorder %s14, 0
    %p101 = por %p99, %p100
    %p102 = scmp.ne.s32.totalorder %s88, %s89
    %p103 = scmp.eq.s32.totalorder %s15, 1
    %p104 = por %p102, %p103
    %p106 = scmp.ne.s32.totalorder %s89, %s105
    %p107 = scmp.eq.s32.totalorder %s15, 0
    %p108 = por %p106, %p107
    %s109 = ssub.s32 %s16, %s28
    %s110 = ssub.s32 %s17, %s24
    %s111 = sor.u32 %s109, %s110
    %p112 = scmp.eq.s32.totalorder %s111, 0
    %s114 = sadd.s32 %s113, 1
    %s115 = scalar_select %p112, %s113, %s114
    %p118 = pneg %p112
    %p119 = scmp.eq.s32.totalorder %s9, 1
    %p120 = por %p118, %p119
    %p121 = scmp.ne.s32.totalorder %s113, %s116
    %p122 = scmp.eq.s32.totalorder %s9, 0
    %p123 = por %p121, %p122
    %p124 = scmp.ne.s32.totalorder %s113, %s116
    %p125 = scmp.eq.s32.totalorder %s14, 1
    %p126 = por %p124, %p125
    %p127 = scmp.ne.s32.totalorder %s116, %s117
    %p128 = scmp.eq.s32.totalorder %s14, 0
    %p129 = por %p127, %p128
    %p130 = scmp.ne.s32.totalorder %s116, %s117
    %p131 = scmp.eq.s32.totalorder %s15, 1
    %p132 = por %p130, %p131
    %p134 = scmp.ne.s32.totalorder %s117, %s133
    %p135 = scmp.eq.s32.totalorder %s15, 0
    %p136 = por %p134, %p135
    %p137 = scmp.le.s32.totalorder 1, %s9
    %p138 = scmp.lt.s32.totalorder %s9, 3
    %p139 = pnand %p137, %p138
    %p140 = pneg %p139
    // Predicated region
    $region9: #{up_block_forward.5} parent=5 // pred_check
      _
    $region10: #{up_block_forward.5} parent=5 // pred_check_branch
      %142 = sbr.rel (%p139) target = $region12
    $region11: #{up_block_forward.5} parent=5 // pred_region
      %s143 = ssub.s32 %s9, 1
    $region12: #{up_block_forward.5} parent=5 // pred_fallthru
      _
    %p144 = scmp.lt.s32.totalorder %s9, 2
    // Predicated region
    $region13: #{up_block_forward.5} parent=5 // pred_check
      %p145 = pneg %p144
    $region14: #{up_block_forward.5} parent=5 // pred_check_branch
      %147 = sbr.rel (%p145) target = $region16
    $region15: #{up_block_forward.5} parent=5 // pred_region
      // Predicated region
      $region17: #{up_block_forward.5} parent=15 // pred_check
        %p148 = pneg %p43
      $region18: #{up_block_forward.5} parent=15 // pred_check_branch
        %150 = sbr.rel (%p148) target = $region20
      $region19: #{up_block_forward.5} parent=15 // pred_region
        %s151 = smul.u32 4, %s17
        %p152 = scmp.lt.s32.totalorder %s16, 1
        %s153 = scalar_select %p152, %s16, 1
        %p154 = scmp.lt.s32.totalorder %s151, 3
        %s155 = scalar_select %p154, %s151, 3
        %s156 = smul.addr %s153, 4
        %s157 = sadd.s32 %s155, %s156
        %s158 = smul.addr %s157, 4
        %s159 = scalar_lea.vmem %s0, %s158
        %s160 = smul.u32 4, %s17
      $region20: #{up_block_forward.5} parent=15 // pred_fallthru
        _
      // Predicated region
      $region21: #{up_block_forward.5} parent=15 // pred_check
        %p161 = pneg %p69
      $region22: #{up_block_forward.5} parent=15 // pred_check_branch
        %163 = sbr.rel (%p161) target = $region24
      $region23: #{up_block_forward.5} parent=15 // pred_region
        %p164 = scmp.lt.s32.totalorder %s16, 1
        %s165 = scalar_select %p164, %s16, 1
        %s166 = smul.addr %s165, 4
        %s167 = smul.addr %s166, 4
        %s168 = scalar_lea.vmem %s1, %s167
      $region24: #{up_block_forward.5} parent=15 // pred_fallthru
        _
      // Predicated region
      $region25: #{up_block_forward.5} parent=15 // pred_check
        %p169 = pneg %p95
      $region26: #{up_block_forward.5} parent=15 // pred_check_branch
        %171 = sbr.rel (%p169) target = $region28
      $region27: #{up_block_forward.5} parent=15 // pred_region
        %p172 = scmp.lt.s32.totalorder %s16, 1
        %s173 = scalar_select %p172, %s16, 1
        %s174 = scalar_lea.vmem %s2, %s173
      $region28: #{up_block_forward.5} parent=15 // pred_fallthru
        _
    $region16: #{up_block_forward.5} parent=5 // pred_fallthru
      _
    %p175 = scmp.le.s32.totalorder 1, %s9
    %p176 = scmp.lt.s32.totalorder %s9, 3
    %p177 = pnand %p175, %p176
    %p178 = pneg %p177
    // Predicated region
    $region29: #{up_block_forward.5} parent=5 // pred_check
      _
    $region30: #{up_block_forward.5} parent=5 // pred_check_branch
      %180 = sbr.rel (%p177) target = $region32
    $region31: #{up_block_forward.5} parent=5 // pred_region
      %s181 = ssub.s32 %s9, 1
      %s182 = smul.u32 4, %s19
      %p183 = scmp.lt.s32.totalorder %s18, 1
      %s184 = scalar_select %p183, %s18, 1
      %p185 = scmp.lt.s32.totalorder %s182, 3
      %s186 = scalar_select %p185, %s182, 3
      %s187 = smul.addr %s184, 4
      %s188 = sadd.s32 %s186, %s187
      %s189 = smul.addr %s188, 4
      %s190 = scalar_lea.vmem %s0, %s189
      %p191 = pneg %p49
      %p192 = pneg %p46
      %p193 = scmp.lt.s32.totalorder %s18, 1
      %s194 = scalar_select %p193, %s18, 1
      %s195 = smul.addr %s194, 4
      %s196 = smul.addr %s195, 4
      %s197 = scalar_lea.vmem %s1, %s196
      %p198 = pneg %p75
      %p199 = pneg %p72
      %p200 = scmp.lt.s32.totalorder %s18, 1
      %s201 = scalar_select %p200, %s18, 1
      %s202 = scalar_lea.vmem %s2, %s201
      %p203 = pneg %p101
      %p204 = pneg %p98
      %p205 = pneg %p129
      %p206 = pneg %p126
      %s207 = smul.u32 4, %s19
      %p208 = scmp.lt.s32.totalorder %s18, 1
      %s209 = scalar_select %p208, %s18, 1
      %p210 = scmp.lt.s32.totalorder %s207, 3
      %s211 = scalar_select %p210, %s207, 3
      %s212 = smul.addr %s209, 4
      %s213 = sadd.s32 %s211, %s212
      %s214 = smul.addr %s213, 8
      %s215 = scalar_lea.vmem %s3, %s214
      %s216 = smul.u32 4, %s19
      %p217 = scmp.lt.s32.totalorder %s18, 1
      %s218 = scalar_select %p217, %s18, 1
      %p219 = scmp.lt.s32.totalorder %s216, 3
      %s220 = scalar_select %p219, %s216, 3
      %s221 = smul.addr %s218, 4
      %s222 = sadd.s32 %s220, %s221
      %s223 = smul.addr %s222, 4
      %s224 = scalar_lea.vmem %s0, %s223
      %s225 = smul.u32 4, %s19
      %p226 = scmp.lt.s32.totalorder %s18, 1
      %s227 = scalar_select %p226, %s18, 1
      %s228 = smul.addr %s227, 4
      %s229 = smul.addr %s228, 4
      %s230 = scalar_lea.vmem %s1, %s229
      %p231 = scmp.lt.s32.totalorder %s18, 1
      %s232 = scalar_select %p231, %s18, 1
      %s233 = scalar_lea.vmem %s2, %s232
      %s234 = smul.u32 4, %s19
      %p235 = scmp.lt.s32.totalorder %s18, 1
      %s236 = scalar_select %p235, %s18, 1
      %p237 = scmp.lt.s32.totalorder %s234, 3
      %s238 = scalar_select %p237, %s234, 3
      %s239 = smul.addr %s236, 4
      %s240 = sadd.s32 %s238, %s239
      %s241 = smul.addr %s240, 8
      %s242 = scalar_lea.vmem %s3, %s241
      %s243 = smul.u32 4, %s19
      %v245 = vld [vmem:[%s224] sm:$0xf]
      %v246 = vld [vmem:[%s224 + $0x4] sm:$0xf]
      %v247 = vld [vmem:[%s224 + $0x8] sm:$0xf]
      %v248 = vld [vmem:[%s224 + $0xc] sm:$0xf]
      %v249 = vld [vmem:[%s230] sm:$0xf]
      %v250 = vld [vmem:[%s230 + $0x4] sm:$0xf]
      %v251 = vld [vmem:[%s230 + $0x8] sm:$0xf]
      %v252 = vld [vmem:[%s230 + $0xc] sm:$0xf]
      %v257 = vunpack.c.l.b16 %v245
      %v258 = vunpack.c.l.b16 %v246
      %v259 = vunpack.c.l.b16 %v247
      %v260 = vunpack.c.l.b16 %v248
      %v261 = vpack.c.b16 %v258, %v257
      %v262 = vpack.c.b16 %v260, %v259
      %v269 = vunpack.c.l.b16 %v249
      %v270 = vunpack.c.l.b16 %v250
      %v271 = vunpack.c.l.b16 %v251
      %v272 = vunpack.c.l.b16 %v252
      %v273 = vpack.c.b16 %v270, %v269
      %v274 = vpack.c.b16 %v272, %v271
      %277 = vmatprep.subr.bf16.mxu0 0
      %278 = vmatpush1.bf16.xpose.msra.mxu0 %v273
      %279 = vmatprep.subr.bf16.mxu0 0
      %280 = vmatpush1.bf16.xpose.msra.mxu0 %v274
      %281 = vmatprep.subr.bf16.mxu0 0
      %282 = vmatpush1.bf16.xpose.msra.mxu0 0
      %283 = vmatprep.subr.bf16.mxu0 0
      %284 = vmatpush1.bf16.xpose.msra.mxu0 0
      %285 = vmatprep.subr.bf16.mxu0 0
      %286 = vmatpush1.bf16.xpose.msra.mxu0 0
      %287 = vmatprep.subr.bf16.mxu0 0
      %288 = vmatpush1.bf16.xpose.msra.mxu0 0
      %289 = vmatprep.subr.bf16.mxu0 0
      %290 = vmatpush1.bf16.xpose.msra.mxu0 0
      %291 = vmatprep.subr.bf16.mxu0 0
      %292 = vmatpush1.bf16.xpose.msra.mxu0 0
      %293 = vmatprep.subr.bf16.mxu0 0
      %294 = vmatpush1.bf16.xpose.msra.mxu0 0
      %295 = vmatprep.subr.bf16.mxu0 0
      %296 = vmatpush1.bf16.xpose.msra.mxu0 0
      %297 = vmatprep.subr.bf16.mxu0 0
      %298 = vmatpush1.bf16.xpose.msra.mxu0 0
      %299 = vmatprep.subr.bf16.mxu0 0
      %300 = vmatpush1.bf16.xpose.msra.mxu0 0
      %301 = vmatprep.subr.bf16.mxu0 0
      %302 = vmatpush1.bf16.xpose.msra.mxu0 0
      %303 = vmatprep.subr.bf16.mxu0 0
      %304 = vmatpush1.bf16.xpose.msra.mxu0 0
      %305 = vmatprep.subr.bf16.mxu0 0
      %306 = vmatpush1.bf16.xpose.msra.mxu0 0
      %307 = vmatprep.subr.bf16.mxu0 0
      %308 = vmatpush1.bf16.xpose.msra.mxu0 0
      %309 = vmatprep.mubr.bf16.mxu0 0
      %310 = vmatmul.mubr.bf16.gmra.mrb[0].mxu0 %v261
      %v311 = vpop.f32.mrb[0].mxu0
      %v312 = vadd.f32 0.0, %v311
      %v313 = vpop.f32.mrb[0].mxu0
      %v314 = vpop.f32.mrb[0].mxu0
      %v315 = vadd.f32 0.0, %v314
      %v316 = vpop.f32.mrb[0].mxu0
      %317 = vmatprep.mubr.bf16.mxu0 0
      %318 = vmatmul.mubr.bf16.gmra.mrb[0].mxu0 %v262
      %v319 = vpop.f32.mrb[0].mxu0
      %v320 = vadd.f32 0.0, %v319
      %v321 = vpop.f32.mrb[0].mxu0
      %v322 = vpop.f32.mrb[0].mxu0
      %v323 = vadd.f32 0.0, %v322
      %v324 = vpop.f32.mrb[0].mxu0
      %325 = vdwg.mxu0
      %v326 = vmul.f32 %v312, 2.0
      %v327 = vmul.f32 %v315, 2.0
      %v328 = vmul.f32 %v320, 2.0
      %v329 = vmul.f32 %v323, 2.0
      %v330 = vld [vmem:[%s233] sm:$0x1]
      %v332 = vlaneseq
      %v333 = vshrl.u32 %v332, 7
      %v334 = vsub.s32 0, %v333
      %v335 = vrot.slane %v330, %v334
      %v337 = vsub.f32 %v326, %v335
      %v338 = vsub.f32 %v327, %v335
      %v339 = vsub.f32 %v328, %v335
      %v340 = vsub.f32 %v329, %v335
      %vm341 = vcmask 261120
      %342 = vst.msk [vmem:[%s242] sm:$0xff] %vm341, %v337
      %343 = vst.msk [vmem:[%s242 + $0x8] sm:$0xff] %vm341, %v338
      %344 = vst.msk [vmem:[%s242 + $0x10] sm:$0xff] %vm341, %v339
      %345 = vst.msk [vmem:[%s242 + $0x18] sm:$0xff] %vm341, %v340
      %s346 = smul.u32 4, %s19
      %p347 = scmp.lt.s32.totalorder %s18, 1
      %s348 = scalar_select %p347, %s18, 1
      %p349 = scmp.lt.s32.totalorder %s346, 3
      %s350 = scalar_select %p349, %s346, 3
      %s351 = smul.addr %s348, 4
      %s352 = sadd.s32 %s350, %s351
      %s353 = smul.addr %s352, 8
      %s354 = scalar_lea.vmem %s3, %s353
      // Predicated region
      $region33: #{up_block_forward.5} parent=31 // pred_check
        %p355 = pneg %p126
      $region34: #{up_block_forward.5} parent=31 // pred_check_branch
        %357 = sbr.rel (%p355) target = $region36
      $region35: #{up_block_forward.5} parent=31 // pred_region
        %s358 = smul.u32 4, %s19
      $region36: #{up_block_forward.5} parent=31 // pred_fallthru
        _
    $region32: #{up_block_forward.5} parent=5 // pred_fallthru
      _
    %p359 = scmp.le.s32.totalorder 2, %s9
    // Predicated region
    $region37: #{up_block_forward.5} parent=5 // pred_check
      %p360 = pneg %p359
    $region38: #{up_block_forward.5} parent=5 // pred_check_branch
      %362 = sbr.rel (%p360) target = $region40
    $region39: #{up_block_forward.5} parent=5 // pred_region
      %s363 = ssub.s32 %s9, 2
      // Predicated region
      $region41: #{up_block_forward.5} parent=39 // pred_check
        %p364 = pneg %p132
      $region42: #{up_block_forward.5} parent=39 // pred_check_branch
        %366 = sbr.rel (%p364) target = $region44
      $region43: #{up_block_forward.5} parent=39 // pred_region
        %s367 = smul.u32 4, %s21
        %p368 = scmp.lt.s32.totalorder %s20, 1
        %s369 = scalar_select %p368, %s20, 1
        %p370 = scmp.lt.s32.totalorder %s367, 3
        %s371 = scalar_select %p370, %s367, 3
        %s372 = smul.addr %s369, 4
        %s373 = sadd.s32 %s371, %s372
        %s374 = smul.addr %s373, 8
        %s375 = scalar_lea.vmem %s3, %s374
      $region44: #{up_block_forward.5} parent=39 // pred_fallthru
        _
    $region40: #{up_block_forward.5} parent=5 // pred_fallthru
      _
  $region6: #{up_block_forward.5} parent=0 // loop_footer
    %s13 = sadd.s32 1, %s9
  $region7: #{up_block_forward.5} parent=0 // loop_footer_branch
    %8 = sbr.rel target = $region3
  $region8: #{up_block_forward.5} parent=0 // loop_exit
    _

// kernel: up_block_forward.6
$region0: #{up_block_forward.6}
  #allocation0 [shape = 'u32[]', space=smem, size = 0x4, offset = 0x4, fixed_abs, tag = 'smem constant byte address 0x4 - core index']
  #allocation1 [shape = 'u32[144,128]{1,0:T(1,128)}', space=vmem, size = 0x12000, scoped, tag = 'internal scratch']
  #allocation2 [shape = 'f32[64,512]{1,0:T(8,128)}', space=vmem, size = 0x20000, scoped, tag = 'scratch operand']
  #allocation3 [shape = 'f32[64,512]{1,0:T(8,128)}', space=vmem, size = 0x20000, scoped, tag = 'scratch operand']
  #allocation4 [shape = 'f32[64,512]{1,0:T(8,128)}', space=vmem, size = 0x20000, scoped, tag = 'scratch operand']
  %s0 = inlined_call_operand.vmem [shape: bf16[64,128], index: 0, kind: input, shape index: {}]
  %s1 = inlined_call_operand.vmem [shape: bf16[20,64,128], index: 1, kind: input, shape index: {}]
  %s2 = inlined_call_operand.vmem [shape: bf16[128,512], index: 2, kind: input, shape index: {}]
  %s3 = inlined_call_operand.vmem [shape: bf16[128,512], index: 3, kind: input, shape index: {}]
  %s4 = inlined_call_operand.vmem [shape: f32[64,512], index: 4, kind: output, shape index: {0}]
  %s5 = inlined_call_operand.vmem [shape: f32[64,512], index: 5, kind: output, shape index: {1}]
  %s6 = inlined_call_operand.vmem [shape: f32[1,8,512], index: 6, kind: output, shape index: {2}]
  %s7 = inlined_call_operand.vmem [shape: f32[1,8,512], index: 7, kind: output, shape index: {3}]
  %8 = xla_tuple %s4, %s5, %s6, %s7
  %s9 = sld [smem:[#allocation0]]
  $region89: #{up_block_forward.6} parent=0
    _
  %s11 = ssub.s32 1, %s9
  %s12 = scalar_select 0, %s11, %s9
  loop: start=0, step=1, limit=7
  $region2: #{up_block_forward.6} parent=0 // loop_pre_header
    _
  $region3: #{up_block_forward.6} parent=0 // loop_header
    %s14 = sphi 0, %s18
    %p15 = scmp.ge.s32.totalorder %s14, 7
    %s21 = sphi 0, %s33
    %s22 = sphi 0, %s29
    %s23 = sphi 0, %s21
    %s24 = sphi 0, %s22
    %s25 = sphi 0, %s23
    %s26 = sphi 0, %s24
    %s36 = sphi 0, %s38
    %s39 = sphi 0, %s36
    %s40 = sphi 0, %s39
    %s56 = sphi 0, %s40
    %s64 = sphi 0, %s66
    %s67 = sphi 0, %s64
    %s68 = sphi 0, %s67
    %s84 = sphi 0, %s68
    %s88 = sphi 0, %s88
    %s90 = sphi 0, %s88
    %s91 = sphi 0, %s90
    %s105 = sphi 0, %s91
    %s109 = sphi 0, %s109
    %s111 = sphi 0, %s109
    %s112 = sphi 0, %s111
    %s126 = sphi 0, %s112
    %s132 = sphi 0, %s134
    %s135 = sphi 0, %s132
    %s136 = sphi 0, %s135
    %s152 = sphi 0, %s136
    %s158 = sphi 0, %s160
    %s161 = sphi 0, %s158
    %s162 = sphi 0, %s161
    %s178 = sphi 0, %s162
    %s184 = sphi 0, %s186
    %s187 = sphi 0, %s184
    %s188 = sphi 0, %s187
    %s204 = sphi 0, %s188
    %s210 = sphi 0, %s212
    %s213 = sphi 0, %s210
    %s214 = sphi 0, %s213
    %s230 = sphi 0, %s214
  $region4: #{up_block_forward.6} parent=0 // loop_header_branch
    %17 = sbr.rel (%p15) target = $region8
  $region5: #{up_block_forward.6} parent=0 // loop_body
    %s19 = ssub.s32 %s14, 1
    %s20 = ssub.s32 %s14, 2
    %s27 = sadd.s32 1, %s22
    %p28 = scmp.ge.s32.totalorder %s27, 5
    %s29 = scalar_select %p28, 0, %s27
    %s30 = sadd.s32 1, %s21
    %s31 = scalar_select %p28, %s30, %s21
    %p32 = scmp.ge.s32.totalorder %s31, 1
    %s33 = scalar_select %p32, 0, %s31
    %s34 = ssub.s32 %s21, %s33
    %p35 = scmp.eq.s32.totalorder %s34, 0
    %s37 = sadd.s32 %s36, 1
    %s38 = scalar_select %p35, %s36, %s37
    %p41 = pneg %p35
    %p42 = scmp.eq.s32.totalorder %s14, 4
    %p43 = por %p41, %p42
    %p44 = scmp.ne.s32.totalorder %s36, %s39
    %p45 = scmp.eq.s32.totalorder %s14, 0
    %p46 = por %p44, %p45
    %p47 = scmp.ne.s32.totalorder %s36, %s39
    %p48 = scmp.eq.s32.totalorder %s19, 4
    %p49 = por %p47, %p48
    %p50 = scmp.ne.s32.totalorder %s39, %s40
    %p51 = scmp.eq.s32.totalorder %s19, 0
    %p52 = por %p50, %p51
    %p53 = scmp.ne.s32.totalorder %s39, %s40
    %p54 = scmp.eq.s32.totalorder %s20, 4
    %p55 = por %p53, %p54
    %p57 = scmp.ne.s32.totalorder %s40, %s56
    %p58 = scmp.eq.s32.totalorder %s20, 0
    %p59 = por %p57, %p58
    %s60 = ssub.s32 %s22, %s29
    %s61 = ssub.s32 %s21, %s33
    %s62 = sor.u32 %s60, %s61
    %p63 = scmp.eq.s32.totalorder %s62, 0
    %s65 = sadd.s32 %s64, 1
    %s66 = scalar_select %p63, %s64, %s65
    %p69 = pneg %p63
    %p70 = scmp.eq.s32.totalorder %s14, 4
    %p71 = por %p69, %p70
    %p72 = scmp.ne.s32.totalorder %s64, %s67
    %p73 = scmp.eq.s32.totalorder %s14, 0
    %p74 = por %p72, %p73
    %p75 = scmp.ne.s32.totalorder %s64, %s67
    %p76 = scmp.eq.s32.totalorder %s19, 4
    %p77 = por %p75, %p76
    %p78 = scmp.ne.s32.totalorder %s67, %s68
    %p79 = scmp.eq.s32.totalorder %s19, 0
    %p80 = por %p78, %p79
    %p81 = scmp.ne.s32.totalorder %s67, %s68
    %p82 = scmp.eq.s32.totalorder %s20, 4
    %p83 = por %p81, %p82
    %p85 = scmp.ne.s32.totalorder %s68, %s84
    %p86 = scmp.eq.s32.totalorder %s20, 0
    %p87 = por %p85, %p86
    %s89 = sadd.s32 %s88, 1
    %p92 = scmp.eq.s32.totalorder %s14, 4
    %p93 = scmp.ne.s32.totalorder %s88, %s90
    %p94 = scmp.eq.s32.totalorder %s14, 0
    %p95 = por %p93, %p94
    %p96 = scmp.ne.s32.totalorder %s88, %s90
    %p97 = scmp.eq.s32.totalorder %s19, 4
    %p98 = por %p96, %p97
    %p99 = scmp.ne.s32.totalorder %s90, %s91
    %p100 = scmp.eq.s32.totalorder %s19, 0
    %p101 = por %p99, %p100
    %p102 = scmp.ne.s32.totalorder %s90, %s91
    %p103 = scmp.eq.s32.totalorder %s20, 4
    %p104 = por %p102, %p103
    %p106 = scmp.ne.s32.totalorder %s91, %s105
    %p107 = scmp.eq.s32.totalorder %s20, 0
    %p108 = por %p106, %p107
    %s110 = sadd.s32 %s109, 1
    %p113 = scmp.eq.s32.totalorder %s14, 4
    %p114 = scmp.ne.s32.totalorder %s109, %s111
    %p115 = scmp.eq.s32.totalorder %s14, 0
    %p116 = por %p114, %p115
    %p117 = scmp.ne.s32.totalorder %s109, %s111
    %p118 = scmp.eq.s32.totalorder %s19, 4
    %p119 = por %p117, %p118
    %p120 = scmp.ne.s32.totalorder %s111, %s112
    %p121 = scmp.eq.s32.totalorder %s19, 0
    %p122 = por %p120, %p121
    %p123 = scmp.ne.s32.totalorder %s111, %s112
    %p124 = scmp.eq.s32.totalorder %s20, 4
    %p125 = por %p123, %p124
    %p127 = scmp.ne.s32.totalorder %s112, %s126
    %p128 = scmp.eq.s32.totalorder %s20, 0
    %p129 = por %p127, %p128
    %s130 = ssub.s32 %s21, %s33
    %p131 = scmp.eq.s32.totalorder %s130, 0
    %s133 = sadd.s32 %s132, 1
    %s134 = scalar_select %p131, %s132, %s133
    %p137 = pneg %p131
    %p138 = scmp.eq.s32.totalorder %s14, 4
    %p139 = por %p137, %p138
    %p140 = scmp.ne.s32.totalorder %s132, %s135
    %p141 = scmp.eq.s32.totalorder %s14, 0
    %p142 = por %p140, %p141
    %p143 = scmp.ne.s32.totalorder %s132, %s135
    %p144 = scmp.eq.s32.totalorder %s19, 4
    %p145 = por %p143, %p144
    %p146 = scmp.ne.s32.totalorder %s135, %s136
    %p147 = scmp.eq.s32.totalorder %s19, 0
    %p148 = por %p146, %p147
    %p149 = scmp.ne.s32.totalorder %s135, %s136
    %p150 = scmp.eq.s32.totalorder %s20, 4
    %p151 = por %p149, %p150
    %p153 = scmp.ne.s32.totalorder %s136, %s152
    %p154 = scmp.eq.s32.totalorder %s20, 0
    %p155 = por %p153, %p154
    %s156 = ssub.s32 %s21, %s33
    %p157 = scmp.eq.s32.totalorder %s156, 0
    %s159 = sadd.s32 %s158, 1
    %s160 = scalar_select %p157, %s158, %s159
    %p163 = pneg %p157
    %p164 = scmp.eq.s32.totalorder %s14, 4
    %p165 = por %p163, %p164
    %p166 = scmp.ne.s32.totalorder %s158, %s161
    %p167 = scmp.eq.s32.totalorder %s14, 0
    %p168 = por %p166, %p167
    %p169 = scmp.ne.s32.totalorder %s158, %s161
    %p170 = scmp.eq.s32.totalorder %s19, 4
    %p171 = por %p169, %p170
    %p172 = scmp.ne.s32.totalorder %s161, %s162
    %p173 = scmp.eq.s32.totalorder %s19, 0
    %p174 = por %p172, %p173
    %p175 = scmp.ne.s32.totalorder %s161, %s162
    %p176 = scmp.eq.s32.totalorder %s20, 4
    %p177 = por %p175, %p176
    %p179 = scmp.ne.s32.totalorder %s162, %s178
    %p180 = scmp.eq.s32.totalorder %s20, 0
    %p181 = por %p179, %p180
    %s182 = ssub.s32 %s21, %s33
    %p183 = scmp.eq.s32.totalorder %s182, 0
    %s185 = sadd.s32 %s184, 1
    %s186 = scalar_select %p183, %s184, %s185
    %p189 = pneg %p183
    %p190 = scmp.eq.s32.totalorder %s14, 4
    %p191 = por %p189, %p190
    %p192 = scmp.ne.s32.totalorder %s184, %s187
    %p193 = scmp.eq.s32.totalorder %s14, 0
    %p194 = por %p192, %p193
    %p195 = scmp.ne.s32.totalorder %s184, %s187
    %p196 = scmp.eq.s32.totalorder %s19, 4
    %p197 = por %p195, %p196
    %p198 = scmp.ne.s32.totalorder %s187, %s188
    %p199 = scmp.eq.s32.totalorder %s19, 0
    %p200 = por %p198, %p199
    %p201 = scmp.ne.s32.totalorder %s187, %s188
    %p202 = scmp.eq.s32.totalorder %s20, 4
    %p203 = por %p201, %p202
    %p205 = scmp.ne.s32.totalorder %s188, %s204
    %p206 = scmp.eq.s32.totalorder %s20, 0
    %p207 = por %p205, %p206
    %s208 = ssub.s32 %s21, %s33
    %p209 = scmp.eq.s32.totalorder %s208, 0
    %s211 = sadd.s32 %s210, 1
    %s212 = scalar_select %p209, %s210, %s211
    %p215 = pneg %p209
    %p216 = scmp.eq.s32.totalorder %s14, 4
    %p217 = por %p215, %p216
    %p218 = scmp.ne.s32.totalorder %s210, %s213
    %p219 = scmp.eq.s32.totalorder %s14, 0
    %p220 = por %p218, %p219
    %p221 = scmp.ne.s32.totalorder %s210, %s213
    %p222 = scmp.eq.s32.totalorder %s19, 4
    %p223 = por %p221, %p222
    %p224 = scmp.ne.s32.totalorder %s213, %s214
    %p225 = scmp.eq.s32.totalorder %s19, 0
    %p226 = por %p224, %p225
    %p227 = scmp.ne.s32.totalorder %s213, %s214
    %p228 = scmp.eq.s32.totalorder %s20, 4
    %p229 = por %p227, %p228
    %p231 = scmp.ne.s32.totalorder %s214, %s230
    %p232 = scmp.eq.s32.totalorder %s20, 0
    %p233 = por %p231, %p232
    %p234 = scmp.le.s32.totalorder 1, %s14
    %p235 = scmp.lt.s32.totalorder %s14, 6
    %p236 = pnand %p234, %p235
    %p237 = pneg %p236
    // Predicated region
    $region9: #{up_block_forward.6} parent=5 // pred_check
      _
    $region10: #{up_block_forward.6} parent=5 // pred_check_branch
      %239 = sbr.rel (%p236) target = $region12
    $region11: #{up_block_forward.6} parent=5 // pred_region
      %s240 = ssub.s32 %s14, 1
      // Predicated region
      $region13: #{up_block_forward.6} parent=11 // pred_check
        %p241 = pneg %p52
      $region14: #{up_block_forward.6} parent=11 // pred_check_branch
        %243 = sbr.rel (%p241) target = $region16
      $region15: #{up_block_forward.6} parent=11 // pred_region
        %s244 = smul.u32 8, %s23
        %p245 = scmp.lt.s32.totalorder %s244, 7
        %s246 = scalar_select %p245, %s244, 7
        %s247 = smul.addr %s246, 4
        %s248 = scalar_lea.vmem %s0, %s247
        %s249 = smul.u32 8, %s23
      $region16: #{up_block_forward.6} parent=11 // pred_fallthru
        _
      // Predicated region
      $region17: #{up_block_forward.6} parent=11 // pred_check
        %p250 = pneg %p101
      $region18: #{up_block_forward.6} parent=11 // pred_check_branch
        %252 = sbr.rel (%p250) target = $region20
      $region19: #{up_block_forward.6} parent=11 // pred_region
        _
      $region20: #{up_block_forward.6} parent=11 // pred_fallthru
        _
      // Predicated region
      $region21: #{up_block_forward.6} parent=11 // pred_check
        %p253 = pneg %p122
      $region22: #{up_block_forward.6} parent=11 // pred_check_branch
        %255 = sbr.rel (%p253) target = $region24
      $region23: #{up_block_forward.6} parent=11 // pred_region
        _
      $region24: #{up_block_forward.6} parent=11 // pred_fallthru
        _
    $region12: #{up_block_forward.6} parent=5 // pred_fallthru
      _
    %p256 = scmp.lt.s32.totalorder %s14, 5
    // Predicated region
    $region25: #{up_block_forward.6} parent=5 // pred_check
      %p257 = pneg %p256
    $region26: #{up_block_forward.6} parent=5 // pred_check_branch
      %259 = sbr.rel (%p257) target = $region28
    $region27: #{up_block_forward.6} parent=5 // pred_region
      // Predicated region
      $region29: #{up_block_forward.6} parent=27 // pred_check
        %p260 = pneg %p74
      $region30: #{up_block_forward.6} parent=27 // pred_check_branch
        %262 = sbr.rel (%p260) target = $region32
      $region31: #{up_block_forward.6} parent=27 // pred_region
        %s263 = smul.u32 4, %s22
        %s264 = smul.u32 8, %s21
        %p265 = scmp.lt.s32.totalorder %s263, 19
        %s266 = scalar_select %p265, %s263, 19
        %p267 = scmp.lt.s32.totalorder %s264, 7
        %s268 = scalar_select %p267, %s264, 7
        %s269 = smul.addr %s266, 8
        %s270 = sadd.s32 %s268, %s269
        %s271 = smul.addr %s270, 4
        %s272 = scalar_lea.vmem %s1, %s271
        %s273 = smul.u32 4, %s22
        %s274 = smul.u32 8, %s21
      $region32: #{up_block_forward.6} parent=27 // pred_fallthru
        _
    $region28: #{up_block_forward.6} parent=5 // pred_fallthru
      _
    %p275 = scmp.le.s32.totalorder 1, %s14
    %p276 = scmp.lt.s32.totalorder %s14, 6
    %p277 = pnand %p275, %p276
    %p278 = pneg %p277
    // Predicated region
    $region33: #{up_block_forward.6} parent=5 // pred_check
      _
    $region34: #{up_block_forward.6} parent=5 // pred_check_branch
      %280 = sbr.rel (%p277) target = $region36
    $region35: #{up_block_forward.6} parent=5 // pred_region
      %s281 = ssub.s32 %s14, 1
      %s282 = smul.u32 8, %s23
      %p283 = scmp.lt.s32.totalorder %s282, 7
      %s284 = scalar_select %p283, %s282, 7
      %s285 = smul.addr %s284, 4
      %s286 = scalar_lea.vmem %s0, %s285
      %p287 = pneg %p52
      %p288 = pneg %p49
      %s289 = smul.u32 4, %s24
      %s290 = smul.u32 8, %s23
      %p291 = scmp.lt.s32.totalorder %s289, 19
      %s292 = scalar_select %p291, %s289, 19
      %p293 = scmp.lt.s32.totalorder %s290, 7
      %s294 = scalar_select %p293, %s290, 7
      %s295 = smul.addr %s292, 8
      %s296 = sadd.s32 %s294, %s295
      %s297 = smul.addr %s296, 4
      %s298 = scalar_lea.vmem %s1, %s297
      %p299 = pneg %p80
      %p300 = pneg %p77
      %p301 = pneg %p101
      %p302 = pneg %p98
      %p303 = pneg %p122
      %p304 = pneg %p119
      %p305 = pneg %p148
      %p306 = pneg %p145
      %s307 = smul.u32 8, %s23
      %p308 = scmp.lt.s32.totalorder %s307, 7
      %s309 = scalar_select %p308, %s307, 7
      %s310 = smul.addr %s309, 4
      %s311 = smul.addr %s310, 8
      %s312 = scalar_lea.vmem %s4, %s311
      %p313 = pneg %p174
      %p314 = pneg %p171
      %s315 = smul.u32 8, %s23
      %p316 = scmp.lt.s32.totalorder %s315, 7
      %s317 = scalar_select %p316, %s315, 7
      %s318 = smul.addr %s317, 4
      %s319 = smul.addr %s318, 8
      %s320 = scalar_lea.vmem %s5, %s319
      %p321 = pneg %p200
      %p322 = pneg %p197
      %p323 = scmp.lt.s32.totalorder %s23, 0
      %s324 = scalar_select %p323, %s23, 0
      %s325 = smul.addr %s324, 4
      %s326 = smul.addr %s325, 8
      %s327 = scalar_lea.vmem %s6, %s326
      %p328 = pneg %p226
      %p329 = pneg %p223
      %p330 = scmp.lt.s32.totalorder %s23, 0
      %s331 = scalar_select %p330, %s23, 0
      %s332 = smul.addr %s331, 4
      %s333 = smul.addr %s332, 8
      %s334 = scalar_lea.vmem %s7, %s333
      %s335 = smul.u32 8, %s23
      %p336 = scmp.lt.s32.totalorder %s335, 7
      %s337 = scalar_select %p336, %s335, 7
      %s338 = smul.addr %s337, 4
      %s339 = scalar_lea.vmem %s0, %s338
      %s340 = smul.u32 8, %s23
      %s341 = smul.u32 4, %s24
      %s342 = smul.u32 8, %s23
      %p343 = scmp.lt.s32.totalorder %s341, 19
      %s344 = scalar_select %p343, %s341, 19
      %p345 = scmp.lt.s32.totalorder %s342, 7
      %s346 = scalar_select %p345, %s342, 7
      %s347 = smul.addr %s344, 8
      %s348 = sadd.s32 %s346, %s347
      %s349 = smul.addr %s348, 4
      %s350 = scalar_lea.vmem %s1, %s349
      %s351 = smul.u32 4, %s24
      %s352 = smul.u32 8, %s23
      %s353 = smul.u32 8, %s23
      %p354 = scmp.lt.s32.totalorder %s353, 7
      %s355 = scalar_select %p354, %s353, 7
      %s356 = smul.addr %s355, 4
      %s357 = smul.addr %s356, 8
      %s358 = scalar_lea.vmem %s4, %s357
      %s359 = smul.u32 8, %s23
      %s360 = smul.u32 8, %s23
      %p361 = scmp.lt.s32.totalorder %s360, 7
      %s362 = scalar_select %p361, %s360, 7
      %s363 = smul.addr %s362, 4
      %s364 = smul.addr %s363, 8
      %s365 = scalar_lea.vmem %s5, %s364
      %s366 = smul.u32 8, %s23
      %p367 = scmp.lt.s32.totalorder %s23, 0
      %s368 = scalar_select %p367, %s23, 0
      %s369 = smul.addr %s368, 4
      %s370 = smul.addr %s369, 8
      %s371 = scalar_lea.vmem %s6, %s370
      %p372 = scmp.lt.s32.totalorder %s23, 0
      %s373 = scalar_select %p372, %s23, 0
      %s374 = smul.addr %s373, 4
      %s375 = smul.addr %s374, 8
      %s376 = scalar_lea.vmem %s7, %s375
      %p378 = scmp.eq.s32.totalorder %s24, 0
      // Predicated region
      $region37: #{up_block_forward.6} parent=35 // pred_check
        %p379 = pneg %p378
      $region38: #{up_block_forward.6} parent=35 // pred_check_branch
        %381 = sbr.rel (%p379) target = $region40
      $region39: #{up_block_forward.6} parent=35 // pred_region
        %v382 = vld [vmem:[%s339] sm:$0xf]
        %v383 = vld [vmem:[%s339 + $0x4] sm:$0xf]
        %v384 = vld [vmem:[%s339 + $0x8] sm:$0xf]
        %v385 = vld [vmem:[%s339 + $0xc] sm:$0xf]
        %v386 = vld [vmem:[%s339 + $0x10] sm:$0xf]
        %v387 = vld [vmem:[%s339 + $0x14] sm:$0xf]
        %v388 = vld [vmem:[%s339 + $0x18] sm:$0xf]
        %v389 = vld [vmem:[%s339 + $0x1c] sm:$0xf]
        %v390 = vld [vmem:[%s3] sm:$0xff]
        %v391 = vld [vmem:[%s3 + $0x8] sm:$0xff]
        %v392 = vld [vmem:[%s3 + $0x10] sm:$0xff]
        %v393 = vld [vmem:[%s3 + $0x18] sm:$0xff]
        %v394 = vld [vmem:[%s3 + $0x20] sm:$0xff]
        %v395 = vld [vmem:[%s3 + $0x28] sm:$0xff]
        %v396 = vld [vmem:[%s3 + $0x30] sm:$0xff]
        %v397 = vld [vmem:[%s3 + $0x38] sm:$0xff]
        %v398 = vld [vmem:[%s3 + $0x40] sm:$0xff]
        %v399 = vld [vmem:[%s3 + $0x48] sm:$0xff]
        %v400 = vld [vmem:[%s3 + $0x50] sm:$0xff]
        %v401 = vld [vmem:[%s3 + $0x58] sm:$0xff]
        %v402 = vld [vmem:[%s3 + $0x60] sm:$0xff]
        %v403 = vld [vmem:[%s3 + $0x68] sm:$0xff]
        %v404 = vld [vmem:[%s3 + $0x70] sm:$0xff]
        %v405 = vld [vmem:[%s3 + $0x78] sm:$0xff]
        %v406 = vld [vmem:[%s3 + $0x80] sm:$0xff]
        %v407 = vld [vmem:[%s3 + $0x88] sm:$0xff]
        %v408 = vld [vmem:[%s3 + $0x90] sm:$0xff]
        %v409 = vld [vmem:[%s3 + $0x98] sm:$0xff]
        %v410 = vld [vmem:[%s3 + $0xa0] sm:$0xff]
        %v411 = vld [vmem:[%s3 + $0xa8] sm:$0xff]
        %v412 = vld [vmem:[%s3 + $0xb0] sm:$0xff]
        %v413 = vld [vmem:[%s3 + $0xb8] sm:$0xff]
        %v414 = vld [vmem:[%s3 + $0xc0] sm:$0xff]
        %v415 = vld [vmem:[%s3 + $0xc8] sm:$0xff]
        %v416 = vld [vmem:[%s3 + $0xd0] sm:$0xff]
        %v417 = vld [vmem:[%s3 + $0xd8] sm:$0xff]
        %v418 = vld [vmem:[%s3 + $0xe0] sm:$0xff]
        %v419 = vld [vmem:[%s3 + $0xe8] sm:$0xff]
        %v420 = vld [vmem:[%s3 + $0xf0] sm:$0xff]
        %v421 = vld [vmem:[%s3 + $0xf8] sm:$0xff]
        %v430 = vunpack.c.l.b16 %v382
        %v431 = vunpack.c.l.b16 %v383
        %v432 = vunpack.c.l.b16 %v384
        %v433 = vunpack.c.l.b16 %v385
        %v434 = vunpack.c.l.b16 %v386
        %v435 = vunpack.c.l.b16 %v387
        %v436 = vunpack.c.l.b16 %v388
        %v437 = vunpack.c.l.b16 %v389
        %v438 = vpack.c.b16 %v431, %v430
        %v439 = vpack.c.b16 %v433, %v432
        %v440 = vpack.c.b16 %v435, %v434
        %v441 = vpack.c.b16 %v437, %v436
        %v478 = vunpack.c.l.b16 %v390
        %v479 = vunpack.c.h.b16 %v390
        %v480 = vunpack.c.l.b16 %v391
        %v481 = vunpack.c.h.b16 %v391
        %v482 = vunpack.c.l.b16 %v392
        %v483 = vunpack.c.h.b16 %v392
        %v484 = vunpack.c.l.b16 %v393
        %v485 = vunpack.c.h.b16 %v393
        %v486 = vunpack.c.l.b16 %v394
        %v487 = vunpack.c.h.b16 %v394
        %v488 = vunpack.c.l.b16 %v395
        %v489 = vunpack.c.h.b16 %v395
        %v490 = vunpack.c.l.b16 %v396
        %v491 = vunpack.c.h.b16 %v396
        %v492 = vunpack.c.l.b16 %v397
        %v493 = vunpack.c.h.b16 %v397
        %v494 = vunpack.c.l.b16 %v398
        %v495 = vunpack.c.h.b16 %v398
        %v496 = vunpack.c.l.b16 %v399
        %v497 = vunpack.c.h.b16 %v399
        %v498 = vunpack.c.l.b16 %v400
        %v499 = vunpack.c.h.b16 %v400
        %v500 = vunpack.c.l.b16 %v401
        %v501 = vunpack.c.h.b16 %v401
        %v502 = vunpack.c.l.b16 %v402
        %v503 = vunpack.c.h.b16 %v402
        %v504 = vunpack.c.l.b16 %v403
        %v505 = vunpack.c.h.b16 %v403
        %v506 = vunpack.c.l.b16 %v404
        %v507 = vunpack.c.h.b16 %v404
        %v508 = vunpack.c.l.b16 %v405
        %v509 = vunpack.c.h.b16 %v405
        %v510 = vunpack.c.l.b16 %v406
        %v511 = vunpack.c.h.b16 %v406
        %v512 = vunpack.c.l.b16 %v407
        %v513 = vunpack.c.h.b16 %v407
        %v514 = vunpack.c.l.b16 %v408
        %v515 = vunpack.c.h.b16 %v408
        %v516 = vunpack.c.l.b16 %v409
        %v517 = vunpack.c.h.b16 %v409
        %v518 = vunpack.c.l.b16 %v410
        %v519 = vunpack.c.h.b16 %v410
        %v520 = vunpack.c.l.b16 %v411
        %v521 = vunpack.c.h.b16 %v411
        %v522 = vunpack.c.l.b16 %v412
        %v523 = vunpack.c.h.b16 %v412
        %v524 = vunpack.c.l.b16 %v413
        %v525 = vunpack.c.h.b16 %v413
        %v526 = vunpack.c.l.b16 %v414
        %v527 = vunpack.c.h.b16 %v414
        %v528 = vunpack.c.l.b16 %v415
        %v529 = vunpack.c.h.b16 %v415
        %v530 = vunpack.c.l.b16 %v416
        %v531 = vunpack.c.h.b16 %v416
        %v532 = vunpack.c.l.b16 %v417
        %v533 = vunpack.c.h.b16 %v417
        %v534 = vunpack.c.l.b16 %v418
        %v535 = vunpack.c.h.b16 %v418
        %v536 = vunpack.c.l.b16 %v419
        %v537 = vunpack.c.h.b16 %v419
        %v538 = vunpack.c.l.b16 %v420
        %v539 = vunpack.c.h.b16 %v420
        %v540 = vunpack.c.l.b16 %v421
        %v541 = vunpack.c.h.b16 %v421
        %v542 = vpack.c.b16 %v482, %v478
        %v543 = vpack.c.b16 %v483, %v479
        %v544 = vpack.c.b16 %v484, %v480
        %v545 = vpack.c.b16 %v485, %v481
        %v546 = vpack.c.b16 %v490, %v486
        %v547 = vpack.c.b16 %v491, %v487
        %v548 = vpack.c.b16 %v492, %v488
        %v549 = vpack.c.b16 %v493, %v489
        %v550 = vpack.c.b16 %v498, %v494
        %v551 = vpack.c.b16 %v499, %v495
        %v552 = vpack.c.b16 %v500, %v496
        %v553 = vpack.c.b16 %v501, %v497
        %v554 = vpack.c.b16 %v506, %v502
        %v555 = vpack.c.b16 %v507, %v503
        %v556 = vpack.c.b16 %v508, %v504
        %v557 = vpack.c.b16 %v509, %v505
        %v558 = vpack.c.b16 %v514, %v510
        %v559 = vpack.c.b16 %v515, %v511
        %v560 = vpack.c.b16 %v516, %v512
        %v561 = vpack.c.b16 %v517, %v513
        %v562 = vpack.c.b16 %v522, %v518
        %v563 = vpack.c.b16 %v523, %v519
        %v564 = vpack.c.b16 %v524, %v520
        %v565 = vpack.c.b16 %v525, %v521
        %v566 = vpack.c.b16 %v530, %v526
        %v567 = vpack.c.b16 %v531, %v527
        %v568 = vpack.c.b16 %v532, %v528
        %v569 = vpack.c.b16 %v533, %v529
        %v570 = vpack.c.b16 %v538, %v534
        %v571 = vpack.c.b16 %v539, %v535
        %v572 = vpack.c.b16 %v540, %v536
        %v573 = vpack.c.b16 %v541, %v537
        %606 = vmatprep.subr.bf16.mxu0 %v543
        %607 = vmatpush1.bf16.msra.mxu0 %v542
        %608 = vmatprep.subr.bf16.mxu0 %v547
        %609 = vmatpush1.bf16.msra.mxu0 %v546
        %610 = vmatprep.subr.bf16.mxu0 %v551
        %611 = vmatpush1.bf16.msra.mxu0 %v550
        %612 = vmatprep.subr.bf16.mxu0 %v555
        %613 = vmatpush1.bf16.msra.mxu0 %v554
        %614 = vmatprep.subr.bf16.mxu0 %v559
        %615 = vmatpush1.bf16.msra.mxu0 %v558
        %616 = vmatprep.subr.bf16.mxu0 %v563
        %617 = vmatpush1.bf16.msra.mxu0 %v562
        %618 = vmatprep.subr.bf16.mxu0 %v567
        %619 = vmatpush1.bf16.msra.mxu0 %v566
        %620 = vmatprep.subr.bf16.mxu0 %v571
        %621 = vmatpush1.bf16.msra.mxu0 %v570
        %622 = vmatprep.subr.bf16.mxu0 0
        %623 = vmatpush1.bf16.msra.mxu0 0
        %624 = vmatprep.subr.bf16.mxu0 0
        %625 = vmatpush1.bf16.msra.mxu0 0
        %626 = vmatprep.subr.bf16.mxu0 0
        %627 = vmatpush1.bf16.msra.mxu0 0
        %628 = vmatprep.subr.bf16.mxu0 0
        %629 = vmatpush1.bf16.msra.mxu0 0
        %630 = vmatprep.subr.bf16.mxu0 0
        %631 = vmatpush1.bf16.msra.mxu0 0
        %632 = vmatprep.subr.bf16.mxu0 0
        %633 = vmatpush1.bf16.msra.mxu0 0
        %634 = vmatprep.subr.bf16.mxu0 0
        %635 = vmatpush1.bf16.msra.mxu0 0
        %636 = vmatprep.subr.bf16.mxu0 0
        %637 = vmatpush1.bf16.msra.mxu0 0
        %638 = vmatprep.mubr.bf16.mxu0 0
        %639 = vmatmul.mubr.bf16.gmra.mrb[0].mxu0 %v438
        %v640 = vpop.f32.mrb[0].mxu0
        %v641 = vadd.f32 0.0, %v640
        %v642 = vpop.f32.mrb[0].mxu0
        %v643 = vadd.f32 0.0, %v642
        %v644 = vpop.f32.mrb[0].mxu0
        %v645 = vadd.f32 0.0, %v644
        %v646 = vpop.f32.mrb[0].mxu0
        %v647 = vadd.f32 0.0, %v646
        %648 = vmatprep.mubr.bf16.mxu0 0
        %649 = vmatmul.mubr.bf16.gmra.mrb[0].mxu0 %v439
        %v650 = vpop.f32.mrb[0].mxu0
        %v651 = vadd.f32 0.0, %v650
        %v652 = vpop.f32.mrb[0].mxu0
        %v653 = vadd.f32 0.0, %v652
        %v654 = vpop.f32.mrb[0].mxu0
        %v655 = vadd.f32 0.0, %v654
        %v656 = vpop.f32.mrb[0].mxu0
        %v657 = vadd.f32 0.0, %v656
        %658 = vmatprep.mubr.bf16.mxu0 0
        %659 = vmatmul.mubr.bf16.gmra.mrb[0].mxu0 %v440
        %v660 = vpop.f32.mrb[0].mxu0
        %v661 = vadd.f32 0.0, %v660
        %v662 = vpop.f32.mrb[0].mxu0
        %v663 = vadd.f32 0.0, %v662
        %v664 = vpop.f32.mrb[0].mxu0
        %v665 = vadd.f32 0.0, %v664
        %v666 = vpop.f32.mrb[0].mxu0
        %v667 = vadd.f32 0.0, %v666
        %668 = vmatprep.mubr.bf16.mxu0 0
        %669 = vmatmul.mubr.bf16.gmra.mrb[0].mxu0 %v441
        %v670 = vpop.f32.mrb[0].mxu0
        %v671 = vadd.f32 0.0, %v670
        %v672 = vpop.f32.mrb[0].mxu0
        %v673 = vadd.f32 0.0, %v672
        %v674 = vpop.f32.mrb[0].mxu0
        %v675 = vadd.f32 0.0, %v674
        %v676 = vpop.f32.mrb[0].mxu0
        %v677 = vadd.f32 0.0, %v676
        %678 = vdwg.mxu0
        %679 = vmatprep.subr.bf16.mxu0 %v545
        %680 = vmatpush1.bf16.msra.mxu0 %v544
        %681 = vmatprep.subr.bf16.mxu0 %v549
        %682 = vmatpush1.bf16.msra.mxu0 %v548
        %683 = vmatprep.subr.bf16.mxu0 %v553
        %684 = vmatpush1.bf16.msra.mxu0 %v552
        %685 = vmatprep.subr.bf16.mxu0 %v557
        %686 = vmatpush1.bf16.msra.mxu0 %v556
        %687 = vmatprep.subr.bf16.mxu0 %v561
        %688 = vmatpush1.bf16.msra.mxu0 %v560
        %689 = vmatprep.subr.bf16.mxu0 %v565
        %690 = vmatpush1.bf16.msra.mxu0 %v564
        %691 = vmatprep.subr.bf16.mxu0 %v569
        %692 = vmatpush1.bf16.msra.mxu0 %v568
        %693 = vmatprep.subr.bf16.mxu0 %v573
        %694 = vmatpush1.bf16.msra.mxu0 %v572
        %695 = vmatprep.subr.bf16.mxu0 0
        %696 = vmatpush1.bf16.msra.mxu0 0
        %697 = vmatprep.subr.bf16.mxu0 0
        %698 = vmatpush1.bf16.msra.mxu0 0
        %699 = vmatprep.subr.bf16.mxu0 0
        %700 = vmatpush1.bf16.msra.mxu0 0
        %701 = vmatprep.subr.bf16.mxu0 0
        %702 = vmatpush1.bf16.msra.mxu0 0
        %703 = vmatprep.subr.bf16.mxu0 0
        %704 = vmatpush1.bf16.msra.mxu0 0
        %705 = vmatprep.subr.bf16.mxu0 0
        %706 = vmatpush1.bf16.msra.mxu0 0
        %707 = vmatprep.subr.bf16.mxu0 0
        %708 = vmatpush1.bf16.msra.mxu0 0
        %709 = vmatprep.subr.bf16.mxu0 0
        %710 = vmatpush1.bf16.msra.mxu0 0
        %711 = vmatprep.mubr.bf16.mxu0 0
        %712 = vmatmul.mubr.bf16.gmra.mrb[0].mxu0 %v438
        %v713 = vpop.f32.mrb[0].mxu0
        %v714 = vadd.f32 0.0, %v713
        %v715 = vpop.f32.mrb[0].mxu0
        %v716 = vadd.f32 0.0, %v715
        %v717 = vpop.f32.mrb[0].mxu0
        %v718 = vadd.f32 0.0, %v717
        %v719 = vpop.f32.mrb[0].mxu0
        %v720 = vadd.f32 0.0, %v719
        %721 = vmatprep.mubr.bf16.mxu0 0
        %722 = vmatmul.mubr.bf16.gmra.mrb[0].mxu0 %v439
        %v723 = vpop.f32.mrb[0].mxu0
        %v724 = vadd.f32 0.0, %v723
        %v725 = vpop.f32.mrb[0].mxu0
        %v726 = vadd.f32 0.0, %v725
        %v727 = vpop.f32.mrb[0].mxu0
        %v728 = vadd.f32 0.0, %v727
        %v729 = vpop.f32.mrb[0].mxu0
        %v730 = vadd.f32 0.0, %v729
        %731 = vmatprep.mubr.bf16.mxu0 0
        %732 = vmatmul.mubr.bf16.gmra.mrb[0].mxu0 %v440
        %v733 = vpop.f32.mrb[0].mxu0
        %v734 = vadd.f32 0.0, %v733
        %v735 = vpop.f32.mrb[0].mxu0
        %v736 = vadd.f32 0.0, %v735
        %v737 = vpop.f32.mrb[0].mxu0
        %v738 = vadd.f32 0.0, %v737
        %v739 = vpop.f32.mrb[0].mxu0
        %v740 = vadd.f32 0.0, %v739
        %741 = vmatprep.mubr.bf16.mxu0 0
        %742 = vmatmul.mubr.bf16.gmra.mrb[0].mxu0 %v441
        %v743 = vpop.f32.mrb[0].mxu0
        %v744 = vadd.f32 0.0, %v743
        %v745 = vpop.f32.mrb[0].mxu0
        %v746 = vadd.f32 0.0, %v745
        %v747 = vpop.f32.mrb[0].mxu0
        %v748 = vadd.f32 0.0, %v747
        %v749 = vpop.f32.mrb[0].mxu0
        %v750 = vadd.f32 0.0, %v749
        %751 = vdwg.mxu0
        %752 = vst [vmem:[#allocation2] sm:$0xff] %v641
        %753 = vst [vmem:[#allocation2 + $0x8] sm:$0xff] %v643
        %754 = vst [vmem:[#allocation2 + $0x10] sm:$0xff] %v714
        %755 = vst [vmem:[#allocation2 + $0x18] sm:$0xff] %v716
        %756 = vst [vmem:[#allocation2 + $0x20] sm:$0xff] %v645
        %757 = vst [vmem:[#allocation2 + $0x28] sm:$0xff] %v647
        %758 = vst [vmem:[#allocation2 + $0x30] sm:$0xff] %v718
        %759 = vst [vmem:[#allocation2 + $0x38] sm:$0xff] %v720
        %760 = vst [vmem:[#allocation2 + $0x40] sm:$0xff] %v651
        %761 = vst [vmem:[#allocation2 + $0x48] sm:$0xff] %v653
        %762 = vst [vmem:[#allocation2 + $0x50] sm:$0xff] %v724
        %763 = vst [vmem:[#allocation2 + $0x58] sm:$0xff] %v726
        %764 = vst [vmem:[#allocation2 + $0x60] sm:$0xff] %v655
        %765 = vst [vmem:[#allocation2 + $0x68] sm:$0xff] %v657
        %766 = vst [vmem:[#allocation2 + $0x70] sm:$0xff] %v728
        %767 = vst [vmem:[#allocation2 + $0x78] sm:$0xff] %v730
        %768 = vst [vmem:[#allocation2 + $0x80] sm:$0xff] %v661
        %769 = vst [vmem:[#allocation2 + $0x88] sm:$0xff] %v663
        %770 = vst [vmem:[#allocation2 + $0x90] sm:$0xff] %v734
        %771 = vst [vmem:[#allocation2 + $0x98] sm:$0xff] %v736
        %772 = vst [vmem:[#allocation2 + $0xa0] sm:$0xff] %v665
        %773 = vst [vmem:[#allocation2 + $0xa8] sm:$0xff] %v667
        %774 = vst [vmem:[#allocation2 + $0xb0] sm:$0xff] %v738
        %775 = vst [vmem:[#allocation2 + $0xb8] sm:$0xff] %v740
        %776 = vst [vmem:[#allocation2 + $0xc0] sm:$0xff] %v671
        %777 = vst [vmem:[#allocation2 + $0xc8] sm:$0xff] %v673
        %778 = vst [vmem:[#allocation2 + $0xd0] sm:$0xff] %v744
        %779 = vst [vmem:[#allocation2 + $0xd8] sm:$0xff] %v746
        %780 = vst [vmem:[#allocation2 + $0xe0] sm:$0xff] %v675
        %781 = vst [vmem:[#allocation2 + $0xe8] sm:$0xff] %v677
        %782 = vst [vmem:[#allocation2 + $0xf0] sm:$0xff] %v748
        %783 = vst [vmem:[#allocation2 + $0xf8] sm:$0xff] %v750
      $region40: #{up_block_forward.6} parent=35 // pred_fallthru
        _
      %v784 = vld [vmem:[#allocation2] sm:$0xff]
      %v785 = vld [vmem:[#allocation2 + $0x8] sm:$0xff]
      %v786 = vld [vmem:[#allocation2 + $0x10] sm:$0xff]
      %v787 = vld [vmem:[#allocation2 + $0x18] sm:$0xff]
      %v788 = vld [vmem:[#allocation2 + $0x20] sm:$0xff]
      %v789 = vld [vmem:[#allocation2 + $0x28] sm:$0xff]
      %v790 = vld [vmem:[#allocation2 + $0x30] sm:$0xff]
      %v791 = vld [vmem:[#allocation2 + $0x38] sm:$0xff]
      %v792 = vld [vmem:[#allocation2 + $0x40] sm:$0xff]
      %v793 = vld [vmem:[#allocation2 + $0x48] sm:$0xff]
      %v794 = vld [vmem:[#allocation2 + $0x50] sm:$0xff]
      %v795 = vld [vmem:[#allocation2 + $0x58] sm:$0xff]
      %v796 = vld [vmem:[#allocation2 + $0x60] sm:$0xff]
      %v797 = vld [vmem:[#allocation2 + $0x68] sm:$0xff]
      %v798 = vld [vmem:[#allocation2 + $0x70] sm:$0xff]
      %v799 = vld [vmem:[#allocation2 + $0x78] sm:$0xff]
      %v800 = vld [vmem:[#allocation2 + $0x80] sm:$0xff]
      %v801 = vld [vmem:[#allocation2 + $0x88] sm:$0xff]
      %v802 = vld [vmem:[#allocation2 + $0x90] sm:$0xff]
      %v803 = vld [vmem:[#allocation2 + $0x98] sm:$0xff]
      %v804 = vld [vmem:[#allocation2 + $0xa0] sm:$0xff]
      %v805 = vld [vmem:[#allocation2 + $0xa8] sm:$0xff]
      %v806 = vld [vmem:[#allocation2 + $0xb0] sm:$0xff]
      %v807 = vld [vmem:[#allocation2 + $0xb8] sm:$0xff]
      %v808 = vld [vmem:[#allocation2 + $0xc0] sm:$0xff]
      %v809 = vld [vmem:[#allocation2 + $0xc8] sm:$0xff]
      %v810 = vld [vmem:[#allocation2 + $0xd0] sm:$0xff]
      %v811 = vld [vmem:[#allocation2 + $0xd8] sm:$0xff]
      %v812 = vld [vmem:[#allocation2 + $0xe0] sm:$0xff]
      %v813 = vld [vmem:[#allocation2 + $0xe8] sm:$0xff]
      %v814 = vld [vmem:[#allocation2 + $0xf0] sm:$0xff]
      %v815 = vld [vmem:[#allocation2 + $0xf8] sm:$0xff]
      %v816 = vld [vmem:[%s350] sm:$0xf]
      %v817 = vld [vmem:[%s350 + $0x4] sm:$0xf]
      %v818 = vld [vmem:[%s350 + $0x8] sm:$0xf]
      %v819 = vld [vmem:[%s350 + $0xc] sm:$0xf]
      %v820 = vld [vmem:[%s350 + $0x10] sm:$0xf]
      %v821 = vld [vmem:[%s350 + $0x14] sm:$0xf]
      %v822 = vld [vmem:[%s350 + $0x18] sm:$0xf]
      %v823 = vld [vmem:[%s350 + $0x1c] sm:$0xf]
      %v824 = vld [vmem:[%s2] sm:$0xff]
      %v825 = vld [vmem:[%s2 + $0x8] sm:$0xff]
      %v826 = vld [vmem:[%s2 + $0x10] sm:$0xff]
      %v827 = vld [vmem:[%s2 + $0x18] sm:$0xff]
      %v828 = vld [vmem:[%s2 + $0x20] sm:$0xff]
      %v829 = vld [vmem:[%s2 + $0x28] sm:$0xff]
      %v830 = vld [vmem:[%s2 + $0x30] sm:$0xff]
      %v831 = vld [vmem:[%s2 + $0x38] sm:$0xff]
      %v832 = vld [vmem:[%s2 + $0x40] sm:$0xff]
      %v833 = vld [vmem:[%s2 + $0x48] sm:$0xff]
      %v834 = vld [vmem:[%s2 + $0x50] sm:$0xff]
      %v835 = vld [vmem:[%s2 + $0x58] sm:$0xff]
      %v836 = vld [vmem:[%s2 + $0x60] sm:$0xff]
      %v837 = vld [vmem:[%s2 + $0x68] sm:$0xff]
      %v838 = vld [vmem:[%s2 + $0x70] sm:$0xff]
      %v839 = vld [vmem:[%s2 + $0x78] sm:$0xff]
      %v840 = vld [vmem:[%s2 + $0x80] sm:$0xff]
      %v841 = vld [vmem:[%s2 + $0x88] sm:$0xff]
      %v842 = vld [vmem:[%s2 + $0x90] sm:$0xff]
      %v843 = vld [vmem:[%s2 + $0x98] sm:$0xff]
      %v844 = vld [vmem:[%s2 + $0xa0] sm:$0xff]
      %v845 = vld [vmem:[%s2 + $0xa8] sm:$0xff]
      %v846 = vld [vmem:[%s2 + $0xb0] sm:$0xff]
      %v847 = vld [vmem:[%s2 + $0xb8] sm:$0xff]
      %v848 = vld [vmem:[%s2 + $0xc0] sm:$0xff]
      %v849 = vld [vmem:[%s2 + $0xc8] sm:$0xff]
      %v850 = vld [vmem:[%s2 + $0xd0] sm:$0xff]
      %v851 = vld [vmem:[%s2 + $0xd8] sm:$0xff]
      %v852 = vld [vmem:[%s2 + $0xe0] sm:$0xff]
      %v853 = vld [vmem:[%s2 + $0xe8] sm:$0xff]
      %v854 = vld [vmem:[%s2 + $0xf0] sm:$0xff]
      %v855 = vld [vmem:[%s2 + $0xf8] sm:$0xff]
      %v864 = vunpack.c.l.b16 %v816
      %v865 = vunpack.c.l.b16 %v817
      %v866 = vunpack.c.l.b16 %v818
      %v867 = vunpack.c.l.b16 %v819
      %v868 = vunpack.c.l.b16 %v820
      %v869 = vunpack.c.l.b16 %v821
      %v870 = vunpack.c.l.b16 %v822
      %v871 = vunpack.c.l.b16 %v823
      %v872 = vpack.c.b16 %v865, %v864
      %v873 = vpack.c.b16 %v867, %v866
      %v874 = vpack.c.b16 %v869, %v868
      %v875 = vpack.c.b16 %v871, %v870
      %v912 = vunpack.c.l.b16 %v824
      %v913 = vunpack.c.h.b16 %v824
      %v914 = vunpack.c.l.b16 %v825
      %v915 = vunpack.c.h.b16 %v825
      %v916 = vunpack.c.l.b16 %v826
      %v917 = vunpack.c.h.b16 %v826
      %v918 = vunpack.c.l.b16 %v827
      %v919 = vunpack.c.h.b16 %v827
      %v920 = vunpack.c.l.b16 %v828
      %v921 = vunpack.c.h.b16 %v828
      %v922 = vunpack.c.l.b16 %v829
      %v923 = vunpack.c.h.b16 %v829
      %v924 = vunpack.c.l.b16 %v830
      %v925 = vunpack.c.h.b16 %v830
      %v926 = vunpack.c.l.b16 %v831
      %v927 = vunpack.c.h.b16 %v831
      %v928 = vunpack.c.l.b16 %v832
      %v929 = vunpack.c.h.b16 %v832
      %v930 = vunpack.c.l.b16 %v833
      %v931 = vunpack.c.h.b16 %v833
      %v932 = vunpack.c.l.b16 %v834
      %v933 = vunpack.c.h.b16 %v834
      %v934 = vunpack.c.l.b16 %v835
      %v935 = vunpack.c.h.b16 %v835
      %v936 = vunpack.c.l.b16 %v836
      %v937 = vunpack.c.h.b16 %v836
      %v938 = vunpack.c.l.b16 %v837
      %v939 = vunpack.c.h.b16 %v837
      %v940 = vunpack.c.l.b16 %v838
      %v941 = vunpack.c.h.b16 %v838
      %v942 = vunpack.c.l.b16 %v839
      %v943 = vunpack.c.h.b16 %v839
      %v944 = vunpack.c.l.b16 %v840
      %v945 = vunpack.c.h.b16 %v840
      %v946 = vunpack.c.l.b16 %v841
      %v947 = vunpack.c.h.b16 %v841
      %v948 = vunpack.c.l.b16 %v842
      %v949 = vunpack.c.h.b16 %v842
      %v950 = vunpack.c.l.b16 %v843
      %v951 = vunpack.c.h.b16 %v843
      %v952 = vunpack.c.l.b16 %v844
      %v953 = vunpack.c.h.b16 %v844
      %v954 = vunpack.c.l.b16 %v845
      %v955 = vunpack.c.h.b16 %v845
      %v956 = vunpack.c.l.b16 %v846
      %v957 = vunpack.c.h.b16 %v846
      %v958 = vunpack.c.l.b16 %v847
      %v959 = vunpack.c.h.b16 %v847
      %v960 = vunpack.c.l.b16 %v848
      %v961 = vunpack.c.h.b16 %v848
      %v962 = vunpack.c.l.b16 %v849
      %v963 = vunpack.c.h.b16 %v849
      %v964 = vunpack.c.l.b16 %v850
      %v965 = vunpack.c.h.b16 %v850
      %v966 = vunpack.c.l.b16 %v851
      %v967 = vunpack.c.h.b16 %v851
      %v968 = vunpack.c.l.b16 %v852
      %v969 = vunpack.c.h.b16 %v852
      %v970 = vunpack.c.l.b16 %v853
      %v971 = vunpack.c.h.b16 %v853
      %v972 = vunpack.c.l.b16 %v854
      %v973 = vunpack.c.h.b16 %v854
      %v974 = vunpack.c.l.b16 %v855
      %v975 = vunpack.c.h.b16 %v855
      %v976 = vpack.c.b16 %v916, %v912
      %v977 = vpack.c.b16 %v917, %v913
      %v978 = vpack.c.b16 %v918, %v914
      %v979 = vpack.c.b16 %v919, %v915
      %v980 = vpack.c.b16 %v924, %v920
      %v981 = vpack.c.b16 %v925, %v921
      %v982 = vpack.c.b16 %v926, %v922
      %v983 = vpack.c.b16 %v927, %v923
      %v984 = vpack.c.b16 %v932, %v928
      %v985 = vpack.c.b16 %v933, %v929
      %v986 = vpack.c.b16 %v934, %v930
      %v987 = vpack.c.b16 %v935, %v931
      %v988 = vpack.c.b16 %v940, %v936
      %v989 = vpack.c.b16 %v941, %v937
      %v990 = vpack.c.b16 %v942, %v938
      %v991 = vpack.c.b16 %v943, %v939
      %v992 = vpack.c.b16 %v948, %v944
      %v993 = vpack.c.b16 %v949, %v945
      %v994 = vpack.c.b16 %v950, %v946
      %v995 = vpack.c.b16 %v951, %v947
      %v996 = vpack.c.b16 %v956, %v952
      %v997 = vpack.c.b16 %v957, %v953
      %v998 = vpack.c.b16 %v958, %v954
      %v999 = vpack.c.b16 %v959, %v955
      %v1000 = vpack.c.b16 %v964, %v960
      %v1001 = vpack.c.b16 %v965, %v961
      %v1002 = vpack.c.b16 %v966, %v962
      %v1003 = vpack.c.b16 %v967, %v963
      %v1004 = vpack.c.b16 %v972, %v968
      %v1005 = vpack.c.b16 %v973, %v969
      %v1006 = vpack.c.b16 %v974, %v970
      %v1007 = vpack.c.b16 %v975, %v971
      %1040 = vmatprep.subr.bf16.mxu0 %v977
      %1041 = vmatpush1.bf16.msra.mxu0 %v976
      %1042 = vmatprep.subr.bf16.mxu0 %v981
      %1043 = vmatpush1.bf16.msra.mxu0 %v980
      %1044 = vmatprep.subr.bf16.mxu0 %v985
      %1045 = vmatpush1.bf16.msra.mxu0 %v984
      %1046 = vmatprep.subr.bf16.mxu0 %v989
      %1047 = vmatpush1.bf16.msra.mxu0 %v988
      %1048 = vmatprep.subr.bf16.mxu0 %v993
      %1049 = vmatpush1.bf16.msra.mxu0 %v992
      %1050 = vmatprep.subr.bf16.mxu0 %v997
      %1051 = vmatpush1.bf16.msra.mxu0 %v996
      %1052 = vmatprep.subr.bf16.mxu0 %v1001
      %1053 = vmatpush1.bf16.msra.mxu0 %v1000
      %1054 = vmatprep.subr.bf16.mxu0 %v1005
      %1055 = vmatpush1.bf16.msra.mxu0 %v1004
      %1056 = vmatprep.subr.bf16.mxu0 0
      %1057 = vmatpush1.bf16.msra.mxu0 0
      %1058 = vmatprep.subr.bf16.mxu0 0
      %1059 = vmatpush1.bf16.msra.mxu0 0
      %1060 = vmatprep.subr.bf16.mxu0 0
      %1061 = vmatpush1.bf16.msra.mxu0 0
      %1062 = vmatprep.subr.bf16.mxu0 0
      %1063 = vmatpush1.bf16.msra.mxu0 0
      %1064 = vmatprep.subr.bf16.mxu0 0
      %1065 = vmatpush1.bf16.msra.mxu0 0
      %1066 = vmatprep.subr.bf16.mxu0 0
      %1067 = vmatpush1.bf16.msra.mxu0 0
      %1068 = vmatprep.subr.bf16.mxu0 0
      %1069 = vmatpush1.bf16.msra.mxu0 0
      %1070 = vmatprep.subr.bf16.mxu0 0
      %1071 = vmatpush1.bf16.msra.mxu0 0
      %1072 = vmatprep.mubr.bf16.mxu0 0
      %1073 = vmatmul.mubr.bf16.gmra.mrb[0].mxu0 %v872
      %v1074 = vpop.f32.mrb[0].mxu0
      %v1075 = vadd.f32 %v784, %v1074
      %v1076 = vpop.f32.mrb[0].mxu0
      %v1077 = vadd.f32 %v785, %v1076
      %v1078 = vpop.f32.mrb[0].mxu0
      %v1079 = vadd.f32 %v788, %v1078
      %v1080 = vpop.f32.mrb[0].mxu0
      %v1081 = vadd.f32 %v789, %v1080
      %1082 = vmatprep.mubr.bf16.mxu0 0
      %1083 = vmatmul.mubr.bf16.gmra.mrb[0].mxu0 %v873
      %v1084 = vpop.f32.mrb[0].mxu0
      %v1085 = vadd.f32 %v792, %v1084
      %v1086 = vpop.f32.mrb[0].mxu0
      %v1087 = vadd.f32 %v793, %v1086
      %v1088 = vpop.f32.mrb[0].mxu0
      %v1089 = vadd.f32 %v796, %v1088
      %v1090 = vpop.f32.mrb[0].mxu0
      %v1091 = vadd.f32 %v797, %v1090
      %1092 = vmatprep.mubr.bf16.mxu0 0
      %1093 = vmatmul.mubr.bf16.gmra.mrb[0].mxu0 %v874
      %v1094 = vpop.f32.mrb[0].mxu0
      %v1095 = vadd.f32 %v800, %v1094
      %v1096 = vpop.f32.mrb[0].mxu0
      %v1097 = vadd.f32 %v801, %v1096
      %v1098 = vpop.f32.mrb[0].mxu0
      %v1099 = vadd.f32 %v804, %v1098
      %v1100 = vpop.f32.mrb[0].mxu0
      %v1101 = vadd.f32 %v805, %v1100
      %1102 = vmatprep.mubr.bf16.mxu0 0
      %1103 = vmatmul.mubr.bf16.gmra.mrb[0].mxu0 %v875
      %v1104 = vpop.f32.mrb[0].mxu0
      %v1105 = vadd.f32 %v808, %v1104
      %v1106 = vpop.f32.mrb[0].mxu0
      %v1107 = vadd.f32 %v809, %v1106
      %v1108 = vpop.f32.mrb[0].mxu0
      %v1109 = vadd.f32 %v812, %v1108
      %v1110 = vpop.f32.mrb[0].mxu0
      %v1111 = vadd.f32 %v813, %v1110
      %1112 = vdwg.mxu0
      %1113 = vmatprep.subr.bf16.mxu0 %v979
      %1114 = vmatpush1.bf16.msra.mxu0 %v978
      %1115 = vmatprep.subr.bf16.mxu0 %v983
      %1116 = vmatpush1.bf16.msra.mxu0 %v982
      %1117 = vmatprep.subr.bf16.mxu0 %v987
      %1118 = vmatpush1.bf16.msra.mxu0 %v986
      %1119 = vmatprep.subr.bf16.mxu0 %v991
      %1120 = vmatpush1.bf16.msra.mxu0 %v990
      %1121 = vmatprep.subr.bf16.mxu0 %v995
      %1122 = vmatpush1.bf16.msra.mxu0 %v994
      %1123 = vmatprep.subr.bf16.mxu0 %v999
      %1124 = vmatpush1.bf16.msra.mxu0 %v998
      %1125 = vmatprep.subr.bf16.mxu0 %v1003
      %1126 = vmatpush1.bf16.msra.mxu0 %v1002
      %1127 = vmatprep.subr.bf16.mxu0 %v1007
      %1128 = vmatpush1.bf16.msra.mxu0 %v1006
      %1129 = vmatprep.subr.bf16.mxu0 0
      %1130 = vmatpush1.bf16.msra.mxu0 0
      %1131 = vmatprep.subr.bf16.mxu0 0
      %1132 = vmatpush1.bf16.msra.mxu0 0
      %1133 = vmatprep.subr.bf16.mxu0 0
      %1134 = vmatpush1.bf16.msra.mxu0 0
      %1135 = vmatprep.subr.bf16.mxu0 0
      %1136 = vmatpush1.bf16.msra.mxu0 0
      %1137 = vmatprep.subr.bf16.mxu0 0
      %1138 = vmatpush1.bf16.msra.mxu0 0
      %1139 = vmatprep.subr.bf16.mxu0 0
      %1140 = vmatpush1.bf16.msra.mxu0 0
      %1141 = vmatprep.subr.bf16.mxu0 0
      %1142 = vmatpush1.bf16.msra.mxu0 0
      %1143 = vmatprep.subr.bf16.mxu0 0
      %1144 = vmatpush1.bf16.msra.mxu0 0
      %1145 = vmatprep.mubr.bf16.mxu0 0
      %1146 = vmatmul.mubr.bf16.gmra.mrb[0].mxu0 %v872
      %v1147 = vpop.f32.mrb[0].mxu0
      %v1148 = vadd.f32 %v786, %v1147
      %v1149 = vpop.f32.mrb[0].mxu0
      %v1150 = vadd.f32 %v787, %v1149
      %v1151 = vpop.f32.mrb[0].mxu0
      %v1152 = vadd.f32 %v790, %v1151
      %v1153 = vpop.f32.mrb[0].mxu0
      %v1154 = vadd.f32 %v791, %v1153
      %1155 = vmatprep.mubr.bf16.mxu0 0
      %1156 = vmatmul.mubr.bf16.gmra.mrb[0].mxu0 %v873
      %v1157 = vpop.f32.mrb[0].mxu0
      %v1158 = vadd.f32 %v794, %v1157
      %v1159 = vpop.f32.mrb[0].mxu0
      %v1160 = vadd.f32 %v795, %v1159
      %v1161 = vpop.f32.mrb[0].mxu0
      %v1162 = vadd.f32 %v798, %v1161
      %v1163 = vpop.f32.mrb[0].mxu0
      %v1164 = vadd.f32 %v799, %v1163
      %1165 = vmatprep.mubr.bf16.mxu0 0
      %1166 = vmatmul.mubr.bf16.gmra.mrb[0].mxu0 %v874
      %v1167 = vpop.f32.mrb[0].mxu0
      %v1168 = vadd.f32 %v802, %v1167
      %v1169 = vpop.f32.mrb[0].mxu0
      %v1170 = vadd.f32 %v803, %v1169
      %v1171 = vpop.f32.mrb[0].mxu0
      %v1172 = vadd.f32 %v806, %v1171
      %v1173 = vpop.f32.mrb[0].mxu0
      %v1174 = vadd.f32 %v807, %v1173
      %1175 = vmatprep.mubr.bf16.mxu0 0
      %1176 = vmatmul.mubr.bf16.gmra.mrb[0].mxu0 %v875
      %v1177 = vpop.f32.mrb[0].mxu0
      %v1178 = vadd.f32 %v810, %v1177
      %v1179 = vpop.f32.mrb[0].mxu0
      %v1180 = vadd.f32 %v811, %v1179
      %v1181 = vpop.f32.mrb[0].mxu0
      %v1182 = vadd.f32 %v814, %v1181
      %v1183 = vpop.f32.mrb[0].mxu0
      %v1184 = vadd.f32 %v815, %v1183
      %1185 = vdwg.mxu0
      %v1186 = vmul.f32 %v1075, %v1075
      %v1187 = vmul.f32 %v1077, %v1077
      %v1188 = vmul.f32 %v1148, %v1148
      %v1189 = vmul.f32 %v1150, %v1150
      %v1190 = vmul.f32 %v1079, %v1079
      %v1191 = vmul.f32 %v1081, %v1081
      %v1192 = vmul.f32 %v1152, %v1152
      %v1193 = vmul.f32 %v1154, %v1154
      %v1194 = vmul.f32 %v1085, %v1085
      %v1195 = vmul.f32 %v1087, %v1087
      %v1196 = vmul.f32 %v1158, %v1158
      %v1197 = vmul.f32 %v1160, %v1160
      %v1198 = vmul.f32 %v1089, %v1089
      %v1199 = vmul.f32 %v1091, %v1091
      %v1200 = vmul.f32 %v1162, %v1162
      %v1201 = vmul.f32 %v1164, %v1164
      %v1202 = vmul.f32 %v1095, %v1095
      %v1203 = vmul.f32 %v1097, %v1097
      %v1204 = vmul.f32 %v1168, %v1168
      %v1205 = vmul.f32 %v1170, %v1170
      %v1206 = vmul.f32 %v1099, %v1099
      %v1207 = vmul.f32 %v1101, %v1101
      %v1208 = vmul.f32 %v1172, %v1172
      %v1209 = vmul.f32 %v1174, %v1174
      %v1210 = vmul.f32 %v1105, %v1105
      %v1211 = vmul.f32 %v1107, %v1107
      %v1212 = vmul.f32 %v1178, %v1178
      %v1213 = vmul.f32 %v1180, %v1180
      %v1214 = vmul.f32 %v1109, %v1109
      %v1215 = vmul.f32 %v1111, %v1111
      %v1216 = vmul.f32 %v1182, %v1182
      %v1217 = vmul.f32 %v1184, %v1184
      %s1218 = scalar_lea.vmem %s350, 32
      %v1219 = vld [vmem:[%s1218] sm:$0xf]
      %v1220 = vld [vmem:[%s1218 + $0x4] sm:$0xf]
      %v1221 = vld [vmem:[%s1218 + $0x8] sm:$0xf]
      %v1222 = vld [vmem:[%s1218 + $0xc] sm:$0xf]
      %v1223 = vld [vmem:[%s1218 + $0x10] sm:$0xf]
      %v1224 = vld [vmem:[%s1218 + $0x14] sm:$0xf]
      %v1225 = vld [vmem:[%s1218 + $0x18] sm:$0xf]
      %v1226 = vld [vmem:[%s1218 + $0x1c] sm:$0xf]
      %v1235 = vunpack.c.l.b16 %v1219
      %v1236 = vunpack.c.l.b16 %v1220
      %v1237 = vunpack.c.l.b16 %v1221
      %v1238 = vunpack.c.l.b16 %v1222
      %v1239 = vunpack.c.l.b16 %v1223
      %v1240 = vunpack.c.l.b16 %v1224
      %v1241 = vunpack.c.l.b16 %v1225
      %v1242 = vunpack.c.l.b16 %v1226
      %v1243 = vpack.c.b16 %v1236, %v1235
      %v1244 = vpack.c.b16 %v1238, %v1237
      %v1245 = vpack.c.b16 %v1240, %v1239
      %v1246 = vpack.c.b16 %v1242, %v1241
      %1251 = vmatprep.subr.bf16.mxu0 %v977
      %1252 = vmatpush1.bf16.msra.mxu0 %v976
      %1253 = vmatprep.subr.bf16.mxu0 %v981
      %1254 = vmatpush1.bf16.msra.mxu0 %v980
      %1255 = vmatprep.subr.bf16.mxu0 %v985
      %1256 = vmatpush1.bf16.msra.mxu0 %v984
      %1257 = vmatprep.subr.bf16.mxu0 %v989
      %1258 = vmatpush1.bf16.msra.mxu0 %v988
      %1259 = vmatprep.subr.bf16.mxu0 %v993
      %1260 = vmatpush1.bf16.msra.mxu0 %v992
      %1261 = vmatprep.subr.bf16.mxu0 %v997
      %1262 = vmatpush1.bf16.msra.mxu0 %v996
      %1263 = vmatprep.subr.bf16.mxu0 %v1001
      %1264 = vmatpush1.bf16.msra.mxu0 %v1000
      %1265 = vmatprep.subr.bf16.mxu0 %v1005
      %1266 = vmatpush1.bf16.msra.mxu0 %v1004
      %1267 = vmatprep.subr.bf16.mxu0 0
      %1268 = vmatpush1.bf16.msra.mxu0 0
      %1269 = vmatprep.subr.bf16.mxu0 0
      %1270 = vmatpush1.bf16.msra.mxu0 0
      %1271 = vmatprep.subr.bf16.mxu0 0
      %1272 = vmatpush1.bf16.msra.mxu0 0
      %1273 = vmatprep.subr.bf16.mxu0 0
      %1274 = vmatpush1.bf16.msra.mxu0 0
      %1275 = vmatprep.subr.bf16.mxu0 0
      %1276 = vmatpush1.bf16.msra.mxu0 0
      %1277 = vmatprep.subr.bf16.mxu0 0
      %1278 = vmatpush1.bf16.msra.mxu0 0
      %1279 = vmatprep.subr.bf16.mxu0 0
      %1280 = vmatpush1.bf16.msra.mxu0 0
      %1281 = vmatprep.subr.bf16.mxu0 0
      %1282 = vmatpush1.bf16.msra.mxu0 0
      %1283 = vmatprep.mubr.bf16.mxu0 0
      %1284 = vmatmul.mubr.bf16.gmra.mrb[0].mxu0 %v1243
      %v1285 = vpop.f32.mrb[0].mxu0
      %v1286 = vadd.f32 %v784, %v1285
      %v1287 = vpop.f32.mrb[0].mxu0
      %v1288 = vadd.f32 %v785, %v1287
      %v1289 = vpop.f32.mrb[0].mxu0
      %v1290 = vadd.f32 %v788, %v1289
      %v1291 = vpop.f32.mrb[0].mxu0
      %v1292 = vadd.f32 %v789, %v1291
      %1293 = vmatprep.mubr.bf16.mxu0 0
      %1294 = vmatmul.mubr.bf16.gmra.mrb[0].mxu0 %v1244
      %v1295 = vpop.f32.mrb[0].mxu0
      %v1296 = vadd.f32 %v792, %v1295
      %v1297 = vpop.f32.mrb[0].mxu0
      %v1298 = vadd.f32 %v793, %v1297
      %v1299 = vpop.f32.mrb[0].mxu0
      %v1300 = vadd.f32 %v796, %v1299
      %v1301 = vpop.f32.mrb[0].mxu0
      %v1302 = vadd.f32 %v797, %v1301
      %1303 = vmatprep.mubr.bf16.mxu0 0
      %1304 = vmatmul.mubr.bf16.gmra.mrb[0].mxu0 %v1245
      %v1305 = vpop.f32.mrb[0].mxu0
      %v1306 = vadd.f32 %v800, %v1305
      %v1307 = vpop.f32.mrb[0].mxu0
      %v1308 = vadd.f32 %v801, %v1307
      %v1309 = vpop.f32.mrb[0].mxu0
      %v1310 = vadd.f32 %v804, %v1309
      %v1311 = vpop.f32.mrb[0].mxu0
      %v1312 = vadd.f32 %v805, %v1311
      %1313 = vmatprep.mubr.bf16.mxu0 0
      %1314 = vmatmul.mubr.bf16.gmra.mrb[0].mxu0 %v1246
      %v1315 = vpop.f32.mrb[0].mxu0
      %v1316 = vadd.f32 %v808, %v1315
      %v1317 = vpop.f32.mrb[0].mxu0
      %v1318 = vadd.f32 %v809, %v1317
      %v1319 = vpop.f32.mrb[0].mxu0
      %v1320 = vadd.f32 %v812, %v1319
      %v1321 = vpop.f32.mrb[0].mxu0
      %v1322 = vadd.f32 %v813, %v1321
      %1323 = vdwg.mxu0
      %1324 = vmatprep.subr.bf16.mxu0 %v979
      %1325 = vmatpush1.bf16.msra.mxu0 %v978
      %1326 = vmatprep.subr.bf16.mxu0 %v983
      %1327 = vmatpush1.bf16.msra.mxu0 %v982
      %1328 = vmatprep.subr.bf16.mxu0 %v987
      %1329 = vmatpush1.bf16.msra.mxu0 %v986
      %1330 = vmatprep.subr.bf16.mxu0 %v991
      %1331 = vmatpush1.bf16.msra.mxu0 %v990
      %1332 = vmatprep.subr.bf16.mxu0 %v995
      %1333 = vmatpush1.bf16.msra.mxu0 %v994
      %1334 = vmatprep.subr.bf16.mxu0 %v999
      %1335 = vmatpush1.bf16.msra.mxu0 %v998
      %1336 = vmatprep.subr.bf16.mxu0 %v1003
      %1337 = vmatpush1.bf16.msra.mxu0 %v1002
      %1338 = vmatprep.subr.bf16.mxu0 %v1007
      %1339 = vmatpush1.bf16.msra.mxu0 %v1006
      %1340 = vmatprep.subr.bf16.mxu0 0
      %1341 = vmatpush1.bf16.msra.mxu0 0
      %1342 = vmatprep.subr.bf16.mxu0 0
      %1343 = vmatpush1.bf16.msra.mxu0 0
      %1344 = vmatprep.subr.bf16.mxu0 0
      %1345 = vmatpush1.bf16.msra.mxu0 0
      %1346 = vmatprep.subr.bf16.mxu0 0
      %1347 = vmatpush1.bf16.msra.mxu0 0
      %1348 = vmatprep.subr.bf16.mxu0 0
      %1349 = vmatpush1.bf16.msra.mxu0 0
      %1350 = vmatprep.subr.bf16.mxu0 0
      %1351 = vmatpush1.bf16.msra.mxu0 0
      %1352 = vmatprep.subr.bf16.mxu0 0
      %1353 = vmatpush1.bf16.msra.mxu0 0
      %1354 = vmatprep.subr.bf16.mxu0 0
      %1355 = vmatpush1.bf16.msra.mxu0 0
      %1356 = vmatprep.mubr.bf16.mxu0 0
      %1357 = vmatmul.mubr.bf16.gmra.mrb[0].mxu0 %v1243
      %v1358 = vpop.f32.mrb[0].mxu0
      %v1359 = vadd.f32 %v786, %v1358
      %v1360 = vpop.f32.mrb[0].mxu0
      %v1361 = vadd.f32 %v787, %v1360
      %v1362 = vpop.f32.mrb[0].mxu0
      %v1363 = vadd.f32 %v790, %v1362
      %v1364 = vpop.f32.mrb[0].mxu0
      %v1365 = vadd.f32 %v791, %v1364
      %1366 = vmatprep.mubr.bf16.mxu0 0
      %1367 = vmatmul.mubr.bf16.gmra.mrb[0].mxu0 %v1244
      %v1368 = vpop.f32.mrb[0].mxu0
      %v1369 = vadd.f32 %v794, %v1368
      %v1370 = vpop.f32.mrb[0].mxu0
      %v1371 = vadd.f32 %v795, %v1370
      %v1372 = vpop.f32.mrb[0].mxu0
      %v1373 = vadd.f32 %v798, %v1372
      %v1374 = vpop.f32.mrb[0].mxu0
      %v1375 = vadd.f32 %v799, %v1374
      %1376 = vmatprep.mubr.bf16.mxu0 0
      %1377 = vmatmul.mubr.bf16.gmra.mrb[0].mxu0 %v1245
      %v1378 = vpop.f32.mrb[0].mxu0
      %v1379 = vadd.f32 %v802, %v1378
      %v1380 = vpop.f32.mrb[0].mxu0
      %v1381 = vadd.f32 %v803, %v1380
      %v1382 = vpop.f32.mrb[0].mxu0
      %v1383 = vadd.f32 %v806, %v1382
      %v1384 = vpop.f32.mrb[0].mxu0
      %v1385 = vadd.f32 %v807, %v1384
      %1386 = vmatprep.mubr.bf16.mxu0 0
      %1387 = vmatmul.mubr.bf16.gmra.mrb[0].mxu0 %v1246
      %v1388 = vpop.f32.mrb[0].mxu0
      %v1389 = vadd.f32 %v810, %v1388
      %v1390 = vpop.f32.mrb[0].mxu0
      %v1391 = vadd.f32 %v811, %v1390
      %v1392 = vpop.f32.mrb[0].mxu0
      %v1393 = vadd.f32 %v814, %v1392
      %v1394 = vpop.f32.mrb[0].mxu0
      %v1395 = vadd.f32 %v815, %v1394
      %1396 = vdwg.mxu0
      %v1397 = vmax.f32 %v1075, %v1286
      %v1398 = vmax.f32 %v1077, %v1288
      %v1399 = vmax.f32 %v1148, %v1359
      %v1400 = vmax.f32 %v1150, %v1361
      %v1401 = vmax.f32 %v1079, %v1290
      %v1402 = vmax.f32 %v1081, %v1292
      %v1403 = vmax.f32 %v1152, %v1363
      %v1404 = vmax.f32 %v1154, %v1365
      %v1405 = vmax.f32 %v1085, %v1296
      %v1406 = vmax.f32 %v1087, %v1298
      %v1407 = vmax.f32 %v1158, %v1369
      %v1408 = vmax.f32 %v1160, %v1371
      %v1409 = vmax.f32 %v1089, %v1300
      %v1410 = vmax.f32 %v1091, %v1302
      %v1411 = vmax.f32 %v1162, %v1373
      %v1412 = vmax.f32 %v1164, %v1375
      %v1413 = vmax.f32 %v1095, %v1306
      %v1414 = vmax.f32 %v1097, %v1308
      %v1415 = vmax.f32 %v1168, %v1379
      %v1416 = vmax.f32 %v1170, %v1381
      %v1417 = vmax.f32 %v1099, %v1310
      %v1418 = vmax.f32 %v1101, %v1312
      %v1419 = vmax.f32 %v1172, %v1383
      %v1420 = vmax.f32 %v1174, %v1385
      %v1421 = vmax.f32 %v1105, %v1316
      %v1422 = vmax.f32 %v1107, %v1318
      %v1423 = vmax.f32 %v1178, %v1389
      %v1424 = vmax.f32 %v1180, %v1391
      %v1425 = vmax.f32 %v1109, %v1320
      %v1426 = vmax.f32 %v1111, %v1322
      %v1427 = vmax.f32 %v1182, %v1393
      %v1428 = vmax.f32 %v1184, %v1395
      %v1429 = vmin.f32 %v1075, %v1286
      %v1430 = vmin.f32 %v1077, %v1288
      %v1431 = vmin.f32 %v1148, %v1359
      %v1432 = vmin.f32 %v1150, %v1361
      %v1433 = vmin.f32 %v1079, %v1290
      %v1434 = vmin.f32 %v1081, %v1292
      %v1435 = vmin.f32 %v1152, %v1363
      %v1436 = vmin.f32 %v1154, %v1365
      %v1437 = vmin.f32 %v1085, %v1296
      %v1438 = vmin.f32 %v1087, %v1298
      %v1439 = vmin.f32 %v1158, %v1369
      %v1440 = vmin.f32 %v1160, %v1371
      %v1441 = vmin.f32 %v1089, %v1300
      %v1442 = vmin.f32 %v1091, %v1302
      %v1443 = vmin.f32 %v1162, %v1373
      %v1444 = vmin.f32 %v1164, %v1375
      %v1445 = vmin.f32 %v1095, %v1306
      %v1446 = vmin.f32 %v1097, %v1308
      %v1447 = vmin.f32 %v1168, %v1379
      %v1448 = vmin.f32 %v1170, %v1381
      %v1449 = vmin.f32 %v1099, %v1310
      %v1450 = vmin.f32 %v1101, %v1312
      %v1451 = vmin.f32 %v1172, %v1383
      %v1452 = vmin.f32 %v1174, %v1385
      %v1453 = vmin.f32 %v1105, %v1316
      %v1454 = vmin.f32 %v1107, %v1318
      %v1455 = vmin.f32 %v1178, %v1389
      %v1456 = vmin.f32 %v1180, %v1391
      %v1457 = vmin.f32 %v1109, %v1320
      %v1458 = vmin.f32 %v1111, %v1322
      %v1459 = vmin.f32 %v1182, %v1393
      %v1460 = vmin.f32 %v1184, %v1395
      %v1461 = vadd.f32 %v1075, %v1286
      %v1462 = vadd.f32 %v1077, %v1288
      %v1463 = vadd.f32 %v1148, %v1359
      %v1464 = vadd.f32 %v1150, %v1361
      %v1465 = vadd.f32 %v1079, %v1290
      %v1466 = vadd.f32 %v1081, %v1292
      %v1467 = vadd.f32 %v1152, %v1363
      %v1468 = vadd.f32 %v1154, %v1365
      %v1469 = vadd.f32 %v1085, %v1296
      %v1470 = vadd.f32 %v1087, %v1298
      %v1471 = vadd.f32 %v1158, %v1369
      %v1472 = vadd.f32 %v1160, %v1371
      %v1473 = vadd.f32 %v1089, %v1300
      %v1474 = vadd.f32 %v1091, %v1302
      %v1475 = vadd.f32 %v1162, %v1373
      %v1476 = vadd.f32 %v1164, %v1375
      %v1477 = vadd.f32 %v1095, %v1306
      %v1478 = vadd.f32 %v1097, %v1308
      %v1479 = vadd.f32 %v1168, %v1379
      %v1480 = vadd.f32 %v1170, %v1381
      %v1481 = vadd.f32 %v1099, %v1310
      %v1482 = vadd.f32 %v1101, %v1312
      %v1483 = vadd.f32 %v1172, %v1383
      %v1484 = vadd.f32 %v1174, %v1385
      %v1485 = vadd.f32 %v1105, %v1316
      %v1486 = vadd.f32 %v1107, %v1318
      %v1487 = vadd.f32 %v1178, %v1389
      %v1488 = vadd.f32 %v1180, %v1391
      %v1489 = vadd.f32 %v1109, %v1320
      %v1490 = vadd.f32 %v1111, %v1322
      %v1491 = vadd.f32 %v1182, %v1393
      %v1492 = vadd.f32 %v1184, %v1395
      %v1493 = vmul.f32 %v1286, %v1286
      %v1494 = vmul.f32 %v1288, %v1288
      %v1495 = vmul.f32 %v1359, %v1359
      %v1496 = vmul.f32 %v1361, %v1361
      %v1497 = vmul.f32 %v1290, %v1290
      %v1498 = vmul.f32 %v1292, %v1292
      %v1499 = vmul.f32 %v1363, %v1363
      %v1500 = vmul.f32 %v1365, %v1365
      %v1501 = vmul.f32 %v1296, %v1296
      %v1502 = vmul.f32 %v1298, %v1298
      %v1503 = vmul.f32 %v1369, %v1369
      %v1504 = vmul.f32 %v1371, %v1371
      %v1505 = vmul.f32 %v1300, %v1300
      %v1506 = vmul.f32 %v1302, %v1302
      %v1507 = vmul.f32 %v1373, %v1373
      %v1508 = vmul.f32 %v1375, %v1375
      %v1509 = vmul.f32 %v1306, %v1306
      %v1510 = vmul.f32 %v1308, %v1308
      %v1511 = vmul.f32 %v1379, %v1379
      %v1512 = vmul.f32 %v1381, %v1381
      %v1513 = vmul.f32 %v1310, %v1310
      %v1514 = vmul.f32 %v1312, %v1312
      %v1515 = vmul.f32 %v1383, %v1383
      %v1516 = vmul.f32 %v1385, %v1385
      %v1517 = vmul.f32 %v1316, %v1316
      %v1518 = vmul.f32 %v1318, %v1318
      %v1519 = vmul.f32 %v1389, %v1389
      %v1520 = vmul.f32 %v1391, %v1391
      %v1521 = vmul.f32 %v1320, %v1320
      %v1522 = vmul.f32 %v1322, %v1322
      %v1523 = vmul.f32 %v1393, %v1393
      %v1524 = vmul.f32 %v1395, %v1395
      %v1525 = vadd.f32 %v1186, %v1493
      %v1526 = vadd.f32 %v1187, %v1494
      %v1527 = vadd.f32 %v1188, %v1495
      %v1528 = vadd.f32 %v1189, %v1496
      %v1529 = vadd.f32 %v1190, %v1497
      %v1530 = vadd.f32 %v1191, %v1498
      %v1531 = vadd.f32 %v1192, %v1499
      %v1532 = vadd.f32 %v1193, %v1500
      %v1533 = vadd.f32 %v1194, %v1501
      %v1534 = vadd.f32 %v1195, %v1502
      %v1535 = vadd.f32 %v1196, %v1503
      %v1536 = vadd.f32 %v1197, %v1504
      %v1537 = vadd.f32 %v1198, %v1505
      %v1538 = vadd.f32 %v1199, %v1506
      %v1539 = vadd.f32 %v1200, %v1507
      %v1540 = vadd.f32 %v1201, %v1508
      %v1541 = vadd.f32 %v1202, %v1509
      %v1542 = vadd.f32 %v1203, %v1510
      %v1543 = vadd.f32 %v1204, %v1511
      %v1544 = vadd.f32 %v1205, %v1512
      %v1545 = vadd.f32 %v1206, %v1513
      %v1546 = vadd.f32 %v1207, %v1514
      %v1547 = vadd.f32 %v1208, %v1515
      %v1548 = vadd.f32 %v1209, %v1516
      %v1549 = vadd.f32 %v1210, %v1517
      %v1550 = vadd.f32 %v1211, %v1518
      %v1551 = vadd.f32 %v1212, %v1519
      %v1552 = vadd.f32 %v1213, %v1520
      %v1553 = vadd.f32 %v1214, %v1521
      %v1554 = vadd.f32 %v1215, %v1522
      %v1555 = vadd.f32 %v1216, %v1523
      %v1556 = vadd.f32 %v1217, %v1524
      %s1557 = scalar_lea.vmem %s350, 64
      %v1558 = vld [vmem:[%s1557] sm:$0xf]
      %v1559 = vld [vmem:[%s1557 + $0x4] sm:$0xf]
      %v1560 = vld [vmem:[%s1557 + $0x8] sm:$0xf]
      %v1561 = vld [vmem:[%s1557 + $0xc] sm:$0xf]
      %v1562 = vld [vmem:[%s1557 + $0x10] sm:$0xf]
      %v1563 = vld [vmem:[%s1557 + $0x14] sm:$0xf]
      %v1564 = vld [vmem:[%s1557 + $0x18] sm:$0xf]
      %v1565 = vld [vmem:[%s1557 + $0x1c] sm:$0xf]
      %v1574 = vunpack.c.l.b16 %v1558
      %v1575 = vunpack.c.l.b16 %v1559
      %v1576 = vunpack.c.l.b16 %v1560
      %v1577 = vunpack.c.l.b16 %v1561
      %v1578 = vunpack.c.l.b16 %v1562
      %v1579 = vunpack.c.l.b16 %v1563
      %v1580 = vunpack.c.l.b16 %v1564
      %v1581 = vunpack.c.l.b16 %v1565
      %v1582 = vpack.c.b16 %v1575, %v1574
      %v1583 = vpack.c.b16 %v1577, %v1576
      %v1584 = vpack.c.b16 %v1579, %v1578
      %v1585 = vpack.c.b16 %v1581, %v1580
      %1590 = vmatprep.subr.bf16.mxu0 %v977
      %1591 = vmatpush1.bf16.msra.mxu0 %v976
      %1592 = vmatprep.subr.bf16.mxu0 %v981
      %1593 = vmatpush1.bf16.msra.mxu0 %v980
      %1594 = vmatprep.subr.bf16.mxu0 %v985
      %1595 = vmatpush1.bf16.msra.mxu0 %v984
      %1596 = vmatprep.subr.bf16.mxu0 %v989
      %1597 = vmatpush1.bf16.msra.mxu0 %v988
      %1598 = vmatprep.subr.bf16.mxu0 %v993
      %1599 = vmatpush1.bf16.msra.mxu0 %v992
      %1600 = vmatprep.subr.bf16.mxu0 %v997
      %1601 = vmatpush1.bf16.msra.mxu0 %v996
      %1602 = vmatprep.subr.bf16.mxu0 %v1001
      %1603 = vmatpush1.bf16.msra.mxu0 %v1000
      %1604 = vmatprep.subr.bf16.mxu0 %v1005
      %1605 = vmatpush1.bf16.msra.mxu0 %v1004
      %1606 = vmatprep.subr.bf16.mxu0 0
      %1607 = vmatpush1.bf16.msra.mxu0 0
      %1608 = vmatprep.subr.bf16.mxu0 0
      %1609 = vmatpush1.bf16.msra.mxu0 0
      %1610 = vmatprep.subr.bf16.mxu0 0
      %1611 = vmatpush1.bf16.msra.mxu0 0
      %1612 = vmatprep.subr.bf16.mxu0 0
      %1613 = vmatpush1.bf16.msra.mxu0 0
      %1614 = vmatprep.subr.bf16.mxu0 0
      %1615 = vmatpush1.bf16.msra.mxu0 0
      %1616 = vmatprep.subr.bf16.mxu0 0
      %1617 = vmatpush1.bf16.msra.mxu0 0
      %1618 = vmatprep.subr.bf16.mxu0 0
      %1619 = vmatpush1.bf16.msra.mxu0 0
      %1620 = vmatprep.subr.bf16.mxu0 0
      %1621 = vmatpush1.bf16.msra.mxu0 0
      %1622 = vmatprep.mubr.bf16.mxu0 0
      %1623 = vmatmul.mubr.bf16.gmra.mrb[0].mxu0 %v1582
      %v1624 = vpop.f32.mrb[0].mxu0
      %v1625 = vadd.f32 %v784, %v1624
      %v1626 = vpop.f32.mrb[0].mxu0
      %v1627 = vadd.f32 %v785, %v1626
      %v1628 = vpop.f32.mrb[0].mxu0
      %v1629 = vadd.f32 %v788, %v1628
      %v1630 = vpop.f32.mrb[0].mxu0
      %v1631 = vadd.f32 %v789, %v1630
      %1632 = vmatprep.mubr.bf16.mxu0 0
      %1633 = vmatmul.mubr.bf16.gmra.mrb[0].mxu0 %v1583
      %v1634 = vpop.f32.mrb[0].mxu0
      %v1635 = vadd.f32 %v792, %v1634
      %v1636 = vpop.f32.mrb[0].mxu0
      %v1637 = vadd.f32 %v793, %v1636
      %v1638 = vpop.f32.mrb[0].mxu0
      %v1639 = vadd.f32 %v796, %v1638
      %v1640 = vpop.f32.mrb[0].mxu0
      %v1641 = vadd.f32 %v797, %v1640
      %1642 = vmatprep.mubr.bf16.mxu0 0
      %1643 = vmatmul.mubr.bf16.gmra.mrb[0].mxu0 %v1584
      %v1644 = vpop.f32.mrb[0].mxu0
      %v1645 = vadd.f32 %v800, %v1644
      %v1646 = vpop.f32.mrb[0].mxu0
      %v1647 = vadd.f32 %v801, %v1646
      %v1648 = vpop.f32.mrb[0].mxu0
      %v1649 = vadd.f32 %v804, %v1648
      %v1650 = vpop.f32.mrb[0].mxu0
      %v1651 = vadd.f32 %v805, %v1650
      %1652 = vmatprep.mubr.bf16.mxu0 0
      %1653 = vmatmul.mubr.bf16.gmra.mrb[0].mxu0 %v1585
      %v1654 = vpop.f32.mrb[0].mxu0
      %v1655 = vadd.f32 %v808, %v1654
      %v1656 = vpop.f32.mrb[0].mxu0
      %v1657 = vadd.f32 %v809, %v1656
      %v1658 = vpop.f32.mrb[0].mxu0
      %v1659 = vadd.f32 %v812, %v1658
      %v1660 = vpop.f32.mrb[0].mxu0
      %v1661 = vadd.f32 %v813, %v1660
      %1662 = vdwg.mxu0
      %1663 = vmatprep.subr.bf16.mxu0 %v979
      %1664 = vmatpush1.bf16.msra.mxu0 %v978
      %1665 = vmatprep.subr.bf16.mxu0 %v983
      %1666 = vmatpush1.bf16.msra.mxu0 %v982
      %1667 = vmatprep.subr.bf16.mxu0 %v987
      %1668 = vmatpush1.bf16.msra.mxu0 %v986
      %1669 = vmatprep.subr.bf16.mxu0 %v991
      %1670 = vmatpush1.bf16.msra.mxu0 %v990
      %1671 = vmatprep.subr.bf16.mxu0 %v995
      %1672 = vmatpush1.bf16.msra.mxu0 %v994
      %1673 = vmatprep.subr.bf16.mxu0 %v999
      %1674 = vmatpush1.bf16.msra.mxu0 %v998
      %1675 = vmatprep.subr.bf16.mxu0 %v1003
      %1676 = vmatpush1.bf16.msra.mxu0 %v1002
      %1677 = vmatprep.subr.bf16.mxu0 %v1007
      %1678 = vmatpush1.bf16.msra.mxu0 %v1006
      %1679 = vmatprep.subr.bf16.mxu0 0
      %1680 = vmatpush1.bf16.msra.mxu0 0
      %1681 = vmatprep.subr.bf16.mxu0 0
      %1682 = vmatpush1.bf16.msra.mxu0 0
      %1683 = vmatprep.subr.bf16.mxu0 0
      %1684 = vmatpush1.bf16.msra.mxu0 0
      %1685 = vmatprep.subr.bf16.mxu0 0
      %1686 = vmatpush1.bf16.msra.mxu0 0
      %1687 = vmatprep.subr.bf16.mxu0 0
      %1688 = vmatpush1.bf16.msra.mxu0 0
      %1689 = vmatprep.subr.bf16.mxu0 0
      %1690 = vmatpush1.bf16.msra.mxu0 0
      %1691 = vmatprep.subr.bf16.mxu0 0
      %1692 = vmatpush1.bf16.msra.mxu0 0
      %1693 = vmatprep.subr.bf16.mxu0 0
      %1694 = vmatpush1.bf16.msra.mxu0 0
      %1695 = vmatprep.mubr.bf16.mxu0 0
      %1696 = vmatmul.mubr.bf16.gmra.mrb[0].mxu0 %v1582
      %v1697 = vpop.f32.mrb[0].mxu0
      %v1698 = vadd.f32 %v786, %v1697
      %v1699 = vpop.f32.mrb[0].mxu0
      %v1700 = vadd.f32 %v787, %v1699
      %v1701 = vpop.f32.mrb[0].mxu0
      %v1702 = vadd.f32 %v790, %v1701
      %v1703 = vpop.f32.mrb[0].mxu0
      %v1704 = vadd.f32 %v791, %v1703
      %1705 = vmatprep.mubr.bf16.mxu0 0
      %1706 = vmatmul.mubr.bf16.gmra.mrb[0].mxu0 %v1583
      %v1707 = vpop.f32.mrb[0].mxu0
      %v1708 = vadd.f32 %v794, %v1707
      %v1709 = vpop.f32.mrb[0].mxu0
      %v1710 = vadd.f32 %v795, %v1709
      %v1711 = vpop.f32.mrb[0].mxu0
      %v1712 = vadd.f32 %v798, %v1711
      %v1713 = vpop.f32.mrb[0].mxu0
      %v1714 = vadd.f32 %v799, %v1713
      %1715 = vmatprep.mubr.bf16.mxu0 0
      %1716 = vmatmul.mubr.bf16.gmra.mrb[0].mxu0 %v1584
      %v1717 = vpop.f32.mrb[0].mxu0
      %v1718 = vadd.f32 %v802, %v1717
      %v1719 = vpop.f32.mrb[0].mxu0
      %v1720 = vadd.f32 %v803, %v1719
      %v1721 = vpop.f32.mrb[0].mxu0
      %v1722 = vadd.f32 %v806, %v1721
      %v1723 = vpop.f32.mrb[0].mxu0
      %v1724 = vadd.f32 %v807, %v1723
      %1725 = vmatprep.mubr.bf16.mxu0 0
      %1726 = vmatmul.mubr.bf16.gmra.mrb[0].mxu0 %v1585
      %v1727 = vpop.f32.mrb[0].mxu0
      %v1728 = vadd.f32 %v810, %v1727
      %v1729 = vpop.f32.mrb[0].mxu0
      %v1730 = vadd.f32 %v811, %v1729
      %v1731 = vpop.f32.mrb[0].mxu0
      %v1732 = vadd.f32 %v814, %v1731
      %v1733 = vpop.f32.mrb[0].mxu0
      %v1734 = vadd.f32 %v815, %v1733
      %1735 = vdwg.mxu0
      %v1736 = vmax.f32 %v1397, %v1625
      %v1737 = vmax.f32 %v1398, %v1627
      %v1738 = vmax.f32 %v1399, %v1698
      %v1739 = vmax.f32 %v1400, %v1700
      %v1740 = vmax.f32 %v1401, %v1629
      %v1741 = vmax.f32 %v1402, %v1631
      %v1742 = vmax.f32 %v1403, %v1702
      %v1743 = vmax.f32 %v1404, %v1704
      %v1744 = vmax.f32 %v1405, %v1635
      %v1745 = vmax.f32 %v1406, %v1637
      %v1746 = vmax.f32 %v1407, %v1708
      %v1747 = vmax.f32 %v1408, %v1710
      %v1748 = vmax.f32 %v1409, %v1639
      %v1749 = vmax.f32 %v1410, %v1641
      %v1750 = vmax.f32 %v1411, %v1712
      %v1751 = vmax.f32 %v1412, %v1714
      %v1752 = vmax.f32 %v1413, %v1645
      %v1753 = vmax.f32 %v1414, %v1647
      %v1754 = vmax.f32 %v1415, %v1718
      %v1755 = vmax.f32 %v1416, %v1720
      %v1756 = vmax.f32 %v1417, %v1649
      %v1757 = vmax.f32 %v1418, %v1651
      %v1758 = vmax.f32 %v1419, %v1722
      %v1759 = vmax.f32 %v1420, %v1724
      %v1760 = vmax.f32 %v1421, %v1655
      %v1761 = vmax.f32 %v1422, %v1657
      %v1762 = vmax.f32 %v1423, %v1728
      %v1763 = vmax.f32 %v1424, %v1730
      %v1764 = vmax.f32 %v1425, %v1659
      %v1765 = vmax.f32 %v1426, %v1661
      %v1766 = vmax.f32 %v1427, %v1732
      %v1767 = vmax.f32 %v1428, %v1734
      %v1768 = vmin.f32 %v1429, %v1625
      %v1769 = vmin.f32 %v1430, %v1627
      %v1770 = vmin.f32 %v1431, %v1698
      %v1771 = vmin.f32 %v1432, %v1700
      %v1772 = vmin.f32 %v1433, %v1629
      %v1773 = vmin.f32 %v1434, %v1631
      %v1774 = vmin.f32 %v1435, %v1702
      %v1775 = vmin.f32 %v1436, %v1704
      %v1776 = vmin.f32 %v1437, %v1635
      %v1777 = vmin.f32 %v1438, %v1637
      %v1778 = vmin.f32 %v1439, %v1708
      %v1779 = vmin.f32 %v1440, %v1710
      %v1780 = vmin.f32 %v1441, %v1639
      %v1781 = vmin.f32 %v1442, %v1641
      %v1782 = vmin.f32 %v1443, %v1712
      %v1783 = vmin.f32 %v1444, %v1714
      %v1784 = vmin.f32 %v1445, %v1645
      %v1785 = vmin.f32 %v1446, %v1647
      %v1786 = vmin.f32 %v1447, %v1718
      %v1787 = vmin.f32 %v1448, %v1720
      %v1788 = vmin.f32 %v1449, %v1649
      %v1789 = vmin.f32 %v1450, %v1651
      %v1790 = vmin.f32 %v1451, %v1722
      %v1791 = vmin.f32 %v1452, %v1724
      %v1792 = vmin.f32 %v1453, %v1655
      %v1793 = vmin.f32 %v1454, %v1657
      %v1794 = vmin.f32 %v1455, %v1728
      %v1795 = vmin.f32 %v1456, %v1730
      %v1796 = vmin.f32 %v1457, %v1659
      %v1797 = vmin.f32 %v1458, %v1661
      %v1798 = vmin.f32 %v1459, %v1732
      %v1799 = vmin.f32 %v1460, %v1734
      %v1800 = vadd.f32 %v1461, %v1625
      %v1801 = vadd.f32 %v1462, %v1627
      %v1802 = vadd.f32 %v1463, %v1698
      %v1803 = vadd.f32 %v1464, %v1700
      %v1804 = vadd.f32 %v1465, %v1629
      %v1805 = vadd.f32 %v1466, %v1631
      %v1806 = vadd.f32 %v1467, %v1702
      %v1807 = vadd.f32 %v1468, %v1704
      %v1808 = vadd.f32 %v1469, %v1635
      %v1809 = vadd.f32 %v1470, %v1637
      %v1810 = vadd.f32 %v1471, %v1708
      %v1811 = vadd.f32 %v1472, %v1710
      %v1812 = vadd.f32 %v1473, %v1639
      %v1813 = vadd.f32 %v1474, %v1641
      %v1814 = vadd.f32 %v1475, %v1712
      %v1815 = vadd.f32 %v1476, %v1714
      %v1816 = vadd.f32 %v1477, %v1645
      %v1817 = vadd.f32 %v1478, %v1647
      %v1818 = vadd.f32 %v1479, %v1718
      %v1819 = vadd.f32 %v1480, %v1720
      %v1820 = vadd.f32 %v1481, %v1649
      %v1821 = vadd.f32 %v1482, %v1651
      %v1822 = vadd.f32 %v1483, %v1722
      %v1823 = vadd.f32 %v1484, %v1724
      %v1824 = vadd.f32 %v1485, %v1655
      %v1825 = vadd.f32 %v1486, %v1657
      %v1826 = vadd.f32 %v1487, %v1728
      %v1827 = vadd.f32 %v1488, %v1730
      %v1828 = vadd.f32 %v1489, %v1659
      %v1829 = vadd.f32 %v1490, %v1661
      %v1830 = vadd.f32 %v1491, %v1732
      %v1831 = vadd.f32 %v1492, %v1734
      %v1832 = vmul.f32 %v1625, %v1625
      %v1833 = vmul.f32 %v1627, %v1627
      %v1834 = vmul.f32 %v1698, %v1698
      %v1835 = vmul.f32 %v1700, %v1700
      %v1836 = vmul.f32 %v1629, %v1629
      %v1837 = vmul.f32 %v1631, %v1631
      %v1838 = vmul.f32 %v1702, %v1702
      %v1839 = vmul.f32 %v1704, %v1704
      %v1840 = vmul.f32 %v1635, %v1635
      %v1841 = vmul.f32 %v1637, %v1637
      %v1842 = vmul.f32 %v1708, %v1708
      %v1843 = vmul.f32 %v1710, %v1710
      %v1844 = vmul.f32 %v1639, %v1639
      %v1845 = vmul.f32 %v1641, %v1641
      %v1846 = vmul.f32 %v1712, %v1712
      %v1847 = vmul.f32 %v1714, %v1714
      %v1848 = vmul.f32 %v1645, %v1645
      %v1849 = vmul.f32 %v1647, %v1647
      %v1850 = vmul.f32 %v1718, %v1718
      %v1851 = vmul.f32 %v1720, %v1720
      %v1852 = vmul.f32 %v1649, %v1649
      %v1853 = vmul.f32 %v1651, %v1651
      %v1854 = vmul.f32 %v1722, %v1722
      %v1855 = vmul.f32 %v1724, %v1724
      %v1856 = vmul.f32 %v1655, %v1655
      %v1857 = vmul.f32 %v1657, %v1657
      %v1858 = vmul.f32 %v1728, %v1728
      %v1859 = vmul.f32 %v1730, %v1730
      %v1860 = vmul.f32 %v1659, %v1659
      %v1861 = vmul.f32 %v1661, %v1661
      %v1862 = vmul.f32 %v1732, %v1732
      %v1863 = vmul.f32 %v1734, %v1734
      %v1864 = vadd.f32 %v1525, %v1832
      %v1865 = vadd.f32 %v1526, %v1833
      %v1866 = vadd.f32 %v1527, %v1834
      %v1867 = vadd.f32 %v1528, %v1835
      %v1868 = vadd.f32 %v1529, %v1836
      %v1869 = vadd.f32 %v1530, %v1837
      %v1870 = vadd.f32 %v1531, %v1838
      %v1871 = vadd.f32 %v1532, %v1839
      %v1872 = vadd.f32 %v1533, %v1840
      %v1873 = vadd.f32 %v1534, %v1841
      %v1874 = vadd.f32 %v1535, %v1842
      %v1875 = vadd.f32 %v1536, %v1843
      %v1876 = vadd.f32 %v1537, %v1844
      %v1877 = vadd.f32 %v1538, %v1845
      %v1878 = vadd.f32 %v1539, %v1846
      %v1879 = vadd.f32 %v1540, %v1847
      %v1880 = vadd.f32 %v1541, %v1848
      %v1881 = vadd.f32 %v1542, %v1849
      %v1882 = vadd.f32 %v1543, %v1850
      %v1883 = vadd.f32 %v1544, %v1851
      %v1884 = vadd.f32 %v1545, %v1852
      %v1885 = vadd.f32 %v1546, %v1853
      %v1886 = vadd.f32 %v1547, %v1854
      %v1887 = vadd.f32 %v1548, %v1855
      %v1888 = vadd.f32 %v1549, %v1856
      %v1889 = vadd.f32 %v1550, %v1857
      %v1890 = vadd.f32 %v1551, %v1858
      %v1891 = vadd.f32 %v1552, %v1859
      %v1892 = vadd.f32 %v1553, %v1860
      %v1893 = vadd.f32 %v1554, %v1861
      %v1894 = vadd.f32 %v1555, %v1862
      %v1895 = vadd.f32 %v1556, %v1863
      %s1896 = scalar_lea.vmem %s350, 96
      %v1897 = vld [vmem:[%s1896] sm:$0xf]
      %v1898 = vld [vmem:[%s1896 + $0x4] sm:$0xf]
      %v1899 = vld [vmem:[%s1896 + $0x8] sm:$0xf]
      %v1900 = vld [vmem:[%s1896 + $0xc] sm:$0xf]
      %v1901 = vld [vmem:[%s1896 + $0x10] sm:$0xf]
      %v1902 = vld [vmem:[%s1896 + $0x14] sm:$0xf]
      %v1903 = vld [vmem:[%s1896 + $0x18] sm:$0xf]
      %v1904 = vld [vmem:[%s1896 + $0x1c] sm:$0xf]
      %v1913 = vunpack.c.l.b16 %v1897
      %v1914 = vunpack.c.l.b16 %v1898
      %v1915 = vunpack.c.l.b16 %v1899
      %v1916 = vunpack.c.l.b16 %v1900
      %v1917 = vunpack.c.l.b16 %v1901
      %v1918 = vunpack.c.l.b16 %v1902
      %v1919 = vunpack.c.l.b16 %v1903
      %v1920 = vunpack.c.l.b16 %v1904
      %v1921 = vpack.c.b16 %v1914, %v1913
      %v1922 = vpack.c.b16 %v1916, %v1915
      %v1923 = vpack.c.b16 %v1918, %v1917
      %v1924 = vpack.c.b16 %v1920, %v1919
      %1929 = vmatprep.subr.bf16.mxu0 %v977
      %1930 = vmatpush1.bf16.msra.mxu0 %v976
      %1931 = vmatprep.subr.bf16.mxu0 %v981
      %1932 = vmatpush1.bf16.msra.mxu0 %v980
      %1933 = vmatprep.subr.bf16.mxu0 %v985
      %1934 = vmatpush1.bf16.msra.mxu0 %v984
      %1935 = vmatprep.subr.bf16.mxu0 %v989
      %1936 = vmatpush1.bf16.msra.mxu0 %v988
      %1937 = vmatprep.subr.bf16.mxu0 %v993
      %1938 = vmatpush1.bf16.msra.mxu0 %v992
      %1939 = vmatprep.subr.bf16.mxu0 %v997
      %1940 = vmatpush1.bf16.msra.mxu0 %v996
      %1941 = vmatprep.subr.bf16.mxu0 %v1001
      %1942 = vmatpush1.bf16.msra.mxu0 %v1000
      %1943 = vmatprep.subr.bf16.mxu0 %v1005
      %1944 = vmatpush1.bf16.msra.mxu0 %v1004
      %1945 = vmatprep.subr.bf16.mxu0 0
      %1946 = vmatpush1.bf16.msra.mxu0 0
      %1947 = vmatprep.subr.bf16.mxu0 0
      %1948 = vmatpush1.bf16.msra.mxu0 0
      %1949 = vmatprep.subr.bf16.mxu0 0
      %1950 = vmatpush1.bf16.msra.mxu0 0
      %1951 = vmatprep.subr.bf16.mxu0 0
      %1952 = vmatpush1.bf16.msra.mxu0 0
      %1953 = vmatprep.subr.bf16.mxu0 0
      %1954 = vmatpush1.bf16.msra.mxu0 0
      %1955 = vmatprep.subr.bf16.mxu0 0
      %1956 = vmatpush1.bf16.msra.mxu0 0
      %1957 = vmatprep.subr.bf16.mxu0 0
      %1958 = vmatpush1.bf16.msra.mxu0 0
      %1959 = vmatprep.subr.bf16.mxu0 0
      %1960 = vmatpush1.bf16.msra.mxu0 0
      %1961 = vmatprep.mubr.bf16.mxu0 0
      %1962 = vmatmul.mubr.bf16.gmra.mrb[0].mxu0 %v1921
      %v1963 = vpop.f32.mrb[0].mxu0
      %v1964 = vadd.f32 %v784, %v1963
      %v1965 = vpop.f32.mrb[0].mxu0
      %v1966 = vadd.f32 %v785, %v1965
      %v1967 = vpop.f32.mrb[0].mxu0
      %v1968 = vadd.f32 %v788, %v1967
      %v1969 = vpop.f32.mrb[0].mxu0
      %v1970 = vadd.f32 %v789, %v1969
      %1971 = vmatprep.mubr.bf16.mxu0 0
      %1972 = vmatmul.mubr.bf16.gmra.mrb[0].mxu0 %v1922
      %v1973 = vpop.f32.mrb[0].mxu0
      %v1974 = vadd.f32 %v792, %v1973
      %v1975 = vpop.f32.mrb[0].mxu0
      %v1976 = vadd.f32 %v793, %v1975
      %v1977 = vpop.f32.mrb[0].mxu0
      %v1978 = vadd.f32 %v796, %v1977
      %v1979 = vpop.f32.mrb[0].mxu0
      %v1980 = vadd.f32 %v797, %v1979
      %1981 = vmatprep.mubr.bf16.mxu0 0
      %1982 = vmatmul.mubr.bf16.gmra.mrb[0].mxu0 %v1923
      %v1983 = vpop.f32.mrb[0].mxu0
      %v1984 = vadd.f32 %v800, %v1983
      %v1985 = vpop.f32.mrb[0].mxu0
      %v1986 = vadd.f32 %v801, %v1985
      %v1987 = vpop.f32.mrb[0].mxu0
      %v1988 = vadd.f32 %v804, %v1987
      %v1989 = vpop.f32.mrb[0].mxu0
      %v1990 = vadd.f32 %v805, %v1989
      %1991 = vmatprep.mubr.bf16.mxu0 0
      %1992 = vmatmul.mubr.bf16.gmra.mrb[0].mxu0 %v1924
      %v1993 = vpop.f32.mrb[0].mxu0
      %v1994 = vadd.f32 %v808, %v1993
      %v1995 = vpop.f32.mrb[0].mxu0
      %v1996 = vadd.f32 %v809, %v1995
      %v1997 = vpop.f32.mrb[0].mxu0
      %v1998 = vadd.f32 %v812, %v1997
      %v1999 = vpop.f32.mrb[0].mxu0
      %v2000 = vadd.f32 %v813, %v1999
      %2001 = vdwg.mxu0
      %2002 = vmatprep.subr.bf16.mxu0 %v979
      %2003 = vmatpush1.bf16.msra.mxu0 %v978
      %2004 = vmatprep.subr.bf16.mxu0 %v983
      %2005 = vmatpush1.bf16.msra.mxu0 %v982
      %2006 = vmatprep.subr.bf16.mxu0 %v987
      %2007 = vmatpush1.bf16.msra.mxu0 %v986
      %2008 = vmatprep.subr.bf16.mxu0 %v991
      %2009 = vmatpush1.bf16.msra.mxu0 %v990
      %2010 = vmatprep.subr.bf16.mxu0 %v995
      %2011 = vmatpush1.bf16.msra.mxu0 %v994
      %2012 = vmatprep.subr.bf16.mxu0 %v999
      %2013 = vmatpush1.bf16.msra.mxu0 %v998
      %2014 = vmatprep.subr.bf16.mxu0 %v1003
      %2015 = vmatpush1.bf16.msra.mxu0 %v1002
      %2016 = vmatprep.subr.bf16.mxu0 %v1007
      %2017 = vmatpush1.bf16.msra.mxu0 %v1006
      %2018 = vmatprep.subr.bf16.mxu0 0
      %2019 = vmatpush1.bf16.msra.mxu0 0
      %2020 = vmatprep.subr.bf16.mxu0 0
      %2021 = vmatpush1.bf16.msra.mxu0 0
      %2022 = vmatprep.subr.bf16.mxu0 0
      %2023 = vmatpush1.bf16.msra.mxu0 0
      %2024 = vmatprep.subr.bf16.mxu0 0
      %2025 = vmatpush1.bf16.msra.mxu0 0
      %2026 = vmatprep.subr.bf16.mxu0 0
      %2027 = vmatpush1.bf16.msra.mxu0 0
      %2028 = vmatprep.subr.bf16.mxu0 0
      %2029 = vmatpush1.bf16.msra.mxu0 0
      %2030 = vmatprep.subr.bf16.mxu0 0
      %2031 = vmatpush1.bf16.msra.mxu0 0
      %2032 = vmatprep.subr.bf16.mxu0 0
      %2033 = vmatpush1.bf16.msra.mxu0 0
      %2034 = vmatprep.mubr.bf16.mxu0 0
      %2035 = vmatmul.mubr.bf16.gmra.mrb[0].mxu0 %v1921
      %v2036 = vpop.f32.mrb[0].mxu0
      %v2037 = vadd.f32 %v786, %v2036
      %v2038 = vpop.f32.mrb[0].mxu0
      %v2039 = vadd.f32 %v787, %v2038
      %v2040 = vpop.f32.mrb[0].mxu0
      %v2041 = vadd.f32 %v790, %v2040
      %v2042 = vpop.f32.mrb[0].mxu0
      %v2043 = vadd.f32 %v791, %v2042
      %2044 = vmatprep.mubr.bf16.mxu0 0
      %2045 = vmatmul.mubr.bf16.gmra.mrb[0].mxu0 %v1922
      %v2046 = vpop.f32.mrb[0].mxu0
      %v2047 = vadd.f32 %v794, %v2046
      %v2048 = vpop.f32.mrb[0].mxu0
      %v2049 = vadd.f32 %v795, %v2048
      %v2050 = vpop.f32.mrb[0].mxu0
      %v2051 = vadd.f32 %v798, %v2050
      %v2052 = vpop.f32.mrb[0].mxu0
      %v2053 = vadd.f32 %v799, %v2052
      %2054 = vmatprep.mubr.bf16.mxu0 0
      %2055 = vmatmul.mubr.bf16.gmra.mrb[0].mxu0 %v1923
      %v2056 = vpop.f32.mrb[0].mxu0
      %v2057 = vadd.f32 %v802, %v2056
      %v2058 = vpop.f32.mrb[0].mxu0
      %v2059 = vadd.f32 %v803, %v2058
      %v2060 = vpop.f32.mrb[0].mxu0
      %v2061 = vadd.f32 %v806, %v2060
      %v2062 = vpop.f32.mrb[0].mxu0
      %v2063 = vadd.f32 %v807, %v2062
      %2064 = vmatprep.mubr.bf16.mxu0 0
      %2065 = vmatmul.mubr.bf16.gmra.mrb[0].mxu0 %v1924
      %v2066 = vpop.f32.mrb[0].mxu0
      %v2067 = vadd.f32 %v810, %v2066
      %v2068 = vpop.f32.mrb[0].mxu0
      %v2069 = vadd.f32 %v811, %v2068
      %v2070 = vpop.f32.mrb[0].mxu0
      %v2071 = vadd.f32 %v814, %v2070
      %v2072 = vpop.f32.mrb[0].mxu0
      %v2073 = vadd.f32 %v815, %v2072
      %2074 = vdwg.mxu0
      %v2075 = vmax.f32 %v1736, %v1964
      %v2076 = vmax.f32 %v1737, %v1966
      %v2077 = vmax.f32 %v1738, %v2037
      %v2078 = vmax.f32 %v1739, %v2039
      %v2079 = vmax.f32 %v1740, %v1968
      %v2080 = vmax.f32 %v1741, %v1970
      %v2081 = vmax.f32 %v1742, %v2041
      %v2082 = vmax.f32 %v1743, %v2043
      %v2083 = vmax.f32 %v1744, %v1974
      %v2084 = vmax.f32 %v1745, %v1976
      %v2085 = vmax.f32 %v1746, %v2047
      %v2086 = vmax.f32 %v1747, %v2049
      %v2087 = vmax.f32 %v1748, %v1978
      %v2088 = vmax.f32 %v1749, %v1980
      %v2089 = vmax.f32 %v1750, %v2051
      %v2090 = vmax.f32 %v1751, %v2053
      %v2091 = vmax.f32 %v1752, %v1984
      %v2092 = vmax.f32 %v1753, %v1986
      %v2093 = vmax.f32 %v1754, %v2057
      %v2094 = vmax.f32 %v1755, %v2059
      %v2095 = vmax.f32 %v1756, %v1988
      %v2096 = vmax.f32 %v1757, %v1990
      %v2097 = vmax.f32 %v1758, %v2061
      %v2098 = vmax.f32 %v1759, %v2063
      %v2099 = vmax.f32 %v1760, %v1994
      %v2100 = vmax.f32 %v1761, %v1996
      %v2101 = vmax.f32 %v1762, %v2067
      %v2102 = vmax.f32 %v1763, %v2069
      %v2103 = vmax.f32 %v1764, %v1998
      %v2104 = vmax.f32 %v1765, %v2000
      %v2105 = vmax.f32 %v1766, %v2071
      %v2106 = vmax.f32 %v1767, %v2073
      %v2107 = vmin.f32 %v1768, %v1964
      %v2108 = vmin.f32 %v1769, %v1966
      %v2109 = vmin.f32 %v1770, %v2037
      %v2110 = vmin.f32 %v1771, %v2039
      %v2111 = vmin.f32 %v1772, %v1968
      %v2112 = vmin.f32 %v1773, %v1970
      %v2113 = vmin.f32 %v1774, %v2041
      %v2114 = vmin.f32 %v1775, %v2043
      %v2115 = vmin.f32 %v1776, %v1974
      %v2116 = vmin.f32 %v1777, %v1976
      %v2117 = vmin.f32 %v1778, %v2047
      %v2118 = vmin.f32 %v1779, %v2049
      %v2119 = vmin.f32 %v1780, %v1978
      %v2120 = vmin.f32 %v1781, %v1980
      %v2121 = vmin.f32 %v1782, %v2051
      %v2122 = vmin.f32 %v1783, %v2053
      %v2123 = vmin.f32 %v1784, %v1984
      %v2124 = vmin.f32 %v1785, %v1986
      %v2125 = vmin.f32 %v1786, %v2057
      %v2126 = vmin.f32 %v1787, %v2059
      %v2127 = vmin.f32 %v1788, %v1988
      %v2128 = vmin.f32 %v1789, %v1990
      %v2129 = vmin.f32 %v1790, %v2061
      %v2130 = vmin.f32 %v1791, %v2063
      %v2131 = vmin.f32 %v1792, %v1994
      %v2132 = vmin.f32 %v1793, %v1996
      %v2133 = vmin.f32 %v1794, %v2067
      %v2134 = vmin.f32 %v1795, %v2069
      %v2135 = vmin.f32 %v1796, %v1998
      %v2136 = vmin.f32 %v1797, %v2000
      %v2137 = vmin.f32 %v1798, %v2071
      %v2138 = vmin.f32 %v1799, %v2073
      %v2139 = vadd.f32 %v1800, %v1964
      %v2140 = vadd.f32 %v1801, %v1966
      %v2141 = vadd.f32 %v1802, %v2037
      %v2142 = vadd.f32 %v1803, %v2039
      %v2143 = vadd.f32 %v1804, %v1968
      %v2144 = vadd.f32 %v1805, %v1970
      %v2145 = vadd.f32 %v1806, %v2041
      %v2146 = vadd.f32 %v1807, %v2043
      %v2147 = vadd.f32 %v1808, %v1974
      %v2148 = vadd.f32 %v1809, %v1976
      %v2149 = vadd.f32 %v1810, %v2047
      %v2150 = vadd.f32 %v1811, %v2049
      %v2151 = vadd.f32 %v1812, %v1978
      %v2152 = vadd.f32 %v1813, %v1980
      %v2153 = vadd.f32 %v1814, %v2051
      %v2154 = vadd.f32 %v1815, %v2053
      %v2155 = vadd.f32 %v1816, %v1984
      %v2156 = vadd.f32 %v1817, %v1986
      %v2157 = vadd.f32 %v1818, %v2057
      %v2158 = vadd.f32 %v1819, %v2059
      %v2159 = vadd.f32 %v1820, %v1988
      %v2160 = vadd.f32 %v1821, %v1990
      %v2161 = vadd.f32 %v1822, %v2061
      %v2162 = vadd.f32 %v1823, %v2063
      %v2163 = vadd.f32 %v1824, %v1994
      %v2164 = vadd.f32 %v1825, %v1996
      %v2165 = vadd.f32 %v1826, %v2067
      %v2166 = vadd.f32 %v1827, %v2069
      %v2167 = vadd.f32 %v1828, %v1998
      %v2168 = vadd.f32 %v1829, %v2000
      %v2169 = vadd.f32 %v1830, %v2071
      %v2170 = vadd.f32 %v1831, %v2073
      %v2171 = vmul.f32 %v1964, %v1964
      %v2172 = vmul.f32 %v1966, %v1966
      %v2173 = vmul.f32 %v2037, %v2037
      %v2174 = vmul.f32 %v2039, %v2039
      %v2175 = vmul.f32 %v1968, %v1968
      %v2176 = vmul.f32 %v1970, %v1970
      %v2177 = vmul.f32 %v2041, %v2041
      %v2178 = vmul.f32 %v2043, %v2043
      %v2179 = vmul.f32 %v1974, %v1974
      %v2180 = vmul.f32 %v1976, %v1976
      %v2181 = vmul.f32 %v2047, %v2047
      %v2182 = vmul.f32 %v2049, %v2049
      %v2183 = vmul.f32 %v1978, %v1978
      %v2184 = vmul.f32 %v1980, %v1980
      %v2185 = vmul.f32 %v2051, %v2051
      %v2186 = vmul.f32 %v2053, %v2053
      %v2187 = vmul.f32 %v1984, %v1984
      %v2188 = vmul.f32 %v1986, %v1986
      %v2189 = vmul.f32 %v2057, %v2057
      %v2190 = vmul.f32 %v2059, %v2059
      %v2191 = vmul.f32 %v1988, %v1988
      %v2192 = vmul.f32 %v1990, %v1990
      %v2193 = vmul.f32 %v2061, %v2061
      %v2194 = vmul.f32 %v2063, %v2063
      %v2195 = vmul.f32 %v1994, %v1994
      %v2196 = vmul.f32 %v1996, %v1996
      %v2197 = vmul.f32 %v2067, %v2067
      %v2198 = vmul.f32 %v2069, %v2069
      %v2199 = vmul.f32 %v1998, %v1998
      %v2200 = vmul.f32 %v2000, %v2000
      %v2201 = vmul.f32 %v2071, %v2071
      %v2202 = vmul.f32 %v2073, %v2073
      %v2203 = vadd.f32 %v1864, %v2171
      %v2204 = vadd.f32 %v1865, %v2172
      %v2205 = vadd.f32 %v1866, %v2173
      %v2206 = vadd.f32 %v1867, %v2174
      %v2207 = vadd.f32 %v1868, %v2175
      %v2208 = vadd.f32 %v1869, %v2176
      %v2209 = vadd.f32 %v1870, %v2177
      %v2210 = vadd.f32 %v1871, %v2178
      %v2211 = vadd.f32 %v1872, %v2179
      %v2212 = vadd.f32 %v1873, %v2180
      %v2213 = vadd.f32 %v1874, %v2181
      %v2214 = vadd.f32 %v1875, %v2182
      %v2215 = vadd.f32 %v1876, %v2183
      %v2216 = vadd.f32 %v1877, %v2184
      %v2217 = vadd.f32 %v1878, %v2185
      %v2218 = vadd.f32 %v1879, %v2186
      %v2219 = vadd.f32 %v1880, %v2187
      %v2220 = vadd.f32 %v1881, %v2188
      %v2221 = vadd.f32 %v1882, %v2189
      %v2222 = vadd.f32 %v1883, %v2190
      %v2223 = vadd.f32 %v1884, %v2191
      %v2224 = vadd.f32 %v1885, %v2192
      %v2225 = vadd.f32 %v1886, %v2193
      %v2226 = vadd.f32 %v1887, %v2194
      %v2227 = vadd.f32 %v1888, %v2195
      %v2228 = vadd.f32 %v1889, %v2196
      %v2229 = vadd.f32 %v1890, %v2197
      %v2230 = vadd.f32 %v1891, %v2198
      %v2231 = vadd.f32 %v1892, %v2199
      %v2232 = vadd.f32 %v1893, %v2200
      %v2233 = vadd.f32 %v1894, %v2201
      %v2234 = vadd.f32 %v1895, %v2202
      // Predicated region
      $region41: #{up_block_forward.6} parent=35 // pred_check
        %p2235 = pneg %p378
      $region42: #{up_block_forward.6} parent=35 // pred_check_branch
        %2237 = sbr.rel (%p2235) target = $region44
      $region43: #{up_block_forward.6} parent=35 // pred_region
        %2238 = vst [vmem:[%s358] sm:$0xff] %v2075
        %2239 = vst [vmem:[%s358 + $0x8] sm:$0xff] %v2076
        %2240 = vst [vmem:[%s358 + $0x10] sm:$0xff] %v2077
        %2241 = vst [vmem:[%s358 + $0x18] sm:$0xff] %v2078
        %2242 = vst [vmem:[%s358 + $0x20] sm:$0xff] %v2079
        %2243 = vst [vmem:[%s358 + $0x28] sm:$0xff] %v2080
        %2244 = vst [vmem:[%s358 + $0x30] sm:$0xff] %v2081
        %2245 = vst [vmem:[%s358 + $0x38] sm:$0xff] %v2082
        %2246 = vst [vmem:[%s358 + $0x40] sm:$0xff] %v2083
        %2247 = vst [vmem:[%s358 + $0x48] sm:$0xff] %v2084
        %2248 = vst [vmem:[%s358 + $0x50] sm:$0xff] %v2085
        %2249 = vst [vmem:[%s358 + $0x58] sm:$0xff] %v2086
        %2250 = vst [vmem:[%s358 + $0x60] sm:$0xff] %v2087
        %2251 = vst [vmem:[%s358 + $0x68] sm:$0xff] %v2088
        %2252 = vst [vmem:[%s358 + $0x70] sm:$0xff] %v2089
        %2253 = vst [vmem:[%s358 + $0x78] sm:$0xff] %v2090
        %2254 = vst [vmem:[%s358 + $0x80] sm:$0xff] %v2091
        %2255 = vst [vmem:[%s358 + $0x88] sm:$0xff] %v2092
        %2256 = vst [vmem:[%s358 + $0x90] sm:$0xff] %v2093
        %2257 = vst [vmem:[%s358 + $0x98] sm:$0xff] %v2094
        %2258 = vst [vmem:[%s358 + $0xa0] sm:$0xff] %v2095
        %2259 = vst [vmem:[%s358 + $0xa8] sm:$0xff] %v2096
        %2260 = vst [vmem:[%s358 + $0xb0] sm:$0xff] %v2097
        %2261 = vst [vmem:[%s358 + $0xb8] sm:$0xff] %v2098
        %2262 = vst [vmem:[%s358 + $0xc0] sm:$0xff] %v2099
        %2263 = vst [vmem:[%s358 + $0xc8] sm:$0xff] %v2100
        %2264 = vst [vmem:[%s358 + $0xd0] sm:$0xff] %v2101
        %2265 = vst [vmem:[%s358 + $0xd8] sm:$0xff] %v2102
        %2266 = vst [vmem:[%s358 + $0xe0] sm:$0xff] %v2103
        %2267 = vst [vmem:[%s358 + $0xe8] sm:$0xff] %v2104
        %2268 = vst [vmem:[%s358 + $0xf0] sm:$0xff] %v2105
        %2269 = vst [vmem:[%s358 + $0xf8] sm:$0xff] %v2106
        %2270 = vst [vmem:[%s365] sm:$0xff] %v2107
        %2271 = vst [vmem:[%s365 + $0x8] sm:$0xff] %v2108
        %2272 = vst [vmem:[%s365 + $0x10] sm:$0xff] %v2109
        %2273 = vst [vmem:[%s365 + $0x18] sm:$0xff] %v2110
        %2274 = vst [vmem:[%s365 + $0x20] sm:$0xff] %v2111
        %2275 = vst [vmem:[%s365 + $0x28] sm:$0xff] %v2112
        %2276 = vst [vmem:[%s365 + $0x30] sm:$0xff] %v2113
        %2277 = vst [vmem:[%s365 + $0x38] sm:$0xff] %v2114
        %2278 = vst [vmem:[%s365 + $0x40] sm:$0xff] %v2115
        %2279 = vst [vmem:[%s365 + $0x48] sm:$0xff] %v2116
        %2280 = vst [vmem:[%s365 + $0x50] sm:$0xff] %v2117
        %2281 = vst [vmem:[%s365 + $0x58] sm:$0xff] %v2118
        %2282 = vst [vmem:[%s365 + $0x60] sm:$0xff] %v2119
        %2283 = vst [vmem:[%s365 + $0x68] sm:$0xff] %v2120
        %2284 = vst [vmem:[%s365 + $0x70] sm:$0xff] %v2121
        %2285 = vst [vmem:[%s365 + $0x78] sm:$0xff] %v2122
        %2286 = vst [vmem:[%s365 + $0x80] sm:$0xff] %v2123
        %2287 = vst [vmem:[%s365 + $0x88] sm:$0xff] %v2124
        %2288 = vst [vmem:[%s365 + $0x90] sm:$0xff] %v2125
        %2289 = vst [vmem:[%s365 + $0x98] sm:$0xff] %v2126
        %2290 = vst [vmem:[%s365 + $0xa0] sm:$0xff] %v2127
        %2291 = vst [vmem:[%s365 + $0xa8] sm:$0xff] %v2128
        %2292 = vst [vmem:[%s365 + $0xb0] sm:$0xff] %v2129
        %2293 = vst [vmem:[%s365 + $0xb8] sm:$0xff] %v2130
        %2294 = vst [vmem:[%s365 + $0xc0] sm:$0xff] %v2131
        %2295 = vst [vmem:[%s365 + $0xc8] sm:$0xff] %v2132
        %2296 = vst [vmem:[%s365 + $0xd0] sm:$0xff] %v2133
        %2297 = vst [vmem:[%s365 + $0xd8] sm:$0xff] %v2134
        %2298 = vst [vmem:[%s365 + $0xe0] sm:$0xff] %v2135
        %2299 = vst [vmem:[%s365 + $0xe8] sm:$0xff] %v2136
        %2300 = vst [vmem:[%s365 + $0xf0] sm:$0xff] %v2137
        %2301 = vst [vmem:[%s365 + $0xf8] sm:$0xff] %v2138
        %2302 = vst [vmem:[#allocation3] sm:$0xff] %v2139
        %2303 = vst [vmem:[#allocation3 + $0x8] sm:$0xff] %v2140
        %2304 = vst [vmem:[#allocation3 + $0x10] sm:$0xff] %v2141
        %2305 = vst [vmem:[#allocation3 + $0x18] sm:$0xff] %v2142
        %2306 = vst [vmem:[#allocation3 + $0x20] sm:$0xff] %v2143
        %2307 = vst [vmem:[#allocation3 + $0x28] sm:$0xff] %v2144
        %2308 = vst [vmem:[#allocation3 + $0x30] sm:$0xff] %v2145
        %2309 = vst [vmem:[#allocation3 + $0x38] sm:$0xff] %v2146
        %2310 = vst [vmem:[#allocation3 + $0x40] sm:$0xff] %v2147
        %2311 = vst [vmem:[#allocation3 + $0x48] sm:$0xff] %v2148
        %2312 = vst [vmem:[#allocation3 + $0x50] sm:$0xff] %v2149
        %2313 = vst [vmem:[#allocation3 + $0x58] sm:$0xff] %v2150
        %2314 = vst [vmem:[#allocation3 + $0x60] sm:$0xff] %v2151
        %2315 = vst [vmem:[#allocation3 + $0x68] sm:$0xff] %v2152
        %2316 = vst [vmem:[#allocation3 + $0x70] sm:$0xff] %v2153
        %2317 = vst [vmem:[#allocation3 + $0x78] sm:$0xff] %v2154
        %2318 = vst [vmem:[#allocation3 + $0x80] sm:$0xff] %v2155
        %2319 = vst [vmem:[#allocation3 + $0x88] sm:$0xff] %v2156
        %2320 = vst [vmem:[#allocation3 + $0x90] sm:$0xff] %v2157
        %2321 = vst [vmem:[#allocation3 + $0x98] sm:$0xff] %v2158
        %2322 = vst [vmem:[#allocation3 + $0xa0] sm:$0xff] %v2159
        %2323 = vst [vmem:[#allocation3 + $0xa8] sm:$0xff] %v2160
        %2324 = vst [vmem:[#allocation3 + $0xb0] sm:$0xff] %v2161
        %2325 = vst [vmem:[#allocation3 + $0xb8] sm:$0xff] %v2162
        %2326 = vst [vmem:[#allocation3 + $0xc0] sm:$0xff] %v2163
        %2327 = vst [vmem:[#allocation3 + $0xc8] sm:$0xff] %v2164
        %2328 = vst [vmem:[#allocation3 + $0xd0] sm:$0xff] %v2165
        %2329 = vst [vmem:[#allocation3 + $0xd8] sm:$0xff] %v2166
        %2330 = vst [vmem:[#allocation3 + $0xe0] sm:$0xff] %v2167
        %2331 = vst [vmem:[#allocation3 + $0xe8] sm:$0xff] %v2168
        %2332 = vst [vmem:[#allocation3 + $0xf0] sm:$0xff] %v2169
        %2333 = vst [vmem:[#allocation3 + $0xf8] sm:$0xff] %v2170
        %2334 = vst [vmem:[#allocation4] sm:$0xff] %v2203
        %2335 = vst [vmem:[#allocation4 + $0x8] sm:$0xff] %v2204
        %2336 = vst [vmem:[#allocation4 + $0x10] sm:$0xff] %v2205
        %2337 = vst [vmem:[#allocation4 + $0x18] sm:$0xff] %v2206
        %2338 = vst [vmem:[#allocation4 + $0x20] sm:$0xff] %v2207
        %2339 = vst [vmem:[#allocation4 + $0x28] sm:$0xff] %v2208
        %2340 = vst [vmem:[#allocation4 + $0x30] sm:$0xff] %v2209
        %2341 = vst [vmem:[#allocation4 + $0x38] sm:$0xff] %v2210
        %2342 = vst [vmem:[#allocation4 + $0x40] sm:$0xff] %v2211
        %2343 = vst [vmem:[#allocation4 + $0x48] sm:$0xff] %v2212
        %2344 = vst [vmem:[#allocation4 + $0x50] sm:$0xff] %v2213
        %2345 = vst [vmem:[#allocation4 + $0x58] sm:$0xff] %v2214
        %2346 = vst [vmem:[#allocation4 + $0x60] sm:$0xff] %v2215
        %2347 = vst [vmem:[#allocation4 + $0x68] sm:$0xff] %v2216
        %2348 = vst [vmem:[#allocation4 + $0x70] sm:$0xff] %v2217
        %2349 = vst [vmem:[#allocation4 + $0x78] sm:$0xff] %v2218
        %2350 = vst [vmem:[#allocation4 + $0x80] sm:$0xff] %v2219
        %2351 = vst [vmem:[#allocation4 + $0x88] sm:$0xff] %v2220
        %2352 = vst [vmem:[#allocation4 + $0x90] sm:$0xff] %v2221
        %2353 = vst [vmem:[#allocation4 + $0x98] sm:$0xff] %v2222
        %2354 = vst [vmem:[#allocation4 + $0xa0] sm:$0xff] %v2223
        %2355 = vst [vmem:[#allocation4 + $0xa8] sm:$0xff] %v2224
        %2356 = vst [vmem:[#allocation4 + $0xb0] sm:$0xff] %v2225
        %2357 = vst [vmem:[#allocation4 + $0xb8] sm:$0xff] %v2226
        %2358 = vst [vmem:[#allocation4 + $0xc0] sm:$0xff] %v2227
        %2359 = vst [vmem:[#allocation4 + $0xc8] sm:$0xff] %v2228
        %2360 = vst [vmem:[#allocation4 + $0xd0] sm:$0xff] %v2229
        %2361 = vst [vmem:[#allocation4 + $0xd8] sm:$0xff] %v2230
        %2362 = vst [vmem:[#allocation4 + $0xe0] sm:$0xff] %v2231
        %2363 = vst [vmem:[#allocation4 + $0xe8] sm:$0xff] %v2232
        %2364 = vst [vmem:[#allocation4 + $0xf0] sm:$0xff] %v2233
        %2365 = vst [vmem:[#allocation4 + $0xf8] sm:$0xff] %v2234
      $region44: #{up_block_forward.6} parent=35 // pred_fallthru
        _
      %p2366 = scmp.gt.s32.totalorder %s24, 0
      // Predicated region
      $region45: #{up_block_forward.6} parent=35 // pred_check
        %p2367 = pneg %p2366
      $region46: #{up_block_forward.6} parent=35 // pred_check_branch
        %2369 = sbr.rel (%p2367) target = $region48
      $region47: #{up_block_forward.6} parent=35 // pred_region
        %v2370 = vld [vmem:[%s358] sm:$0xff]
        %v2371 = vld [vmem:[%s358 + $0x8] sm:$0xff]
        %v2372 = vld [vmem:[%s358 + $0x10] sm:$0xff]
        %v2373 = vld [vmem:[%s358 + $0x18] sm:$0xff]
        %v2374 = vld [vmem:[%s358 + $0x20] sm:$0xff]
        %v2375 = vld [vmem:[%s358 + $0x28] sm:$0xff]
        %v2376 = vld [vmem:[%s358 + $0x30] sm:$0xff]
        %v2377 = vld [vmem:[%s358 + $0x38] sm:$0xff]
        %v2378 = vld [vmem:[%s358 + $0x40] sm:$0xff]
        %v2379 = vld [vmem:[%s358 + $0x48] sm:$0xff]
        %v2380 = vld [vmem:[%s358 + $0x50] sm:$0xff]
        %v2381 = vld [vmem:[%s358 + $0x58] sm:$0xff]
        %v2382 = vld [vmem:[%s358 + $0x60] sm:$0xff]
        %v2383 = vld [vmem:[%s358 + $0x68] sm:$0xff]
        %v2384 = vld [vmem:[%s358 + $0x70] sm:$0xff]
        %v2385 = vld [vmem:[%s358 + $0x78] sm:$0xff]
        %v2386 = vld [vmem:[%s358 + $0x80] sm:$0xff]
        %v2387 = vld [vmem:[%s358 + $0x88] sm:$0xff]
        %v2388 = vld [vmem:[%s358 + $0x90] sm:$0xff]
        %v2389 = vld [vmem:[%s358 + $0x98] sm:$0xff]
        %v2390 = vld [vmem:[%s358 + $0xa0] sm:$0xff]
        %v2391 = vld [vmem:[%s358 + $0xa8] sm:$0xff]
        %v2392 = vld [vmem:[%s358 + $0xb0] sm:$0xff]
        %v2393 = vld [vmem:[%s358 + $0xb8] sm:$0xff]
        %v2394 = vld [vmem:[%s358 + $0xc0] sm:$0xff]
        %v2395 = vld [vmem:[%s358 + $0xc8] sm:$0xff]
        %v2396 = vld [vmem:[%s358 + $0xd0] sm:$0xff]
        %v2397 = vld [vmem:[%s358 + $0xd8] sm:$0xff]
        %v2398 = vld [vmem:[%s358 + $0xe0] sm:$0xff]
        %v2399 = vld [vmem:[%s358 + $0xe8] sm:$0xff]
        %v2400 = vld [vmem:[%s358 + $0xf0] sm:$0xff]
        %v2401 = vld [vmem:[%s358 + $0xf8] sm:$0xff]
        %v2402 = vmax.f32 %v2370, %v2075
        %v2403 = vmax.f32 %v2371, %v2076
        %v2404 = vmax.f32 %v2372, %v2077
        %v2405 = vmax.f32 %v2373, %v2078
        %v2406 = vmax.f32 %v2374, %v2079
        %v2407 = vmax.f32 %v2375, %v2080
        %v2408 = vmax.f32 %v2376, %v2081
        %v2409 = vmax.f32 %v2377, %v2082
        %v2410 = vmax.f32 %v2378, %v2083
        %v2411 = vmax.f32 %v2379, %v2084
        %v2412 = vmax.f32 %v2380, %v2085
        %v2413 = vmax.f32 %v2381, %v2086
        %v2414 = vmax.f32 %v2382, %v2087
        %v2415 = vmax.f32 %v2383, %v2088
        %v2416 = vmax.f32 %v2384, %v2089
        %v2417 = vmax.f32 %v2385, %v2090
        %v2418 = vmax.f32 %v2386, %v2091
        %v2419 = vmax.f32 %v2387, %v2092
        %v2420 = vmax.f32 %v2388, %v2093
        %v2421 = vmax.f32 %v2389, %v2094
        %v2422 = vmax.f32 %v2390, %v2095
        %v2423 = vmax.f32 %v2391, %v2096
        %v2424 = vmax.f32 %v2392, %v2097
        %v2425 = vmax.f32 %v2393, %v2098
        %v2426 = vmax.f32 %v2394, %v2099
        %v2427 = vmax.f32 %v2395, %v2100
        %v2428 = vmax.f32 %v2396, %v2101
        %v2429 = vmax.f32 %v2397, %v2102
        %v2430 = vmax.f32 %v2398, %v2103
        %v2431 = vmax.f32 %v2399, %v2104
        %v2432 = vmax.f32 %v2400, %v2105
        %v2433 = vmax.f32 %v2401, %v2106
        %2434 = vst [vmem:[%s358] sm:$0xff] %v2402
        %2435 = vst [vmem:[%s358 + $0x8] sm:$0xff] %v2403
        %2436 = vst [vmem:[%s358 + $0x10] sm:$0xff] %v2404
        %2437 = vst [vmem:[%s358 + $0x18] sm:$0xff] %v2405
        %2438 = vst [vmem:[%s358 + $0x20] sm:$0xff] %v2406
        %2439 = vst [vmem:[%s358 + $0x28] sm:$0xff] %v2407
        %2440 = vst [vmem:[%s358 + $0x30] sm:$0xff] %v2408
        %2441 = vst [vmem:[%s358 + $0x38] sm:$0xff] %v2409
        %2442 = vst [vmem:[%s358 + $0x40] sm:$0xff] %v2410
        %2443 = vst [vmem:[%s358 + $0x48] sm:$0xff] %v2411
        %2444 = vst [vmem:[%s358 + $0x50] sm:$0xff] %v2412
        %2445 = vst [vmem:[%s358 + $0x58] sm:$0xff] %v2413
        %2446 = vst [vmem:[%s358 + $0x60] sm:$0xff] %v2414
        %2447 = vst [vmem:[%s358 + $0x68] sm:$0xff] %v2415
        %2448 = vst [vmem:[%s358 + $0x70] sm:$0xff] %v2416
        %2449 = vst [vmem:[%s358 + $0x78] sm:$0xff] %v2417
        %2450 = vst [vmem:[%s358 + $0x80] sm:$0xff] %v2418
        %2451 = vst [vmem:[%s358 + $0x88] sm:$0xff] %v2419
        %2452 = vst [vmem:[%s358 + $0x90] sm:$0xff] %v2420
        %2453 = vst [vmem:[%s358 + $0x98] sm:$0xff] %v2421
        %2454 = vst [vmem:[%s358 + $0xa0] sm:$0xff] %v2422
        %2455 = vst [vmem:[%s358 + $0xa8] sm:$0xff] %v2423
        %2456 = vst [vmem:[%s358 + $0xb0] sm:$0xff] %v2424
        %2457 = vst [vmem:[%s358 + $0xb8] sm:$0xff] %v2425
        %2458 = vst [vmem:[%s358 + $0xc0] sm:$0xff] %v2426
        %2459 = vst [vmem:[%s358 + $0xc8] sm:$0xff] %v2427
        %2460 = vst [vmem:[%s358 + $0xd0] sm:$0xff] %v2428
        %2461 = vst [vmem:[%s358 + $0xd8] sm:$0xff] %v2429
        %2462 = vst [vmem:[%s358 + $0xe0] sm:$0xff] %v2430
        %2463 = vst [vmem:[%s358 + $0xe8] sm:$0xff] %v2431
        %2464 = vst [vmem:[%s358 + $0xf0] sm:$0xff] %v2432
        %2465 = vst [vmem:[%s358 + $0xf8] sm:$0xff] %v2433
        %v2466 = vld [vmem:[%s365] sm:$0xff]
        %v2467 = vld [vmem:[%s365 + $0x8] sm:$0xff]
        %v2468 = vld [vmem:[%s365 + $0x10] sm:$0xff]
        %v2469 = vld [vmem:[%s365 + $0x18] sm:$0xff]
        %v2470 = vld [vmem:[%s365 + $0x20] sm:$0xff]
        %v2471 = vld [vmem:[%s365 + $0x28] sm:$0xff]
        %v2472 = vld [vmem:[%s365 + $0x30] sm:$0xff]
        %v2473 = vld [vmem:[%s365 + $0x38] sm:$0xff]
        %v2474 = vld [vmem:[%s365 + $0x40] sm:$0xff]
        %v2475 = vld [vmem:[%s365 + $0x48] sm:$0xff]
        %v2476 = vld [vmem:[%s365 + $0x50] sm:$0xff]
        %v2477 = vld [vmem:[%s365 + $0x58] sm:$0xff]
        %v2478 = vld [vmem:[%s365 + $0x60] sm:$0xff]
        %v2479 = vld [vmem:[%s365 + $0x68] sm:$0xff]
        %v2480 = vld [vmem:[%s365 + $0x70] sm:$0xff]
        %v2481 = vld [vmem:[%s365 + $0x78] sm:$0xff]
        %v2482 = vld [vmem:[%s365 + $0x80] sm:$0xff]
        %v2483 = vld [vmem:[%s365 + $0x88] sm:$0xff]
        %v2484 = vld [vmem:[%s365 + $0x90] sm:$0xff]
        %v2485 = vld [vmem:[%s365 + $0x98] sm:$0xff]
        %v2486 = vld [vmem:[%s365 + $0xa0] sm:$0xff]
        %v2487 = vld [vmem:[%s365 + $0xa8] sm:$0xff]
        %v2488 = vld [vmem:[%s365 + $0xb0] sm:$0xff]
        %v2489 = vld [vmem:[%s365 + $0xb8] sm:$0xff]
        %v2490 = vld [vmem:[%s365 + $0xc0] sm:$0xff]
        %v2491 = vld [vmem:[%s365 + $0xc8] sm:$0xff]
        %v2492 = vld [vmem:[%s365 + $0xd0] sm:$0xff]
        %v2493 = vld [vmem:[%s365 + $0xd8] sm:$0xff]
        %v2494 = vld [vmem:[%s365 + $0xe0] sm:$0xff]
        %v2495 = vld [vmem:[%s365 + $0xe8] sm:$0xff]
        %v2496 = vld [vmem:[%s365 + $0xf0] sm:$0xff]
        %v2497 = vld [vmem:[%s365 + $0xf8] sm:$0xff]
        %v2498 = vmin.f32 %v2466, %v2107
        %v2499 = vmin.f32 %v2467, %v2108
        %v2500 = vmin.f32 %v2468, %v2109
        %v2501 = vmin.f32 %v2469, %v2110
        %v2502 = vmin.f32 %v2470, %v2111
        %v2503 = vmin.f32 %v2471, %v2112
        %v2504 = vmin.f32 %v2472, %v2113
        %v2505 = vmin.f32 %v2473, %v2114
        %v2506 = vmin.f32 %v2474, %v2115
        %v2507 = vmin.f32 %v2475, %v2116
        %v2508 = vmin.f32 %v2476, %v2117
        %v2509 = vmin.f32 %v2477, %v2118
        %v2510 = vmin.f32 %v2478, %v2119
        %v2511 = vmin.f32 %v2479, %v2120
        %v2512 = vmin.f32 %v2480, %v2121
        %v2513 = vmin.f32 %v2481, %v2122
        %v2514 = vmin.f32 %v2482, %v2123
        %v2515 = vmin.f32 %v2483, %v2124
        %v2516 = vmin.f32 %v2484, %v2125
        %v2517 = vmin.f32 %v2485, %v2126
        %v2518 = vmin.f32 %v2486, %v2127
        %v2519 = vmin.f32 %v2487, %v2128
        %v2520 = vmin.f32 %v2488, %v2129
        %v2521 = vmin.f32 %v2489, %v2130
        %v2522 = vmin.f32 %v2490, %v2131
        %v2523 = vmin.f32 %v2491, %v2132
        %v2524 = vmin.f32 %v2492, %v2133
        %v2525 = vmin.f32 %v2493, %v2134
        %v2526 = vmin.f32 %v2494, %v2135
        %v2527 = vmin.f32 %v2495, %v2136
        %v2528 = vmin.f32 %v2496, %v2137
        %v2529 = vmin.f32 %v2497, %v2138
        %2530 = vst [vmem:[%s365] sm:$0xff] %v2498
        %2531 = vst [vmem:[%s365 + $0x8] sm:$0xff] %v2499
        %2532 = vst [vmem:[%s365 + $0x10] sm:$0xff] %v2500
        %2533 = vst [vmem:[%s365 + $0x18] sm:$0xff] %v2501
        %2534 = vst [vmem:[%s365 + $0x20] sm:$0xff] %v2502
        %2535 = vst [vmem:[%s365 + $0x28] sm:$0xff] %v2503
        %2536 = vst [vmem:[%s365 + $0x30] sm:$0xff] %v2504
        %2537 = vst [vmem:[%s365 + $0x38] sm:$0xff] %v2505
        %2538 = vst [vmem:[%s365 + $0x40] sm:$0xff] %v2506
        %2539 = vst [vmem:[%s365 + $0x48] sm:$0xff] %v2507
        %2540 = vst [vmem:[%s365 + $0x50] sm:$0xff] %v2508
        %2541 = vst [vmem:[%s365 + $0x58] sm:$0xff] %v2509
        %2542 = vst [vmem:[%s365 + $0x60] sm:$0xff] %v2510
        %2543 = vst [vmem:[%s365 + $0x68] sm:$0xff] %v2511
        %2544 = vst [vmem:[%s365 + $0x70] sm:$0xff] %v2512
        %2545 = vst [vmem:[%s365 + $0x78] sm:$0xff] %v2513
        %2546 = vst [vmem:[%s365 + $0x80] sm:$0xff] %v2514
        %2547 = vst [vmem:[%s365 + $0x88] sm:$0xff] %v2515
        %2548 = vst [vmem:[%s365 + $0x90] sm:$0xff] %v2516
        %2549 = vst [vmem:[%s365 + $0x98] sm:$0xff] %v2517
        %2550 = vst [vmem:[%s365 + $0xa0] sm:$0xff] %v2518
        %2551 = vst [vmem:[%s365 + $0xa8] sm:$0xff] %v2519
        %2552 = vst [vmem:[%s365 + $0xb0] sm:$0xff] %v2520
        %2553 = vst [vmem:[%s365 + $0xb8] sm:$0xff] %v2521
        %2554 = vst [vmem:[%s365 + $0xc0] sm:$0xff] %v2522
        %2555 = vst [vmem:[%s365 + $0xc8] sm:$0xff] %v2523
        %2556 = vst [vmem:[%s365 + $0xd0] sm:$0xff] %v2524
        %2557 = vst [vmem:[%s365 + $0xd8] sm:$0xff] %v2525
        %2558 = vst [vmem:[%s365 + $0xe0] sm:$0xff] %v2526
        %2559 = vst [vmem:[%s365 + $0xe8] sm:$0xff] %v2527
        %2560 = vst [vmem:[%s365 + $0xf0] sm:$0xff] %v2528
        %2561 = vst [vmem:[%s365 + $0xf8] sm:$0xff] %v2529
        %v2562 = vld [vmem:[#allocation3] sm:$0xff]
        %v2563 = vld [vmem:[#allocation3 + $0x8] sm:$0xff]
        %v2564 = vld [vmem:[#allocation3 + $0x10] sm:$0xff]
        %v2565 = vld [vmem:[#allocation3 + $0x18] sm:$0xff]
        %v2566 = vld [vmem:[#allocation3 + $0x20] sm:$0xff]
        %v2567 = vld [vmem:[#allocation3 + $0x28] sm:$0xff]
        %v2568 = vld [vmem:[#allocation3 + $0x30] sm:$0xff]
        %v2569 = vld [vmem:[#allocation3 + $0x38] sm:$0xff]
        %v2570 = vld [vmem:[#allocation3 + $0x40] sm:$0xff]
        %v2571 = vld [vmem:[#allocation3 + $0x48] sm:$0xff]
        %v2572 = vld [vmem:[#allocation3 + $0x50] sm:$0xff]
        %v2573 = vld [vmem:[#allocation3 + $0x58] sm:$0xff]
        %v2574 = vld [vmem:[#allocation3 + $0x60] sm:$0xff]
        %v2575 = vld [vmem:[#allocation3 + $0x68] sm:$0xff]
        %v2576 = vld [vmem:[#allocation3 + $0x70] sm:$0xff]
        %v2577 = vld [vmem:[#allocation3 + $0x78] sm:$0xff]
        %v2578 = vld [vmem:[#allocation3 + $0x80] sm:$0xff]
        %v2579 = vld [vmem:[#allocation3 + $0x88] sm:$0xff]
        %v2580 = vld [vmem:[#allocation3 + $0x90] sm:$0xff]
        %v2581 = vld [vmem:[#allocation3 + $0x98] sm:$0xff]
        %v2582 = vld [vmem:[#allocation3 + $0xa0] sm:$0xff]
        %v2583 = vld [vmem:[#allocation3 + $0xa8] sm:$0xff]
        %v2584 = vld [vmem:[#allocation3 + $0xb0] sm:$0xff]
        %v2585 = vld [vmem:[#allocation3 + $0xb8] sm:$0xff]
        %v2586 = vld [vmem:[#allocation3 + $0xc0] sm:$0xff]
        %v2587 = vld [vmem:[#allocation3 + $0xc8] sm:$0xff]
        %v2588 = vld [vmem:[#allocation3 + $0xd0] sm:$0xff]
        %v2589 = vld [vmem:[#allocation3 + $0xd8] sm:$0xff]
        %v2590 = vld [vmem:[#allocation3 + $0xe0] sm:$0xff]
        %v2591 = vld [vmem:[#allocation3 + $0xe8] sm:$0xff]
        %v2592 = vld [vmem:[#allocation3 + $0xf0] sm:$0xff]
        %v2593 = vld [vmem:[#allocation3 + $0xf8] sm:$0xff]
        %v2594 = vadd.f32 %v2562, %v2139
        %v2595 = vadd.f32 %v2563, %v2140
        %v2596 = vadd.f32 %v2564, %v2141
        %v2597 = vadd.f32 %v2565, %v2142
        %v2598 = vadd.f32 %v2566, %v2143
        %v2599 = vadd.f32 %v2567, %v2144
        %v2600 = vadd.f32 %v2568, %v2145
        %v2601 = vadd.f32 %v2569, %v2146
        %v2602 = vadd.f32 %v2570, %v2147
        %v2603 = vadd.f32 %v2571, %v2148
        %v2604 = vadd.f32 %v2572, %v2149
        %v2605 = vadd.f32 %v2573, %v2150
        %v2606 = vadd.f32 %v2574, %v2151
        %v2607 = vadd.f32 %v2575, %v2152
        %v2608 = vadd.f32 %v2576, %v2153
        %v2609 = vadd.f32 %v2577, %v2154
        %v2610 = vadd.f32 %v2578, %v2155
        %v2611 = vadd.f32 %v2579, %v2156
        %v2612 = vadd.f32 %v2580, %v2157
        %v2613 = vadd.f32 %v2581, %v2158
        %v2614 = vadd.f32 %v2582, %v2159
        %v2615 = vadd.f32 %v2583, %v2160
        %v2616 = vadd.f32 %v2584, %v2161
        %v2617 = vadd.f32 %v2585, %v2162
        %v2618 = vadd.f32 %v2586, %v2163
        %v2619 = vadd.f32 %v2587, %v2164
        %v2620 = vadd.f32 %v2588, %v2165
        %v2621 = vadd.f32 %v2589, %v2166
        %v2622 = vadd.f32 %v2590, %v2167
        %v2623 = vadd.f32 %v2591, %v2168
        %v2624 = vadd.f32 %v2592, %v2169
        %v2625 = vadd.f32 %v2593, %v2170
        %2626 = vst [vmem:[#allocation3] sm:$0xff] %v2594
        %2627 = vst [vmem:[#allocation3 + $0x8] sm:$0xff] %v2595
        %2628 = vst [vmem:[#allocation3 + $0x10] sm:$0xff] %v2596
        %2629 = vst [vmem:[#allocation3 + $0x18] sm:$0xff] %v2597
        %2630 = vst [vmem:[#allocation3 + $0x20] sm:$0xff] %v2598
        %2631 = vst [vmem:[#allocation3 + $0x28] sm:$0xff] %v2599
        %2632 = vst [vmem:[#allocation3 + $0x30] sm:$0xff] %v2600
        %2633 = vst [vmem:[#allocation3 + $0x38] sm:$0xff] %v2601
        %2634 = vst [vmem:[#allocation3 + $0x40] sm:$0xff] %v2602
        %2635 = vst [vmem:[#allocation3 + $0x48] sm:$0xff] %v2603
        %2636 = vst [vmem:[#allocation3 + $0x50] sm:$0xff] %v2604
        %2637 = vst [vmem:[#allocation3 + $0x58] sm:$0xff] %v2605
        %2638 = vst [vmem:[#allocation3 + $0x60] sm:$0xff] %v2606
        %2639 = vst [vmem:[#allocation3 + $0x68] sm:$0xff] %v2607
        %2640 = vst [vmem:[#allocation3 + $0x70] sm:$0xff] %v2608
        %2641 = vst [vmem:[#allocation3 + $0x78] sm:$0xff] %v2609
        %2642 = vst [vmem:[#allocation3 + $0x80] sm:$0xff] %v2610
        %2643 = vst [vmem:[#allocation3 + $0x88] sm:$0xff] %v2611
        %2644 = vst [vmem:[#allocation3 + $0x90] sm:$0xff] %v2612
        %2645 = vst [vmem:[#allocation3 + $0x98] sm:$0xff] %v2613
        %2646 = vst [vmem:[#allocation3 + $0xa0] sm:$0xff] %v2614
        %2647 = vst [vmem:[#allocation3 + $0xa8] sm:$0xff] %v2615
        %2648 = vst [vmem:[#allocation3 + $0xb0] sm:$0xff] %v2616
        %2649 = vst [vmem:[#allocation3 + $0xb8] sm:$0xff] %v2617
        %2650 = vst [vmem:[#allocation3 + $0xc0] sm:$0xff] %v2618
        %2651 = vst [vmem:[#allocation3 + $0xc8] sm:$0xff] %v2619
        %2652 = vst [vmem:[#allocation3 + $0xd0] sm:$0xff] %v2620
        %2653 = vst [vmem:[#allocation3 + $0xd8] sm:$0xff] %v2621
        %2654 = vst [vmem:[#allocation3 + $0xe0] sm:$0xff] %v2622
        %2655 = vst [vmem:[#allocation3 + $0xe8] sm:$0xff] %v2623
        %2656 = vst [vmem:[#allocation3 + $0xf0] sm:$0xff] %v2624
        %2657 = vst [vmem:[#allocation3 + $0xf8] sm:$0xff] %v2625
        %v2658 = vld [vmem:[#allocation4] sm:$0xff]
        %v2659 = vld [vmem:[#allocation4 + $0x8] sm:$0xff]
        %v2660 = vld [vmem:[#allocation4 + $0x10] sm:$0xff]
        %v2661 = vld [vmem:[#allocation4 + $0x18] sm:$0xff]
        %v2662 = vld [vmem:[#allocation4 + $0x20] sm:$0xff]
        %v2663 = vld [vmem:[#allocation4 + $0x28] sm:$0xff]
        %v2664 = vld [vmem:[#allocation4 + $0x30] sm:$0xff]
        %v2665 = vld [vmem:[#allocation4 + $0x38] sm:$0xff]
        %v2666 = vld [vmem:[#allocation4 + $0x40] sm:$0xff]
        %v2667 = vld [vmem:[#allocation4 + $0x48] sm:$0xff]
        %v2668 = vld [vmem:[#allocation4 + $0x50] sm:$0xff]
        %v2669 = vld [vmem:[#allocation4 + $0x58] sm:$0xff]
        %v2670 = vld [vmem:[#allocation4 + $0x60] sm:$0xff]
        %v2671 = vld [vmem:[#allocation4 + $0x68] sm:$0xff]
        %v2672 = vld [vmem:[#allocation4 + $0x70] sm:$0xff]
        %v2673 = vld [vmem:[#allocation4 + $0x78] sm:$0xff]
        %v2674 = vld [vmem:[#allocation4 + $0x80] sm:$0xff]
        %v2675 = vld [vmem:[#allocation4 + $0x88] sm:$0xff]
        %v2676 = vld [vmem:[#allocation4 + $0x90] sm:$0xff]
        %v2677 = vld [vmem:[#allocation4 + $0x98] sm:$0xff]
        %v2678 = vld [vmem:[#allocation4 + $0xa0] sm:$0xff]
        %v2679 = vld [vmem:[#allocation4 + $0xa8] sm:$0xff]
        %v2680 = vld [vmem:[#allocation4 + $0xb0] sm:$0xff]
        %v2681 = vld [vmem:[#allocation4 + $0xb8] sm:$0xff]
        %v2682 = vld [vmem:[#allocation4 + $0xc0] sm:$0xff]
        %v2683 = vld [vmem:[#allocation4 + $0xc8] sm:$0xff]
        %v2684 = vld [vmem:[#allocation4 + $0xd0] sm:$0xff]
        %v2685 = vld [vmem:[#allocation4 + $0xd8] sm:$0xff]
        %v2686 = vld [vmem:[#allocation4 + $0xe0] sm:$0xff]
        %v2687 = vld [vmem:[#allocation4 + $0xe8] sm:$0xff]
        %v2688 = vld [vmem:[#allocation4 + $0xf0] sm:$0xff]
        %v2689 = vld [vmem:[#allocation4 + $0xf8] sm:$0xff]
        %v2690 = vadd.f32 %v2658, %v2203
        %v2691 = vadd.f32 %v2659, %v2204
        %v2692 = vadd.f32 %v2660, %v2205
        %v2693 = vadd.f32 %v2661, %v2206
        %v2694 = vadd.f32 %v2662, %v2207
        %v2695 = vadd.f32 %v2663, %v2208
        %v2696 = vadd.f32 %v2664, %v2209
        %v2697 = vadd.f32 %v2665, %v2210
        %v2698 = vadd.f32 %v2666, %v2211
        %v2699 = vadd.f32 %v2667, %v2212
        %v2700 = vadd.f32 %v2668, %v2213
        %v2701 = vadd.f32 %v2669, %v2214
        %v2702 = vadd.f32 %v2670, %v2215
        %v2703 = vadd.f32 %v2671, %v2216
        %v2704 = vadd.f32 %v2672, %v2217
        %v2705 = vadd.f32 %v2673, %v2218
        %v2706 = vadd.f32 %v2674, %v2219
        %v2707 = vadd.f32 %v2675, %v2220
        %v2708 = vadd.f32 %v2676, %v2221
        %v2709 = vadd.f32 %v2677, %v2222
        %v2710 = vadd.f32 %v2678, %v2223
        %v2711 = vadd.f32 %v2679, %v2224
        %v2712 = vadd.f32 %v2680, %v2225
        %v2713 = vadd.f32 %v2681, %v2226
        %v2714 = vadd.f32 %v2682, %v2227
        %v2715 = vadd.f32 %v2683, %v2228
        %v2716 = vadd.f32 %v2684, %v2229
        %v2717 = vadd.f32 %v2685, %v2230
        %v2718 = vadd.f32 %v2686, %v2231
        %v2719 = vadd.f32 %v2687, %v2232
        %v2720 = vadd.f32 %v2688, %v2233
        %v2721 = vadd.f32 %v2689, %v2234
        %2722 = vst [vmem:[#allocation4] sm:$0xff] %v2690
        %2723 = vst [vmem:[#allocation4 + $0x8] sm:$0xff] %v2691
        %2724 = vst [vmem:[#allocation4 + $0x10] sm:$0xff] %v2692
        %2725 = vst [vmem:[#allocation4 + $0x18] sm:$0xff] %v2693
        %2726 = vst [vmem:[#allocation4 + $0x20] sm:$0xff] %v2694
        %2727 = vst [vmem:[#allocation4 + $0x28] sm:$0xff] %v2695
        %2728 = vst [vmem:[#allocation4 + $0x30] sm:$0xff] %v2696
        %2729 = vst [vmem:[#allocation4 + $0x38] sm:$0xff] %v2697
        %2730 = vst [vmem:[#allocation4 + $0x40] sm:$0xff] %v2698
        %2731 = vst [vmem:[#allocation4 + $0x48] sm:$0xff] %v2699
        %2732 = vst [vmem:[#allocation4 + $0x50] sm:$0xff] %v2700
        %2733 = vst [vmem:[#allocation4 + $0x58] sm:$0xff] %v2701
        %2734 = vst [vmem:[#allocation4 + $0x60] sm:$0xff] %v2702
        %2735 = vst [vmem:[#allocation4 + $0x68] sm:$0xff] %v2703
        %2736 = vst [vmem:[#allocation4 + $0x70] sm:$0xff] %v2704
        %2737 = vst [vmem:[#allocation4 + $0x78] sm:$0xff] %v2705
        %2738 = vst [vmem:[#allocation4 + $0x80] sm:$0xff] %v2706
        %2739 = vst [vmem:[#allocation4 + $0x88] sm:$0xff] %v2707
        %2740 = vst [vmem:[#allocation4 + $0x90] sm:$0xff] %v2708
        %2741 = vst [vmem:[#allocation4 + $0x98] sm:$0xff] %v2709
        %2742 = vst [vmem:[#allocation4 + $0xa0] sm:$0xff] %v2710
        %2743 = vst [vmem:[#allocation4 + $0xa8] sm:$0xff] %v2711
        %2744 = vst [vmem:[#allocation4 + $0xb0] sm:$0xff] %v2712
        %2745 = vst [vmem:[#allocation4 + $0xb8] sm:$0xff] %v2713
        %2746 = vst [vmem:[#allocation4 + $0xc0] sm:$0xff] %v2714
        %2747 = vst [vmem:[#allocation4 + $0xc8] sm:$0xff] %v2715
        %2748 = vst [vmem:[#allocation4 + $0xd0] sm:$0xff] %v2716
        %2749 = vst [vmem:[#allocation4 + $0xd8] sm:$0xff] %v2717
        %2750 = vst [vmem:[#allocation4 + $0xe0] sm:$0xff] %v2718
        %2751 = vst [vmem:[#allocation4 + $0xe8] sm:$0xff] %v2719
        %2752 = vst [vmem:[#allocation4 + $0xf0] sm:$0xff] %v2720
        %2753 = vst [vmem:[#allocation4 + $0xf8] sm:$0xff] %v2721
      $region48: #{up_block_forward.6} parent=35 // pred_fallthru
        _
      %p2754 = scmp.eq.s32.totalorder %s24, 4
      // Predicated region
      $region49: #{up_block_forward.6} parent=35 // pred_check
        %p2755 = pneg %p2754
      $region50: #{up_block_forward.6} parent=35 // pred_check_branch
        %2757 = sbr.rel (%p2755) target = $region52
      $region51: #{up_block_forward.6} parent=35 // pred_region
        %v2758 = vld [vmem:[#allocation3] sm:$0xff]
        %v2759 = vld [vmem:[#allocation3 + $0x8] sm:$0xff]
        %v2760 = vld [vmem:[#allocation3 + $0x10] sm:$0xff]
        %v2761 = vld [vmem:[#allocation3 + $0x18] sm:$0xff]
        %v2762 = vld [vmem:[#allocation3 + $0x20] sm:$0xff]
        %v2763 = vld [vmem:[#allocation3 + $0x28] sm:$0xff]
        %v2764 = vld [vmem:[#allocation3 + $0x30] sm:$0xff]
        %v2765 = vld [vmem:[#allocation3 + $0x38] sm:$0xff]
        %v2766 = vld [vmem:[#allocation3 + $0x40] sm:$0xff]
        %v2767 = vld [vmem:[#allocation3 + $0x48] sm:$0xff]
        %v2768 = vld [vmem:[#allocation3 + $0x50] sm:$0xff]
        %v2769 = vld [vmem:[#allocation3 + $0x58] sm:$0xff]
        %v2770 = vld [vmem:[#allocation3 + $0x60] sm:$0xff]
        %v2771 = vld [vmem:[#allocation3 + $0x68] sm:$0xff]
        %v2772 = vld [vmem:[#allocation3 + $0x70] sm:$0xff]
        %v2773 = vld [vmem:[#allocation3 + $0x78] sm:$0xff]
        %v2774 = vld [vmem:[#allocation3 + $0x80] sm:$0xff]
        %v2775 = vld [vmem:[#allocation3 + $0x88] sm:$0xff]
        %v2776 = vld [vmem:[#allocation3 + $0x90] sm:$0xff]
        %v2777 = vld [vmem:[#allocation3 + $0x98] sm:$0xff]
        %v2778 = vld [vmem:[#allocation3 + $0xa0] sm:$0xff]
        %v2779 = vld [vmem:[#allocation3 + $0xa8] sm:$0xff]
        %v2780 = vld [vmem:[#allocation3 + $0xb0] sm:$0xff]
        %v2781 = vld [vmem:[#allocation3 + $0xb8] sm:$0xff]
        %v2782 = vld [vmem:[#allocation3 + $0xc0] sm:$0xff]
        %v2783 = vld [vmem:[#allocation3 + $0xc8] sm:$0xff]
        %v2784 = vld [vmem:[#allocation3 + $0xd0] sm:$0xff]
        %v2785 = vld [vmem:[#allocation3 + $0xd8] sm:$0xff]
        %v2786 = vld [vmem:[#allocation3 + $0xe0] sm:$0xff]
        %v2787 = vld [vmem:[#allocation3 + $0xe8] sm:$0xff]
        %v2788 = vld [vmem:[#allocation3 + $0xf0] sm:$0xff]
        %v2789 = vld [vmem:[#allocation3 + $0xf8] sm:$0xff]
        %v2790 = vadd.f32 %v2758, %v2762
        %v2791 = vadd.f32 %v2790, %v2766
        %v2792 = vadd.f32 %v2791, %v2770
        %v2793 = vadd.f32 %v2792, %v2774
        %v2794 = vadd.f32 %v2793, %v2778
        %v2795 = vadd.f32 %v2794, %v2782
        %v2796 = vadd.f32 %v2795, %v2786
        %v2797 = vrot.slane %v2796, 4
        %v2798 = vadd.f32 %v2796, %v2797
        %v2799 = vrot.slane %v2798, 2
        %v2800 = vadd.f32 %v2798, %v2799
        %v2801 = vrot.slane %v2800, 1
        %v2802 = vadd.f32 %v2800, %v2801
        %v2803 = vadd.f32 %v2759, %v2763
        %v2804 = vadd.f32 %v2803, %v2767
        %v2805 = vadd.f32 %v2804, %v2771
        %v2806 = vadd.f32 %v2805, %v2775
        %v2807 = vadd.f32 %v2806, %v2779
        %v2808 = vadd.f32 %v2807, %v2783
        %v2809 = vadd.f32 %v2808, %v2787
        %v2810 = vrot.slane %v2809, 4
        %v2811 = vadd.f32 %v2809, %v2810
        %v2812 = vrot.slane %v2811, 2
        %v2813 = vadd.f32 %v2811, %v2812
        %v2814 = vrot.slane %v2813, 1
        %v2815 = vadd.f32 %v2813, %v2814
        %v2816 = vadd.f32 %v2760, %v2764
        %v2817 = vadd.f32 %v2816, %v2768
        %v2818 = vadd.f32 %v2817, %v2772
        %v2819 = vadd.f32 %v2818, %v2776
        %v2820 = vadd.f32 %v2819, %v2780
        %v2821 = vadd.f32 %v2820, %v2784
        %v2822 = vadd.f32 %v2821, %v2788
        %v2823 = vrot.slane %v2822, 4
        %v2824 = vadd.f32 %v2822, %v2823
        %v2825 = vrot.slane %v2824, 2
        %v2826 = vadd.f32 %v2824, %v2825
        %v2827 = vrot.slane %v2826, 1
        %v2828 = vadd.f32 %v2826, %v2827
        %v2829 = vadd.f32 %v2761, %v2765
        %v2830 = vadd.f32 %v2829, %v2769
        %v2831 = vadd.f32 %v2830, %v2773
        %v2832 = vadd.f32 %v2831, %v2777
        %v2833 = vadd.f32 %v2832, %v2781
        %v2834 = vadd.f32 %v2833, %v2785
        %v2835 = vadd.f32 %v2834, %v2789
        %v2836 = vrot.slane %v2835, 4
        %v2837 = vadd.f32 %v2835, %v2836
        %v2838 = vrot.slane %v2837, 2
        %v2839 = vadd.f32 %v2837, %v2838
        %v2840 = vrot.slane %v2839, 1
        %v2841 = vadd.f32 %v2839, %v2840
        %2842 = vst [vmem:[%s371] sm:$0xff] %v2802
        %2843 = vst [vmem:[%s371 + $0x8] sm:$0xff] %v2815
        %2844 = vst [vmem:[%s371 + $0x10] sm:$0xff] %v2828
        %2845 = vst [vmem:[%s371 + $0x18] sm:$0xff] %v2841
        %v2846 = vld [vmem:[#allocation4] sm:$0xff]
        %v2847 = vld [vmem:[#allocation4 + $0x8] sm:$0xff]
        %v2848 = vld [vmem:[#allocation4 + $0x10] sm:$0xff]
        %v2849 = vld [vmem:[#allocation4 + $0x18] sm:$0xff]
        %v2850 = vld [vmem:[#allocation4 + $0x20] sm:$0xff]
        %v2851 = vld [vmem:[#allocation4 + $0x28] sm:$0xff]
        %v2852 = vld [vmem:[#allocation4 + $0x30] sm:$0xff]
        %v2853 = vld [vmem:[#allocation4 + $0x38] sm:$0xff]
        %v2854 = vld [vmem:[#allocation4 + $0x40] sm:$0xff]
        %v2855 = vld [vmem:[#allocation4 + $0x48] sm:$0xff]
        %v2856 = vld [vmem:[#allocation4 + $0x50] sm:$0xff]
        %v2857 = vld [vmem:[#allocation4 + $0x58] sm:$0xff]
        %v2858 = vld [vmem:[#allocation4 + $0x60] sm:$0xff]
        %v2859 = vld [vmem:[#allocation4 + $0x68] sm:$0xff]
        %v2860 = vld [vmem:[#allocation4 + $0x70] sm:$0xff]
        %v2861 = vld [vmem:[#allocation4 + $0x78] sm:$0xff]
        %v2862 = vld [vmem:[#allocation4 + $0x80] sm:$0xff]
        %v2863 = vld [vmem:[#allocation4 + $0x88] sm:$0xff]
        %v2864 = vld [vmem:[#allocation4 + $0x90] sm:$0xff]
        %v2865 = vld [vmem:[#allocation4 + $0x98] sm:$0xff]
        %v2866 = vld [vmem:[#allocation4 + $0xa0] sm:$0xff]
        %v2867 = vld [vmem:[#allocation4 + $0xa8] sm:$0xff]
        %v2868 = vld [vmem:[#allocation4 + $0xb0] sm:$0xff]
        %v2869 = vld [vmem:[#allocation4 + $0xb8] sm:$0xff]
        %v2870 = vld [vmem:[#allocation4 + $0xc0] sm:$0xff]
        %v2871 = vld [vmem:[#allocation4 + $0xc8] sm:$0xff]
        %v2872 = vld [vmem:[#allocation4 + $0xd0] sm:$0xff]
        %v2873 = vld [vmem:[#allocation4 + $0xd8] sm:$0xff]
        %v2874 = vld [vmem:[#allocation4 + $0xe0] sm:$0xff]
        %v2875 = vld [vmem:[#allocation4 + $0xe8] sm:$0xff]
        %v2876 = vld [vmem:[#allocation4 + $0xf0] sm:$0xff]
        %v2877 = vld [vmem:[#allocation4 + $0xf8] sm:$0xff]
        %v2878 = vadd.f32 %v2846, %v2850
        %v2879 = vadd.f32 %v2878, %v2854
        %v2880 = vadd.f32 %v2879, %v2858
        %v2881 = vadd.f32 %v2880, %v2862
        %v2882 = vadd.f32 %v2881, %v2866
        %v2883 = vadd.f32 %v2882, %v2870
        %v2884 = vadd.f32 %v2883, %v2874
        %v2885 = vrot.slane %v2884, 4
        %v2886 = vadd.f32 %v2884, %v2885
        %v2887 = vrot.slane %v2886, 2
        %v2888 = vadd.f32 %v2886, %v2887
        %v2889 = vrot.slane %v2888, 1
        %v2890 = vadd.f32 %v2888, %v2889
        %v2891 = vadd.f32 %v2847, %v2851
        %v2892 = vadd.f32 %v2891, %v2855
        %v2893 = vadd.f32 %v2892, %v2859
        %v2894 = vadd.f32 %v2893, %v2863
        %v2895 = vadd.f32 %v2894, %v2867
        %v2896 = vadd.f32 %v2895, %v2871
        %v2897 = vadd.f32 %v2896, %v2875
        %v2898 = vrot.slane %v2897, 4
        %v2899 = vadd.f32 %v2897, %v2898
        %v2900 = vrot.slane %v2899, 2
        %v2901 = vadd.f32 %v2899, %v2900
        %v2902 = vrot.slane %v2901, 1
        %v2903 = vadd.f32 %v2901, %v2902
        %v2904 = vadd.f32 %v2848, %v2852
        %v2905 = vadd.f32 %v2904, %v2856
        %v2906 = vadd.f32 %v2905, %v2860
        %v2907 = vadd.f32 %v2906, %v2864
        %v2908 = vadd.f32 %v2907, %v2868
        %v2909 = vadd.f32 %v2908, %v2872
        %v2910 = vadd.f32 %v2909, %v2876
        %v2911 = vrot.slane %v2910, 4
        %v2912 = vadd.f32 %v2910, %v2911
        %v2913 = vrot.slane %v2912, 2
        %v2914 = vadd.f32 %v2912, %v2913
        %v2915 = vrot.slane %v2914, 1
        %v2916 = vadd.f32 %v2914, %v2915
        %v2917 = vadd.f32 %v2849, %v2853
        %v2918 = vadd.f32 %v2917, %v2857
        %v2919 = vadd.f32 %v2918, %v2861
        %v2920 = vadd.f32 %v2919, %v2865
        %v2921 = vadd.f32 %v2920, %v2869
        %v2922 = vadd.f32 %v2921, %v2873
        %v2923 = vadd.f32 %v2922, %v2877
        %v2924 = vrot.slane %v2923, 4
        %v2925 = vadd.f32 %v2923, %v2924
        %v2926 = vrot.slane %v2925, 2
        %v2927 = vadd.f32 %v2925, %v2926
        %v2928 = vrot.slane %v2927, 1
        %v2929 = vadd.f32 %v2927, %v2928
        %2930 = vst [vmem:[%s376] sm:$0xff] %v2890
        %2931 = vst [vmem:[%s376 + $0x8] sm:$0xff] %v2903
        %2932 = vst [vmem:[%s376 + $0x10] sm:$0xff] %v2916
        %2933 = vst [vmem:[%s376 + $0x18] sm:$0xff] %v2929
      $region52: #{up_block_forward.6} parent=35 // pred_fallthru
        _
      %s2934 = smul.u32 8, %s23
      %p2935 = scmp.lt.s32.totalorder %s2934, 7
      %s2936 = scalar_select %p2935, %s2934, 7
      %s2937 = smul.addr %s2936, 4
      %s2938 = smul.addr %s2937, 8
      %s2939 = scalar_lea.vmem %s4, %s2938
      %s2940 = smul.u32 8, %s23
      %p2941 = scmp.lt.s32.totalorder %s2940, 7
      %s2942 = scalar_select %p2941, %s2940, 7
      %s2943 = smul.addr %s2942, 4
      %s2944 = smul.addr %s2943, 8
      %s2945 = scalar_lea.vmem %s5, %s2944
      %p2946 = scmp.lt.s32.totalorder %s23, 0
      %s2947 = scalar_select %p2946, %s23, 0
      %s2948 = smul.addr %s2947, 4
      %s2949 = smul.addr %s2948, 8
      %s2950 = scalar_lea.vmem %s6, %s2949
      %p2951 = scmp.lt.s32.totalorder %s23, 0
      %s2952 = scalar_select %p2951, %s23, 0
      %s2953 = smul.addr %s2952, 4
      %s2954 = smul.addr %s2953, 8
      %s2955 = scalar_lea.vmem %s7, %s2954
      // Predicated region
      $region53: #{up_block_forward.6} parent=35 // pred_check
        %p2956 = pneg %p145
      $region54: #{up_block_forward.6} parent=35 // pred_check_branch
        %2958 = sbr.rel (%p2956) target = $region56
      $region55: #{up_block_forward.6} parent=35 // pred_region
        %s2959 = smul.u32 8, %s23
      $region56: #{up_block_forward.6} parent=35 // pred_fallthru
        _
      // Predicated region
      $region57: #{up_block_forward.6} parent=35 // pred_check
        %p2960 = pneg %p171
      $region58: #{up_block_forward.6} parent=35 // pred_check_branch
        %2962 = sbr.rel (%p2960) target = $region60
      $region59: #{up_block_forward.6} parent=35 // pred_region
        %s2963 = smul.u32 8, %s23
      $region60: #{up_block_forward.6} parent=35 // pred_fallthru
        _
      // Predicated region
      $region61: #{up_block_forward.6} parent=35 // pred_check
        %p2964 = pneg %p197
      $region62: #{up_block_forward.6} parent=35 // pred_check_branch
        %2966 = sbr.rel (%p2964) target = $region64
      $region63: #{up_block_forward.6} parent=35 // pred_region
        _
      $region64: #{up_block_forward.6} parent=35 // pred_fallthru
        _
      // Predicated region
      $region65: #{up_block_forward.6} parent=35 // pred_check
        %p2967 = pneg %p223
      $region66: #{up_block_forward.6} parent=35 // pred_check_branch
        %2969 = sbr.rel (%p2967) target = $region68
      $region67: #{up_block_forward.6} parent=35 // pred_region
        _
      $region68: #{up_block_forward.6} parent=35 // pred_fallthru
        _
      // Predicated region
      $region69: #{up_block_forward.6} parent=35 // pred_check
        %p2970 = pneg %p145
      $region70: #{up_block_forward.6} parent=35 // pred_check_branch
        %2972 = sbr.rel (%p2970) target = $region72
      $region71: #{up_block_forward.6} parent=35 // pred_region
        %s2973 = smul.u32 8, %s23
        %p2974 = scmp.lt.s32.totalorder %s2973, 7
        %s2975 = scalar_select %p2974, %s2973, 7
        %s2976 = smul.addr %s2975, 4
        %s2977 = smul.addr %s2976, 8
        %s2978 = scalar_lea.vmem %s4, %s2977
      $region72: #{up_block_forward.6} parent=35 // pred_fallthru
        _
      // Predicated region
      $region73: #{up_block_forward.6} parent=35 // pred_check
        %p2979 = pneg %p171
      $region74: #{up_block_forward.6} parent=35 // pred_check_branch
        %2981 = sbr.rel (%p2979) target = $region76
      $region75: #{up_block_forward.6} parent=35 // pred_region
        %s2982 = smul.u32 8, %s23
        %p2983 = scmp.lt.s32.totalorder %s2982, 7
        %s2984 = scalar_select %p2983, %s2982, 7
        %s2985 = smul.addr %s2984, 4
        %s2986 = smul.addr %s2985, 8
        %s2987 = scalar_lea.vmem %s5, %s2986
      $region76: #{up_block_forward.6} parent=35 // pred_fallthru
        _
      // Predicated region
      $region77: #{up_block_forward.6} parent=35 // pred_check
        %p2988 = pneg %p197
      $region78: #{up_block_forward.6} parent=35 // pred_check_branch
        %2990 = sbr.rel (%p2988) target = $region80
      $region79: #{up_block_forward.6} parent=35 // pred_region
        %p2991 = scmp.lt.s32.totalorder %s23, 0
        %s2992 = scalar_select %p2991, %s23, 0
        %s2993 = smul.addr %s2992, 4
        %s2994 = smul.addr %s2993, 8
        %s2995 = scalar_lea.vmem %s6, %s2994
      $region80: #{up_block_forward.6} parent=35 // pred_fallthru
        _
      // Predicated region
      $region81: #{up_block_forward.6} parent=35 // pred_check
        %p2996 = pneg %p223
      $region82: #{up_block_forward.6} parent=35 // pred_check_branch
        %2998 = sbr.rel (%p2996) target = $region84
      $region83: #{up_block_forward.6} parent=35 // pred_region
        %p2999 = scmp.lt.s32.totalorder %s23, 0
        %s3000 = scalar_select %p2999, %s23, 0
        %s3001 = smul.addr %s3000, 4
        %s3002 = smul.addr %s3001, 8
        %s3003 = scalar_lea.vmem %s7, %s3002
      $region84: #{up_block_forward.6} parent=35 // pred_fallthru
        _
    $region36: #{up_block_forward.6} parent=5 // pred_fallthru
      _
    %p3004 = scmp.le.s32.totalorder 2, %s14
    // Predicated region
    $region85: #{up_block_forward.6} parent=5 // pred_check
      %p3005 = pneg %p3004
    $region86: #{up_block_forward.6} parent=5 // pred_check_branch
      %3007 = sbr.rel (%p3005) target = $region88
    $region87: #{up_block_forward.6} parent=5 // pred_region
      %s3008 = ssub.s32 %s14, 2
    $region88: #{up_block_forward.6} parent=5 // pred_fallthru
      _
  $region6: #{up_block_forward.6} parent=0 // loop_footer
    %s18 = sadd.s32 1, %s14
  $region7: #{up_block_forward.6} parent=0 // loop_footer_branch
    %13 = sbr.rel target = $region3
  $region8: #{up_block_forward.6} parent=0 // loop_exit
    _

// kernel: up_block_forward.7
$region0: #{up_block_forward.7}
  #allocation0 [shape = 'u32[]', space=smem, size = 0x4, offset = 0x4, fixed_abs, tag = 'smem constant byte address 0x4 - core index']
  #allocation1 [shape = 'u32[144,128]{1,0:T(1,128)}', space=vmem, size = 0x12000, scoped, tag = 'internal scratch']
  %s0 = inlined_call_operand.vmem [shape: f32[2,128,128], index: 0, kind: input, shape index: {}]
  %s1 = inlined_call_operand.vmem [shape: f32[2,128,128], index: 1, kind: input, shape index: {}]
  %s2 = inlined_call_operand.vmem [shape: f32[128,128], index: 2, kind: input, shape index: {}]
  %s3 = inlined_call_operand.vmem [shape: f32[128,128], index: 3, kind: input, shape index: {}]
  %s4 = inlined_call_operand.vmem [shape: bf16[128,320], index: 4, kind: input, shape index: {}]
  %s5 = inlined_call_operand.vmem [shape: f32[128,320], index: 5, kind: input, shape index: {}]
  %s6 = inlined_call_operand.vmem [shape: f32[2,128,128], index: 6, kind: output, shape index: {0}]
  %s7 = inlined_call_operand.vmem [shape: bf16[2,128,256], index: 7, kind: output, shape index: {1}]
  %s8 = inlined_call_operand.vmem [shape: bf16[2,128,64], index: 8, kind: output, shape index: {2}]
  %9 = xla_tuple %s6, %s7, %s8
  %s10 = sld [smem:[#allocation0]]
  $region73: #{up_block_forward.7} parent=0
    _
  %s12 = ssub.s32 1, %s10
  %s13 = scalar_select 0, %s12, %s10
  loop: start=0, step=1, limit=4
  $region2: #{up_block_forward.7} parent=0 // loop_pre_header
    _
  $region3: #{up_block_forward.7} parent=0 // loop_header
    %s15 = sphi 0, %s19
    %p16 = scmp.ge.s32.totalorder %s15, 4
    %s22 = sphi 0, %s34
    %s23 = sphi 0, %s30
    %s24 = sphi 0, %s22
    %s25 = sphi 0, %s23
    %s26 = sphi 0, %s24
    %s27 = sphi 0, %s25
    %s39 = sphi 0, %s41
    %s42 = sphi 0, %s39
    %s43 = sphi 0, %s42
    %s59 = sphi 0, %s43
    %s67 = sphi 0, %s69
    %s70 = sphi 0, %s67
    %s71 = sphi 0, %s70
    %s87 = sphi 0, %s71
    %s93 = sphi 0, %s95
    %s96 = sphi 0, %s93
    %s97 = sphi 0, %s96
    %s113 = sphi 0, %s97
    %s119 = sphi 0, %s121
    %s122 = sphi 0, %s119
    %s123 = sphi 0, %s122
    %s139 = sphi 0, %s123
    %s143 = sphi 0, %s143
    %s145 = sphi 0, %s143
    %s146 = sphi 0, %s145
    %s160 = sphi 0, %s146
    %s166 = sphi 0, %s168
    %s169 = sphi 0, %s166
    %s170 = sphi 0, %s169
    %s186 = sphi 0, %s170
    %s194 = sphi 0, %s196
    %s197 = sphi 0, %s194
    %s198 = sphi 0, %s197
    %s214 = sphi 0, %s198
    %s222 = sphi 0, %s224
    %s225 = sphi 0, %s222
    %s226 = sphi 0, %s225
    %s242 = sphi 0, %s226
    %s250 = sphi 0, %s252
    %s253 = sphi 0, %s250
    %s254 = sphi 0, %s253
    %s270 = sphi 0, %s254
  $region4: #{up_block_forward.7} parent=0 // loop_header_branch
    %18 = sbr.rel (%p16) target = $region8
  $region5: #{up_block_forward.7} parent=0 // loop_body
    %s20 = ssub.s32 %s15, 1
    %s21 = ssub.s32 %s15, 2
    %s28 = sadd.s32 1, %s23
    %p29 = scmp.ge.s32.totalorder %s28, 1
    %s30 = scalar_select %p29, 0, %s28
    %s31 = sadd.s32 1, %s22
    %s32 = scalar_select %p29, %s31, %s22
    %p33 = scmp.ge.s32.totalorder %s32, 2
    %s34 = scalar_select %p33, 0, %s32
    %s35 = ssub.s32 %s22, %s34
    %s36 = ssub.s32 %s23, %s30
    %s37 = sor.u32 %s35, %s36
    %p38 = scmp.eq.s32.totalorder %s37, 0
    %s40 = sadd.s32 %s39, 1
    %s41 = scalar_select %p38, %s39, %s40
    %p44 = pneg %p38
    %p45 = scmp.eq.s32.totalorder %s15, 1
    %p46 = por %p44, %p45
    %p47 = scmp.ne.s32.totalorder %s39, %s42
    %p48 = scmp.eq.s32.totalorder %s15, 0
    %p49 = por %p47, %p48
    %p50 = scmp.ne.s32.totalorder %s39, %s42
    %p51 = scmp.eq.s32.totalorder %s20, 1
    %p52 = por %p50, %p51
    %p53 = scmp.ne.s32.totalorder %s42, %s43
    %p54 = scmp.eq.s32.totalorder %s20, 0
    %p55 = por %p53, %p54
    %p56 = scmp.ne.s32.totalorder %s42, %s43
    %p57 = scmp.eq.s32.totalorder %s21, 1
    %p58 = por %p56, %p57
    %p60 = scmp.ne.s32.totalorder %s43, %s59
    %p61 = scmp.eq.s32.totalorder %s21, 0
    %p62 = por %p60, %p61
    %s63 = ssub.s32 %s22, %s34
    %s64 = ssub.s32 %s23, %s30
    %s65 = sor.u32 %s63, %s64
    %p66 = scmp.eq.s32.totalorder %s65, 0
    %s68 = sadd.s32 %s67, 1
    %s69 = scalar_select %p66, %s67, %s68
    %p72 = pneg %p66
    %p73 = scmp.eq.s32.totalorder %s15, 1
    %p74 = por %p72, %p73
    %p75 = scmp.ne.s32.totalorder %s67, %s70
    %p76 = scmp.eq.s32.totalorder %s15, 0
    %p77 = por %p75, %p76
    %p78 = scmp.ne.s32.totalorder %s67, %s70
    %p79 = scmp.eq.s32.totalorder %s20, 1
    %p80 = por %p78, %p79
    %p81 = scmp.ne.s32.totalorder %s70, %s71
    %p82 = scmp.eq.s32.totalorder %s20, 0
    %p83 = por %p81, %p82
    %p84 = scmp.ne.s32.totalorder %s70, %s71
    %p85 = scmp.eq.s32.totalorder %s21, 1
    %p86 = por %p84, %p85
    %p88 = scmp.ne.s32.totalorder %s71, %s87
    %p89 = scmp.eq.s32.totalorder %s21, 0
    %p90 = por %p88, %p89
    %s91 = ssub.s32 %s23, %s30
    %p92 = scmp.eq.s32.totalorder %s91, 0
    %s94 = sadd.s32 %s93, 1
    %s95 = scalar_select %p92, %s93, %s94
    %p98 = pneg %p92
    %p99 = scmp.eq.s32.totalorder %s15, 1
    %p100 = por %p98, %p99
    %p101 = scmp.ne.s32.totalorder %s93, %s96
    %p102 = scmp.eq.s32.totalorder %s15, 0
    %p103 = por %p101, %p102
    %p104 = scmp.ne.s32.totalorder %s93, %s96
    %p105 = scmp.eq.s32.totalorder %s20, 1
    %p106 = por %p104, %p105
    %p107 = scmp.ne.s32.totalorder %s96, %s97
    %p108 = scmp.eq.s32.totalorder %s20, 0
    %p109 = por %p107, %p108
    %p110 = scmp.ne.s32.totalorder %s96, %s97
    %p111 = scmp.eq.s32.totalorder %s21, 1
    %p112 = por %p110, %p111
    %p114 = scmp.ne.s32.totalorder %s97, %s113
    %p115 = scmp.eq.s32.totalorder %s21, 0
    %p116 = por %p114, %p115
    %s117 = ssub.s32 %s23, %s30
    %p118 = scmp.eq.s32.totalorder %s117, 0
    %s120 = sadd.s32 %s119, 1
    %s121 = scalar_select %p118, %s119, %s120
    %p124 = pneg %p118
    %p125 = scmp.eq.s32.totalorder %s15, 1
    %p126 = por %p124, %p125
    %p127 = scmp.ne.s32.totalorder %s119, %s122
    %p128 = scmp.eq.s32.totalorder %s15, 0
    %p129 = por %p127, %p128
    %p130 = scmp.ne.s32.totalorder %s119, %s122
    %p131 = scmp.eq.s32.totalorder %s20, 1
    %p132 = por %p130, %p131
    %p133 = scmp.ne.s32.totalorder %s122, %s123
    %p134 = scmp.eq.s32.totalorder %s20, 0
    %p135 = por %p133, %p134
    %p136 = scmp.ne.s32.totalorder %s122, %s123
    %p137 = scmp.eq.s32.totalorder %s21, 1
    %p138 = por %p136, %p137
    %p140 = scmp.ne.s32.totalorder %s123, %s139
    %p141 = scmp.eq.s32.totalorder %s21, 0
    %p142 = por %p140, %p141
    %s144 = sadd.s32 %s143, 1
    %p147 = scmp.eq.s32.totalorder %s15, 1
    %p148 = scmp.ne.s32.totalorder %s143, %s145
    %p149 = scmp.eq.s32.totalorder %s15, 0
    %p150 = por %p148, %p149
    %p151 = scmp.ne.s32.totalorder %s143, %s145
    %p152 = scmp.eq.s32.totalorder %s20, 1
    %p153 = por %p151, %p152
    %p154 = scmp.ne.s32.totalorder %s145, %s146
    %p155 = scmp.eq.s32.totalorder %s20, 0
    %p156 = por %p154, %p155
    %p157 = scmp.ne.s32.totalorder %s145, %s146
    %p158 = scmp.eq.s32.totalorder %s21, 1
    %p159 = por %p157, %p158
    %p161 = scmp.ne.s32.totalorder %s146, %s160
    %p162 = scmp.eq.s32.totalorder %s21, 0
    %p163 = por %p161, %p162
    %s164 = ssub.s32 %s23, %s30
    %p165 = scmp.eq.s32.totalorder %s164, 0
    %s167 = sadd.s32 %s166, 1
    %s168 = scalar_select %p165, %s166, %s167
    %p171 = pneg %p165
    %p172 = scmp.eq.s32.totalorder %s15, 1
    %p173 = por %p171, %p172
    %p174 = scmp.ne.s32.totalorder %s166, %s169
    %p175 = scmp.eq.s32.totalorder %s15, 0
    %p176 = por %p174, %p175
    %p177 = scmp.ne.s32.totalorder %s166, %s169
    %p178 = scmp.eq.s32.totalorder %s20, 1
    %p179 = por %p177, %p178
    %p180 = scmp.ne.s32.totalorder %s169, %s170
    %p181 = scmp.eq.s32.totalorder %s20, 0
    %p182 = por %p180, %p181
    %p183 = scmp.ne.s32.totalorder %s169, %s170
    %p184 = scmp.eq.s32.totalorder %s21, 1
    %p185 = por %p183, %p184
    %p187 = scmp.ne.s32.totalorder %s170, %s186
    %p188 = scmp.eq.s32.totalorder %s21, 0
    %p189 = por %p187, %p188
    %s190 = ssub.s32 %s22, %s34
    %s191 = ssub.s32 %s23, %s30
    %s192 = sor.u32 %s190, %s191
    %p193 = scmp.eq.s32.totalorder %s192, 0
    %s195 = sadd.s32 %s194, 1
    %s196 = scalar_select %p193, %s194, %s195
    %p199 = pneg %p193
    %p200 = scmp.eq.s32.totalorder %s15, 1
    %p201 = por %p199, %p200
    %p202 = scmp.ne.s32.totalorder %s194, %s197
    %p203 = scmp.eq.s32.totalorder %s15, 0
    %p204 = por %p202, %p203
    %p205 = scmp.ne.s32.totalorder %s194, %s197
    %p206 = scmp.eq.s32.totalorder %s20, 1
    %p207 = por %p205, %p206
    %p208 = scmp.ne.s32.totalorder %s197, %s198
    %p209 = scmp.eq.s32.totalorder %s20, 0
    %p210 = por %p208, %p209
    %p211 = scmp.ne.s32.totalorder %s197, %s198
    %p212 = scmp.eq.s32.totalorder %s21, 1
    %p213 = por %p211, %p212
    %p215 = scmp.ne.s32.totalorder %s198, %s214
    %p216 = scmp.eq.s32.totalorder %s21, 0
    %p217 = por %p215, %p216
    %s218 = ssub.s32 %s22, %s34
    %s219 = ssub.s32 %s23, %s30
    %s220 = sor.u32 %s218, %s219
    %p221 = scmp.eq.s32.totalorder %s220, 0
    %s223 = sadd.s32 %s222, 1
    %s224 = scalar_select %p221, %s222, %s223
    %p227 = pneg %p221
    %p228 = scmp.eq.s32.totalorder %s15, 1
    %p229 = por %p227, %p228
    %p230 = scmp.ne.s32.totalorder %s222, %s225
    %p231 = scmp.eq.s32.totalorder %s15, 0
    %p232 = por %p230, %p231
    %p233 = scmp.ne.s32.totalorder %s222, %s225
    %p234 = scmp.eq.s32.totalorder %s20, 1
    %p235 = por %p233, %p234
    %p236 = scmp.ne.s32.totalorder %s225, %s226
    %p237 = scmp.eq.s32.totalorder %s20, 0
    %p238 = por %p236, %p237
    %p239 = scmp.ne.s32.totalorder %s225, %s226
    %p240 = scmp.eq.s32.totalorder %s21, 1
    %p241 = por %p239, %p240
    %p243 = scmp.ne.s32.totalorder %s226, %s242
    %p244 = scmp.eq.s32.totalorder %s21, 0
    %p245 = por %p243, %p244
    %s246 = ssub.s32 %s22, %s34
    %s247 = ssub.s32 %s23, %s30
    %s248 = sor.u32 %s246, %s247
    %p249 = scmp.eq.s32.totalorder %s248, 0
    %s251 = sadd.s32 %s250, 1
    %s252 = scalar_select %p249, %s250, %s251
    %p255 = pneg %p249
    %p256 = scmp.eq.s32.totalorder %s15, 1
    %p257 = por %p255, %p256
    %p258 = scmp.ne.s32.totalorder %s250, %s253
    %p259 = scmp.eq.s32.totalorder %s15, 0
    %p260 = por %p258, %p259
    %p261 = scmp.ne.s32.totalorder %s250, %s253
    %p262 = scmp.eq.s32.totalorder %s20, 1
    %p263 = por %p261, %p262
    %p264 = scmp.ne.s32.totalorder %s253, %s254
    %p265 = scmp.eq.s32.totalorder %s20, 0
    %p266 = por %p264, %p265
    %p267 = scmp.ne.s32.totalorder %s253, %s254
    %p268 = scmp.eq.s32.totalorder %s21, 1
    %p269 = por %p267, %p268
    %p271 = scmp.ne.s32.totalorder %s254, %s270
    %p272 = scmp.eq.s32.totalorder %s21, 0
    %p273 = por %p271, %p272
    %p274 = scmp.le.s32.totalorder 1, %s15
    %p275 = scmp.lt.s32.totalorder %s15, 3
    %p276 = pnand %p274, %p275
    %p277 = pneg %p276
    // Predicated region
    $region9: #{up_block_forward.7} parent=5 // pred_check
      _
    $region10: #{up_block_forward.7} parent=5 // pred_check_branch
      %279 = sbr.rel (%p276) target = $region12
    $region11: #{up_block_forward.7} parent=5 // pred_region
      %s280 = ssub.s32 %s15, 1
      // Predicated region
      $region13: #{up_block_forward.7} parent=11 // pred_check
        %p281 = pneg %p109
      $region14: #{up_block_forward.7} parent=11 // pred_check_branch
        %283 = sbr.rel (%p281) target = $region16
      $region15: #{up_block_forward.7} parent=11 // pred_region
        %s284 = smul.u32 16, %s25
        %p285 = scmp.lt.s32.totalorder %s284, 15
        %s286 = scalar_select %p285, %s284, 15
        %s287 = smul.addr %s286, 8
        %s288 = scalar_lea.vmem %s2, %s287
        %s289 = smul.u32 16, %s25
      $region16: #{up_block_forward.7} parent=11 // pred_fallthru
        _
      // Predicated region
      $region17: #{up_block_forward.7} parent=11 // pred_check
        %p290 = pneg %p135
      $region18: #{up_block_forward.7} parent=11 // pred_check_branch
        %292 = sbr.rel (%p290) target = $region20
      $region19: #{up_block_forward.7} parent=11 // pred_region
        %s293 = smul.u32 16, %s25
        %p294 = scmp.lt.s32.totalorder %s293, 15
        %s295 = scalar_select %p294, %s293, 15
        %s296 = smul.addr %s295, 8
        %s297 = scalar_lea.vmem %s3, %s296
        %s298 = smul.u32 16, %s25
      $region20: #{up_block_forward.7} parent=11 // pred_fallthru
        _
      // Predicated region
      $region21: #{up_block_forward.7} parent=11 // pred_check
        %p299 = pneg %p156
      $region22: #{up_block_forward.7} parent=11 // pred_check_branch
        %301 = sbr.rel (%p299) target = $region24
      $region23: #{up_block_forward.7} parent=11 // pred_region
        _
      $region24: #{up_block_forward.7} parent=11 // pred_fallthru
        _
      // Predicated region
      $region25: #{up_block_forward.7} parent=11 // pred_check
        %p302 = pneg %p182
      $region26: #{up_block_forward.7} parent=11 // pred_check_branch
        %304 = sbr.rel (%p302) target = $region28
      $region27: #{up_block_forward.7} parent=11 // pred_region
        %s305 = smul.u32 16, %s25
        %p306 = scmp.lt.s32.totalorder %s305, 15
        %s307 = scalar_select %p306, %s305, 15
        %s308 = smul.addr %s307, 3
        %s309 = smul.addr %s308, 8
        %s310 = scalar_lea.vmem %s5, %s309
        %s311 = smul.u32 16, %s25
      $region28: #{up_block_forward.7} parent=11 // pred_fallthru
        _
    $region12: #{up_block_forward.7} parent=5 // pred_fallthru
      _
    %p312 = scmp.lt.s32.totalorder %s15, 2
    // Predicated region
    $region29: #{up_block_forward.7} parent=5 // pred_check
      %p313 = pneg %p312
    $region30: #{up_block_forward.7} parent=5 // pred_check_branch
      %315 = sbr.rel (%p313) target = $region32
    $region31: #{up_block_forward.7} parent=5 // pred_region
      // Predicated region
      $region33: #{up_block_forward.7} parent=31 // pred_check
        %p316 = pneg %p49
      $region34: #{up_block_forward.7} parent=31 // pred_check_branch
        %318 = sbr.rel (%p316) target = $region36
      $region35: #{up_block_forward.7} parent=31 // pred_region
        %s319 = smul.u32 16, %s23
        %p320 = scmp.lt.s32.totalorder %s22, 1
        %s321 = scalar_select %p320, %s22, 1
        %p322 = scmp.lt.s32.totalorder %s319, 15
        %s323 = scalar_select %p322, %s319, 15
        %s324 = smul.addr %s321, 16
        %s325 = sadd.s32 %s323, %s324
        %s326 = smul.addr %s325, 8
        %s327 = scalar_lea.vmem %s0, %s326
        %s328 = smul.u32 16, %s23
      $region36: #{up_block_forward.7} parent=31 // pred_fallthru
        _
      // Predicated region
      $region37: #{up_block_forward.7} parent=31 // pred_check
        %p329 = pneg %p77
      $region38: #{up_block_forward.7} parent=31 // pred_check_branch
        %331 = sbr.rel (%p329) target = $region40
      $region39: #{up_block_forward.7} parent=31 // pred_region
        %s332 = smul.u32 16, %s23
        %p333 = scmp.lt.s32.totalorder %s22, 1
        %s334 = scalar_select %p333, %s22, 1
        %p335 = scmp.lt.s32.totalorder %s332, 15
        %s336 = scalar_select %p335, %s332, 15
        %s337 = smul.addr %s334, 16
        %s338 = sadd.s32 %s336, %s337
        %s339 = smul.addr %s338, 8
        %s340 = scalar_lea.vmem %s1, %s339
        %s341 = smul.u32 16, %s23
      $region40: #{up_block_forward.7} parent=31 // pred_fallthru
        _
    $region32: #{up_block_forward.7} parent=5 // pred_fallthru
      _
    %p342 = scmp.le.s32.totalorder 1, %s15
    %p343 = scmp.lt.s32.totalorder %s15, 3
    %p344 = pnand %p342, %p343
    %p345 = pneg %p344
    // Predicated region
    $region41: #{up_block_forward.7} parent=5 // pred_check
      _
    $region42: #{up_block_forward.7} parent=5 // pred_check_branch
      %347 = sbr.rel (%p344) target = $region44
    $region43: #{up_block_forward.7} parent=5 // pred_region
      %s348 = ssub.s32 %s15, 1
      %s349 = smul.u32 16, %s25
      %p350 = scmp.lt.s32.totalorder %s24, 1
      %s351 = scalar_select %p350, %s24, 1
      %p352 = scmp.lt.s32.totalorder %s349, 15
      %s353 = scalar_select %p352, %s349, 15
      %s354 = smul.addr %s351, 16
      %s355 = sadd.s32 %s353, %s354
      %s356 = smul.addr %s355, 8
      %s357 = scalar_lea.vmem %s0, %s356
      %p358 = pneg %p55
      %p359 = pneg %p52
      %s360 = smul.u32 16, %s25
      %p361 = scmp.lt.s32.totalorder %s24, 1
      %s362 = scalar_select %p361, %s24, 1
      %p363 = scmp.lt.s32.totalorder %s360, 15
      %s364 = scalar_select %p363, %s360, 15
      %s365 = smul.addr %s362, 16
      %s366 = sadd.s32 %s364, %s365
      %s367 = smul.addr %s366, 8
      %s368 = scalar_lea.vmem %s1, %s367
      %p369 = pneg %p83
      %p370 = pneg %p80
      %s371 = smul.u32 16, %s25
      %p372 = scmp.lt.s32.totalorder %s371, 15
      %s373 = scalar_select %p372, %s371, 15
      %s374 = smul.addr %s373, 8
      %s375 = scalar_lea.vmem %s2, %s374
      %p376 = pneg %p109
      %p377 = pneg %p106
      %s378 = smul.u32 16, %s25
      %p379 = scmp.lt.s32.totalorder %s378, 15
      %s380 = scalar_select %p379, %s378, 15
      %s381 = smul.addr %s380, 8
      %s382 = scalar_lea.vmem %s3, %s381
      %p383 = pneg %p135
      %p384 = pneg %p132
      %p385 = pneg %p156
      %p386 = pneg %p153
      %s387 = smul.u32 16, %s25
      %p388 = scmp.lt.s32.totalorder %s387, 15
      %s389 = scalar_select %p388, %s387, 15
      %s390 = smul.addr %s389, 3
      %s391 = smul.addr %s390, 8
      %s392 = scalar_lea.vmem %s5, %s391
      %p393 = pneg %p182
      %p394 = pneg %p179
      %p395 = pneg %p210
      %p396 = pneg %p207
      %s397 = smul.u32 16, %s25
      %p398 = scmp.lt.s32.totalorder %s24, 1
      %s399 = scalar_select %p398, %s24, 1
      %p400 = scmp.lt.s32.totalorder %s397, 15
      %s401 = scalar_select %p400, %s397, 15
      %s402 = smul.addr %s399, 16
      %s403 = sadd.s32 %s401, %s402
      %s404 = smul.addr %s403, 8
      %s405 = scalar_lea.vmem %s6, %s404
      %p406 = pneg %p238
      %p407 = pneg %p235
      %s408 = smul.u32 16, %s25
      %p409 = scmp.lt.s32.totalorder %s24, 1
      %s410 = scalar_select %p409, %s24, 1
      %p411 = scmp.lt.s32.totalorder %s408, 15
      %s412 = scalar_select %p411, %s408, 15
      %s413 = smul.addr %s412, 2
      %s414 = smul.addr %s410, 32
      %s415 = sadd.s32 %s413, %s414
      %s416 = smul.addr %s415, 4
      %s417 = scalar_lea.vmem %s7, %s416
      %p418 = pneg %p266
      %p419 = pneg %p263
      %s420 = smul.u32 16, %s25
      %p421 = scmp.lt.s32.totalorder %s24, 1
      %s422 = scalar_select %p421, %s24, 1
      %p423 = scmp.lt.s32.totalorder %s420, 15
      %s424 = scalar_select %p423, %s420, 15
      %s425 = smul.addr %s422, 16
      %s426 = sadd.s32 %s424, %s425
      %s427 = smul.addr %s426, 4
      %s428 = scalar_lea.vmem %s8, %s427
      %s429 = smul.u32 16, %s25
      %p430 = scmp.lt.s32.totalorder %s24, 1
      %s431 = scalar_select %p430, %s24, 1
      %p432 = scmp.lt.s32.totalorder %s429, 15
      %s433 = scalar_select %p432, %s429, 15
      %s434 = smul.addr %s431, 16
      %s435 = sadd.s32 %s433, %s434
      %s436 = smul.addr %s435, 8
      %s437 = scalar_lea.vmem %s0, %s436
      %s438 = smul.u32 16, %s25
      %s439 = smul.u32 16, %s25
      %p440 = scmp.lt.s32.totalorder %s24, 1
      %s441 = scalar_select %p440, %s24, 1
      %p442 = scmp.lt.s32.totalorder %s439, 15
      %s443 = scalar_select %p442, %s439, 15
      %s444 = smul.addr %s441, 16
      %s445 = sadd.s32 %s443, %s444
      %s446 = smul.addr %s445, 8
      %s447 = scalar_lea.vmem %s1, %s446
      %s448 = smul.u32 16, %s25
      %s449 = smul.u32 16, %s25
      %p450 = scmp.lt.s32.totalorder %s449, 15
      %s451 = scalar_select %p450, %s449, 15
      %s452 = smul.addr %s451, 8
      %s453 = scalar_lea.vmem %s2, %s452
      %s454 = smul.u32 16, %s25
      %s455 = smul.u32 16, %s25
      %p456 = scmp.lt.s32.totalorder %s455, 15
      %s457 = scalar_select %p456, %s455, 15
      %s458 = smul.addr %s457, 8
      %s459 = scalar_lea.vmem %s3, %s458
      %s460 = smul.u32 16, %s25
      %s461 = smul.u32 16, %s25
      %p462 = scmp.lt.s32.totalorder %s461, 15
      %s463 = scalar_select %p462, %s461, 15
      %s464 = smul.addr %s463, 3
      %s465 = smul.addr %s464, 8
      %s466 = scalar_lea.vmem %s5, %s465
      %s467 = smul.u32 16, %s25
      %s468 = smul.u32 16, %s25
      %p469 = scmp.lt.s32.totalorder %s24, 1
      %s470 = scalar_select %p469, %s24, 1
      %p471 = scmp.lt.s32.totalorder %s468, 15
      %s472 = scalar_select %p471, %s468, 15
      %s473 = smul.addr %s470, 16
      %s474 = sadd.s32 %s472, %s473
      %s475 = smul.addr %s474, 8
      %s476 = scalar_lea.vmem %s6, %s475
      %s477 = smul.u32 16, %s25
      %s478 = smul.u32 16, %s25
      %p479 = scmp.lt.s32.totalorder %s24, 1
      %s480 = scalar_select %p479, %s24, 1
      %p481 = scmp.lt.s32.totalorder %s478, 15
      %s482 = scalar_select %p481, %s478, 15
      %s483 = smul.addr %s482, 2
      %s484 = smul.addr %s480, 32
      %s485 = sadd.s32 %s483, %s484
      %s486 = smul.addr %s485, 4
      %s487 = scalar_lea.vmem %s7, %s486
      %s488 = smul.u32 16, %s25
      %s489 = smul.u32 16, %s25
      %p490 = scmp.lt.s32.totalorder %s24, 1
      %s491 = scalar_select %p490, %s24, 1
      %p492 = scmp.lt.s32.totalorder %s489, 15
      %s493 = scalar_select %p492, %s489, 15
      %s494 = smul.addr %s491, 16
      %s495 = sadd.s32 %s493, %s494
      %s496 = smul.addr %s495, 4
      %s497 = scalar_lea.vmem %s8, %s496
      %s498 = smul.u32 16, %s25
      %v500 = vld [vmem:[%s453] sm:$0xff]
      %v501 = vld [vmem:[%s453 + $0x8] sm:$0xff]
      %v502 = vld [vmem:[%s453 + $0x10] sm:$0xff]
      %v503 = vld [vmem:[%s453 + $0x18] sm:$0xff]
      %v504 = vld [vmem:[%s453 + $0x20] sm:$0xff]
      %v505 = vld [vmem:[%s453 + $0x28] sm:$0xff]
      %v506 = vld [vmem:[%s453 + $0x30] sm:$0xff]
      %v507 = vld [vmem:[%s453 + $0x38] sm:$0xff]
      %v508 = vld [vmem:[%s453 + $0x40] sm:$0xff]
      %v509 = vld [vmem:[%s453 + $0x48] sm:$0xff]
      %v510 = vld [vmem:[%s453 + $0x50] sm:$0xff]
      %v511 = vld [vmem:[%s453 + $0x58] sm:$0xff]
      %v512 = vld [vmem:[%s453 + $0x60] sm:$0xff]
      %v513 = vld [vmem:[%s453 + $0x68] sm:$0xff]
      %v514 = vld [vmem:[%s453 + $0x70] sm:$0xff]
      %v515 = vld [vmem:[%s453 + $0x78] sm:$0xff]
      %v516 = vld [vmem:[%s459] sm:$0xff]
      %v517 = vld [vmem:[%s459 + $0x8] sm:$0xff]
      %v518 = vld [vmem:[%s459 + $0x10] sm:$0xff]
      %v519 = vld [vmem:[%s459 + $0x18] sm:$0xff]
      %v520 = vld [vmem:[%s459 + $0x20] sm:$0xff]
      %v521 = vld [vmem:[%s459 + $0x28] sm:$0xff]
      %v522 = vld [vmem:[%s459 + $0x30] sm:$0xff]
      %v523 = vld [vmem:[%s459 + $0x38] sm:$0xff]
      %v524 = vld [vmem:[%s459 + $0x40] sm:$0xff]
      %v525 = vld [vmem:[%s459 + $0x48] sm:$0xff]
      %v526 = vld [vmem:[%s459 + $0x50] sm:$0xff]
      %v527 = vld [vmem:[%s459 + $0x58] sm:$0xff]
      %v528 = vld [vmem:[%s459 + $0x60] sm:$0xff]
      %v529 = vld [vmem:[%s459 + $0x68] sm:$0xff]
      %v530 = vld [vmem:[%s459 + $0x70] sm:$0xff]
      %v531 = vld [vmem:[%s459 + $0x78] sm:$0xff]
      %vm532 = vcmp.ge.f32.partialorder %v500, 0.0
      %vm533 = vcmp.ge.f32.partialorder %v501, 0.0
      %vm534 = vcmp.ge.f32.partialorder %v502, 0.0
      %vm535 = vcmp.ge.f32.partialorder %v503, 0.0
      %vm536 = vcmp.ge.f32.partialorder %v504, 0.0
      %vm537 = vcmp.ge.f32.partialorder %v505, 0.0
      %vm538 = vcmp.ge.f32.partialorder %v506, 0.0
      %vm539 = vcmp.ge.f32.partialorder %v507, 0.0
      %vm540 = vcmp.ge.f32.partialorder %v508, 0.0
      %vm541 = vcmp.ge.f32.partialorder %v509, 0.0
      %vm542 = vcmp.ge.f32.partialorder %v510, 0.0
      %vm543 = vcmp.ge.f32.partialorder %v511, 0.0
      %vm544 = vcmp.ge.f32.partialorder %v512, 0.0
      %vm545 = vcmp.ge.f32.partialorder %v513, 0.0
      %vm546 = vcmp.ge.f32.partialorder %v514, 0.0
      %vm547 = vcmp.ge.f32.partialorder %v515, 0.0
      %v548 = vld [vmem:[%s437] sm:$0xff]
      %v549 = vld [vmem:[%s437 + $0x8] sm:$0xff]
      %v550 = vld [vmem:[%s437 + $0x10] sm:$0xff]
      %v551 = vld [vmem:[%s437 + $0x18] sm:$0xff]
      %v552 = vld [vmem:[%s437 + $0x20] sm:$0xff]
      %v553 = vld [vmem:[%s437 + $0x28] sm:$0xff]
      %v554 = vld [vmem:[%s437 + $0x30] sm:$0xff]
      %v555 = vld [vmem:[%s437 + $0x38] sm:$0xff]
      %v556 = vld [vmem:[%s437 + $0x40] sm:$0xff]
      %v557 = vld [vmem:[%s437 + $0x48] sm:$0xff]
      %v558 = vld [vmem:[%s437 + $0x50] sm:$0xff]
      %v559 = vld [vmem:[%s437 + $0x58] sm:$0xff]
      %v560 = vld [vmem:[%s437 + $0x60] sm:$0xff]
      %v561 = vld [vmem:[%s437 + $0x68] sm:$0xff]
      %v562 = vld [vmem:[%s437 + $0x70] sm:$0xff]
      %v563 = vld [vmem:[%s437 + $0x78] sm:$0xff]
      %v564 = vld [vmem:[%s447] sm:$0xff]
      %v565 = vld [vmem:[%s447 + $0x8] sm:$0xff]
      %v566 = vld [vmem:[%s447 + $0x10] sm:$0xff]
      %v567 = vld [vmem:[%s447 + $0x18] sm:$0xff]
      %v568 = vld [vmem:[%s447 + $0x20] sm:$0xff]
      %v569 = vld [vmem:[%s447 + $0x28] sm:$0xff]
      %v570 = vld [vmem:[%s447 + $0x30] sm:$0xff]
      %v571 = vld [vmem:[%s447 + $0x38] sm:$0xff]
      %v572 = vld [vmem:[%s447 + $0x40] sm:$0xff]
      %v573 = vld [vmem:[%s447 + $0x48] sm:$0xff]
      %v574 = vld [vmem:[%s447 + $0x50] sm:$0xff]
      %v575 = vld [vmem:[%s447 + $0x58] sm:$0xff]
      %v576 = vld [vmem:[%s447 + $0x60] sm:$0xff]
      %v577 = vld [vmem:[%s447 + $0x68] sm:$0xff]
      %v578 = vld [vmem:[%s447 + $0x70] sm:$0xff]
      %v579 = vld [vmem:[%s447 + $0x78] sm:$0xff]
      %v580 = vsel %vm532, %v548, %v564
      %v581 = vsel %vm533, %v549, %v565
      %v582 = vsel %vm534, %v550, %v566
      %v583 = vsel %vm535, %v551, %v567
      %v584 = vsel %vm536, %v552, %v568
      %v585 = vsel %vm537, %v553, %v569
      %v586 = vsel %vm538, %v554, %v570
      %v587 = vsel %vm539, %v555, %v571
      %v588 = vsel %vm540, %v556, %v572
      %v589 = vsel %vm541, %v557, %v573
      %v590 = vsel %vm542, %v558, %v574
      %v591 = vsel %vm543, %v559, %v575
      %v592 = vsel %vm544, %v560, %v576
      %v593 = vsel %vm545, %v561, %v577
      %v594 = vsel %vm546, %v562, %v578
      %v595 = vsel %vm547, %v563, %v579
      %v596 = vmul.f32 %v580, %v500
      %v597 = vmul.f32 %v581, %v501
      %v598 = vmul.f32 %v582, %v502
      %v599 = vmul.f32 %v583, %v503
      %v600 = vmul.f32 %v584, %v504
      %v601 = vmul.f32 %v585, %v505
      %v602 = vmul.f32 %v586, %v506
      %v603 = vmul.f32 %v587, %v507
      %v604 = vmul.f32 %v588, %v508
      %v605 = vmul.f32 %v589, %v509
      %v606 = vmul.f32 %v590, %v510
      %v607 = vmul.f32 %v591, %v511
      %v608 = vmul.f32 %v592, %v512
      %v609 = vmul.f32 %v593, %v513
      %v610 = vmul.f32 %v594, %v514
      %v611 = vmul.f32 %v595, %v515
      %v612 = vadd.f32 %v596, %v516
      %v613 = vadd.f32 %v597, %v517
      %v614 = vadd.f32 %v598, %v518
      %v615 = vadd.f32 %v599, %v519
      %v616 = vadd.f32 %v600, %v520
      %v617 = vadd.f32 %v601, %v521
      %v618 = vadd.f32 %v602, %v522
      %v619 = vadd.f32 %v603, %v523
      %v620 = vadd.f32 %v604, %v524
      %v621 = vadd.f32 %v605, %v525
      %v622 = vadd.f32 %v606, %v526
      %v623 = vadd.f32 %v607, %v527
      %v624 = vadd.f32 %v608, %v528
      %v625 = vadd.f32 %v609, %v529
      %v626 = vadd.f32 %v610, %v530
      %v627 = vadd.f32 %v611, %v531
      %vm628 = vcmp.ge.f32.partialorder %v612, 0.0
      %vm629 = vcmp.ge.f32.partialorder %v613, 0.0
      %vm630 = vcmp.ge.f32.partialorder %v614, 0.0
      %vm631 = vcmp.ge.f32.partialorder %v615, 0.0
      %vm632 = vcmp.ge.f32.partialorder %v616, 0.0
      %vm633 = vcmp.ge.f32.partialorder %v617, 0.0
      %vm634 = vcmp.ge.f32.partialorder %v618, 0.0
      %vm635 = vcmp.ge.f32.partialorder %v619, 0.0
      %vm636 = vcmp.ge.f32.partialorder %v620, 0.0
      %vm637 = vcmp.ge.f32.partialorder %v621, 0.0
      %vm638 = vcmp.ge.f32.partialorder %v622, 0.0
      %vm639 = vcmp.ge.f32.partialorder %v623, 0.0
      %vm640 = vcmp.ge.f32.partialorder %v624, 0.0
      %vm641 = vcmp.ge.f32.partialorder %v625, 0.0
      %vm642 = vcmp.ge.f32.partialorder %v626, 0.0
      %vm643 = vcmp.ge.f32.partialorder %v627, 0.0
      %v644 = vmul.f32 %v612, 0.2
      %v645 = vmul.f32 %v613, 0.2
      %v646 = vmul.f32 %v614, 0.2
      %v647 = vmul.f32 %v615, 0.2
      %v648 = vmul.f32 %v616, 0.2
      %v649 = vmul.f32 %v617, 0.2
      %v650 = vmul.f32 %v618, 0.2
      %v651 = vmul.f32 %v619, 0.2
      %v652 = vmul.f32 %v620, 0.2
      %v653 = vmul.f32 %v621, 0.2
      %v654 = vmul.f32 %v622, 0.2
      %v655 = vmul.f32 %v623, 0.2
      %v656 = vmul.f32 %v624, 0.2
      %v657 = vmul.f32 %v625, 0.2
      %v658 = vmul.f32 %v626, 0.2
      %v659 = vmul.f32 %v627, 0.2
      %v660 = vsel %vm628, %v612, %v644
      %v661 = vsel %vm629, %v613, %v645
      %v662 = vsel %vm630, %v614, %v646
      %v663 = vsel %vm631, %v615, %v647
      %v664 = vsel %vm632, %v616, %v648
      %v665 = vsel %vm633, %v617, %v649
      %v666 = vsel %vm634, %v618, %v650
      %v667 = vsel %vm635, %v619, %v651
      %v668 = vsel %vm636, %v620, %v652
      %v669 = vsel %vm637, %v621, %v653
      %v670 = vsel %vm638, %v622, %v654
      %v671 = vsel %vm639, %v623, %v655
      %v672 = vsel %vm640, %v624, %v656
      %v673 = vsel %vm641, %v625, %v657
      %v674 = vsel %vm642, %v626, %v658
      %v675 = vsel %vm643, %v627, %v659
      %676 = vst [vmem:[%s476] sm:$0xff] %v660
      %677 = vst [vmem:[%s476 + $0x8] sm:$0xff] %v661
      %678 = vst [vmem:[%s476 + $0x10] sm:$0xff] %v662
      %679 = vst [vmem:[%s476 + $0x18] sm:$0xff] %v663
      %680 = vst [vmem:[%s476 + $0x20] sm:$0xff] %v664
      %681 = vst [vmem:[%s476 + $0x28] sm:$0xff] %v665
      %682 = vst [vmem:[%s476 + $0x30] sm:$0xff] %v666
      %683 = vst [vmem:[%s476 + $0x38] sm:$0xff] %v667
      %684 = vst [vmem:[%s476 + $0x40] sm:$0xff] %v668
      %685 = vst [vmem:[%s476 + $0x48] sm:$0xff] %v669
      %686 = vst [vmem:[%s476 + $0x50] sm:$0xff] %v670
      %687 = vst [vmem:[%s476 + $0x58] sm:$0xff] %v671
      %688 = vst [vmem:[%s476 + $0x60] sm:$0xff] %v672
      %689 = vst [vmem:[%s476 + $0x68] sm:$0xff] %v673
      %690 = vst [vmem:[%s476 + $0x70] sm:$0xff] %v674
      %691 = vst [vmem:[%s476 + $0x78] sm:$0xff] %v675
      %v692 = vpack.c.bf16 %v661, %v660
      %v693 = vpack.c.bf16 %v663, %v662
      %v694 = vpack.c.bf16 %v665, %v664
      %v695 = vpack.c.bf16 %v667, %v666
      %v696 = vpack.c.bf16 %v669, %v668
      %v697 = vpack.c.bf16 %v671, %v670
      %v698 = vpack.c.bf16 %v673, %v672
      %v699 = vpack.c.bf16 %v675, %v674
      %v700 = vld [vmem:[%s4] sm:$0xff]
      %v701 = vld [vmem:[%s4 + $0x8] sm:$0xf]
      %v702 = vld [vmem:[%s4 + $0xc] sm:$0xff]
      %v703 = vld [vmem:[%s4 + $0x14] sm:$0xf]
      %v704 = vld [vmem:[%s4 + $0x18] sm:$0xff]
      %v705 = vld [vmem:[%s4 + $0x20] sm:$0xf]
      %v706 = vld [vmem:[%s4 + $0x24] sm:$0xff]
      %v707 = vld [vmem:[%s4 + $0x2c] sm:$0xf]
      %v708 = vld [vmem:[%s4 + $0x30] sm:$0xff]
      %v709 = vld [vmem:[%s4 + $0x38] sm:$0xf]
      %v710 = vld [vmem:[%s4 + $0x3c] sm:$0xff]
      %v711 = vld [vmem:[%s4 + $0x44] sm:$0xf]
      %v712 = vld [vmem:[%s4 + $0x48] sm:$0xff]
      %v713 = vld [vmem:[%s4 + $0x50] sm:$0xf]
      %v714 = vld [vmem:[%s4 + $0x54] sm:$0xff]
      %v715 = vld [vmem:[%s4 + $0x5c] sm:$0xf]
      %v716 = vld [vmem:[%s4 + $0x60] sm:$0xff]
      %v717 = vld [vmem:[%s4 + $0x68] sm:$0xf]
      %v718 = vld [vmem:[%s4 + $0x6c] sm:$0xff]
      %v719 = vld [vmem:[%s4 + $0x74] sm:$0xf]
      %v720 = vld [vmem:[%s4 + $0x78] sm:$0xff]
      %v721 = vld [vmem:[%s4 + $0x80] sm:$0xf]
      %v722 = vld [vmem:[%s4 + $0x84] sm:$0xff]
      %v723 = vld [vmem:[%s4 + $0x8c] sm:$0xf]
      %v724 = vld [vmem:[%s4 + $0x90] sm:$0xff]
      %v725 = vld [vmem:[%s4 + $0x98] sm:$0xf]
      %v726 = vld [vmem:[%s4 + $0x9c] sm:$0xff]
      %v727 = vld [vmem:[%s4 + $0xa4] sm:$0xf]
      %v728 = vld [vmem:[%s4 + $0xa8] sm:$0xff]
      %v729 = vld [vmem:[%s4 + $0xb0] sm:$0xf]
      %v730 = vld [vmem:[%s4 + $0xb4] sm:$0xff]
      %v731 = vld [vmem:[%s4 + $0xbc] sm:$0xf]
      %v732 = vld [vmem:[%s466] sm:$0xff]
      %v733 = vld [vmem:[%s466 + $0x8] sm:$0xff]
      %v734 = vld [vmem:[%s466 + $0x10] sm:$0xff]
      %v735 = vld [vmem:[%s466 + $0x18] sm:$0xff]
      %v736 = vld [vmem:[%s466 + $0x20] sm:$0xff]
      %v737 = vld [vmem:[%s466 + $0x28] sm:$0xff]
      %v738 = vld [vmem:[%s466 + $0x30] sm:$0xff]
      %v739 = vld [vmem:[%s466 + $0x38] sm:$0xff]
      %v740 = vld [vmem:[%s466 + $0x40] sm:$0xff]
      %v741 = vld [vmem:[%s466 + $0x48] sm:$0xff]
      %v742 = vld [vmem:[%s466 + $0x50] sm:$0xff]
      %v743 = vld [vmem:[%s466 + $0x58] sm:$0xff]
      %v744 = vld [vmem:[%s466 + $0x60] sm:$0xff]
      %v745 = vld [vmem:[%s466 + $0x68] sm:$0xff]
      %v746 = vld [vmem:[%s466 + $0x70] sm:$0xff]
      %v747 = vld [vmem:[%s466 + $0x78] sm:$0xff]
      %v748 = vld [vmem:[%s466 + $0x80] sm:$0xff]
      %v749 = vld [vmem:[%s466 + $0x88] sm:$0xff]
      %v750 = vld [vmem:[%s466 + $0x90] sm:$0xff]
      %v751 = vld [vmem:[%s466 + $0x98] sm:$0xff]
      %v752 = vld [vmem:[%s466 + $0xa0] sm:$0xff]
      %v753 = vld [vmem:[%s466 + $0xa8] sm:$0xff]
      %v754 = vld [vmem:[%s466 + $0xb0] sm:$0xff]
      %v755 = vld [vmem:[%s466 + $0xb8] sm:$0xff]
      %v756 = vld [vmem:[%s466 + $0xc0] sm:$0xff]
      %v757 = vld [vmem:[%s466 + $0xc8] sm:$0xff]
      %v758 = vld [vmem:[%s466 + $0xd0] sm:$0xff]
      %v759 = vld [vmem:[%s466 + $0xd8] sm:$0xff]
      %v760 = vld [vmem:[%s466 + $0xe0] sm:$0xff]
      %v761 = vld [vmem:[%s466 + $0xe8] sm:$0xff]
      %v762 = vld [vmem:[%s466 + $0xf0] sm:$0xff]
      %v763 = vld [vmem:[%s466 + $0xf8] sm:$0xff]
      %v764 = vld [vmem:[%s466 + $0x100] sm:$0xff]
      %v765 = vld [vmem:[%s466 + $0x108] sm:$0xff]
      %v766 = vld [vmem:[%s466 + $0x110] sm:$0xff]
      %v767 = vld [vmem:[%s466 + $0x118] sm:$0xff]
      %v768 = vld [vmem:[%s466 + $0x120] sm:$0xff]
      %v769 = vld [vmem:[%s466 + $0x128] sm:$0xff]
      %v770 = vld [vmem:[%s466 + $0x130] sm:$0xff]
      %v771 = vld [vmem:[%s466 + $0x138] sm:$0xff]
      %v772 = vld [vmem:[%s466 + $0x140] sm:$0xff]
      %v773 = vld [vmem:[%s466 + $0x148] sm:$0xff]
      %v774 = vld [vmem:[%s466 + $0x150] sm:$0xff]
      %v775 = vld [vmem:[%s466 + $0x158] sm:$0xff]
      %v776 = vld [vmem:[%s466 + $0x160] sm:$0xff]
      %v777 = vld [vmem:[%s466 + $0x168] sm:$0xff]
      %v778 = vld [vmem:[%s466 + $0x170] sm:$0xff]
      %v779 = vld [vmem:[%s466 + $0x178] sm:$0xff]
      %v812 = vunpack.c.l.b16 %v700
      %v813 = vunpack.c.h.b16 %v700
      %v814 = vunpack.c.l.b16 %v701
      %v815 = vunpack.c.l.b16 %v702
      %v816 = vunpack.c.h.b16 %v702
      %v817 = vunpack.c.l.b16 %v703
      %v818 = vunpack.c.l.b16 %v704
      %v819 = vunpack.c.h.b16 %v704
      %v820 = vunpack.c.l.b16 %v705
      %v821 = vunpack.c.l.b16 %v706
      %v822 = vunpack.c.h.b16 %v706
      %v823 = vunpack.c.l.b16 %v707
      %v824 = vunpack.c.l.b16 %v708
      %v825 = vunpack.c.h.b16 %v708
      %v826 = vunpack.c.l.b16 %v709
      %v827 = vunpack.c.l.b16 %v710
      %v828 = vunpack.c.h.b16 %v710
      %v829 = vunpack.c.l.b16 %v711
      %v830 = vunpack.c.l.b16 %v712
      %v831 = vunpack.c.h.b16 %v712
      %v832 = vunpack.c.l.b16 %v713
      %v833 = vunpack.c.l.b16 %v714
      %v834 = vunpack.c.h.b16 %v714
      %v835 = vunpack.c.l.b16 %v715
      %v836 = vunpack.c.l.b16 %v716
      %v837 = vunpack.c.h.b16 %v716
      %v838 = vunpack.c.l.b16 %v717
      %v839 = vunpack.c.l.b16 %v718
      %v840 = vunpack.c.h.b16 %v718
      %v841 = vunpack.c.l.b16 %v719
      %v842 = vunpack.c.l.b16 %v720
      %v843 = vunpack.c.h.b16 %v720
      %v844 = vunpack.c.l.b16 %v721
      %v845 = vunpack.c.l.b16 %v722
      %v846 = vunpack.c.h.b16 %v722
      %v847 = vunpack.c.l.b16 %v723
      %v848 = vunpack.c.l.b16 %v724
      %v849 = vunpack.c.h.b16 %v724
      %v850 = vunpack.c.l.b16 %v725
      %v851 = vunpack.c.l.b16 %v726
      %v852 = vunpack.c.h.b16 %v726
      %v853 = vunpack.c.l.b16 %v727
      %v854 = vunpack.c.l.b16 %v728
      %v855 = vunpack.c.h.b16 %v728
      %v856 = vunpack.c.l.b16 %v729
      %v857 = vunpack.c.l.b16 %v730
      %v858 = vunpack.c.h.b16 %v730
      %v859 = vunpack.c.l.b16 %v731
      %v860 = vpack.c.b16 %v815, %v812
      %v861 = vpack.c.b16 %v816, %v813
      %v862 = vpack.c.b16 %v817, %v814
      %v863 = vpack.c.b16 %v821, %v818
      %v864 = vpack.c.b16 %v822, %v819
      %v865 = vpack.c.b16 %v823, %v820
      %v866 = vpack.c.b16 %v827, %v824
      %v867 = vpack.c.b16 %v828, %v825
      %v868 = vpack.c.b16 %v829, %v826
      %v869 = vpack.c.b16 %v833, %v830
      %v870 = vpack.c.b16 %v834, %v831
      %v871 = vpack.c.b16 %v835, %v832
      %v872 = vpack.c.b16 %v839, %v836
      %v873 = vpack.c.b16 %v840, %v837
      %v874 = vpack.c.b16 %v841, %v838
      %v875 = vpack.c.b16 %v845, %v842
      %v876 = vpack.c.b16 %v846, %v843
      %v877 = vpack.c.b16 %v847, %v844
      %v878 = vpack.c.b16 %v851, %v848
      %v879 = vpack.c.b16 %v852, %v849
      %v880 = vpack.c.b16 %v853, %v850
      %v881 = vpack.c.b16 %v857, %v854
      %v882 = vpack.c.b16 %v858, %v855
      %v883 = vpack.c.b16 %v859, %v856
      %908 = vmatprep.subr.bf16.mxu0 %v861
      %909 = vmatpush1.bf16.msra.mxu0 %v860
      %910 = vmatprep.subr.bf16.mxu0 %v864
      %911 = vmatpush1.bf16.msra.mxu0 %v863
      %912 = vmatprep.subr.bf16.mxu0 %v867
      %913 = vmatpush1.bf16.msra.mxu0 %v866
      %914 = vmatprep.subr.bf16.mxu0 %v870
      %915 = vmatpush1.bf16.msra.mxu0 %v869
      %916 = vmatprep.subr.bf16.mxu0 %v873
      %917 = vmatpush1.bf16.msra.mxu0 %v872
      %918 = vmatprep.subr.bf16.mxu0 %v876
      %919 = vmatpush1.bf16.msra.mxu0 %v875
      %920 = vmatprep.subr.bf16.mxu0 %v879
      %921 = vmatpush1.bf16.msra.mxu0 %v878
      %922 = vmatprep.subr.bf16.mxu0 %v882
      %923 = vmatpush1.bf16.msra.mxu0 %v881
      %924 = vmatprep.subr.bf16.mxu0 0
      %925 = vmatpush1.bf16.msra.mxu0 0
      %926 = vmatprep.subr.bf16.mxu0 0
      %927 = vmatpush1.bf16.msra.mxu0 0
      %928 = vmatprep.subr.bf16.mxu0 0
      %929 = vmatpush1.bf16.msra.mxu0 0
      %930 = vmatprep.subr.bf16.mxu0 0
      %931 = vmatpush1.bf16.msra.mxu0 0
      %932 = vmatprep.subr.bf16.mxu0 0
      %933 = vmatpush1.bf16.msra.mxu0 0
      %934 = vmatprep.subr.bf16.mxu0 0
      %935 = vmatpush1.bf16.msra.mxu0 0
      %936 = vmatprep.subr.bf16.mxu0 0
      %937 = vmatpush1.bf16.msra.mxu0 0
      %938 = vmatprep.subr.bf16.mxu0 0
      %939 = vmatpush1.bf16.msra.mxu0 0
      %940 = vmatprep.mubr.bf16.mxu0 0
      %941 = vmatmul.mubr.bf16.gmra.mrb[0].mxu0 %v692
      %v942 = vpop.f32.mrb[0].mxu0
      %v943 = vadd.f32 %v732, %v942
      %v944 = vpop.f32.mrb[0].mxu0
      %v945 = vadd.f32 %v733, %v944
      %v946 = vpop.f32.mrb[0].mxu0
      %v947 = vadd.f32 %v735, %v946
      %v948 = vpop.f32.mrb[0].mxu0
      %v949 = vadd.f32 %v736, %v948
      %950 = vmatprep.mubr.bf16.mxu0 0
      %951 = vmatmul.mubr.bf16.gmra.mrb[0].mxu0 %v693
      %v952 = vpop.f32.mrb[0].mxu0
      %v953 = vadd.f32 %v738, %v952
      %v954 = vpop.f32.mrb[0].mxu0
      %v955 = vadd.f32 %v739, %v954
      %v956 = vpop.f32.mrb[0].mxu0
      %v957 = vadd.f32 %v741, %v956
      %v958 = vpop.f32.mrb[0].mxu0
      %v959 = vadd.f32 %v742, %v958
      %960 = vmatprep.mubr.bf16.mxu0 0
      %961 = vmatmul.mubr.bf16.gmra.mrb[0].mxu0 %v694
      %v962 = vpop.f32.mrb[0].mxu0
      %v963 = vadd.f32 %v744, %v962
      %v964 = vpop.f32.mrb[0].mxu0
      %v965 = vadd.f32 %v745, %v964
      %v966 = vpop.f32.mrb[0].mxu0
      %v967 = vadd.f32 %v747, %v966
      %v968 = vpop.f32.mrb[0].mxu0
      %v969 = vadd.f32 %v748, %v968
      %970 = vmatprep.mubr.bf16.mxu0 0
      %971 = vmatmul.mubr.bf16.gmra.mrb[0].mxu0 %v695
      %v972 = vpop.f32.mrb[0].mxu0
      %v973 = vadd.f32 %v750, %v972
      %v974 = vpop.f32.mrb[0].mxu0
      %v975 = vadd.f32 %v751, %v974
      %v976 = vpop.f32.mrb[0].mxu0
      %v977 = vadd.f32 %v753, %v976
      %v978 = vpop.f32.mrb[0].mxu0
      %v979 = vadd.f32 %v754, %v978
      %980 = vmatprep.mubr.bf16.mxu0 0
      %981 = vmatmul.mubr.bf16.gmra.mrb[0].mxu0 %v696
      %v982 = vpop.f32.mrb[0].mxu0
      %v983 = vadd.f32 %v756, %v982
      %v984 = vpop.f32.mrb[0].mxu0
      %v985 = vadd.f32 %v757, %v984
      %v986 = vpop.f32.mrb[0].mxu0
      %v987 = vadd.f32 %v759, %v986
      %v988 = vpop.f32.mrb[0].mxu0
      %v989 = vadd.f32 %v760, %v988
      %990 = vmatprep.mubr.bf16.mxu0 0
      %991 = vmatmul.mubr.bf16.gmra.mrb[0].mxu0 %v697
      %v992 = vpop.f32.mrb[0].mxu0
      %v993 = vadd.f32 %v762, %v992
      %v994 = vpop.f32.mrb[0].mxu0
      %v995 = vadd.f32 %v763, %v994
      %v996 = vpop.f32.mrb[0].mxu0
      %v997 = vadd.f32 %v765, %v996
      %v998 = vpop.f32.mrb[0].mxu0
      %v999 = vadd.f32 %v766, %v998
      %1000 = vmatprep.mubr.bf16.mxu0 0
      %1001 = vmatmul.mubr.bf16.gmra.mrb[0].mxu0 %v698
      %v1002 = vpop.f32.mrb[0].mxu0
      %v1003 = vadd.f32 %v768, %v1002
      %v1004 = vpop.f32.mrb[0].mxu0
      %v1005 = vadd.f32 %v769, %v1004
      %v1006 = vpop.f32.mrb[0].mxu0
      %v1007 = vadd.f32 %v771, %v1006
      %v1008 = vpop.f32.mrb[0].mxu0
      %v1009 = vadd.f32 %v772, %v1008
      %1010 = vmatprep.mubr.bf16.mxu0 0
      %1011 = vmatmul.mubr.bf16.gmra.mrb[0].mxu0 %v699
      %v1012 = vpop.f32.mrb[0].mxu0
      %v1013 = vadd.f32 %v774, %v1012
      %v1014 = vpop.f32.mrb[0].mxu0
      %v1015 = vadd.f32 %v775, %v1014
      %v1016 = vpop.f32.mrb[0].mxu0
      %v1017 = vadd.f32 %v777, %v1016
      %v1018 = vpop.f32.mrb[0].mxu0
      %v1019 = vadd.f32 %v778, %v1018
      %1020 = vdwg.mxu0
      %1021 = vmatprep.subr.bf16.mxu0 0
      %1022 = vmatpush1.bf16.msra.mxu0 %v862
      %1023 = vmatprep.subr.bf16.mxu0 0
      %1024 = vmatpush1.bf16.msra.mxu0 %v865
      %1025 = vmatprep.subr.bf16.mxu0 0
      %1026 = vmatpush1.bf16.msra.mxu0 %v868
      %1027 = vmatprep.subr.bf16.mxu0 0
      %1028 = vmatpush1.bf16.msra.mxu0 %v871
      %1029 = vmatprep.subr.bf16.mxu0 0
      %1030 = vmatpush1.bf16.msra.mxu0 %v874
      %1031 = vmatprep.subr.bf16.mxu0 0
      %1032 = vmatpush1.bf16.msra.mxu0 %v877
      %1033 = vmatprep.subr.bf16.mxu0 0
      %1034 = vmatpush1.bf16.msra.mxu0 %v880
      %1035 = vmatprep.subr.bf16.mxu0 0
      %1036 = vmatpush1.bf16.msra.mxu0 %v883
      %1037 = vmatprep.subr.bf16.mxu0 0
      %1038 = vmatpush1.bf16.msra.mxu0 0
      %1039 = vmatprep.subr.bf16.mxu0 0
      %1040 = vmatpush1.bf16.msra.mxu0 0
      %1041 = vmatprep.subr.bf16.mxu0 0
      %1042 = vmatpush1.bf16.msra.mxu0 0
      %1043 = vmatprep.subr.bf16.mxu0 0
      %1044 = vmatpush1.bf16.msra.mxu0 0
      %1045 = vmatprep.subr.bf16.mxu0 0
      %1046 = vmatpush1.bf16.msra.mxu0 0
      %1047 = vmatprep.subr.bf16.mxu0 0
      %1048 = vmatpush1.bf16.msra.mxu0 0
      %1049 = vmatprep.subr.bf16.mxu0 0
      %1050 = vmatpush1.bf16.msra.mxu0 0
      %1051 = vmatprep.subr.bf16.mxu0 0
      %1052 = vmatpush1.bf16.msra.mxu0 0
      %1053 = vmatprep.mubr.bf16.mxu0 0
      %1054 = vmatmul.mubr.bf16.gmra.mrb[0].mxu0 %v692
      %v1055 = vpop.f32.mrb[0].mxu0
      %v1056 = vadd.f32 %v734, %v1055
      %v1057 = vpop.f32.mrb[0].mxu0
      %v1058 = vpop.f32.mrb[0].mxu0
      %v1059 = vadd.f32 %v737, %v1058
      %v1060 = vpop.f32.mrb[0].mxu0
      %1061 = vmatprep.mubr.bf16.mxu0 0
      %1062 = vmatmul.mubr.bf16.gmra.mrb[0].mxu0 %v693
      %v1063 = vpop.f32.mrb[0].mxu0
      %v1064 = vadd.f32 %v740, %v1063
      %v1065 = vpop.f32.mrb[0].mxu0
      %v1066 = vpop.f32.mrb[0].mxu0
      %v1067 = vadd.f32 %v743, %v1066
      %v1068 = vpop.f32.mrb[0].mxu0
      %1069 = vmatprep.mubr.bf16.mxu0 0
      %1070 = vmatmul.mubr.bf16.gmra.mrb[0].mxu0 %v694
      %v1071 = vpop.f32.mrb[0].mxu0
      %v1072 = vadd.f32 %v746, %v1071
      %v1073 = vpop.f32.mrb[0].mxu0
      %v1074 = vpop.f32.mrb[0].mxu0
      %v1075 = vadd.f32 %v749, %v1074
      %v1076 = vpop.f32.mrb[0].mxu0
      %1077 = vmatprep.mubr.bf16.mxu0 0
      %1078 = vmatmul.mubr.bf16.gmra.mrb[0].mxu0 %v695
      %v1079 = vpop.f32.mrb[0].mxu0
      %v1080 = vadd.f32 %v752, %v1079
      %v1081 = vpop.f32.mrb[0].mxu0
      %v1082 = vpop.f32.mrb[0].mxu0
      %v1083 = vadd.f32 %v755, %v1082
      %v1084 = vpop.f32.mrb[0].mxu0
      %1085 = vmatprep.mubr.bf16.mxu0 0
      %1086 = vmatmul.mubr.bf16.gmra.mrb[0].mxu0 %v696
      %v1087 = vpop.f32.mrb[0].mxu0
      %v1088 = vadd.f32 %v758, %v1087
      %v1089 = vpop.f32.mrb[0].mxu0
      %v1090 = vpop.f32.mrb[0].mxu0
      %v1091 = vadd.f32 %v761, %v1090
      %v1092 = vpop.f32.mrb[0].mxu0
      %1093 = vmatprep.mubr.bf16.mxu0 0
      %1094 = vmatmul.mubr.bf16.gmra.mrb[0].mxu0 %v697
      %v1095 = vpop.f32.mrb[0].mxu0
      %v1096 = vadd.f32 %v764, %v1095
      %v1097 = vpop.f32.mrb[0].mxu0
      %v1098 = vpop.f32.mrb[0].mxu0
      %v1099 = vadd.f32 %v767, %v1098
      %v1100 = vpop.f32.mrb[0].mxu0
      %1101 = vmatprep.mubr.bf16.mxu0 0
      %1102 = vmatmul.mubr.bf16.gmra.mrb[0].mxu0 %v698
      %v1103 = vpop.f32.mrb[0].mxu0
      %v1104 = vadd.f32 %v770, %v1103
      %v1105 = vpop.f32.mrb[0].mxu0
      %v1106 = vpop.f32.mrb[0].mxu0
      %v1107 = vadd.f32 %v773, %v1106
      %v1108 = vpop.f32.mrb[0].mxu0
      %1109 = vmatprep.mubr.bf16.mxu0 0
      %1110 = vmatmul.mubr.bf16.gmra.mrb[0].mxu0 %v699
      %v1111 = vpop.f32.mrb[0].mxu0
      %v1112 = vadd.f32 %v776, %v1111
      %v1113 = vpop.f32.mrb[0].mxu0
      %v1114 = vpop.f32.mrb[0].mxu0
      %v1115 = vadd.f32 %v779, %v1114
      %v1116 = vpop.f32.mrb[0].mxu0
      %1117 = vdwg.mxu0
      %v1118 = vmax.f32 %v943, 0.0
      %v1119 = vmax.f32 %v945, 0.0
      %v1120 = vmax.f32 %v1056, 0.0
      %v1121 = vmax.f32 %v947, 0.0
      %v1122 = vmax.f32 %v949, 0.0
      %v1123 = vmax.f32 %v1059, 0.0
      %v1124 = vmax.f32 %v953, 0.0
      %v1125 = vmax.f32 %v955, 0.0
      %v1126 = vmax.f32 %v1064, 0.0
      %v1127 = vmax.f32 %v957, 0.0
      %v1128 = vmax.f32 %v959, 0.0
      %v1129 = vmax.f32 %v1067, 0.0
      %v1130 = vmax.f32 %v963, 0.0
      %v1131 = vmax.f32 %v965, 0.0
      %v1132 = vmax.f32 %v1072, 0.0
      %v1133 = vmax.f32 %v967, 0.0
      %v1134 = vmax.f32 %v969, 0.0
      %v1135 = vmax.f32 %v1075, 0.0
      %v1136 = vmax.f32 %v973, 0.0
      %v1137 = vmax.f32 %v975, 0.0
      %v1138 = vmax.f32 %v1080, 0.0
      %v1139 = vmax.f32 %v977, 0.0
      %v1140 = vmax.f32 %v979, 0.0
      %v1141 = vmax.f32 %v1083, 0.0
      %v1142 = vmax.f32 %v983, 0.0
      %v1143 = vmax.f32 %v985, 0.0
      %v1144 = vmax.f32 %v1088, 0.0
      %v1145 = vmax.f32 %v987, 0.0
      %v1146 = vmax.f32 %v989, 0.0
      %v1147 = vmax.f32 %v1091, 0.0
      %v1148 = vmax.f32 %v993, 0.0
      %v1149 = vmax.f32 %v995, 0.0
      %v1150 = vmax.f32 %v1096, 0.0
      %v1151 = vmax.f32 %v997, 0.0
      %v1152 = vmax.f32 %v999, 0.0
      %v1153 = vmax.f32 %v1099, 0.0
      %v1154 = vmax.f32 %v1003, 0.0
      %v1155 = vmax.f32 %v1005, 0.0
      %v1156 = vmax.f32 %v1104, 0.0
      %v1157 = vmax.f32 %v1007, 0.0
      %v1158 = vmax.f32 %v1009, 0.0
      %v1159 = vmax.f32 %v1107, 0.0
      %v1160 = vmax.f32 %v1013, 0.0
      %v1161 = vmax.f32 %v1015, 0.0
      %v1162 = vmax.f32 %v1112, 0.0
      %v1163 = vmax.f32 %v1017, 0.0
      %v1164 = vmax.f32 %v1019, 0.0
      %v1165 = vmax.f32 %v1115, 0.0
      %v1166 = vpack.c.bf16 %v1121, %v1118
      %v1167 = vpack.c.bf16 %v1122, %v1119
      %v1168 = vpack.c.bf16 %v1127, %v1124
      %v1169 = vpack.c.bf16 %v1128, %v1125
      %v1170 = vpack.c.bf16 %v1133, %v1130
      %v1171 = vpack.c.bf16 %v1134, %v1131
      %v1172 = vpack.c.bf16 %v1139, %v1136
      %v1173 = vpack.c.bf16 %v1140, %v1137
      %v1174 = vpack.c.bf16 %v1145, %v1142
      %v1175 = vpack.c.bf16 %v1146, %v1143
      %v1176 = vpack.c.bf16 %v1151, %v1148
      %v1177 = vpack.c.bf16 %v1152, %v1149
      %v1178 = vpack.c.bf16 %v1157, %v1154
      %v1179 = vpack.c.bf16 %v1158, %v1155
      %v1180 = vpack.c.bf16 %v1163, %v1160
      %v1181 = vpack.c.bf16 %v1164, %v1161
      %v1198 = vunpack.c.l.b16 %v1166
      %v1199 = vunpack.c.l.b16 %v1167
      %v1200 = vunpack.c.h.b16 %v1166
      %v1201 = vunpack.c.h.b16 %v1167
      %v1202 = vunpack.c.l.b16 %v1168
      %v1203 = vunpack.c.l.b16 %v1169
      %v1204 = vunpack.c.h.b16 %v1168
      %v1205 = vunpack.c.h.b16 %v1169
      %v1206 = vunpack.c.l.b16 %v1170
      %v1207 = vunpack.c.l.b16 %v1171
      %v1208 = vunpack.c.h.b16 %v1170
      %v1209 = vunpack.c.h.b16 %v1171
      %v1210 = vunpack.c.l.b16 %v1172
      %v1211 = vunpack.c.l.b16 %v1173
      %v1212 = vunpack.c.h.b16 %v1172
      %v1213 = vunpack.c.h.b16 %v1173
      %v1214 = vunpack.c.l.b16 %v1174
      %v1215 = vunpack.c.l.b16 %v1175
      %v1216 = vunpack.c.h.b16 %v1174
      %v1217 = vunpack.c.h.b16 %v1175
      %v1218 = vunpack.c.l.b16 %v1176
      %v1219 = vunpack.c.l.b16 %v1177
      %v1220 = vunpack.c.h.b16 %v1176
      %v1221 = vunpack.c.h.b16 %v1177
      %v1222 = vunpack.c.l.b16 %v1178
      %v1223 = vunpack.c.l.b16 %v1179
      %v1224 = vunpack.c.h.b16 %v1178
      %v1225 = vunpack.c.h.b16 %v1179
      %v1226 = vunpack.c.l.b16 %v1180
      %v1227 = vunpack.c.l.b16 %v1181
      %v1228 = vunpack.c.h.b16 %v1180
      %v1229 = vunpack.c.h.b16 %v1181
      %v1230 = vpack.c.b16 %v1199, %v1198
      %v1231 = vpack.c.b16 %v1201, %v1200
      %v1232 = vpack.c.b16 %v1203, %v1202
      %v1233 = vpack.c.b16 %v1205, %v1204
      %v1234 = vpack.c.b16 %v1207, %v1206
      %v1235 = vpack.c.b16 %v1209, %v1208
      %v1236 = vpack.c.b16 %v1211, %v1210
      %v1237 = vpack.c.b16 %v1213, %v1212
      %v1238 = vpack.c.b16 %v1215, %v1214
      %v1239 = vpack.c.b16 %v1217, %v1216
      %v1240 = vpack.c.b16 %v1219, %v1218
      %v1241 = vpack.c.b16 %v1221, %v1220
      %v1242 = vpack.c.b16 %v1223, %v1222
      %v1243 = vpack.c.b16 %v1225, %v1224
      %v1244 = vpack.c.b16 %v1227, %v1226
      %v1245 = vpack.c.b16 %v1229, %v1228
      %1262 = vst [vmem:[%s487] sm:$0xff] %v1230
      %1263 = vst [vmem:[%s487 + $0x8] sm:$0xff] %v1231
      %1264 = vst [vmem:[%s487 + $0x10] sm:$0xff] %v1232
      %1265 = vst [vmem:[%s487 + $0x18] sm:$0xff] %v1233
      %1266 = vst [vmem:[%s487 + $0x20] sm:$0xff] %v1234
      %1267 = vst [vmem:[%s487 + $0x28] sm:$0xff] %v1235
      %1268 = vst [vmem:[%s487 + $0x30] sm:$0xff] %v1236
      %1269 = vst [vmem:[%s487 + $0x38] sm:$0xff] %v1237
      %1270 = vst [vmem:[%s487 + $0x40] sm:$0xff] %v1238
      %1271 = vst [vmem:[%s487 + $0x48] sm:$0xff] %v1239
      %1272 = vst [vmem:[%s487 + $0x50] sm:$0xff] %v1240
      %1273 = vst [vmem:[%s487 + $0x58] sm:$0xff] %v1241
      %1274 = vst [vmem:[%s487 + $0x60] sm:$0xff] %v1242
      %1275 = vst [vmem:[%s487 + $0x68] sm:$0xff] %v1243
      %1276 = vst [vmem:[%s487 + $0x70] sm:$0xff] %v1244
      %1277 = vst [vmem:[%s487 + $0x78] sm:$0xff] %v1245
      %v1278 = vpack.c.bf16 %v1123, %v1120
      %v1279 = vpack.c.bf16 %v1129, %v1126
      %v1280 = vpack.c.bf16 %v1135, %v1132
      %v1281 = vpack.c.bf16 %v1141, %v1138
      %v1282 = vpack.c.bf16 %v1147, %v1144
      %v1283 = vpack.c.bf16 %v1153, %v1150
      %v1284 = vpack.c.bf16 %v1159, %v1156
      %v1285 = vpack.c.bf16 %v1165, %v1162
      %v1294 = vunpack.c.l.b16 %v1278
      %v1295 = vunpack.c.h.b16 %v1278
      %v1296 = vunpack.c.l.b16 %v1279
      %v1297 = vunpack.c.h.b16 %v1279
      %v1298 = vunpack.c.l.b16 %v1280
      %v1299 = vunpack.c.h.b16 %v1280
      %v1300 = vunpack.c.l.b16 %v1281
      %v1301 = vunpack.c.h.b16 %v1281
      %v1302 = vunpack.c.l.b16 %v1282
      %v1303 = vunpack.c.h.b16 %v1282
      %v1304 = vunpack.c.l.b16 %v1283
      %v1305 = vunpack.c.h.b16 %v1283
      %v1306 = vunpack.c.l.b16 %v1284
      %v1307 = vunpack.c.h.b16 %v1284
      %v1308 = vunpack.c.l.b16 %v1285
      %v1309 = vunpack.c.h.b16 %v1285
      %v1310 = vpack.c.b16 %v1294, %v1294
      %v1311 = vpack.c.b16 %v1295, %v1295
      %v1312 = vpack.c.b16 %v1296, %v1296
      %v1313 = vpack.c.b16 %v1297, %v1297
      %v1314 = vpack.c.b16 %v1298, %v1298
      %v1315 = vpack.c.b16 %v1299, %v1299
      %v1316 = vpack.c.b16 %v1300, %v1300
      %v1317 = vpack.c.b16 %v1301, %v1301
      %v1318 = vpack.c.b16 %v1302, %v1302
      %v1319 = vpack.c.b16 %v1303, %v1303
      %v1320 = vpack.c.b16 %v1304, %v1304
      %v1321 = vpack.c.b16 %v1305, %v1305
      %v1322 = vpack.c.b16 %v1306, %v1306
      %v1323 = vpack.c.b16 %v1307, %v1307
      %v1324 = vpack.c.b16 %v1308, %v1308
      %v1325 = vpack.c.b16 %v1309, %v1309
      %vm1342 = vcmask 519168
      %1343 = vst.msk [vmem:[%s497] sm:$0xf] %vm1342, %v1310
      %1344 = vst.msk [vmem:[%s497 + $0x4] sm:$0xf] %vm1342, %v1311
      %1345 = vst.msk [vmem:[%s497 + $0x8] sm:$0xf] %vm1342, %v1312
      %1346 = vst.msk [vmem:[%s497 + $0xc] sm:$0xf] %vm1342, %v1313
      %1347 = vst.msk [vmem:[%s497 + $0x10] sm:$0xf] %vm1342, %v1314
      %1348 = vst.msk [vmem:[%s497 + $0x14] sm:$0xf] %vm1342, %v1315
      %1349 = vst.msk [vmem:[%s497 + $0x18] sm:$0xf] %vm1342, %v1316
      %1350 = vst.msk [vmem:[%s497 + $0x1c] sm:$0xf] %vm1342, %v1317
      %1351 = vst.msk [vmem:[%s497 + $0x20] sm:$0xf] %vm1342, %v1318
      %1352 = vst.msk [vmem:[%s497 + $0x24] sm:$0xf] %vm1342, %v1319
      %1353 = vst.msk [vmem:[%s497 + $0x28] sm:$0xf] %vm1342, %v1320
      %1354 = vst.msk [vmem:[%s497 + $0x2c] sm:$0xf] %vm1342, %v1321
      %1355 = vst.msk [vmem:[%s497 + $0x30] sm:$0xf] %vm1342, %v1322
      %1356 = vst.msk [vmem:[%s497 + $0x34] sm:$0xf] %vm1342, %v1323
      %1357 = vst.msk [vmem:[%s497 + $0x38] sm:$0xf] %vm1342, %v1324
      %1358 = vst.msk [vmem:[%s497 + $0x3c] sm:$0xf] %vm1342, %v1325
      %s1359 = smul.u32 16, %s25
      %p1360 = scmp.lt.s32.totalorder %s24, 1
      %s1361 = scalar_select %p1360, %s24, 1
      %p1362 = scmp.lt.s32.totalorder %s1359, 15
      %s1363 = scalar_select %p1362, %s1359, 15
      %s1364 = smul.addr %s1361, 16
      %s1365 = sadd.s32 %s1363, %s1364
      %s1366 = smul.addr %s1365, 8
      %s1367 = scalar_lea.vmem %s6, %s1366
      %s1368 = smul.u32 16, %s25
      %p1369 = scmp.lt.s32.totalorder %s24, 1
      %s1370 = scalar_select %p1369, %s24, 1
      %p1371 = scmp.lt.s32.totalorder %s1368, 15
      %s1372 = scalar_select %p1371, %s1368, 15
      %s1373 = smul.addr %s1372, 2
      %s1374 = smul.addr %s1370, 32
      %s1375 = sadd.s32 %s1373, %s1374
      %s1376 = smul.addr %s1375, 4
      %s1377 = scalar_lea.vmem %s7, %s1376
      %s1378 = smul.u32 16, %s25
      %p1379 = scmp.lt.s32.totalorder %s24, 1
      %s1380 = scalar_select %p1379, %s24, 1
      %p1381 = scmp.lt.s32.totalorder %s1378, 15
      %s1382 = scalar_select %p1381, %s1378, 15
      %s1383 = smul.addr %s1380, 16
      %s1384 = sadd.s32 %s1382, %s1383
      %s1385 = smul.addr %s1384, 4
      %s1386 = scalar_lea.vmem %s8, %s1385
      // Predicated region
      $region45: #{up_block_forward.7} parent=43 // pred_check
        %p1387 = pneg %p207
      $region46: #{up_block_forward.7} parent=43 // pred_check_branch
        %1389 = sbr.rel (%p1387) target = $region48
      $region47: #{up_block_forward.7} parent=43 // pred_region
        %s1390 = smul.u32 16, %s25
      $region48: #{up_block_forward.7} parent=43 // pred_fallthru
        _
      // Predicated region
      $region49: #{up_block_forward.7} parent=43 // pred_check
        %p1391 = pneg %p235
      $region50: #{up_block_forward.7} parent=43 // pred_check_branch
        %1393 = sbr.rel (%p1391) target = $region52
      $region51: #{up_block_forward.7} parent=43 // pred_region
        %s1394 = smul.u32 16, %s25
      $region52: #{up_block_forward.7} parent=43 // pred_fallthru
        _
      // Predicated region
      $region53: #{up_block_forward.7} parent=43 // pred_check
        %p1395 = pneg %p263
      $region54: #{up_block_forward.7} parent=43 // pred_check_branch
        %1397 = sbr.rel (%p1395) target = $region56
      $region55: #{up_block_forward.7} parent=43 // pred_region
        %s1398 = smul.u32 16, %s25
      $region56: #{up_block_forward.7} parent=43 // pred_fallthru
        _
    $region44: #{up_block_forward.7} parent=5 // pred_fallthru
      _
    %p1399 = scmp.le.s32.totalorder 2, %s15
    // Predicated region
    $region57: #{up_block_forward.7} parent=5 // pred_check
      %p1400 = pneg %p1399
    $region58: #{up_block_forward.7} parent=5 // pred_check_branch
      %1402 = sbr.rel (%p1400) target = $region60
    $region59: #{up_block_forward.7} parent=5 // pred_region
      %s1403 = ssub.s32 %s15, 2
      // Predicated region
      $region61: #{up_block_forward.7} parent=59 // pred_check
        %p1404 = pneg %p213
      $region62: #{up_block_forward.7} parent=59 // pred_check_branch
        %1406 = sbr.rel (%p1404) target = $region64
      $region63: #{up_block_forward.7} parent=59 // pred_region
        %s1407 = smul.u32 16, %s27
        %p1408 = scmp.lt.s32.totalorder %s26, 1
        %s1409 = scalar_select %p1408, %s26, 1
        %p1410 = scmp.lt.s32.totalorder %s1407, 15
        %s1411 = scalar_select %p1410, %s1407, 15
        %s1412 = smul.addr %s1409, 16
        %s1413 = sadd.s32 %s1411, %s1412
        %s1414 = smul.addr %s1413, 8
        %s1415 = scalar_lea.vmem %s6, %s1414
      $region64: #{up_block_forward.7} parent=59 // pred_fallthru
        _
      // Predicated region
      $region65: #{up_block_forward.7} parent=59 // pred_check
        %p1416 = pneg %p241
      $region66: #{up_block_forward.7} parent=59 // pred_check_branch
        %1418 = sbr.rel (%p1416) target = $region68
      $region67: #{up_block_forward.7} parent=59 // pred_region
        %s1419 = smul.u32 16, %s27
        %p1420 = scmp.lt.s32.totalorder %s26, 1
        %s1421 = scalar_select %p1420, %s26, 1
        %p1422 = scmp.lt.s32.totalorder %s1419, 15
        %s1423 = scalar_select %p1422, %s1419, 15
        %s1424 = smul.addr %s1423, 2
        %s1425 = smul.addr %s1421, 32
        %s1426 = sadd.s32 %s1424, %s1425
        %s1427 = smul.addr %s1426, 4
        %s1428 = scalar_lea.vmem %s7, %s1427
      $region68: #{up_block_forward.7} parent=59 // pred_fallthru
        _
      // Predicated region
      $region69: #{up_block_forward.7} parent=59 // pred_check
        %p1429 = pneg %p269
      $region70: #{up_block_forward.7} parent=59 // pred_check_branch
        %1431 = sbr.rel (%p1429) target = $region72
      $region71: #{up_block_forward.7} parent=59 // pred_region
        %s1432 = smul.u32 16, %s27
        %p1433 = scmp.lt.s32.totalorder %s26, 1
        %s1434 = scalar_select %p1433, %s26, 1
        %p1435 = scmp.lt.s32.totalorder %s1432, 15
        %s1436 = scalar_select %p1435, %s1432, 15
        %s1437 = smul.addr %s1434, 16
        %s1438 = sadd.s32 %s1436, %s1437
        %s1439 = smul.addr %s1438, 4
        %s1440 = scalar_lea.vmem %s8, %s1439
      $region72: #{up_block_forward.7} parent=59 // pred_fallthru
        _
    $region60: #{up_block_forward.7} parent=5 // pred_fallthru
      _
  $region6: #{up_block_forward.7} parent=0 // loop_footer
    %s19 = sadd.s32 1, %s15
  $region7: #{up_block_forward.7} parent=0 // loop_footer_branch
    %14 = sbr.rel target = $region3
  $region8: #{up_block_forward.7} parent=0 // loop_exit
    _

// kernel: up_block_forward.8
$region0: #{up_block_forward.8}
  #allocation0 [shape = 'u32[]', space=smem, size = 0x4, offset = 0x4, fixed_abs, tag = 'smem constant byte address 0x4 - core index']
  #allocation1 [shape = 'u32[144,128]{1,0:T(1,128)}', space=vmem, size = 0x12000, scoped, tag = 'internal scratch']
  #allocation2 [shape = 'f32[128,1]{1,0:T(8,128)}', space=vmem, size = 0x10000, scoped, tag = 'scratch operand']
  #allocation3 [shape = 'f32[128,1]{1,0:T(8,128)}', space=vmem, size = 0x10000, scoped, tag = 'scratch operand']
  %s0 = inlined_call_operand.vmem [shape: bf16[2,128,64], index: 0, kind: input, shape index: {}, may-alias: {0,1}]
  %s1 = inlined_call_operand.vmem [shape: bf16[2,128,64], index: 1, kind: input, shape index: {}, may-alias: {0,1}]
  %s2 = inlined_call_operand.vmem [shape: f32[2,128,2], index: 2, kind: output, shape index: {}]
  %s3 = sld [smem:[#allocation0]]
  $region49: #{up_block_forward.8} parent=0
    _
  %s5 = ssub.s32 1, %s3
  %s6 = scalar_select 0, %s5, %s3
  loop: start=0, step=1, limit=4
  $region2: #{up_block_forward.8} parent=0 // loop_pre_header
    _
  $region3: #{up_block_forward.8} parent=0 // loop_header
    %s8 = sphi 0, %s12
    %p9 = scmp.ge.s32.totalorder %s8, 4
    %s15 = sphi 0, %s34
    %s16 = sphi 0, %s30
    %s17 = sphi 0, %s26
    %s18 = sphi 0, %s15
    %s19 = sphi 0, %s16
    %s20 = sphi 0, %s17
    %s21 = sphi 0, %s18
    %s22 = sphi 0, %s19
    %s23 = sphi 0, %s20
    %s39 = sphi 0, %s41
    %s42 = sphi 0, %s39
    %s43 = sphi 0, %s42
    %s59 = sphi 0, %s43
    %s67 = sphi 0, %s69
    %s70 = sphi 0, %s67
    %s71 = sphi 0, %s70
    %s87 = sphi 0, %s71
    %s95 = sphi 0, %s97
    %s98 = sphi 0, %s95
    %s99 = sphi 0, %s98
    %s115 = sphi 0, %s99
  $region4: #{up_block_forward.8} parent=0 // loop_header_branch
    %11 = sbr.rel (%p9) target = $region8
  $region5: #{up_block_forward.8} parent=0 // loop_body
    %s13 = ssub.s32 %s8, 1
    %s14 = ssub.s32 %s8, 2
    %s24 = sadd.s32 1, %s17
    %p25 = scmp.ge.s32.totalorder %s24, 1
    %s26 = scalar_select %p25, 0, %s24
    %s27 = sadd.s32 1, %s16
    %s28 = scalar_select %p25, %s27, %s16
    %p29 = scmp.ge.s32.totalorder %s28, 1
    %s30 = scalar_select %p29, 0, %s28
    %s31 = sadd.s32 1, %s15
    %s32 = scalar_select %p29, %s31, %s15
    %p33 = scmp.ge.s32.totalorder %s32, 2
    %s34 = scalar_select %p33, 0, %s32
    %s35 = ssub.s32 %s15, %s34
    %s36 = ssub.s32 %s16, %s30
    %s37 = sor.u32 %s35, %s36
    %p38 = scmp.eq.s32.totalorder %s37, 0
    %s40 = sadd.s32 %s39, 1
    %s41 = scalar_select %p38, %s39, %s40
    %p44 = pneg %p38
    %p45 = scmp.eq.s32.totalorder %s8, 1
    %p46 = por %p44, %p45
    %p47 = scmp.ne.s32.totalorder %s39, %s42
    %p48 = scmp.eq.s32.totalorder %s8, 0
    %p49 = por %p47, %p48
    %p50 = scmp.ne.s32.totalorder %s39, %s42
    %p51 = scmp.eq.s32.totalorder %s13, 1
    %p52 = por %p50, %p51
    %p53 = scmp.ne.s32.totalorder %s42, %s43
    %p54 = scmp.eq.s32.totalorder %s13, 0
    %p55 = por %p53, %p54
    %p56 = scmp.ne.s32.totalorder %s42, %s43
    %p57 = scmp.eq.s32.totalorder %s14, 1
    %p58 = por %p56, %p57
    %p60 = scmp.ne.s32.totalorder %s43, %s59
    %p61 = scmp.eq.s32.totalorder %s14, 0
    %p62 = por %p60, %p61
    %s63 = ssub.s32 %s15, %s34
    %s64 = ssub.s32 %s17, %s26
    %s65 = sor.u32 %s63, %s64
    %p66 = scmp.eq.s32.totalorder %s65, 0
    %s68 = sadd.s32 %s67, 1
    %s69 = scalar_select %p66, %s67, %s68
    %p72 = pneg %p66
    %p73 = scmp.eq.s32.totalorder %s8, 1
    %p74 = por %p72, %p73
    %p75 = scmp.ne.s32.totalorder %s67, %s70
    %p76 = scmp.eq.s32.totalorder %s8, 0
    %p77 = por %p75, %p76
    %p78 = scmp.ne.s32.totalorder %s67, %s70
    %p79 = scmp.eq.s32.totalorder %s13, 1
    %p80 = por %p78, %p79
    %p81 = scmp.ne.s32.totalorder %s70, %s71
    %p82 = scmp.eq.s32.totalorder %s13, 0
    %p83 = por %p81, %p82
    %p84 = scmp.ne.s32.totalorder %s70, %s71
    %p85 = scmp.eq.s32.totalorder %s14, 1
    %p86 = por %p84, %p85
    %p88 = scmp.ne.s32.totalorder %s71, %s87
    %p89 = scmp.eq.s32.totalorder %s14, 0
    %p90 = por %p88, %p89
    %s91 = ssub.s32 %s15, %s34
    %s92 = ssub.s32 %s16, %s30
    %s93 = sor.u32 %s91, %s92
    %p94 = scmp.eq.s32.totalorder %s93, 0
    %s96 = sadd.s32 %s95, 1
    %s97 = scalar_select %p94, %s95, %s96
    %p100 = pneg %p94
    %p101 = scmp.eq.s32.totalorder %s8, 1
    %p102 = por %p100, %p101
    %p103 = scmp.ne.s32.totalorder %s95, %s98
    %p104 = scmp.eq.s32.totalorder %s8, 0
    %p105 = por %p103, %p104
    %p106 = scmp.ne.s32.totalorder %s95, %s98
    %p107 = scmp.eq.s32.totalorder %s13, 1
    %p108 = por %p106, %p107
    %p109 = scmp.ne.s32.totalorder %s98, %s99
    %p110 = scmp.eq.s32.totalorder %s13, 0
    %p111 = por %p109, %p110
    %p112 = scmp.ne.s32.totalorder %s98, %s99
    %p113 = scmp.eq.s32.totalorder %s14, 1
    %p114 = por %p112, %p113
    %p116 = scmp.ne.s32.totalorder %s99, %s115
    %p117 = scmp.eq.s32.totalorder %s14, 0
    %p118 = por %p116, %p117
    %p119 = scmp.le.s32.totalorder 1, %s8
    %p120 = scmp.lt.s32.totalorder %s8, 3
    %p121 = pnand %p119, %p120
    %p122 = pneg %p121
    // Predicated region
    $region9: #{up_block_forward.8} parent=5 // pred_check
      _
    $region10: #{up_block_forward.8} parent=5 // pred_check_branch
      %124 = sbr.rel (%p121) target = $region12
    $region11: #{up_block_forward.8} parent=5 // pred_region
      %s125 = ssub.s32 %s8, 1
    $region12: #{up_block_forward.8} parent=5 // pred_fallthru
      _
    %p126 = scmp.lt.s32.totalorder %s8, 2
    // Predicated region
    $region13: #{up_block_forward.8} parent=5 // pred_check
      %p127 = pneg %p126
    $region14: #{up_block_forward.8} parent=5 // pred_check_branch
      %129 = sbr.rel (%p127) target = $region16
    $region15: #{up_block_forward.8} parent=5 // pred_region
      // Predicated region
      $region17: #{up_block_forward.8} parent=15 // pred_check
        %p130 = pneg %p49
      $region18: #{up_block_forward.8} parent=15 // pred_check_branch
        %132 = sbr.rel (%p130) target = $region20
      $region19: #{up_block_forward.8} parent=15 // pred_region
        %s133 = smul.u32 16, %s16
        %p134 = scmp.lt.s32.totalorder %s15, 1
        %s135 = scalar_select %p134, %s15, 1
        %p136 = scmp.lt.s32.totalorder %s133, 15
        %s137 = scalar_select %p136, %s133, 15
        %s138 = smul.addr %s135, 16
        %s139 = sadd.s32 %s137, %s138
        %s140 = smul.addr %s139, 4
        %s141 = scalar_lea.vmem %s0, %s140
        %s142 = smul.u32 16, %s16
      $region20: #{up_block_forward.8} parent=15 // pred_fallthru
        _
      // Predicated region
      $region21: #{up_block_forward.8} parent=15 // pred_check
        %p143 = pneg %p77
      $region22: #{up_block_forward.8} parent=15 // pred_check_branch
        %145 = sbr.rel (%p143) target = $region24
      $region23: #{up_block_forward.8} parent=15 // pred_region
        %s146 = smul.u32 16, %s17
        %p147 = scmp.lt.s32.totalorder %s15, 1
        %s148 = scalar_select %p147, %s15, 1
        %p149 = scmp.lt.s32.totalorder %s146, 15
        %s150 = scalar_select %p149, %s146, 15
        %s151 = smul.addr %s148, 16
        %s152 = sadd.s32 %s150, %s151
        %s153 = smul.addr %s152, 4
        %s154 = scalar_lea.vmem %s1, %s153
        %s155 = smul.u32 16, %s17
      $region24: #{up_block_forward.8} parent=15 // pred_fallthru
        _
    $region16: #{up_block_forward.8} parent=5 // pred_fallthru
      _
    %p156 = scmp.le.s32.totalorder 1, %s8
    %p157 = scmp.lt.s32.totalorder %s8, 3
    %p158 = pnand %p156, %p157
    %p159 = pneg %p158
    // Predicated region
    $region25: #{up_block_forward.8} parent=5 // pred_check
      _
    $region26: #{up_block_forward.8} parent=5 // pred_check_branch
      %161 = sbr.rel (%p158) target = $region28
    $region27: #{up_block_forward.8} parent=5 // pred_region
      %s162 = ssub.s32 %s8, 1
      %s163 = smul.u32 16, %s19
      %p164 = scmp.lt.s32.totalorder %s18, 1
      %s165 = scalar_select %p164, %s18, 1
      %p166 = scmp.lt.s32.totalorder %s163, 15
      %s167 = scalar_select %p166, %s163, 15
      %s168 = smul.addr %s165, 16
      %s169 = sadd.s32 %s167, %s168
      %s170 = smul.addr %s169, 4
      %s171 = scalar_lea.vmem %s0, %s170
      %p172 = pneg %p55
      %p173 = pneg %p52
      %s174 = smul.u32 16, %s20
      %p175 = scmp.lt.s32.totalorder %s18, 1
      %s176 = scalar_select %p175, %s18, 1
      %p177 = scmp.lt.s32.totalorder %s174, 15
      %s178 = scalar_select %p177, %s174, 15
      %s179 = smul.addr %s176, 16
      %s180 = sadd.s32 %s178, %s179
      %s181 = smul.addr %s180, 4
      %s182 = scalar_lea.vmem %s1, %s181
      %p183 = pneg %p83
      %p184 = pneg %p80
      %p185 = pneg %p111
      %p186 = pneg %p108
      %s187 = smul.u32 16, %s19
      %p188 = scmp.lt.s32.totalorder %s18, 1
      %s189 = scalar_select %p188, %s18, 1
      %p190 = scmp.lt.s32.totalorder %s187, 15
      %s191 = scalar_select %p190, %s187, 15
      %s192 = smul.addr %s189, 16
      %s193 = sadd.s32 %s191, %s192
      %s194 = smul.addr %s193, 8
      %s195 = scalar_lea.vmem %s2, %s194
      %s196 = smul.u32 16, %s19
      %p197 = scmp.lt.s32.totalorder %s18, 1
      %s198 = scalar_select %p197, %s18, 1
      %p199 = scmp.lt.s32.totalorder %s196, 15
      %s200 = scalar_select %p199, %s196, 15
      %s201 = smul.addr %s198, 16
      %s202 = sadd.s32 %s200, %s201
      %s203 = smul.addr %s202, 4
      %s204 = scalar_lea.vmem %s0, %s203
      %s205 = smul.u32 16, %s19
      %s206 = smul.u32 16, %s20
      %p207 = scmp.lt.s32.totalorder %s18, 1
      %s208 = scalar_select %p207, %s18, 1
      %p209 = scmp.lt.s32.totalorder %s206, 15
      %s210 = scalar_select %p209, %s206, 15
      %s211 = smul.addr %s208, 16
      %s212 = sadd.s32 %s210, %s211
      %s213 = smul.addr %s212, 4
      %s214 = scalar_lea.vmem %s1, %s213
      %s215 = smul.u32 16, %s20
      %s216 = smul.u32 16, %s19
      %p217 = scmp.lt.s32.totalorder %s18, 1
      %s218 = scalar_select %p217, %s18, 1
      %p219 = scmp.lt.s32.totalorder %s216, 15
      %s220 = scalar_select %p219, %s216, 15
      %s221 = smul.addr %s218, 16
      %s222 = sadd.s32 %s220, %s221
      %s223 = smul.addr %s222, 8
      %s224 = scalar_lea.vmem %s2, %s223
      %s225 = smul.u32 16, %s19
      %p227 = scmp.eq.s32.totalorder %s20, 0
      // Predicated region
      $region29: #{up_block_forward.8} parent=27 // pred_check
        %p228 = pneg %p227
      $region30: #{up_block_forward.8} parent=27 // pred_check_branch
        %230 = sbr.rel (%p228) target = $region32
      $region31: #{up_block_forward.8} parent=27 // pred_region
        %vm231 = vcmask 7168
        %232 = vst.msk [vmem:[#allocation2] sm:$0xff] %vm231, -1e+30
        %233 = vst.msk [vmem:[#allocation2 + $0x8] sm:$0xff] %vm231, -1e+30
        %234 = vst.msk [vmem:[#allocation2 + $0x10] sm:$0xff] %vm231, -1e+30
        %235 = vst.msk [vmem:[#allocation2 + $0x18] sm:$0xff] %vm231, -1e+30
        %236 = vst.msk [vmem:[#allocation2 + $0x20] sm:$0xff] %vm231, -1e+30
        %237 = vst.msk [vmem:[#allocation2 + $0x28] sm:$0xff] %vm231, -1e+30
        %238 = vst.msk [vmem:[#allocation2 + $0x30] sm:$0xff] %vm231, -1e+30
        %239 = vst.msk [vmem:[#allocation2 + $0x38] sm:$0xff] %vm231, -1e+30
        %240 = vst.msk [vmem:[#allocation2 + $0x40] sm:$0xff] %vm231, -1e+30
        %241 = vst.msk [vmem:[#allocation2 + $0x48] sm:$0xff] %vm231, -1e+30
        %242 = vst.msk [vmem:[#allocation2 + $0x50] sm:$0xff] %vm231, -1e+30
        %243 = vst.msk [vmem:[#allocation2 + $0x58] sm:$0xff] %vm231, -1e+30
        %244 = vst.msk [vmem:[#allocation2 + $0x60] sm:$0xff] %vm231, -1e+30
        %245 = vst.msk [vmem:[#allocation2 + $0x68] sm:$0xff] %vm231, -1e+30
        %246 = vst.msk [vmem:[#allocation2 + $0x70] sm:$0xff] %vm231, -1e+30
        %247 = vst.msk [vmem:[#allocation2 + $0x78] sm:$0xff] %vm231, -1e+30
        %248 = vst.msk [vmem:[#allocation3] sm:$0xff] %vm231, 0.0
        %249 = vst.msk [vmem:[#allocation3 + $0x8] sm:$0xff] %vm231, 0.0
        %250 = vst.msk [vmem:[#allocation3 + $0x10] sm:$0xff] %vm231, 0.0
        %251 = vst.msk [vmem:[#allocation3 + $0x18] sm:$0xff] %vm231, 0.0
        %252 = vst.msk [vmem:[#allocation3 + $0x20] sm:$0xff] %vm231, 0.0
        %253 = vst.msk [vmem:[#allocation3 + $0x28] sm:$0xff] %vm231, 0.0
        %254 = vst.msk [vmem:[#allocation3 + $0x30] sm:$0xff] %vm231, 0.0
        %255 = vst.msk [vmem:[#allocation3 + $0x38] sm:$0xff] %vm231, 0.0
        %256 = vst.msk [vmem:[#allocation3 + $0x40] sm:$0xff] %vm231, 0.0
        %257 = vst.msk [vmem:[#allocation3 + $0x48] sm:$0xff] %vm231, 0.0
        %258 = vst.msk [vmem:[#allocation3 + $0x50] sm:$0xff] %vm231, 0.0
        %259 = vst.msk [vmem:[#allocation3 + $0x58] sm:$0xff] %vm231, 0.0
        %260 = vst.msk [vmem:[#allocation3 + $0x60] sm:$0xff] %vm231, 0.0
        %261 = vst.msk [vmem:[#allocation3 + $0x68] sm:$0xff] %vm231, 0.0
        %262 = vst.msk [vmem:[#allocation3 + $0x70] sm:$0xff] %vm231, 0.0
        %263 = vst.msk [vmem:[#allocation3 + $0x78] sm:$0xff] %vm231, 0.0
      $region32: #{up_block_forward.8} parent=27 // pred_fallthru
        _
      %v264 = vld [vmem:[%s204] sm:$0xf]
      %v265 = vld [vmem:[%s204 + $0x4] sm:$0xf]
      %v266 = vld [vmem:[%s204 + $0x8] sm:$0xf]
      %v267 = vld [vmem:[%s204 + $0xc] sm:$0xf]
      %v268 = vld [vmem:[%s204 + $0x10] sm:$0xf]
      %v269 = vld [vmem:[%s204 + $0x14] sm:$0xf]
      %v270 = vld [vmem:[%s204 + $0x18] sm:$0xf]
      %v271 = vld [vmem:[%s204 + $0x1c] sm:$0xf]
      %v272 = vld [vmem:[%s204 + $0x20] sm:$0xf]
      %v273 = vld [vmem:[%s204 + $0x24] sm:$0xf]
      %v274 = vld [vmem:[%s204 + $0x28] sm:$0xf]
      %v275 = vld [vmem:[%s204 + $0x2c] sm:$0xf]
      %v276 = vld [vmem:[%s204 + $0x30] sm:$0xf]
      %v277 = vld [vmem:[%s204 + $0x34] sm:$0xf]
      %v278 = vld [vmem:[%s204 + $0x38] sm:$0xf]
      %v279 = vld [vmem:[%s204 + $0x3c] sm:$0xf]
      %v280 = vld [vmem:[%s214] sm:$0xf]
      %v281 = vld [vmem:[%s214 + $0x4] sm:$0xf]
      %v282 = vld [vmem:[%s214 + $0x8] sm:$0xf]
      %v283 = vld [vmem:[%s214 + $0xc] sm:$0xf]
      %v284 = vld [vmem:[%s214 + $0x10] sm:$0xf]
      %v285 = vld [vmem:[%s214 + $0x14] sm:$0xf]
      %v286 = vld [vmem:[%s214 + $0x18] sm:$0xf]
      %v287 = vld [vmem:[%s214 + $0x1c] sm:$0xf]
      %v288 = vld [vmem:[%s214 + $0x20] sm:$0xf]
      %v289 = vld [vmem:[%s214 + $0x24] sm:$0xf]
      %v290 = vld [vmem:[%s214 + $0x28] sm:$0xf]
      %v291 = vld [vmem:[%s214 + $0x2c] sm:$0xf]
      %v292 = vld [vmem:[%s214 + $0x30] sm:$0xf]
      %v293 = vld [vmem:[%s214 + $0x34] sm:$0xf]
      %v294 = vld [vmem:[%s214 + $0x38] sm:$0xf]
      %v295 = vld [vmem:[%s214 + $0x3c] sm:$0xf]
      %v312 = vunpack.c.l.b16 %v264
      %v313 = vunpack.c.l.b16 %v265
      %v314 = vunpack.c.l.b16 %v266
      %v315 = vunpack.c.l.b16 %v267
      %v316 = vunpack.c.l.b16 %v268
      %v317 = vunpack.c.l.b16 %v269
      %v318 = vunpack.c.l.b16 %v270
      %v319 = vunpack.c.l.b16 %v271
      %v320 = vunpack.c.l.b16 %v272
      %v321 = vunpack.c.l.b16 %v273
      %v322 = vunpack.c.l.b16 %v274
      %v323 = vunpack.c.l.b16 %v275
      %v324 = vunpack.c.l.b16 %v276
      %v325 = vunpack.c.l.b16 %v277
      %v326 = vunpack.c.l.b16 %v278
      %v327 = vunpack.c.l.b16 %v279
      %v328 = vpack.c.b16 %v313, %v312
      %v329 = vpack.c.b16 %v315, %v314
      %v330 = vpack.c.b16 %v317, %v316
      %v331 = vpack.c.b16 %v319, %v318
      %v332 = vpack.c.b16 %v321, %v320
      %v333 = vpack.c.b16 %v323, %v322
      %v334 = vpack.c.b16 %v325, %v324
      %v335 = vpack.c.b16 %v327, %v326
      %336 = vrot.lane.b32.xlu0 %v328, 96
      %v337 = vpop.permute.xlu0 %336
      %338 = vrot.lane.b32.xlu0 %v329, 96
      %v339 = vpop.permute.xlu0 %338
      %340 = vrot.lane.b32.xlu0 %v330, 96
      %v341 = vpop.permute.xlu0 %340
      %342 = vrot.lane.b32.xlu0 %v331, 96
      %v343 = vpop.permute.xlu0 %342
      %344 = vrot.lane.b32.xlu0 %v332, 96
      %v345 = vpop.permute.xlu0 %344
      %346 = vrot.lane.b32.xlu0 %v333, 96
      %v347 = vpop.permute.xlu0 %346
      %348 = vrot.lane.b32.xlu0 %v334, 96
      %v349 = vpop.permute.xlu0 %348
      %350 = vrot.lane.b32.xlu0 %v335, 96
      %v351 = vpop.permute.xlu0 %350
      %v368 = vunpack.c.l.b16 %v280
      %v369 = vunpack.c.l.b16 %v281
      %v370 = vunpack.c.l.b16 %v282
      %v371 = vunpack.c.l.b16 %v283
      %v372 = vunpack.c.l.b16 %v284
      %v373 = vunpack.c.l.b16 %v285
      %v374 = vunpack.c.l.b16 %v286
      %v375 = vunpack.c.l.b16 %v287
      %v376 = vunpack.c.l.b16 %v288
      %v377 = vunpack.c.l.b16 %v289
      %v378 = vunpack.c.l.b16 %v290
      %v379 = vunpack.c.l.b16 %v291
      %v380 = vunpack.c.l.b16 %v292
      %v381 = vunpack.c.l.b16 %v293
      %v382 = vunpack.c.l.b16 %v294
      %v383 = vunpack.c.l.b16 %v295
      %v384 = vpack.c.b16 %v369, %v368
      %v385 = vpack.c.b16 %v371, %v370
      %v386 = vpack.c.b16 %v373, %v372
      %v387 = vpack.c.b16 %v375, %v374
      %v388 = vpack.c.b16 %v377, %v376
      %v389 = vpack.c.b16 %v379, %v378
      %v390 = vpack.c.b16 %v381, %v380
      %v391 = vpack.c.b16 %v383, %v382
      %vm392 = vcmask 261120
      %v394 = vsel %vm392, %v337, 0
      %v397 = vsel %vm392, %v339, 0
      %v400 = vsel %vm392, %v341, 0
      %v403 = vsel %vm392, %v343, 0
      %v406 = vsel %vm392, %v345, 0
      %v409 = vsel %vm392, %v347, 0
      %v412 = vsel %vm392, %v349, 0
      %v415 = vsel %vm392, %v351, 0
      %v418 = vsel %vm392, %v384, 0
      %v421 = vsel %vm392, %v385, 0
      %v424 = vsel %vm392, %v386, 0
      %v427 = vsel %vm392, %v387, 0
      %v430 = vsel %vm392, %v388, 0
      %v433 = vsel %vm392, %v389, 0
      %v436 = vsel %vm392, %v390, 0
      %v439 = vsel %vm392, %v391, 0
      %441 = vmatprep.subr.bf16.mxu0 0
      %442 = vmatpush1.bf16.xpose.msra.mxu0 %v418
      %443 = vmatprep.subr.bf16.mxu0 0
      %444 = vmatpush1.bf16.xpose.msra.mxu0 %v421
      %445 = vmatprep.subr.bf16.mxu0 0
      %446 = vmatpush1.bf16.xpose.msra.mxu0 %v424
      %447 = vmatprep.subr.bf16.mxu0 0
      %448 = vmatpush1.bf16.xpose.msra.mxu0 %v427
      %449 = vmatprep.subr.bf16.mxu0 0
      %450 = vmatpush1.bf16.xpose.msra.mxu0 %v430
      %451 = vmatprep.subr.bf16.mxu0 0
      %452 = vmatpush1.bf16.xpose.msra.mxu0 %v433
      %453 = vmatprep.subr.bf16.mxu0 0
      %454 = vmatpush1.bf16.xpose.msra.mxu0 %v436
      %455 = vmatprep.subr.bf16.mxu0 0
      %456 = vmatpush1.bf16.xpose.msra.mxu0 %v439
      %457 = vmatprep.subr.bf16.mxu0 0
      %458 = vmatpush1.bf16.xpose.msra.mxu0 0
      %459 = vmatprep.subr.bf16.mxu0 0
      %460 = vmatpush1.bf16.xpose.msra.mxu0 0
      %461 = vmatprep.subr.bf16.mxu0 0
      %462 = vmatpush1.bf16.xpose.msra.mxu0 0
      %463 = vmatprep.subr.bf16.mxu0 0
      %464 = vmatpush1.bf16.xpose.msra.mxu0 0
      %465 = vmatprep.subr.bf16.mxu0 0
      %466 = vmatpush1.bf16.xpose.msra.mxu0 0
      %467 = vmatprep.subr.bf16.mxu0 0
      %468 = vmatpush1.bf16.xpose.msra.mxu0 0
      %469 = vmatprep.subr.bf16.mxu0 0
      %470 = vmatpush1.bf16.xpose.msra.mxu0 0
      %471 = vmatprep.subr.bf16.mxu0 0
      %472 = vmatpush1.bf16.xpose.msra.mxu0 0
      %473 = vmatprep.mubr.bf16.mxu0 0
      %474 = vmatmul.mubr.bf16.gmra.mrb[0].mxu0 %v394
      %v475 = vpop.f32.mrb[0].mxu0
      %v476 = vadd.f32 0.0, %v475
      %v477 = vpop.f32.mrb[0].mxu0
      %v478 = vpop.f32.mrb[0].mxu0
      %v479 = vadd.f32 0.0, %v478
      %v480 = vpop.f32.mrb[0].mxu0
      %481 = vmatprep.mubr.bf16.mxu0 0
      %482 = vmatmul.mubr.bf16.gmra.mrb[0].mxu0 %v397
      %v483 = vpop.f32.mrb[0].mxu0
      %v484 = vadd.f32 0.0, %v483
      %v485 = vpop.f32.mrb[0].mxu0
      %v486 = vpop.f32.mrb[0].mxu0
      %v487 = vadd.f32 0.0, %v486
      %v488 = vpop.f32.mrb[0].mxu0
      %489 = vmatprep.mubr.bf16.mxu0 0
      %490 = vmatmul.mubr.bf16.gmra.mrb[0].mxu0 %v400
      %v491 = vpop.f32.mrb[0].mxu0
      %v492 = vadd.f32 0.0, %v491
      %v493 = vpop.f32.mrb[0].mxu0
      %v494 = vpop.f32.mrb[0].mxu0
      %v495 = vadd.f32 0.0, %v494
      %v496 = vpop.f32.mrb[0].mxu0
      %497 = vmatprep.mubr.bf16.mxu0 0
      %498 = vmatmul.mubr.bf16.gmra.mrb[0].mxu0 %v403
      %v499 = vpop.f32.mrb[0].mxu0
      %v500 = vadd.f32 0.0, %v499
      %v501 = vpop.f32.mrb[0].mxu0
      %v502 = vpop.f32.mrb[0].mxu0
      %v503 = vadd.f32 0.0, %v502
      %v504 = vpop.f32.mrb[0].mxu0
      %505 = vmatprep.mubr.bf16.mxu0 0
      %506 = vmatmul.mubr.bf16.gmra.mrb[0].mxu0 %v406
      %v507 = vpop.f32.mrb[0].mxu0
      %v508 = vadd.f32 0.0, %v507
      %v509 = vpop.f32.mrb[0].mxu0
      %v510 = vpop.f32.mrb[0].mxu0
      %v511 = vadd.f32 0.0, %v510
      %v512 = vpop.f32.mrb[0].mxu0
      %513 = vmatprep.mubr.bf16.mxu0 0
      %514 = vmatmul.mubr.bf16.gmra.mrb[0].mxu0 %v409
      %v515 = vpop.f32.mrb[0].mxu0
      %v516 = vadd.f32 0.0, %v515
      %v517 = vpop.f32.mrb[0].mxu0
      %v518 = vpop.f32.mrb[0].mxu0
      %v519 = vadd.f32 0.0, %v518
      %v520 = vpop.f32.mrb[0].mxu0
      %521 = vmatprep.mubr.bf16.mxu0 0
      %522 = vmatmul.mubr.bf16.gmra.mrb[0].mxu0 %v412
      %v523 = vpop.f32.mrb[0].mxu0
      %v524 = vadd.f32 0.0, %v523
      %v525 = vpop.f32.mrb[0].mxu0
      %v526 = vpop.f32.mrb[0].mxu0
      %v527 = vadd.f32 0.0, %v526
      %v528 = vpop.f32.mrb[0].mxu0
      %529 = vmatprep.mubr.bf16.mxu0 0
      %530 = vmatmul.mubr.bf16.gmra.mrb[0].mxu0 %v415
      %v531 = vpop.f32.mrb[0].mxu0
      %v532 = vadd.f32 0.0, %v531
      %v533 = vpop.f32.mrb[0].mxu0
      %v534 = vpop.f32.mrb[0].mxu0
      %v535 = vadd.f32 0.0, %v534
      %v536 = vpop.f32.mrb[0].mxu0
      %537 = vdwg.mxu0
      %v538 = vld [vmem:[#allocation2] sm:$0xff]
      %v539 = vld [vmem:[#allocation2 + $0x8] sm:$0xff]
      %v540 = vld [vmem:[#allocation2 + $0x10] sm:$0xff]
      %v541 = vld [vmem:[#allocation2 + $0x18] sm:$0xff]
      %v542 = vld [vmem:[#allocation2 + $0x20] sm:$0xff]
      %v543 = vld [vmem:[#allocation2 + $0x28] sm:$0xff]
      %v544 = vld [vmem:[#allocation2 + $0x30] sm:$0xff]
      %v545 = vld [vmem:[#allocation2 + $0x38] sm:$0xff]
      %v546 = vld [vmem:[#allocation2 + $0x40] sm:$0xff]
      %v547 = vld [vmem:[#allocation2 + $0x48] sm:$0xff]
      %v548 = vld [vmem:[#allocation2 + $0x50] sm:$0xff]
      %v549 = vld [vmem:[#allocation2 + $0x58] sm:$0xff]
      %v550 = vld [vmem:[#allocation2 + $0x60] sm:$0xff]
      %v551 = vld [vmem:[#allocation2 + $0x68] sm:$0xff]
      %v552 = vld [vmem:[#allocation2 + $0x70] sm:$0xff]
      %v553 = vld [vmem:[#allocation2 + $0x78] sm:$0xff]
      %554 = vmax.xlane.f32.xlu0 %v476
      %v555 = vpop.xlane.xlu0 %554
      %556 = vmax.xlane.f32.xlu0 %v479
      %v557 = vpop.xlane.xlu0 %556
      %558 = vmax.xlane.f32.xlu0 %v484
      %v559 = vpop.xlane.xlu0 %558
      %560 = vmax.xlane.f32.xlu0 %v487
      %v561 = vpop.xlane.xlu0 %560
      %562 = vmax.xlane.f32.xlu0 %v492
      %v563 = vpop.xlane.xlu0 %562
      %564 = vmax.xlane.f32.xlu0 %v495
      %v565 = vpop.xlane.xlu0 %564
      %566 = vmax.xlane.f32.xlu0 %v500
      %v567 = vpop.xlane.xlu0 %566
      %568 = vmax.xlane.f32.xlu0 %v503
      %v569 = vpop.xlane.xlu0 %568
      %570 = vmax.xlane.f32.xlu0 %v508
      %v571 = vpop.xlane.xlu0 %570
      %572 = vmax.xlane.f32.xlu0 %v511
      %v573 = vpop.xlane.xlu0 %572
      %574 = vmax.xlane.f32.xlu0 %v516
      %v575 = vpop.xlane.xlu0 %574
      %576 = vmax.xlane.f32.xlu0 %v519
      %v577 = vpop.xlane.xlu0 %576
      %578 = vmax.xlane.f32.xlu0 %v524
      %v579 = vpop.xlane.xlu0 %578
      %580 = vmax.xlane.f32.xlu0 %v527
      %v581 = vpop.xlane.xlu0 %580
      %582 = vmax.xlane.f32.xlu0 %v532
      %v583 = vpop.xlane.xlu0 %582
      %584 = vmax.xlane.f32.xlu0 %v535
      %v585 = vpop.xlane.xlu0 %584
      %v586 = vmax.f32 %v538, %v555
      %v587 = vmax.f32 %v539, %v557
      %v588 = vmax.f32 %v540, %v559
      %v589 = vmax.f32 %v541, %v561
      %v590 = vmax.f32 %v542, %v563
      %v591 = vmax.f32 %v543, %v565
      %v592 = vmax.f32 %v544, %v567
      %v593 = vmax.f32 %v545, %v569
      %v594 = vmax.f32 %v546, %v571
      %v595 = vmax.f32 %v547, %v573
      %v596 = vmax.f32 %v548, %v575
      %v597 = vmax.f32 %v549, %v577
      %v598 = vmax.f32 %v550, %v579
      %v599 = vmax.f32 %v551, %v581
      %v600 = vmax.f32 %v552, %v583
      %v601 = vmax.f32 %v553, %v585
      %v602 = vsub.f32 %v538, %v586
      %v603 = vsub.f32 %v539, %v587
      %v604 = vsub.f32 %v540, %v588
      %v605 = vsub.f32 %v541, %v589
      %v606 = vsub.f32 %v542, %v590
      %v607 = vsub.f32 %v543, %v591
      %v608 = vsub.f32 %v544, %v592
      %v609 = vsub.f32 %v545, %v593
      %v610 = vsub.f32 %v546, %v594
      %v611 = vsub.f32 %v547, %v595
      %v612 = vsub.f32 %v548, %v596
      %v613 = vsub.f32 %v549, %v597
      %v614 = vsub.f32 %v550, %v598
      %v615 = vsub.f32 %v551, %v599
      %v616 = vsub.f32 %v552, %v600
      %v617 = vsub.f32 %v553, %v601
      %v618 = vmul.f32 %v602, 1.442695
      %v619 = vpow.pop %v618
      %v620 = vmul.f32 %v603, 1.442695
      %v621 = vpow.pop %v620
      %v622 = vmul.f32 %v604, 1.442695
      %v623 = vpow.pop %v622
      %v624 = vmul.f32 %v605, 1.442695
      %v625 = vpow.pop %v624
      %v626 = vmul.f32 %v606, 1.442695
      %v627 = vpow.pop %v626
      %v628 = vmul.f32 %v607, 1.442695
      %v629 = vpow.pop %v628
      %v630 = vmul.f32 %v608, 1.442695
      %v631 = vpow.pop %v630
      %v632 = vmul.f32 %v609, 1.442695
      %v633 = vpow.pop %v632
      %v634 = vmul.f32 %v610, 1.442695
      %v635 = vpow.pop %v634
      %v636 = vmul.f32 %v611, 1.442695
      %v637 = vpow.pop %v636
      %v638 = vmul.f32 %v612, 1.442695
      %v639 = vpow.pop %v638
      %v640 = vmul.f32 %v613, 1.442695
      %v641 = vpow.pop %v640
      %v642 = vmul.f32 %v614, 1.442695
      %v643 = vpow.pop %v642
      %v644 = vmul.f32 %v615, 1.442695
      %v645 = vpow.pop %v644
      %v646 = vmul.f32 %v616, 1.442695
      %v647 = vpow.pop %v646
      %v648 = vmul.f32 %v617, 1.442695
      %v649 = vpow.pop %v648
      %v650 = vld [vmem:[#allocation3] sm:$0xff]
      %v651 = vld [vmem:[#allocation3 + $0x8] sm:$0xff]
      %v652 = vld [vmem:[#allocation3 + $0x10] sm:$0xff]
      %v653 = vld [vmem:[#allocation3 + $0x18] sm:$0xff]
      %v654 = vld [vmem:[#allocation3 + $0x20] sm:$0xff]
      %v655 = vld [vmem:[#allocation3 + $0x28] sm:$0xff]
      %v656 = vld [vmem:[#allocation3 + $0x30] sm:$0xff]
      %v657 = vld [vmem:[#allocation3 + $0x38] sm:$0xff]
      %v658 = vld [vmem:[#allocation3 + $0x40] sm:$0xff]
      %v659 = vld [vmem:[#allocation3 + $0x48] sm:$0xff]
      %v660 = vld [vmem:[#allocation3 + $0x50] sm:$0xff]
      %v661 = vld [vmem:[#allocation3 + $0x58] sm:$0xff]
      %v662 = vld [vmem:[#allocation3 + $0x60] sm:$0xff]
      %v663 = vld [vmem:[#allocation3 + $0x68] sm:$0xff]
      %v664 = vld [vmem:[#allocation3 + $0x70] sm:$0xff]
      %v665 = vld [vmem:[#allocation3 + $0x78] sm:$0xff]
      %v666 = vmul.f32 %v619, %v650
      %v667 = vmul.f32 %v621, %v651
      %v668 = vmul.f32 %v623, %v652
      %v669 = vmul.f32 %v625, %v653
      %v670 = vmul.f32 %v627, %v654
      %v671 = vmul.f32 %v629, %v655
      %v672 = vmul.f32 %v631, %v656
      %v673 = vmul.f32 %v633, %v657
      %v674 = vmul.f32 %v635, %v658
      %v675 = vmul.f32 %v637, %v659
      %v676 = vmul.f32 %v639, %v660
      %v677 = vmul.f32 %v641, %v661
      %v678 = vmul.f32 %v643, %v662
      %v679 = vmul.f32 %v645, %v663
      %v680 = vmul.f32 %v647, %v664
      %v681 = vmul.f32 %v649, %v665
      %683 = vset.pattern.permute.xlu0 0
      %684 = vperm.xlu0 %683, %v586
      %v685 = vpop.permute.xlu0 %684
      %688 = vset.pattern.permute.xlu0 0
      %689 = vperm.xlu0 %688, %v587
      %v690 = vpop.permute.xlu0 %689
      %693 = vset.pattern.permute.xlu0 0
      %694 = vperm.xlu0 %693, %v588
      %v695 = vpop.permute.xlu0 %694
      %698 = vset.pattern.permute.xlu0 0
      %699 = vperm.xlu0 %698, %v589
      %v700 = vpop.permute.xlu0 %699
      %703 = vset.pattern.permute.xlu0 0
      %704 = vperm.xlu0 %703, %v590
      %v705 = vpop.permute.xlu0 %704
      %708 = vset.pattern.permute.xlu0 0
      %709 = vperm.xlu0 %708, %v591
      %v710 = vpop.permute.xlu0 %709
      %713 = vset.pattern.permute.xlu0 0
      %714 = vperm.xlu0 %713, %v592
      %v715 = vpop.permute.xlu0 %714
      %718 = vset.pattern.permute.xlu0 0
      %719 = vperm.xlu0 %718, %v593
      %v720 = vpop.permute.xlu0 %719
      %723 = vset.pattern.permute.xlu0 0
      %724 = vperm.xlu0 %723, %v594
      %v725 = vpop.permute.xlu0 %724
      %728 = vset.pattern.permute.xlu0 0
      %729 = vperm.xlu0 %728, %v595
      %v730 = vpop.permute.xlu0 %729
      %733 = vset.pattern.permute.xlu0 0
      %734 = vperm.xlu0 %733, %v596
      %v735 = vpop.permute.xlu0 %734
      %738 = vset.pattern.permute.xlu0 0
      %739 = vperm.xlu0 %738, %v597
      %v740 = vpop.permute.xlu0 %739
      %743 = vset.pattern.permute.xlu0 0
      %744 = vperm.xlu0 %743, %v598
      %v745 = vpop.permute.xlu0 %744
      %748 = vset.pattern.permute.xlu0 0
      %749 = vperm.xlu0 %748, %v599
      %v750 = vpop.permute.xlu0 %749
      %753 = vset.pattern.permute.xlu0 0
      %754 = vperm.xlu0 %753, %v600
      %v755 = vpop.permute.xlu0 %754
      %758 = vset.pattern.permute.xlu0 0
      %759 = vperm.xlu0 %758, %v601
      %v760 = vpop.permute.xlu0 %759
      %v762 = vsub.f32 %v476, %v685
      %v763 = vsub.f32 %v479, %v690
      %v764 = vsub.f32 %v484, %v695
      %v765 = vsub.f32 %v487, %v700
      %v766 = vsub.f32 %v492, %v705
      %v767 = vsub.f32 %v495, %v710
      %v768 = vsub.f32 %v500, %v715
      %v769 = vsub.f32 %v503, %v720
      %v770 = vsub.f32 %v508, %v725
      %v771 = vsub.f32 %v511, %v730
      %v772 = vsub.f32 %v516, %v735
      %v773 = vsub.f32 %v519, %v740
      %v774 = vsub.f32 %v524, %v745
      %v775 = vsub.f32 %v527, %v750
      %v776 = vsub.f32 %v532, %v755
      %v777 = vsub.f32 %v535, %v760
      %v778 = vmul.f32 %v762, 1.442695
      %v779 = vpow.pop %v778
      %v780 = vmul.f32 %v763, 1.442695
      %v781 = vpow.pop %v780
      %v782 = vmul.f32 %v764, 1.442695
      %v783 = vpow.pop %v782
      %v784 = vmul.f32 %v765, 1.442695
      %v785 = vpow.pop %v784
      %v786 = vmul.f32 %v766, 1.442695
      %v787 = vpow.pop %v786
      %v788 = vmul.f32 %v767, 1.442695
      %v789 = vpow.pop %v788
      %v790 = vmul.f32 %v768, 1.442695
      %v791 = vpow.pop %v790
      %v792 = vmul.f32 %v769, 1.442695
      %v793 = vpow.pop %v792
      %v794 = vmul.f32 %v770, 1.442695
      %v795 = vpow.pop %v794
      %v796 = vmul.f32 %v771, 1.442695
      %v797 = vpow.pop %v796
      %v798 = vmul.f32 %v772, 1.442695
      %v799 = vpow.pop %v798
      %v800 = vmul.f32 %v773, 1.442695
      %v801 = vpow.pop %v800
      %v802 = vmul.f32 %v774, 1.442695
      %v803 = vpow.pop %v802
      %v804 = vmul.f32 %v775, 1.442695
      %v805 = vpow.pop %v804
      %v806 = vmul.f32 %v776, 1.442695
      %v807 = vpow.pop %v806
      %v808 = vmul.f32 %v777, 1.442695
      %v809 = vpow.pop %v808
      %810 = vadd.xlane.f32.xlu0 %v779
      %v811 = vpop.xlane.xlu0 %810
      %812 = vadd.xlane.f32.xlu0 %v781
      %v813 = vpop.xlane.xlu0 %812
      %814 = vadd.xlane.f32.xlu0 %v783
      %v815 = vpop.xlane.xlu0 %814
      %816 = vadd.xlane.f32.xlu0 %v785
      %v817 = vpop.xlane.xlu0 %816
      %818 = vadd.xlane.f32.xlu0 %v787
      %v819 = vpop.xlane.xlu0 %818
      %820 = vadd.xlane.f32.xlu0 %v789
      %v821 = vpop.xlane.xlu0 %820
      %822 = vadd.xlane.f32.xlu0 %v791
      %v823 = vpop.xlane.xlu0 %822
      %824 = vadd.xlane.f32.xlu0 %v793
      %v825 = vpop.xlane.xlu0 %824
      %826 = vadd.xlane.f32.xlu0 %v795
      %v827 = vpop.xlane.xlu0 %826
      %828 = vadd.xlane.f32.xlu0 %v797
      %v829 = vpop.xlane.xlu0 %828
      %830 = vadd.xlane.f32.xlu0 %v799
      %v831 = vpop.xlane.xlu0 %830
      %832 = vadd.xlane.f32.xlu0 %v801
      %v833 = vpop.xlane.xlu0 %832
      %834 = vadd.xlane.f32.xlu0 %v803
      %v835 = vpop.xlane.xlu0 %834
      %836 = vadd.xlane.f32.xlu0 %v805
      %v837 = vpop.xlane.xlu0 %836
      %838 = vadd.xlane.f32.xlu0 %v807
      %v839 = vpop.xlane.xlu0 %838
      %840 = vadd.xlane.f32.xlu0 %v809
      %v841 = vpop.xlane.xlu0 %840
      %v842 = vadd.f32 %v666, %v811
      %v843 = vadd.f32 %v667, %v813
      %v844 = vadd.f32 %v668, %v815
      %v845 = vadd.f32 %v669, %v817
      %v846 = vadd.f32 %v670, %v819
      %v847 = vadd.f32 %v671, %v821
      %v848 = vadd.f32 %v672, %v823
      %v849 = vadd.f32 %v673, %v825
      %v850 = vadd.f32 %v674, %v827
      %v851 = vadd.f32 %v675, %v829
      %v852 = vadd.f32 %v676, %v831
      %v853 = vadd.f32 %v677, %v833
      %v854 = vadd.f32 %v678, %v835
      %v855 = vadd.f32 %v679, %v837
      %v856 = vadd.f32 %v680, %v839
      %v857 = vadd.f32 %v681, %v841
      %vm858 = vcmask 7168
      %859 = vst.msk [vmem:[#allocation3] sm:$0xff] %vm858, %v842
      %860 = vst.msk [vmem:[#allocation3 + $0x8] sm:$0xff] %vm858, %v843
      %861 = vst.msk [vmem:[#allocation3 + $0x10] sm:$0xff] %vm858, %v844
      %862 = vst.msk [vmem:[#allocation3 + $0x18] sm:$0xff] %vm858, %v845
      %863 = vst.msk [vmem:[#allocation3 + $0x20] sm:$0xff] %vm858, %v846
      %864 = vst.msk [vmem:[#allocation3 + $0x28] sm:$0xff] %vm858, %v847
      %865 = vst.msk [vmem:[#allocation3 + $0x30] sm:$0xff] %vm858, %v848
      %866 = vst.msk [vmem:[#allocation3 + $0x38] sm:$0xff] %vm858, %v849
      %867 = vst.msk [vmem:[#allocation3 + $0x40] sm:$0xff] %vm858, %v850
      %868 = vst.msk [vmem:[#allocation3 + $0x48] sm:$0xff] %vm858, %v851
      %869 = vst.msk [vmem:[#allocation3 + $0x50] sm:$0xff] %vm858, %v852
      %870 = vst.msk [vmem:[#allocation3 + $0x58] sm:$0xff] %vm858, %v853
      %871 = vst.msk [vmem:[#allocation3 + $0x60] sm:$0xff] %vm858, %v854
      %872 = vst.msk [vmem:[#allocation3 + $0x68] sm:$0xff] %vm858, %v855
      %873 = vst.msk [vmem:[#allocation3 + $0x70] sm:$0xff] %vm858, %v856
      %874 = vst.msk [vmem:[#allocation3 + $0x78] sm:$0xff] %vm858, %v857
      %875 = vst.msk [vmem:[#allocation2] sm:$0xff] %vm858, %v586
      %876 = vst.msk [vmem:[#allocation2 + $0x8] sm:$0xff] %vm858, %v587
      %877 = vst.msk [vmem:[#allocation2 + $0x10] sm:$0xff] %vm858, %v588
      %878 = vst.msk [vmem:[#allocation2 + $0x18] sm:$0xff] %vm858, %v589
      %879 = vst.msk [vmem:[#allocation2 + $0x20] sm:$0xff] %vm858, %v590
      %880 = vst.msk [vmem:[#allocation2 + $0x28] sm:$0xff] %vm858, %v591
      %881 = vst.msk [vmem:[#allocation2 + $0x30] sm:$0xff] %vm858, %v592
      %882 = vst.msk [vmem:[#allocation2 + $0x38] sm:$0xff] %vm858, %v593
      %883 = vst.msk [vmem:[#allocation2 + $0x40] sm:$0xff] %vm858, %v594
      %884 = vst.msk [vmem:[#allocation2 + $0x48] sm:$0xff] %vm858, %v595
      %885 = vst.msk [vmem:[#allocation2 + $0x50] sm:$0xff] %vm858, %v596
      %886 = vst.msk [vmem:[#allocation2 + $0x58] sm:$0xff] %vm858, %v597
      %887 = vst.msk [vmem:[#allocation2 + $0x60] sm:$0xff] %vm858, %v598
      %888 = vst.msk [vmem:[#allocation2 + $0x68] sm:$0xff] %vm858, %v599
      %889 = vst.msk [vmem:[#allocation2 + $0x70] sm:$0xff] %vm858, %v600
      %890 = vst.msk [vmem:[#allocation2 + $0x78] sm:$0xff] %vm858, %v601
      // Predicated region
      $region33: #{up_block_forward.8} parent=27 // pred_check
        %p891 = pneg %p227
      $region34: #{up_block_forward.8} parent=27 // pred_check_branch
        %893 = sbr.rel (%p891) target = $region36
      $region35: #{up_block_forward.8} parent=27 // pred_region
        %v894 = vld [vmem:[#allocation2] sm:$0xff]
        %v895 = vld [vmem:[#allocation2 + $0x8] sm:$0xff]
        %v896 = vld [vmem:[#allocation2 + $0x10] sm:$0xff]
        %v897 = vld [vmem:[#allocation2 + $0x18] sm:$0xff]
        %v898 = vld [vmem:[#allocation2 + $0x20] sm:$0xff]
        %v899 = vld [vmem:[#allocation2 + $0x28] sm:$0xff]
        %v900 = vld [vmem:[#allocation2 + $0x30] sm:$0xff]
        %v901 = vld [vmem:[#allocation2 + $0x38] sm:$0xff]
        %v902 = vld [vmem:[#allocation2 + $0x40] sm:$0xff]
        %v903 = vld [vmem:[#allocation2 + $0x48] sm:$0xff]
        %v904 = vld [vmem:[#allocation2 + $0x50] sm:$0xff]
        %v905 = vld [vmem:[#allocation2 + $0x58] sm:$0xff]
        %v906 = vld [vmem:[#allocation2 + $0x60] sm:$0xff]
        %v907 = vld [vmem:[#allocation2 + $0x68] sm:$0xff]
        %v908 = vld [vmem:[#allocation2 + $0x70] sm:$0xff]
        %v909 = vld [vmem:[#allocation2 + $0x78] sm:$0xff]
        %v910 = vld [vmem:[#allocation3] sm:$0xff]
        %v911 = vld [vmem:[#allocation3 + $0x8] sm:$0xff]
        %v912 = vld [vmem:[#allocation3 + $0x10] sm:$0xff]
        %v913 = vld [vmem:[#allocation3 + $0x18] sm:$0xff]
        %v914 = vld [vmem:[#allocation3 + $0x20] sm:$0xff]
        %v915 = vld [vmem:[#allocation3 + $0x28] sm:$0xff]
        %v916 = vld [vmem:[#allocation3 + $0x30] sm:$0xff]
        %v917 = vld [vmem:[#allocation3 + $0x38] sm:$0xff]
        %v918 = vld [vmem:[#allocation3 + $0x40] sm:$0xff]
        %v919 = vld [vmem:[#allocation3 + $0x48] sm:$0xff]
        %v920 = vld [vmem:[#allocation3 + $0x50] sm:$0xff]
        %v921 = vld [vmem:[#allocation3 + $0x58] sm:$0xff]
        %v922 = vld [vmem:[#allocation3 + $0x60] sm:$0xff]
        %v923 = vld [vmem:[#allocation3 + $0x68] sm:$0xff]
        %v924 = vld [vmem:[#allocation3 + $0x70] sm:$0xff]
        %v925 = vld [vmem:[#allocation3 + $0x78] sm:$0xff]
        %v926 = vrcp.pop %v910
        %v927 = vmul.f32 1.0, %v926
        %v928 = vrcp.pop %v911
        %v929 = vmul.f32 1.0, %v928
        %v930 = vrcp.pop %v912
        %v931 = vmul.f32 1.0, %v930
        %v932 = vrcp.pop %v913
        %v933 = vmul.f32 1.0, %v932
        %v934 = vrcp.pop %v914
        %v935 = vmul.f32 1.0, %v934
        %v936 = vrcp.pop %v915
        %v937 = vmul.f32 1.0, %v936
        %v938 = vrcp.pop %v916
        %v939 = vmul.f32 1.0, %v938
        %v940 = vrcp.pop %v917
        %v941 = vmul.f32 1.0, %v940
        %v942 = vrcp.pop %v918
        %v943 = vmul.f32 1.0, %v942
        %v944 = vrcp.pop %v919
        %v945 = vmul.f32 1.0, %v944
        %v946 = vrcp.pop %v920
        %v947 = vmul.f32 1.0, %v946
        %v948 = vrcp.pop %v921
        %v949 = vmul.f32 1.0, %v948
        %v950 = vrcp.pop %v922
        %v951 = vmul.f32 1.0, %v950
        %v952 = vrcp.pop %v923
        %v953 = vmul.f32 1.0, %v952
        %v954 = vrcp.pop %v924
        %v955 = vmul.f32 1.0, %v954
        %v956 = vrcp.pop %v925
        %v957 = vmul.f32 1.0, %v956
        %974 = vrot.lane.b32.xlu0 %v927, 1
        %v975 = vpop.permute.xlu0 %974
        %976 = vrot.lane.b32.xlu0 %v929, 1
        %v977 = vpop.permute.xlu0 %976
        %978 = vrot.lane.b32.xlu0 %v931, 1
        %v979 = vpop.permute.xlu0 %978
        %980 = vrot.lane.b32.xlu0 %v933, 1
        %v981 = vpop.permute.xlu0 %980
        %982 = vrot.lane.b32.xlu0 %v935, 1
        %v983 = vpop.permute.xlu0 %982
        %984 = vrot.lane.b32.xlu0 %v937, 1
        %v985 = vpop.permute.xlu0 %984
        %986 = vrot.lane.b32.xlu0 %v939, 1
        %v987 = vpop.permute.xlu0 %986
        %988 = vrot.lane.b32.xlu0 %v941, 1
        %v989 = vpop.permute.xlu0 %988
        %990 = vrot.lane.b32.xlu0 %v943, 1
        %v991 = vpop.permute.xlu0 %990
        %992 = vrot.lane.b32.xlu0 %v945, 1
        %v993 = vpop.permute.xlu0 %992
        %994 = vrot.lane.b32.xlu0 %v947, 1
        %v995 = vpop.permute.xlu0 %994
        %996 = vrot.lane.b32.xlu0 %v949, 1
        %v997 = vpop.permute.xlu0 %996
        %998 = vrot.lane.b32.xlu0 %v951, 1
        %v999 = vpop.permute.xlu0 %998
        %1000 = vrot.lane.b32.xlu0 %v953, 1
        %v1001 = vpop.permute.xlu0 %1000
        %1002 = vrot.lane.b32.xlu0 %v955, 1
        %v1003 = vpop.permute.xlu0 %1002
        %1004 = vrot.lane.b32.xlu0 %v957, 1
        %v1005 = vpop.permute.xlu0 %1004
        %v1022 = vsel %vm858, %v894, %v975
        %v1023 = vsel %vm858, %v895, %v977
        %v1024 = vsel %vm858, %v896, %v979
        %v1025 = vsel %vm858, %v897, %v981
        %v1026 = vsel %vm858, %v898, %v983
        %v1027 = vsel %vm858, %v899, %v985
        %v1028 = vsel %vm858, %v900, %v987
        %v1029 = vsel %vm858, %v901, %v989
        %v1030 = vsel %vm858, %v902, %v991
        %v1031 = vsel %vm858, %v903, %v993
        %v1032 = vsel %vm858, %v904, %v995
        %v1033 = vsel %vm858, %v905, %v997
        %v1034 = vsel %vm858, %v906, %v999
        %v1035 = vsel %vm858, %v907, %v1001
        %v1036 = vsel %vm858, %v908, %v1003
        %v1037 = vsel %vm858, %v909, %v1005
        %vm1038 = vcmask 15360
        %1039 = vst.msk [vmem:[%s224] sm:$0xff] %vm1038, %v1022
        %1040 = vst.msk [vmem:[%s224 + $0x8] sm:$0xff] %vm1038, %v1023
        %1041 = vst.msk [vmem:[%s224 + $0x10] sm:$0xff] %vm1038, %v1024
        %1042 = vst.msk [vmem:[%s224 + $0x18] sm:$0xff] %vm1038, %v1025
        %1043 = vst.msk [vmem:[%s224 + $0x20] sm:$0xff] %vm1038, %v1026
        %1044 = vst.msk [vmem:[%s224 + $0x28] sm:$0xff] %vm1038, %v1027
        %1045 = vst.msk [vmem:[%s224 + $0x30] sm:$0xff] %vm1038, %v1028
        %1046 = vst.msk [vmem:[%s224 + $0x38] sm:$0xff] %vm1038, %v1029
        %1047 = vst.msk [vmem:[%s224 + $0x40] sm:$0xff] %vm1038, %v1030
        %1048 = vst.msk [vmem:[%s224 + $0x48] sm:$0xff] %vm1038, %v1031
        %1049 = vst.msk [vmem:[%s224 + $0x50] sm:$0xff] %vm1038, %v1032
        %1050 = vst.msk [vmem:[%s224 + $0x58] sm:$0xff] %vm1038, %v1033
        %1051 = vst.msk [vmem:[%s224 + $0x60] sm:$0xff] %vm1038, %v1034
        %1052 = vst.msk [vmem:[%s224 + $0x68] sm:$0xff] %vm1038, %v1035
        %1053 = vst.msk [vmem:[%s224 + $0x70] sm:$0xff] %vm1038, %v1036
        %1054 = vst.msk [vmem:[%s224 + $0x78] sm:$0xff] %vm1038, %v1037
      $region36: #{up_block_forward.8} parent=27 // pred_fallthru
        _
      %s1055 = smul.u32 16, %s19
      %p1056 = scmp.lt.s32.totalorder %s18, 1
      %s1057 = scalar_select %p1056, %s18, 1
      %p1058 = scmp.lt.s32.totalorder %s1055, 15
      %s1059 = scalar_select %p1058, %s1055, 15
      %s1060 = smul.addr %s1057, 16
      %s1061 = sadd.s32 %s1059, %s1060
      %s1062 = smul.addr %s1061, 8
      %s1063 = scalar_lea.vmem %s2, %s1062
      // Predicated region
      $region37: #{up_block_forward.8} parent=27 // pred_check
        %p1064 = pneg %p108
      $region38: #{up_block_forward.8} parent=27 // pred_check_branch
        %1066 = sbr.rel (%p1064) target = $region40
      $region39: #{up_block_forward.8} parent=27 // pred_region
        %s1067 = smul.u32 16, %s19
      $region40: #{up_block_forward.8} parent=27 // pred_fallthru
        _
    $region28: #{up_block_forward.8} parent=5 // pred_fallthru
      _
    %p1068 = scmp.le.s32.totalorder 2, %s8
    // Predicated region
    $region41: #{up_block_forward.8} parent=5 // pred_check
      %p1069 = pneg %p1068
    $region42: #{up_block_forward.8} parent=5 // pred_check_branch
      %1071 = sbr.rel (%p1069) target = $region44
    $region43: #{up_block_forward.8} parent=5 // pred_region
      %s1072 = ssub.s32 %s8, 2
      // Predicated region
      $region45: #{up_block_forward.8} parent=43 // pred_check
        %p1073 = pneg %p114
      $region46: #{up_block_forward.8} parent=43 // pred_check_branch
        %1075 = sbr.rel (%p1073) target = $region48
      $region47: #{up_block_forward.8} parent=43 // pred_region
        %s1076 = smul.u32 16, %s22
        %p1077 = scmp.lt.s32.totalorder %s21, 1
        %s1078 = scalar_select %p1077, %s21, 1
        %p1079 = scmp.lt.s32.totalorder %s1076, 15
        %s1080 = scalar_select %p1079, %s1076, 15
        %s1081 = smul.addr %s1078, 16
        %s1082 = sadd.s32 %s1080, %s1081
        %s1083 = smul.addr %s1082, 8
        %s1084 = scalar_lea.vmem %s2, %s1083
      $region48: #{up_block_forward.8} parent=43 // pred_fallthru
        _
    $region44: #{up_block_forward.8} parent=5 // pred_fallthru
      _
  $region6: #{up_block_forward.8} parent=0 // loop_footer
    %s12 = sadd.s32 1, %s8
  $region7: #{up_block_forward.8} parent=0 // loop_footer_branch
    %7 = sbr.rel target = $region3
  $region8: #{up_block_forward.8} parent=0 // loop_exit
    _

// kernel: up_block_forward.9
$region0: #{up_block_forward.9}
  #allocation0 [shape = 'u32[]', space=smem, size = 0x4, offset = 0x4, fixed_abs, tag = 'smem constant byte address 0x4 - core index']
  #allocation1 [shape = 'u32[144,128]{1,0:T(1,128)}', space=vmem, size = 0x12000, scoped, tag = 'internal scratch']
  #allocation2 [shape = 'f32[128,256]{1,0:T(8,128)}', space=vmem, size = 0x20000, scoped, tag = 'scratch operand']
  #allocation3 [shape = 'f32[1,1]{1,0:T(1,128)S(1)}', space=vmem, size = 0x200, scoped, tag = 'scoped memory for up_block_forward.9']
  %s0 = inlined_call_operand.vmem [shape: bf16[2,128,64], index: 0, kind: input, shape index: {}, may-alias: {0,1}]
  %s1 = inlined_call_operand.vmem [shape: bf16[2,128,64], index: 1, kind: input, shape index: {}, may-alias: {0,1}]
  %s2 = inlined_call_operand.vmem [shape: bf16[2,128,256], index: 2, kind: input, shape index: {}]
  %s3 = inlined_call_operand.vmem [shape: f32[2,128,2], index: 3, kind: input, shape index: {}]
  %s4 = inlined_call_operand.vmem [shape: f32[2,128,128], index: 4, kind: input, shape index: {}]
  %s5 = inlined_call_operand.vmem [shape: f32[128,2], index: 5, kind: input, shape index: {}]
  %s6 = inlined_call_operand.<no memory space> [shape: f32[1,1], index: 6, kind: input, shape index: {}]
  %s7 = inlined_call_operand.vmem [shape: bf16[128,256], index: 7, kind: input, shape index: {}]
  %s8 = inlined_call_operand.vmem [shape: f32[2,256], index: 8, kind: input, shape index: {}]
  %s9 = inlined_call_operand.vmem [shape: f32[1,256], index: 9, kind: input, shape index: {}]
  %s10 = inlined_call_operand.vmem [shape: bf16[256,128], index: 10, kind: input, shape index: {}]
  %s11 = inlined_call_operand.vmem [shape: f32[1,128], index: 11, kind: input, shape index: {}]
  %s12 = inlined_call_operand.vmem [shape: f32[2,128,128], index: 12, kind: output, shape index: {}]
  %s13 = sld [smem:[#allocation0]]
  $region89: #{up_block_forward.9} parent=0
    _
  %s15 = ssub.s32 1, %s13
  %s16 = scalar_select 0, %s15, %s13
  %v17 = vstv %s6
  %18 = vst [vmem:[#allocation3] sm:$0x1] %v17
  loop: start=0, step=1, limit=4
  $region2: #{up_block_forward.9} parent=0 // loop_pre_header
    _
  $region3: #{up_block_forward.9} parent=0 // loop_header
    %s20 = sphi 0, %s24
    %p21 = scmp.ge.s32.totalorder %s20, 4
    %s27 = sphi 0, %s46
    %s28 = sphi 0, %s42
    %s29 = sphi 0, %s38
    %s30 = sphi 0, %s27
    %s31 = sphi 0, %s28
    %s32 = sphi 0, %s29
    %s33 = sphi 0, %s30
    %s34 = sphi 0, %s31
    %s35 = sphi 0, %s32
    %s51 = sphi 0, %s53
    %s54 = sphi 0, %s51
    %s55 = sphi 0, %s54
    %s71 = sphi 0, %s55
    %s79 = sphi 0, %s81
    %s82 = sphi 0, %s79
    %s83 = sphi 0, %s82
    %s99 = sphi 0, %s83
    %s107 = sphi 0, %s109
    %s110 = sphi 0, %s107
    %s111 = sphi 0, %s110
    %s127 = sphi 0, %s111
    %s135 = sphi 0, %s137
    %s138 = sphi 0, %s135
    %s139 = sphi 0, %s138
    %s155 = sphi 0, %s139
    %s163 = sphi 0, %s165
    %s166 = sphi 0, %s163
    %s167 = sphi 0, %s166
    %s183 = sphi 0, %s167
    %s189 = sphi 0, %s191
    %s192 = sphi 0, %s189
    %s193 = sphi 0, %s192
    %s209 = sphi 0, %s193
    %s213 = sphi 0, %s213
    %s215 = sphi 0, %s213
    %s216 = sphi 0, %s215
    %s230 = sphi 0, %s216
    %s234 = sphi 0, %s234
    %s236 = sphi 0, %s234
    %s237 = sphi 0, %s236
    %s251 = sphi 0, %s237
    %s255 = sphi 0, %s255
    %s257 = sphi 0, %s255
    %s258 = sphi 0, %s257
    %s272 = sphi 0, %s258
    %s276 = sphi 0, %s276
    %s278 = sphi 0, %s276
    %s279 = sphi 0, %s278
    %s293 = sphi 0, %s279
    %s297 = sphi 0, %s297
    %s299 = sphi 0, %s297
    %s300 = sphi 0, %s299
    %s314 = sphi 0, %s300
    %s318 = sphi 0, %s318
    %s320 = sphi 0, %s318
    %s321 = sphi 0, %s320
    %s335 = sphi 0, %s321
    %s343 = sphi 0, %s345
    %s346 = sphi 0, %s343
    %s347 = sphi 0, %s346
    %s363 = sphi 0, %s347
  $region4: #{up_block_forward.9} parent=0 // loop_header_branch
    %23 = sbr.rel (%p21) target = $region8
  $region5: #{up_block_forward.9} parent=0 // loop_body
    %s25 = ssub.s32 %s20, 1
    %s26 = ssub.s32 %s20, 2
    %s36 = sadd.s32 1, %s29
    %p37 = scmp.ge.s32.totalorder %s36, 1
    %s38 = scalar_select %p37, 0, %s36
    %s39 = sadd.s32 1, %s28
    %s40 = scalar_select %p37, %s39, %s28
    %p41 = scmp.ge.s32.totalorder %s40, 1
    %s42 = scalar_select %p41, 0, %s40
    %s43 = sadd.s32 1, %s27
    %s44 = scalar_select %p41, %s43, %s27
    %p45 = scmp.ge.s32.totalorder %s44, 2
    %s46 = scalar_select %p45, 0, %s44
    %s47 = ssub.s32 %s27, %s46
    %s48 = ssub.s32 %s28, %s42
    %s49 = sor.u32 %s47, %s48
    %p50 = scmp.eq.s32.totalorder %s49, 0
    %s52 = sadd.s32 %s51, 1
    %s53 = scalar_select %p50, %s51, %s52
    %p56 = pneg %p50
    %p57 = scmp.eq.s32.totalorder %s20, 1
    %p58 = por %p56, %p57
    %p59 = scmp.ne.s32.totalorder %s51, %s54
    %p60 = scmp.eq.s32.totalorder %s20, 0
    %p61 = por %p59, %p60
    %p62 = scmp.ne.s32.totalorder %s51, %s54
    %p63 = scmp.eq.s32.totalorder %s25, 1
    %p64 = por %p62, %p63
    %p65 = scmp.ne.s32.totalorder %s54, %s55
    %p66 = scmp.eq.s32.totalorder %s25, 0
    %p67 = por %p65, %p66
    %p68 = scmp.ne.s32.totalorder %s54, %s55
    %p69 = scmp.eq.s32.totalorder %s26, 1
    %p70 = por %p68, %p69
    %p72 = scmp.ne.s32.totalorder %s55, %s71
    %p73 = scmp.eq.s32.totalorder %s26, 0
    %p74 = por %p72, %p73
    %s75 = ssub.s32 %s27, %s46
    %s76 = ssub.s32 %s29, %s38
    %s77 = sor.u32 %s75, %s76
    %p78 = scmp.eq.s32.totalorder %s77, 0
    %s80 = sadd.s32 %s79, 1
    %s81 = scalar_select %p78, %s79, %s80
    %p84 = pneg %p78
    %p85 = scmp.eq.s32.totalorder %s20, 1
    %p86 = por %p84, %p85
    %p87 = scmp.ne.s32.totalorder %s79, %s82
    %p88 = scmp.eq.s32.totalorder %s20, 0
    %p89 = por %p87, %p88
    %p90 = scmp.ne.s32.totalorder %s79, %s82
    %p91 = scmp.eq.s32.totalorder %s25, 1
    %p92 = por %p90, %p91
    %p93 = scmp.ne.s32.totalorder %s82, %s83
    %p94 = scmp.eq.s32.totalorder %s25, 0
    %p95 = por %p93, %p94
    %p96 = scmp.ne.s32.totalorder %s82, %s83
    %p97 = scmp.eq.s32.totalorder %s26, 1
    %p98 = por %p96, %p97
    %p100 = scmp.ne.s32.totalorder %s83, %s99
    %p101 = scmp.eq.s32.totalorder %s26, 0
    %p102 = por %p100, %p101
    %s103 = ssub.s32 %s27, %s46
    %s104 = ssub.s32 %s29, %s38
    %s105 = sor.u32 %s103, %s104
    %p106 = scmp.eq.s32.totalorder %s105, 0
    %s108 = sadd.s32 %s107, 1
    %s109 = scalar_select %p106, %s107, %s108
    %p112 = pneg %p106
    %p113 = scmp.eq.s32.totalorder %s20, 1
    %p114 = por %p112, %p113
    %p115 = scmp.ne.s32.totalorder %s107, %s110
    %p116 = scmp.eq.s32.totalorder %s20, 0
    %p117 = por %p115, %p116
    %p118 = scmp.ne.s32.totalorder %s107, %s110
    %p119 = scmp.eq.s32.totalorder %s25, 1
    %p120 = por %p118, %p119
    %p121 = scmp.ne.s32.totalorder %s110, %s111
    %p122 = scmp.eq.s32.totalorder %s25, 0
    %p123 = por %p121, %p122
    %p124 = scmp.ne.s32.totalorder %s110, %s111
    %p125 = scmp.eq.s32.totalorder %s26, 1
    %p126 = por %p124, %p125
    %p128 = scmp.ne.s32.totalorder %s111, %s127
    %p129 = scmp.eq.s32.totalorder %s26, 0
    %p130 = por %p128, %p129
    %s131 = ssub.s32 %s27, %s46
    %s132 = ssub.s32 %s29, %s38
    %s133 = sor.u32 %s131, %s132
    %p134 = scmp.eq.s32.totalorder %s133, 0
    %s136 = sadd.s32 %s135, 1
    %s137 = scalar_select %p134, %s135, %s136
    %p140 = pneg %p134
    %p141 = scmp.eq.s32.totalorder %s20, 1
    %p142 = por %p140, %p141
    %p143 = scmp.ne.s32.totalorder %s135, %s138
    %p144 = scmp.eq.s32.totalorder %s20, 0
    %p145 = por %p143, %p144
    %p146 = scmp.ne.s32.totalorder %s135, %s138
    %p147 = scmp.eq.s32.totalorder %s25, 1
    %p148 = por %p146, %p147
    %p149 = scmp.ne.s32.totalorder %s138, %s139
    %p150 = scmp.eq.s32.totalorder %s25, 0
    %p151 = por %p149, %p150
    %p152 = scmp.ne.s32.totalorder %s138, %s139
    %p153 = scmp.eq.s32.totalorder %s26, 1
    %p154 = por %p152, %p153
    %p156 = scmp.ne.s32.totalorder %s139, %s155
    %p157 = scmp.eq.s32.totalorder %s26, 0
    %p158 = por %p156, %p157
    %s159 = ssub.s32 %s27, %s46
    %s160 = ssub.s32 %s28, %s42
    %s161 = sor.u32 %s159, %s160
    %p162 = scmp.eq.s32.totalorder %s161, 0
    %s164 = sadd.s32 %s163, 1
    %s165 = scalar_select %p162, %s163, %s164
    %p168 = pneg %p162
    %p169 = scmp.eq.s32.totalorder %s20, 1
    %p170 = por %p168, %p169
    %p171 = scmp.ne.s32.totalorder %s163, %s166
    %p172 = scmp.eq.s32.totalorder %s20, 0
    %p173 = por %p171, %p172
    %p174 = scmp.ne.s32.totalorder %s163, %s166
    %p175 = scmp.eq.s32.totalorder %s25, 1
    %p176 = por %p174, %p175
    %p177 = scmp.ne.s32.totalorder %s166, %s167
    %p178 = scmp.eq.s32.totalorder %s25, 0
    %p179 = por %p177, %p178
    %p180 = scmp.ne.s32.totalorder %s166, %s167
    %p181 = scmp.eq.s32.totalorder %s26, 1
    %p182 = por %p180, %p181
    %p184 = scmp.ne.s32.totalorder %s167, %s183
    %p185 = scmp.eq.s32.totalorder %s26, 0
    %p186 = por %p184, %p185
    %s187 = ssub.s32 %s28, %s42
    %p188 = scmp.eq.s32.totalorder %s187, 0
    %s190 = sadd.s32 %s189, 1
    %s191 = scalar_select %p188, %s189, %s190
    %p194 = pneg %p188
    %p195 = scmp.eq.s32.totalorder %s20, 1
    %p196 = por %p194, %p195
    %p197 = scmp.ne.s32.totalorder %s189, %s192
    %p198 = scmp.eq.s32.totalorder %s20, 0
    %p199 = por %p197, %p198
    %p200 = scmp.ne.s32.totalorder %s189, %s192
    %p201 = scmp.eq.s32.totalorder %s25, 1
    %p202 = por %p200, %p201
    %p203 = scmp.ne.s32.totalorder %s192, %s193
    %p204 = scmp.eq.s32.totalorder %s25, 0
    %p205 = por %p203, %p204
    %p206 = scmp.ne.s32.totalorder %s192, %s193
    %p207 = scmp.eq.s32.totalorder %s26, 1
    %p208 = por %p206, %p207
    %p210 = scmp.ne.s32.totalorder %s193, %s209
    %p211 = scmp.eq.s32.totalorder %s26, 0
    %p212 = por %p210, %p211
    %s214 = sadd.s32 %s213, 1
    %p217 = scmp.eq.s32.totalorder %s20, 1
    %p218 = scmp.ne.s32.totalorder %s213, %s215
    %p219 = scmp.eq.s32.totalorder %s20, 0
    %p220 = por %p218, %p219
    %p221 = scmp.ne.s32.totalorder %s213, %s215
    %p222 = scmp.eq.s32.totalorder %s25, 1
    %p223 = por %p221, %p222
    %p224 = scmp.ne.s32.totalorder %s215, %s216
    %p225 = scmp.eq.s32.totalorder %s25, 0
    %p226 = por %p224, %p225
    %p227 = scmp.ne.s32.totalorder %s215, %s216
    %p228 = scmp.eq.s32.totalorder %s26, 1
    %p229 = por %p227, %p228
    %p231 = scmp.ne.s32.totalorder %s216, %s230
    %p232 = scmp.eq.s32.totalorder %s26, 0
    %p233 = por %p231, %p232
    %s235 = sadd.s32 %s234, 1
    %p238 = scmp.eq.s32.totalorder %s20, 1
    %p239 = scmp.ne.s32.totalorder %s234, %s236
    %p240 = scmp.eq.s32.totalorder %s20, 0
    %p241 = por %p239, %p240
    %p242 = scmp.ne.s32.totalorder %s234, %s236
    %p243 = scmp.eq.s32.totalorder %s25, 1
    %p244 = por %p242, %p243
    %p245 = scmp.ne.s32.totalorder %s236, %s237
    %p246 = scmp.eq.s32.totalorder %s25, 0
    %p247 = por %p245, %p246
    %p248 = scmp.ne.s32.totalorder %s236, %s237
    %p249 = scmp.eq.s32.totalorder %s26, 1
    %p250 = por %p248, %p249
    %p252 = scmp.ne.s32.totalorder %s237, %s251
    %p253 = scmp.eq.s32.totalorder %s26, 0
    %p254 = por %p252, %p253
    %s256 = sadd.s32 %s255, 1
    %p259 = scmp.eq.s32.totalorder %s20, 1
    %p260 = scmp.ne.s32.totalorder %s255, %s257
    %p261 = scmp.eq.s32.totalorder %s20, 0
    %p262 = por %p260, %p261
    %p263 = scmp.ne.s32.totalorder %s255, %s257
    %p264 = scmp.eq.s32.totalorder %s25, 1
    %p265 = por %p263, %p264
    %p266 = scmp.ne.s32.totalorder %s257, %s258
    %p267 = scmp.eq.s32.totalorder %s25, 0
    %p268 = por %p266, %p267
    %p269 = scmp.ne.s32.totalorder %s257, %s258
    %p270 = scmp.eq.s32.totalorder %s26, 1
    %p271 = por %p269, %p270
    %p273 = scmp.ne.s32.totalorder %s258, %s272
    %p274 = scmp.eq.s32.totalorder %s26, 0
    %p275 = por %p273, %p274
    %s277 = sadd.s32 %s276, 1
    %p280 = scmp.eq.s32.totalorder %s20, 1
    %p281 = scmp.ne.s32.totalorder %s276, %s278
    %p282 = scmp.eq.s32.totalorder %s20, 0
    %p283 = por %p281, %p282
    %p284 = scmp.ne.s32.totalorder %s276, %s278
    %p285 = scmp.eq.s32.totalorder %s25, 1
    %p286 = por %p284, %p285
    %p287 = scmp.ne.s32.totalorder %s278, %s279
    %p288 = scmp.eq.s32.totalorder %s25, 0
    %p289 = por %p287, %p288
    %p290 = scmp.ne.s32.totalorder %s278, %s279
    %p291 = scmp.eq.s32.totalorder %s26, 1
    %p292 = por %p290, %p291
    %p294 = scmp.ne.s32.totalorder %s279, %s293
    %p295 = scmp.eq.s32.totalorder %s26, 0
    %p296 = por %p294, %p295
    %s298 = sadd.s32 %s297, 1
    %p301 = scmp.eq.s32.totalorder %s20, 1
    %p302 = scmp.ne.s32.totalorder %s297, %s299
    %p303 = scmp.eq.s32.totalorder %s20, 0
    %p304 = por %p302, %p303
    %p305 = scmp.ne.s32.totalorder %s297, %s299
    %p306 = scmp.eq.s32.totalorder %s25, 1
    %p307 = por %p305, %p306
    %p308 = scmp.ne.s32.totalorder %s299, %s300
    %p309 = scmp.eq.s32.totalorder %s25, 0
    %p310 = por %p308, %p309
    %p311 = scmp.ne.s32.totalorder %s299, %s300
    %p312 = scmp.eq.s32.totalorder %s26, 1
    %p313 = por %p311, %p312
    %p315 = scmp.ne.s32.totalorder %s300, %s314
    %p316 = scmp.eq.s32.totalorder %s26, 0
    %p317 = por %p315, %p316
    %s319 = sadd.s32 %s318, 1
    %p322 = scmp.eq.s32.totalorder %s20, 1
    %p323 = scmp.ne.s32.totalorder %s318, %s320
    %p324 = scmp.eq.s32.totalorder %s20, 0
    %p325 = por %p323, %p324
    %p326 = scmp.ne.s32.totalorder %s318, %s320
    %p327 = scmp.eq.s32.totalorder %s25, 1
    %p328 = por %p326, %p327
    %p329 = scmp.ne.s32.totalorder %s320, %s321
    %p330 = scmp.eq.s32.totalorder %s25, 0
    %p331 = por %p329, %p330
    %p332 = scmp.ne.s32.totalorder %s320, %s321
    %p333 = scmp.eq.s32.totalorder %s26, 1
    %p334 = por %p332, %p333
    %p336 = scmp.ne.s32.totalorder %s321, %s335
    %p337 = scmp.eq.s32.totalorder %s26, 0
    %p338 = por %p336, %p337
    %s339 = ssub.s32 %s27, %s46
    %s340 = ssub.s32 %s28, %s42
    %s341 = sor.u32 %s339, %s340
    %p342 = scmp.eq.s32.totalorder %s341, 0
    %s344 = sadd.s32 %s343, 1
    %s345 = scalar_select %p342, %s343, %s344
    %p348 = pneg %p342
    %p349 = scmp.eq.s32.totalorder %s20, 1
    %p350 = por %p348, %p349
    %p351 = scmp.ne.s32.totalorder %s343, %s346
    %p352 = scmp.eq.s32.totalorder %s20, 0
    %p353 = por %p351, %p352
    %p354 = scmp.ne.s32.totalorder %s343, %s346
    %p355 = scmp.eq.s32.totalorder %s25, 1
    %p356 = por %p354, %p355
    %p357 = scmp.ne.s32.totalorder %s346, %s347
    %p358 = scmp.eq.s32.totalorder %s25, 0
    %p359 = por %p357, %p358
    %p360 = scmp.ne.s32.totalorder %s346, %s347
    %p361 = scmp.eq.s32.totalorder %s26, 1
    %p362 = por %p360, %p361
    %p364 = scmp.ne.s32.totalorder %s347, %s363
    %p365 = scmp.eq.s32.totalorder %s26, 0
    %p366 = por %p364, %p365
    %p367 = scmp.le.s32.totalorder 1, %s20
    %p368 = scmp.lt.s32.totalorder %s20, 3
    %p369 = pnand %p367, %p368
    %p370 = pneg %p369
    // Predicated region
    $region9: #{up_block_forward.9} parent=5 // pred_check
      _
    $region10: #{up_block_forward.9} parent=5 // pred_check_branch
      %372 = sbr.rel (%p369) target = $region12
    $region11: #{up_block_forward.9} parent=5 // pred_region
      %s373 = ssub.s32 %s20, 1
      // Predicated region
      $region13: #{up_block_forward.9} parent=11 // pred_check
        %p374 = pneg %p205
      $region14: #{up_block_forward.9} parent=11 // pred_check_branch
        %376 = sbr.rel (%p374) target = $region16
      $region15: #{up_block_forward.9} parent=11 // pred_region
        %s377 = smul.u32 16, %s31
        %p378 = scmp.lt.s32.totalorder %s377, 15
        %s379 = scalar_select %p378, %s377, 15
        %s380 = smul.addr %s379, 8
        %s381 = scalar_lea.vmem %s5, %s380
        %s382 = smul.u32 16, %s31
      $region16: #{up_block_forward.9} parent=11 // pred_fallthru
        _
      // Predicated region
      $region17: #{up_block_forward.9} parent=11 // pred_check
        %p383 = pneg %p226
      $region18: #{up_block_forward.9} parent=11 // pred_check_branch
        %385 = sbr.rel (%p383) target = $region20
      $region19: #{up_block_forward.9} parent=11 // pred_region
        _
      $region20: #{up_block_forward.9} parent=11 // pred_fallthru
        _
      // Predicated region
      $region21: #{up_block_forward.9} parent=11 // pred_check
        %p386 = pneg %p247
      $region22: #{up_block_forward.9} parent=11 // pred_check_branch
        %388 = sbr.rel (%p386) target = $region24
      $region23: #{up_block_forward.9} parent=11 // pred_region
        _
      $region24: #{up_block_forward.9} parent=11 // pred_fallthru
        _
      // Predicated region
      $region25: #{up_block_forward.9} parent=11 // pred_check
        %p389 = pneg %p268
      $region26: #{up_block_forward.9} parent=11 // pred_check_branch
        %391 = sbr.rel (%p389) target = $region28
      $region27: #{up_block_forward.9} parent=11 // pred_region
        _
      $region28: #{up_block_forward.9} parent=11 // pred_fallthru
        _
      // Predicated region
      $region29: #{up_block_forward.9} parent=11 // pred_check
        %p392 = pneg %p289
      $region30: #{up_block_forward.9} parent=11 // pred_check_branch
        %394 = sbr.rel (%p392) target = $region32
      $region31: #{up_block_forward.9} parent=11 // pred_region
        _
      $region32: #{up_block_forward.9} parent=11 // pred_fallthru
        _
      // Predicated region
      $region33: #{up_block_forward.9} parent=11 // pred_check
        %p395 = pneg %p310
      $region34: #{up_block_forward.9} parent=11 // pred_check_branch
        %397 = sbr.rel (%p395) target = $region36
      $region35: #{up_block_forward.9} parent=11 // pred_region
        _
      $region36: #{up_block_forward.9} parent=11 // pred_fallthru
        _
      // Predicated region
      $region37: #{up_block_forward.9} parent=11 // pred_check
        %p398 = pneg %p331
      $region38: #{up_block_forward.9} parent=11 // pred_check_branch
        %400 = sbr.rel (%p398) target = $region40
      $region39: #{up_block_forward.9} parent=11 // pred_region
        _
      $region40: #{up_block_forward.9} parent=11 // pred_fallthru
        _
    $region12: #{up_block_forward.9} parent=5 // pred_fallthru
      _
    %p401 = scmp.lt.s32.totalorder %s20, 2
    // Predicated region
    $region41: #{up_block_forward.9} parent=5 // pred_check
      %p402 = pneg %p401
    $region42: #{up_block_forward.9} parent=5 // pred_check_branch
      %404 = sbr.rel (%p402) target = $region44
    $region43: #{up_block_forward.9} parent=5 // pred_region
      // Predicated region
      $region45: #{up_block_forward.9} parent=43 // pred_check
        %p405 = pneg %p61
      $region46: #{up_block_forward.9} parent=43 // pred_check_branch
        %407 = sbr.rel (%p405) target = $region48
      $region47: #{up_block_forward.9} parent=43 // pred_region
        %s408 = smul.u32 16, %s28
        %p409 = scmp.lt.s32.totalorder %s27, 1
        %s410 = scalar_select %p409, %s27, 1
        %p411 = scmp.lt.s32.totalorder %s408, 15
        %s412 = scalar_select %p411, %s408, 15
        %s413 = smul.addr %s410, 16
        %s414 = sadd.s32 %s412, %s413
        %s415 = smul.addr %s414, 4
        %s416 = scalar_lea.vmem %s0, %s415
        %s417 = smul.u32 16, %s28
      $region48: #{up_block_forward.9} parent=43 // pred_fallthru
        _
      // Predicated region
      $region49: #{up_block_forward.9} parent=43 // pred_check
        %p418 = pneg %p89
      $region50: #{up_block_forward.9} parent=43 // pred_check_branch
        %420 = sbr.rel (%p418) target = $region52
      $region51: #{up_block_forward.9} parent=43 // pred_region
        %s421 = smul.u32 16, %s29
        %p422 = scmp.lt.s32.totalorder %s27, 1
        %s423 = scalar_select %p422, %s27, 1
        %p424 = scmp.lt.s32.totalorder %s421, 15
        %s425 = scalar_select %p424, %s421, 15
        %s426 = smul.addr %s423, 16
        %s427 = sadd.s32 %s425, %s426
        %s428 = smul.addr %s427, 4
        %s429 = scalar_lea.vmem %s1, %s428
        %s430 = smul.u32 16, %s29
      $region52: #{up_block_forward.9} parent=43 // pred_fallthru
        _
      // Predicated region
      $region53: #{up_block_forward.9} parent=43 // pred_check
        %p431 = pneg %p117
      $region54: #{up_block_forward.9} parent=43 // pred_check_branch
        %433 = sbr.rel (%p431) target = $region56
      $region55: #{up_block_forward.9} parent=43 // pred_region
        %s434 = smul.u32 16, %s29
        %p435 = scmp.lt.s32.totalorder %s27, 1
        %s436 = scalar_select %p435, %s27, 1
        %p437 = scmp.lt.s32.totalorder %s434, 15
        %s438 = scalar_select %p437, %s434, 15
        %s439 = smul.addr %s438, 2
        %s440 = smul.addr %s436, 32
        %s441 = sadd.s32 %s439, %s440
        %s442 = smul.addr %s441, 4
        %s443 = scalar_lea.vmem %s2, %s442
        %s444 = smul.u32 16, %s29
      $region56: #{up_block_forward.9} parent=43 // pred_fallthru
        _
      // Predicated region
      $region57: #{up_block_forward.9} parent=43 // pred_check
        %p445 = pneg %p145
      $region58: #{up_block_forward.9} parent=43 // pred_check_branch
        %447 = sbr.rel (%p445) target = $region60
      $region59: #{up_block_forward.9} parent=43 // pred_region
        %s448 = smul.u32 16, %s29
        %p449 = scmp.lt.s32.totalorder %s27, 1
        %s450 = scalar_select %p449, %s27, 1
        %p451 = scmp.lt.s32.totalorder %s448, 15
        %s452 = scalar_select %p451, %s448, 15
        %s453 = smul.addr %s450, 16
        %s454 = sadd.s32 %s452, %s453
        %s455 = smul.addr %s454, 8
        %s456 = scalar_lea.vmem %s3, %s455
        %s457 = smul.u32 16, %s29
      $region60: #{up_block_forward.9} parent=43 // pred_fallthru
        _
      // Predicated region
      $region61: #{up_block_forward.9} parent=43 // pred_check
        %p458 = pneg %p173
      $region62: #{up_block_forward.9} parent=43 // pred_check_branch
        %460 = sbr.rel (%p458) target = $region64
      $region63: #{up_block_forward.9} parent=43 // pred_region
        %s461 = smul.u32 16, %s28
        %p462 = scmp.lt.s32.totalorder %s27, 1
        %s463 = scalar_select %p462, %s27, 1
        %p464 = scmp.lt.s32.totalorder %s461, 15
        %s465 = scalar_select %p464, %s461, 15
        %s466 = smul.addr %s463, 16
        %s467 = sadd.s32 %s465, %s466
        %s468 = smul.addr %s467, 8
        %s469 = scalar_lea.vmem %s4, %s468
        %s470 = smul.u32 16, %s28
      $region64: #{up_block_forward.9} parent=43 // pred_fallthru
        _
    $region44: #{up_block_forward.9} parent=5 // pred_fallthru
      _
    %p471 = scmp.le.s32.totalorder 1, %s20
    %p472 = scmp.lt.s32.totalorder %s20, 3
    %p473 = pnand %p471, %p472
    %p474 = pneg %p473
    // Predicated region
    $region65: #{up_block_forward.9} parent=5 // pred_check
      _
    $region66: #{up_block_forward.9} parent=5 // pred_check_branch
      %476 = sbr.rel (%p473) target = $region68
    $region67: #{up_block_forward.9} parent=5 // pred_region
      %s477 = ssub.s32 %s20, 1
      %s478 = smul.u32 16, %s31
      %p479 = scmp.lt.s32.totalorder %s30, 1
      %s480 = scalar_select %p479, %s30, 1
      %p481 = scmp.lt.s32.totalorder %s478, 15
      %s482 = scalar_select %p481, %s478, 15
      %s483 = smul.addr %s480, 16
      %s484 = sadd.s32 %s482, %s483
      %s485 = smul.addr %s484, 4
      %s486 = scalar_lea.vmem %s0, %s485
      %p487 = pneg %p67
      %p488 = pneg %p64
      %s489 = smul.u32 16, %s32
      %p490 = scmp.lt.s32.totalorder %s30, 1
      %s491 = scalar_select %p490, %s30, 1
      %p492 = scmp.lt.s32.totalorder %s489, 15
      %s493 = scalar_select %p492, %s489, 15
      %s494 = smul.addr %s491, 16
      %s495 = sadd.s32 %s493, %s494
      %s496 = smul.addr %s495, 4
      %s497 = scalar_lea.vmem %s1, %s496
      %p498 = pneg %p95
      %p499 = pneg %p92
      %s500 = smul.u32 16, %s32
      %p501 = scmp.lt.s32.totalorder %s30, 1
      %s502 = scalar_select %p501, %s30, 1
      %p503 = scmp.lt.s32.totalorder %s500, 15
      %s504 = scalar_select %p503, %s500, 15
      %s505 = smul.addr %s504, 2
      %s506 = smul.addr %s502, 32
      %s507 = sadd.s32 %s505, %s506
      %s508 = smul.addr %s507, 4
      %s509 = scalar_lea.vmem %s2, %s508
      %p510 = pneg %p123
      %p511 = pneg %p120
      %s512 = smul.u32 16, %s32
      %p513 = scmp.lt.s32.totalorder %s30, 1
      %s514 = scalar_select %p513, %s30, 1
      %p515 = scmp.lt.s32.totalorder %s512, 15
      %s516 = scalar_select %p515, %s512, 15
      %s517 = smul.addr %s514, 16
      %s518 = sadd.s32 %s516, %s517
      %s519 = smul.addr %s518, 8
      %s520 = scalar_lea.vmem %s3, %s519
      %p521 = pneg %p151
      %p522 = pneg %p148
      %s523 = smul.u32 16, %s31
      %p524 = scmp.lt.s32.totalorder %s30, 1
      %s525 = scalar_select %p524, %s30, 1
      %p526 = scmp.lt.s32.totalorder %s523, 15
      %s527 = scalar_select %p526, %s523, 15
      %s528 = smul.addr %s525, 16
      %s529 = sadd.s32 %s527, %s528
      %s530 = smul.addr %s529, 8
      %s531 = scalar_lea.vmem %s4, %s530
      %p532 = pneg %p179
      %p533 = pneg %p176
      %s534 = smul.u32 16, %s31
      %p535 = scmp.lt.s32.totalorder %s534, 15
      %s536 = scalar_select %p535, %s534, 15
      %s537 = smul.addr %s536, 8
      %s538 = scalar_lea.vmem %s5, %s537
      %p539 = pneg %p205
      %p540 = pneg %p202
      %p541 = pneg %p226
      %p542 = pneg %p223
      %p543 = pneg %p247
      %p544 = pneg %p244
      %p545 = pneg %p268
      %p546 = pneg %p265
      %p547 = pneg %p289
      %p548 = pneg %p286
      %p549 = pneg %p310
      %p550 = pneg %p307
      %p551 = pneg %p331
      %p552 = pneg %p328
      %p553 = pneg %p359
      %p554 = pneg %p356
      %s555 = smul.u32 16, %s31
      %p556 = scmp.lt.s32.totalorder %s30, 1
      %s557 = scalar_select %p556, %s30, 1
      %p558 = scmp.lt.s32.totalorder %s555, 15
      %s559 = scalar_select %p558, %s555, 15
      %s560 = smul.addr %s557, 16
      %s561 = sadd.s32 %s559, %s560
      %s562 = smul.addr %s561, 8
      %s563 = scalar_lea.vmem %s12, %s562
      %s564 = smul.u32 16, %s31
      %p565 = scmp.lt.s32.totalorder %s30, 1
      %s566 = scalar_select %p565, %s30, 1
      %p567 = scmp.lt.s32.totalorder %s564, 15
      %s568 = scalar_select %p567, %s564, 15
      %s569 = smul.addr %s566, 16
      %s570 = sadd.s32 %s568, %s569
      %s571 = smul.addr %s570, 4
      %s572 = scalar_lea.vmem %s0, %s571
      %s573 = smul.u32 16, %s31
      %s574 = smul.u32 16, %s32
      %p575 = scmp.lt.s32.totalorder %s30, 1
      %s576 = scalar_select %p575, %s30, 1
      %p577 = scmp.lt.s32.totalorder %s574, 15
      %s578 = scalar_select %p577, %s574, 15
      %s579 = smul.addr %s576, 16
      %s580 = sadd.s32 %s578, %s579
      %s581 = smul.addr %s580, 4
      %s582 = scalar_lea.vmem %s1, %s581
      %s583 = smul.u32 16, %s32
      %s584 = smul.u32 16, %s32
      %p585 = scmp.lt.s32.totalorder %s30, 1
      %s586 = scalar_select %p585, %s30, 1
      %p587 = scmp.lt.s32.totalorder %s584, 15
      %s588 = scalar_select %p587, %s584, 15
      %s589 = smul.addr %s588, 2
      %s590 = smul.addr %s586, 32
      %s591 = sadd.s32 %s589, %s590
      %s592 = smul.addr %s591, 4
      %s593 = scalar_lea.vmem %s2, %s592
      %s594 = smul.u32 16, %s32
      %s595 = smul.u32 16, %s32
      %p596 = scmp.lt.s32.totalorder %s30, 1
      %s597 = scalar_select %p596, %s30, 1
      %p598 = scmp.lt.s32.totalorder %s595, 15
      %s599 = scalar_select %p598, %s595, 15
      %s600 = smul.addr %s597, 16
      %s601 = sadd.s32 %s599, %s600
      %s602 = smul.addr %s601, 8
      %s603 = scalar_lea.vmem %s3, %s602
      %s604 = smul.u32 16, %s32
      %s605 = smul.u32 16, %s31
      %p606 = scmp.lt.s32.totalorder %s30, 1
      %s607 = scalar_select %p606, %s30, 1
      %p608 = scmp.lt.s32.totalorder %s605, 15
      %s609 = scalar_select %p608, %s605, 15
      %s610 = smul.addr %s607, 16
      %s611 = sadd.s32 %s609, %s610
      %s612 = smul.addr %s611, 8
      %s613 = scalar_lea.vmem %s4, %s612
      %s614 = smul.u32 16, %s31
      %s615 = smul.u32 16, %s31
      %p616 = scmp.lt.s32.totalorder %s615, 15
      %s617 = scalar_select %p616, %s615, 15
      %s618 = smul.addr %s617, 8
      %s619 = scalar_lea.vmem %s5, %s618
      %s620 = smul.u32 16, %s31
      %s621 = smul.u32 16, %s31
      %p622 = scmp.lt.s32.totalorder %s30, 1
      %s623 = scalar_select %p622, %s30, 1
      %p624 = scmp.lt.s32.totalorder %s621, 15
      %s625 = scalar_select %p624, %s621, 15
      %s626 = smul.addr %s623, 16
      %s627 = sadd.s32 %s625, %s626
      %s628 = smul.addr %s627, 8
      %s629 = scalar_lea.vmem %s12, %s628
      %s630 = smul.u32 16, %s31
      %p632 = scmp.eq.s32.totalorder %s32, 0
      // Predicated region
      $region69: #{up_block_forward.9} parent=67 // pred_check
        %p633 = pneg %p632
      $region70: #{up_block_forward.9} parent=67 // pred_check_branch
        %635 = sbr.rel (%p633) target = $region72
      $region71: #{up_block_forward.9} parent=67 // pred_region
        %636 = vst [vmem:[#allocation2] sm:$0xff] 0.0
        %637 = vst [vmem:[#allocation2 + $0x8] sm:$0xff] 0.0
        %638 = vst [vmem:[#allocation2 + $0x10] sm:$0xff] 0.0
        %639 = vst [vmem:[#allocation2 + $0x18] sm:$0xff] 0.0
        %640 = vst [vmem:[#allocation2 + $0x20] sm:$0xff] 0.0
        %641 = vst [vmem:[#allocation2 + $0x28] sm:$0xff] 0.0
        %642 = vst [vmem:[#allocation2 + $0x30] sm:$0xff] 0.0
        %643 = vst [vmem:[#allocation2 + $0x38] sm:$0xff] 0.0
        %644 = vst [vmem:[#allocation2 + $0x40] sm:$0xff] 0.0
        %645 = vst [vmem:[#allocation2 + $0x48] sm:$0xff] 0.0
        %646 = vst [vmem:[#allocation2 + $0x50] sm:$0xff] 0.0
        %647 = vst [vmem:[#allocation2 + $0x58] sm:$0xff] 0.0
        %648 = vst [vmem:[#allocation2 + $0x60] sm:$0xff] 0.0
        %649 = vst [vmem:[#allocation2 + $0x68] sm:$0xff] 0.0
        %650 = vst [vmem:[#allocation2 + $0x70] sm:$0xff] 0.0
        %651 = vst [vmem:[#allocation2 + $0x78] sm:$0xff] 0.0
        %652 = vst [vmem:[#allocation2 + $0x80] sm:$0xff] 0.0
        %653 = vst [vmem:[#allocation2 + $0x88] sm:$0xff] 0.0
        %654 = vst [vmem:[#allocation2 + $0x90] sm:$0xff] 0.0
        %655 = vst [vmem:[#allocation2 + $0x98] sm:$0xff] 0.0
        %656 = vst [vmem:[#allocation2 + $0xa0] sm:$0xff] 0.0
        %657 = vst [vmem:[#allocation2 + $0xa8] sm:$0xff] 0.0
        %658 = vst [vmem:[#allocation2 + $0xb0] sm:$0xff] 0.0
        %659 = vst [vmem:[#allocation2 + $0xb8] sm:$0xff] 0.0
        %660 = vst [vmem:[#allocation2 + $0xc0] sm:$0xff] 0.0
        %661 = vst [vmem:[#allocation2 + $0xc8] sm:$0xff] 0.0
        %662 = vst [vmem:[#allocation2 + $0xd0] sm:$0xff] 0.0
        %663 = vst [vmem:[#allocation2 + $0xd8] sm:$0xff] 0.0
        %664 = vst [vmem:[#allocation2 + $0xe0] sm:$0xff] 0.0
        %665 = vst [vmem:[#allocation2 + $0xe8] sm:$0xff] 0.0
        %666 = vst [vmem:[#allocation2 + $0xf0] sm:$0xff] 0.0
        %667 = vst [vmem:[#allocation2 + $0xf8] sm:$0xff] 0.0
      $region72: #{up_block_forward.9} parent=67 // pred_fallthru
        _
      %v668 = vld [vmem:[%s582] sm:$0xf]
      %v669 = vld [vmem:[%s582 + $0x4] sm:$0xf]
      %v670 = vld [vmem:[%s582 + $0x8] sm:$0xf]
      %v671 = vld [vmem:[%s582 + $0xc] sm:$0xf]
      %v672 = vld [vmem:[%s582 + $0x10] sm:$0xf]
      %v673 = vld [vmem:[%s582 + $0x14] sm:$0xf]
      %v674 = vld [vmem:[%s582 + $0x18] sm:$0xf]
      %v675 = vld [vmem:[%s582 + $0x1c] sm:$0xf]
      %v676 = vld [vmem:[%s582 + $0x20] sm:$0xf]
      %v677 = vld [vmem:[%s582 + $0x24] sm:$0xf]
      %v678 = vld [vmem:[%s582 + $0x28] sm:$0xf]
      %v679 = vld [vmem:[%s582 + $0x2c] sm:$0xf]
      %v680 = vld [vmem:[%s582 + $0x30] sm:$0xf]
      %v681 = vld [vmem:[%s582 + $0x34] sm:$0xf]
      %v682 = vld [vmem:[%s582 + $0x38] sm:$0xf]
      %v683 = vld [vmem:[%s582 + $0x3c] sm:$0xf]
      %v684 = vld [vmem:[%s572] sm:$0xf]
      %v685 = vld [vmem:[%s572 + $0x4] sm:$0xf]
      %v686 = vld [vmem:[%s572 + $0x8] sm:$0xf]
      %v687 = vld [vmem:[%s572 + $0xc] sm:$0xf]
      %v688 = vld [vmem:[%s572 + $0x10] sm:$0xf]
      %v689 = vld [vmem:[%s572 + $0x14] sm:$0xf]
      %v690 = vld [vmem:[%s572 + $0x18] sm:$0xf]
      %v691 = vld [vmem:[%s572 + $0x1c] sm:$0xf]
      %v692 = vld [vmem:[%s572 + $0x20] sm:$0xf]
      %v693 = vld [vmem:[%s572 + $0x24] sm:$0xf]
      %v694 = vld [vmem:[%s572 + $0x28] sm:$0xf]
      %v695 = vld [vmem:[%s572 + $0x2c] sm:$0xf]
      %v696 = vld [vmem:[%s572 + $0x30] sm:$0xf]
      %v697 = vld [vmem:[%s572 + $0x34] sm:$0xf]
      %v698 = vld [vmem:[%s572 + $0x38] sm:$0xf]
      %v699 = vld [vmem:[%s572 + $0x3c] sm:$0xf]
      %v716 = vunpack.c.l.b16 %v668
      %v717 = vunpack.c.l.b16 %v669
      %v718 = vunpack.c.l.b16 %v670
      %v719 = vunpack.c.l.b16 %v671
      %v720 = vunpack.c.l.b16 %v672
      %v721 = vunpack.c.l.b16 %v673
      %v722 = vunpack.c.l.b16 %v674
      %v723 = vunpack.c.l.b16 %v675
      %v724 = vunpack.c.l.b16 %v676
      %v725 = vunpack.c.l.b16 %v677
      %v726 = vunpack.c.l.b16 %v678
      %v727 = vunpack.c.l.b16 %v679
      %v728 = vunpack.c.l.b16 %v680
      %v729 = vunpack.c.l.b16 %v681
      %v730 = vunpack.c.l.b16 %v682
      %v731 = vunpack.c.l.b16 %v683
      %v732 = vpack.c.b16 %v717, %v716
      %v733 = vpack.c.b16 %v719, %v718
      %v734 = vpack.c.b16 %v721, %v720
      %v735 = vpack.c.b16 %v723, %v722
      %v736 = vpack.c.b16 %v725, %v724
      %v737 = vpack.c.b16 %v727, %v726
      %v738 = vpack.c.b16 %v729, %v728
      %v739 = vpack.c.b16 %v731, %v730
      %740 = vrot.lane.b32.xlu0 %v732, 96
      %v741 = vpop.permute.xlu0 %740
      %742 = vrot.lane.b32.xlu0 %v733, 96
      %v743 = vpop.permute.xlu0 %742
      %744 = vrot.lane.b32.xlu0 %v734, 96
      %v745 = vpop.permute.xlu0 %744
      %746 = vrot.lane.b32.xlu0 %v735, 96
      %v747 = vpop.permute.xlu0 %746
      %748 = vrot.lane.b32.xlu0 %v736, 96
      %v749 = vpop.permute.xlu0 %748
      %750 = vrot.lane.b32.xlu0 %v737, 96
      %v751 = vpop.permute.xlu0 %750
      %752 = vrot.lane.b32.xlu0 %v738, 96
      %v753 = vpop.permute.xlu0 %752
      %754 = vrot.lane.b32.xlu0 %v739, 96
      %v755 = vpop.permute.xlu0 %754
      %v772 = vunpack.c.l.b16 %v684
      %v773 = vunpack.c.l.b16 %v685
      %v774 = vunpack.c.l.b16 %v686
      %v775 = vunpack.c.l.b16 %v687
      %v776 = vunpack.c.l.b16 %v688
      %v777 = vunpack.c.l.b16 %v689
      %v778 = vunpack.c.l.b16 %v690
      %v779 = vunpack.c.l.b16 %v691
      %v780 = vunpack.c.l.b16 %v692
      %v781 = vunpack.c.l.b16 %v693
      %v782 = vunpack.c.l.b16 %v694
      %v783 = vunpack.c.l.b16 %v695
      %v784 = vunpack.c.l.b16 %v696
      %v785 = vunpack.c.l.b16 %v697
      %v786 = vunpack.c.l.b16 %v698
      %v787 = vunpack.c.l.b16 %v699
      %v788 = vpack.c.b16 %v773, %v772
      %v789 = vpack.c.b16 %v775, %v774
      %v790 = vpack.c.b16 %v777, %v776
      %v791 = vpack.c.b16 %v779, %v778
      %v792 = vpack.c.b16 %v781, %v780
      %v793 = vpack.c.b16 %v783, %v782
      %v794 = vpack.c.b16 %v785, %v784
      %v795 = vpack.c.b16 %v787, %v786
      %vm796 = vcmask 261120
      %v798 = vsel %vm796, %v741, 0
      %v801 = vsel %vm796, %v743, 0
      %v804 = vsel %vm796, %v745, 0
      %v807 = vsel %vm796, %v747, 0
      %v810 = vsel %vm796, %v749, 0
      %v813 = vsel %vm796, %v751, 0
      %v816 = vsel %vm796, %v753, 0
      %v819 = vsel %vm796, %v755, 0
      %v822 = vsel %vm796, %v788, 0
      %v825 = vsel %vm796, %v789, 0
      %v828 = vsel %vm796, %v790, 0
      %v831 = vsel %vm796, %v791, 0
      %v834 = vsel %vm796, %v792, 0
      %v837 = vsel %vm796, %v793, 0
      %v840 = vsel %vm796, %v794, 0
      %v843 = vsel %vm796, %v795, 0
      %845 = vmatprep.subr.bf16.mxu0 0
      %846 = vmatpush1.bf16.xpose.msra.mxu0 %v822
      %847 = vmatprep.subr.bf16.mxu0 0
      %848 = vmatpush1.bf16.xpose.msra.mxu0 %v825
      %849 = vmatprep.subr.bf16.mxu0 0
      %850 = vmatpush1.bf16.xpose.msra.mxu0 %v828
      %851 = vmatprep.subr.bf16.mxu0 0
      %852 = vmatpush1.bf16.xpose.msra.mxu0 %v831
      %853 = vmatprep.subr.bf16.mxu0 0
      %854 = vmatpush1.bf16.xpose.msra.mxu0 %v834
      %855 = vmatprep.subr.bf16.mxu0 0
      %856 = vmatpush1.bf16.xpose.msra.mxu0 %v837
      %857 = vmatprep.subr.bf16.mxu0 0
      %858 = vmatpush1.bf16.xpose.msra.mxu0 %v840
      %859 = vmatprep.subr.bf16.mxu0 0
      %860 = vmatpush1.bf16.xpose.msra.mxu0 %v843
      %861 = vmatprep.subr.bf16.mxu0 0
      %862 = vmatpush1.bf16.xpose.msra.mxu0 0
      %863 = vmatprep.subr.bf16.mxu0 0
      %864 = vmatpush1.bf16.xpose.msra.mxu0 0
      %865 = vmatprep.subr.bf16.mxu0 0
      %866 = vmatpush1.bf16.xpose.msra.mxu0 0
      %867 = vmatprep.subr.bf16.mxu0 0
      %868 = vmatpush1.bf16.xpose.msra.mxu0 0
      %869 = vmatprep.subr.bf16.mxu0 0
      %870 = vmatpush1.bf16.xpose.msra.mxu0 0
      %871 = vmatprep.subr.bf16.mxu0 0
      %872 = vmatpush1.bf16.xpose.msra.mxu0 0
      %873 = vmatprep.subr.bf16.mxu0 0
      %874 = vmatpush1.bf16.xpose.msra.mxu0 0
      %875 = vmatprep.subr.bf16.mxu0 0
      %876 = vmatpush1.bf16.xpose.msra.mxu0 0
      %877 = vmatprep.mubr.bf16.mxu0 0
      %878 = vmatmul.mubr.bf16.gmra.mrb[0].mxu0 %v798
      %v879 = vpop.f32.mrb[0].mxu0
      %v880 = vadd.f32 0.0, %v879
      %v881 = vpop.f32.mrb[0].mxu0
      %v882 = vpop.f32.mrb[0].mxu0
      %v883 = vadd.f32 0.0, %v882
      %v884 = vpop.f32.mrb[0].mxu0
      %885 = vmatprep.mubr.bf16.mxu0 0
      %886 = vmatmul.mubr.bf16.gmra.mrb[0].mxu0 %v801
      %v887 = vpop.f32.mrb[0].mxu0
      %v888 = vadd.f32 0.0, %v887
      %v889 = vpop.f32.mrb[0].mxu0
      %v890 = vpop.f32.mrb[0].mxu0
      %v891 = vadd.f32 0.0, %v890
      %v892 = vpop.f32.mrb[0].mxu0
      %893 = vmatprep.mubr.bf16.mxu0 0
      %894 = vmatmul.mubr.bf16.gmra.mrb[0].mxu0 %v804
      %v895 = vpop.f32.mrb[0].mxu0
      %v896 = vadd.f32 0.0, %v895
      %v897 = vpop.f32.mrb[0].mxu0
      %v898 = vpop.f32.mrb[0].mxu0
      %v899 = vadd.f32 0.0, %v898
      %v900 = vpop.f32.mrb[0].mxu0
      %901 = vmatprep.mubr.bf16.mxu0 0
      %902 = vmatmul.mubr.bf16.gmra.mrb[0].mxu0 %v807
      %v903 = vpop.f32.mrb[0].mxu0
      %v904 = vadd.f32 0.0, %v903
      %v905 = vpop.f32.mrb[0].mxu0
      %v906 = vpop.f32.mrb[0].mxu0
      %v907 = vadd.f32 0.0, %v906
      %v908 = vpop.f32.mrb[0].mxu0
      %909 = vmatprep.mubr.bf16.mxu0 0
      %910 = vmatmul.mubr.bf16.gmra.mrb[0].mxu0 %v810
      %v911 = vpop.f32.mrb[0].mxu0
      %v912 = vadd.f32 0.0, %v911
      %v913 = vpop.f32.mrb[0].mxu0
      %v914 = vpop.f32.mrb[0].mxu0
      %v915 = vadd.f32 0.0, %v914
      %v916 = vpop.f32.mrb[0].mxu0
      %917 = vmatprep.mubr.bf16.mxu0 0
      %918 = vmatmul.mubr.bf16.gmra.mrb[0].mxu0 %v813
      %v919 = vpop.f32.mrb[0].mxu0
      %v920 = vadd.f32 0.0, %v919
      %v921 = vpop.f32.mrb[0].mxu0
      %v922 = vpop.f32.mrb[0].mxu0
      %v923 = vadd.f32 0.0, %v922
      %v924 = vpop.f32.mrb[0].mxu0
      %925 = vmatprep.mubr.bf16.mxu0 0
      %926 = vmatmul.mubr.bf16.gmra.mrb[0].mxu0 %v816
      %v927 = vpop.f32.mrb[0].mxu0
      %v928 = vadd.f32 0.0, %v927
      %v929 = vpop.f32.mrb[0].mxu0
      %v930 = vpop.f32.mrb[0].mxu0
      %v931 = vadd.f32 0.0, %v930
      %v932 = vpop.f32.mrb[0].mxu0
      %933 = vmatprep.mubr.bf16.mxu0 0
      %934 = vmatmul.mubr.bf16.gmra.mrb[0].mxu0 %v819
      %v935 = vpop.f32.mrb[0].mxu0
      %v936 = vadd.f32 0.0, %v935
      %v937 = vpop.f32.mrb[0].mxu0
      %v938 = vpop.f32.mrb[0].mxu0
      %v939 = vadd.f32 0.0, %v938
      %v940 = vpop.f32.mrb[0].mxu0
      %941 = vdwg.mxu0
      %v942 = vld [vmem:[%s603] sm:$0xff]
      %v943 = vld [vmem:[%s603 + $0x8] sm:$0xff]
      %v944 = vld [vmem:[%s603 + $0x10] sm:$0xff]
      %v945 = vld [vmem:[%s603 + $0x18] sm:$0xff]
      %v946 = vld [vmem:[%s603 + $0x20] sm:$0xff]
      %v947 = vld [vmem:[%s603 + $0x28] sm:$0xff]
      %v948 = vld [vmem:[%s603 + $0x30] sm:$0xff]
      %v949 = vld [vmem:[%s603 + $0x38] sm:$0xff]
      %v950 = vld [vmem:[%s603 + $0x40] sm:$0xff]
      %v951 = vld [vmem:[%s603 + $0x48] sm:$0xff]
      %v952 = vld [vmem:[%s603 + $0x50] sm:$0xff]
      %v953 = vld [vmem:[%s603 + $0x58] sm:$0xff]
      %v954 = vld [vmem:[%s603 + $0x60] sm:$0xff]
      %v955 = vld [vmem:[%s603 + $0x68] sm:$0xff]
      %v956 = vld [vmem:[%s603 + $0x70] sm:$0xff]
      %v957 = vld [vmem:[%s603 + $0x78] sm:$0xff]
      %959 = vset.pattern.permute.xlu0 0
      %960 = vperm.xlu0 %959, %v942
      %v961 = vpop.permute.xlu0 %960
      %964 = vset.pattern.permute.xlu0 0
      %965 = vperm.xlu0 %964, %v943
      %v966 = vpop.permute.xlu0 %965
      %969 = vset.pattern.permute.xlu0 0
      %970 = vperm.xlu0 %969, %v944
      %v971 = vpop.permute.xlu0 %970
      %974 = vset.pattern.permute.xlu0 0
      %975 = vperm.xlu0 %974, %v945
      %v976 = vpop.permute.xlu0 %975
      %979 = vset.pattern.permute.xlu0 0
      %980 = vperm.xlu0 %979, %v946
      %v981 = vpop.permute.xlu0 %980
      %984 = vset.pattern.permute.xlu0 0
      %985 = vperm.xlu0 %984, %v947
      %v986 = vpop.permute.xlu0 %985
      %989 = vset.pattern.permute.xlu0 0
      %990 = vperm.xlu0 %989, %v948
      %v991 = vpop.permute.xlu0 %990
      %994 = vset.pattern.permute.xlu0 0
      %995 = vperm.xlu0 %994, %v949
      %v996 = vpop.permute.xlu0 %995
      %999 = vset.pattern.permute.xlu0 0
      %1000 = vperm.xlu0 %999, %v950
      %v1001 = vpop.permute.xlu0 %1000
      %1004 = vset.pattern.permute.xlu0 0
      %1005 = vperm.xlu0 %1004, %v951
      %v1006 = vpop.permute.xlu0 %1005
      %1009 = vset.pattern.permute.xlu0 0
      %1010 = vperm.xlu0 %1009, %v952
      %v1011 = vpop.permute.xlu0 %1010
      %1014 = vset.pattern.permute.xlu0 0
      %1015 = vperm.xlu0 %1014, %v953
      %v1016 = vpop.permute.xlu0 %1015
      %1019 = vset.pattern.permute.xlu0 0
      %1020 = vperm.xlu0 %1019, %v954
      %v1021 = vpop.permute.xlu0 %1020
      %1024 = vset.pattern.permute.xlu0 0
      %1025 = vperm.xlu0 %1024, %v955
      %v1026 = vpop.permute.xlu0 %1025
      %1029 = vset.pattern.permute.xlu0 0
      %1030 = vperm.xlu0 %1029, %v956
      %v1031 = vpop.permute.xlu0 %1030
      %1034 = vset.pattern.permute.xlu0 0
      %1035 = vperm.xlu0 %1034, %v957
      %v1036 = vpop.permute.xlu0 %1035
      %v1038 = vsub.f32 %v880, %v961
      %v1039 = vsub.f32 %v883, %v966
      %v1040 = vsub.f32 %v888, %v971
      %v1041 = vsub.f32 %v891, %v976
      %v1042 = vsub.f32 %v896, %v981
      %v1043 = vsub.f32 %v899, %v986
      %v1044 = vsub.f32 %v904, %v991
      %v1045 = vsub.f32 %v907, %v996
      %v1046 = vsub.f32 %v912, %v1001
      %v1047 = vsub.f32 %v915, %v1006
      %v1048 = vsub.f32 %v920, %v1011
      %v1049 = vsub.f32 %v923, %v1016
      %v1050 = vsub.f32 %v928, %v1021
      %v1051 = vsub.f32 %v931, %v1026
      %v1052 = vsub.f32 %v936, %v1031
      %v1053 = vsub.f32 %v939, %v1036
      %v1054 = vmul.f32 %v1038, 1.442695
      %v1055 = vpow.pop %v1054
      %v1056 = vmul.f32 %v1039, 1.442695
      %v1057 = vpow.pop %v1056
      %v1058 = vmul.f32 %v1040, 1.442695
      %v1059 = vpow.pop %v1058
      %v1060 = vmul.f32 %v1041, 1.442695
      %v1061 = vpow.pop %v1060
      %v1062 = vmul.f32 %v1042, 1.442695
      %v1063 = vpow.pop %v1062
      %v1064 = vmul.f32 %v1043, 1.442695
      %v1065 = vpow.pop %v1064
      %v1066 = vmul.f32 %v1044, 1.442695
      %v1067 = vpow.pop %v1066
      %v1068 = vmul.f32 %v1045, 1.442695
      %v1069 = vpow.pop %v1068
      %v1070 = vmul.f32 %v1046, 1.442695
      %v1071 = vpow.pop %v1070
      %v1072 = vmul.f32 %v1047, 1.442695
      %v1073 = vpow.pop %v1072
      %v1074 = vmul.f32 %v1048, 1.442695
      %v1075 = vpow.pop %v1074
      %v1076 = vmul.f32 %v1049, 1.442695
      %v1077 = vpow.pop %v1076
      %v1078 = vmul.f32 %v1050, 1.442695
      %v1079 = vpow.pop %v1078
      %v1080 = vmul.f32 %v1051, 1.442695
      %v1081 = vpow.pop %v1080
      %v1082 = vmul.f32 %v1052, 1.442695
      %v1083 = vpow.pop %v1082
      %v1084 = vmul.f32 %v1053, 1.442695
      %v1085 = vpow.pop %v1084
      %1086 = vset.pattern.permute.xlu0 1
      %1087 = vperm.xlu0 %1086, %v942
      %v1088 = vpop.permute.xlu0 %1087
      %1090 = vset.pattern.permute.xlu0 1
      %1091 = vperm.xlu0 %1090, %v943
      %v1092 = vpop.permute.xlu0 %1091
      %1094 = vset.pattern.permute.xlu0 1
      %1095 = vperm.xlu0 %1094, %v944
      %v1096 = vpop.permute.xlu0 %1095
      %1098 = vset.pattern.permute.xlu0 1
      %1099 = vperm.xlu0 %1098, %v945
      %v1100 = vpop.permute.xlu0 %1099
      %1102 = vset.pattern.permute.xlu0 1
      %1103 = vperm.xlu0 %1102, %v946
      %v1104 = vpop.permute.xlu0 %1103
      %1106 = vset.pattern.permute.xlu0 1
      %1107 = vperm.xlu0 %1106, %v947
      %v1108 = vpop.permute.xlu0 %1107
      %1110 = vset.pattern.permute.xlu0 1
      %1111 = vperm.xlu0 %1110, %v948
      %v1112 = vpop.permute.xlu0 %1111
      %1114 = vset.pattern.permute.xlu0 1
      %1115 = vperm.xlu0 %1114, %v949
      %v1116 = vpop.permute.xlu0 %1115
      %1118 = vset.pattern.permute.xlu0 1
      %1119 = vperm.xlu0 %1118, %v950
      %v1120 = vpop.permute.xlu0 %1119
      %1122 = vset.pattern.permute.xlu0 1
      %1123 = vperm.xlu0 %1122, %v951
      %v1124 = vpop.permute.xlu0 %1123
      %1126 = vset.pattern.permute.xlu0 1
      %1127 = vperm.xlu0 %1126, %v952
      %v1128 = vpop.permute.xlu0 %1127
      %1130 = vset.pattern.permute.xlu0 1
      %1131 = vperm.xlu0 %1130, %v953
      %v1132 = vpop.permute.xlu0 %1131
      %1134 = vset.pattern.permute.xlu0 1
      %1135 = vperm.xlu0 %1134, %v954
      %v1136 = vpop.permute.xlu0 %1135
      %1138 = vset.pattern.permute.xlu0 1
      %1139 = vperm.xlu0 %1138, %v955
      %v1140 = vpop.permute.xlu0 %1139
      %1142 = vset.pattern.permute.xlu0 1
      %1143 = vperm.xlu0 %1142, %v956
      %v1144 = vpop.permute.xlu0 %1143
      %1146 = vset.pattern.permute.xlu0 1
      %1147 = vperm.xlu0 %1146, %v957
      %v1148 = vpop.permute.xlu0 %1147
      %v1150 = vmul.f32 %v1055, %v1088
      %v1151 = vmul.f32 %v1057, %v1092
      %v1152 = vmul.f32 %v1059, %v1096
      %v1153 = vmul.f32 %v1061, %v1100
      %v1154 = vmul.f32 %v1063, %v1104
      %v1155 = vmul.f32 %v1065, %v1108
      %v1156 = vmul.f32 %v1067, %v1112
      %v1157 = vmul.f32 %v1069, %v1116
      %v1158 = vmul.f32 %v1071, %v1120
      %v1159 = vmul.f32 %v1073, %v1124
      %v1160 = vmul.f32 %v1075, %v1128
      %v1161 = vmul.f32 %v1077, %v1132
      %v1162 = vmul.f32 %v1079, %v1136
      %v1163 = vmul.f32 %v1081, %v1140
      %v1164 = vmul.f32 %v1083, %v1144
      %v1165 = vmul.f32 %v1085, %v1148
      %v1166 = vld [vmem:[#allocation2] sm:$0xff]
      %v1167 = vld [vmem:[#allocation2 + $0x8] sm:$0xff]
      %v1168 = vld [vmem:[#allocation2 + $0x10] sm:$0xff]
      %v1169 = vld [vmem:[#allocation2 + $0x18] sm:$0xff]
      %v1170 = vld [vmem:[#allocation2 + $0x20] sm:$0xff]
      %v1171 = vld [vmem:[#allocation2 + $0x28] sm:$0xff]
      %v1172 = vld [vmem:[#allocation2 + $0x30] sm:$0xff]
      %v1173 = vld [vmem:[#allocation2 + $0x38] sm:$0xff]
      %v1174 = vld [vmem:[#allocation2 + $0x40] sm:$0xff]
      %v1175 = vld [vmem:[#allocation2 + $0x48] sm:$0xff]
      %v1176 = vld [vmem:[#allocation2 + $0x50] sm:$0xff]
      %v1177 = vld [vmem:[#allocation2 + $0x58] sm:$0xff]
      %v1178 = vld [vmem:[#allocation2 + $0x60] sm:$0xff]
      %v1179 = vld [vmem:[#allocation2 + $0x68] sm:$0xff]
      %v1180 = vld [vmem:[#allocation2 + $0x70] sm:$0xff]
      %v1181 = vld [vmem:[#allocation2 + $0x78] sm:$0xff]
      %v1182 = vld [vmem:[#allocation2 + $0x80] sm:$0xff]
      %v1183 = vld [vmem:[#allocation2 + $0x88] sm:$0xff]
      %v1184 = vld [vmem:[#allocation2 + $0x90] sm:$0xff]
      %v1185 = vld [vmem:[#allocation2 + $0x98] sm:$0xff]
      %v1186 = vld [vmem:[#allocation2 + $0xa0] sm:$0xff]
      %v1187 = vld [vmem:[#allocation2 + $0xa8] sm:$0xff]
      %v1188 = vld [vmem:[#allocation2 + $0xb0] sm:$0xff]
      %v1189 = vld [vmem:[#allocation2 + $0xb8] sm:$0xff]
      %v1190 = vld [vmem:[#allocation2 + $0xc0] sm:$0xff]
      %v1191 = vld [vmem:[#allocation2 + $0xc8] sm:$0xff]
      %v1192 = vld [vmem:[#allocation2 + $0xd0] sm:$0xff]
      %v1193 = vld [vmem:[#allocation2 + $0xd8] sm:$0xff]
      %v1194 = vld [vmem:[#allocation2 + $0xe0] sm:$0xff]
      %v1195 = vld [vmem:[#allocation2 + $0xe8] sm:$0xff]
      %v1196 = vld [vmem:[#allocation2 + $0xf0] sm:$0xff]
      %v1197 = vld [vmem:[#allocation2 + $0xf8] sm:$0xff]
      %v1198 = vpack.c.bf16 %v1151, %v1150
      %v1199 = vpack.c.bf16 %v1153, %v1152
      %v1200 = vpack.c.bf16 %v1155, %v1154
      %v1201 = vpack.c.bf16 %v1157, %v1156
      %v1202 = vpack.c.bf16 %v1159, %v1158
      %v1203 = vpack.c.bf16 %v1161, %v1160
      %v1204 = vpack.c.bf16 %v1163, %v1162
      %v1205 = vpack.c.bf16 %v1165, %v1164
      %v1206 = vld [vmem:[%s593] sm:$0xff]
      %v1207 = vld [vmem:[%s593 + $0x8] sm:$0xff]
      %v1208 = vld [vmem:[%s593 + $0x10] sm:$0xff]
      %v1209 = vld [vmem:[%s593 + $0x18] sm:$0xff]
      %v1210 = vld [vmem:[%s593 + $0x20] sm:$0xff]
      %v1211 = vld [vmem:[%s593 + $0x28] sm:$0xff]
      %v1212 = vld [vmem:[%s593 + $0x30] sm:$0xff]
      %v1213 = vld [vmem:[%s593 + $0x38] sm:$0xff]
      %v1214 = vld [vmem:[%s593 + $0x40] sm:$0xff]
      %v1215 = vld [vmem:[%s593 + $0x48] sm:$0xff]
      %v1216 = vld [vmem:[%s593 + $0x50] sm:$0xff]
      %v1217 = vld [vmem:[%s593 + $0x58] sm:$0xff]
      %v1218 = vld [vmem:[%s593 + $0x60] sm:$0xff]
      %v1219 = vld [vmem:[%s593 + $0x68] sm:$0xff]
      %v1220 = vld [vmem:[%s593 + $0x70] sm:$0xff]
      %v1221 = vld [vmem:[%s593 + $0x78] sm:$0xff]
      %1222 = vxpose.xlu0.c.b16.start [1/8] %v1198, 128
      %1223 = vxpose.xlu0.c.b16.cont [2/8] %v1199, 128
      %1224 = vxpose.xlu0.c.b16.cont [3/8] %v1200, 128
      %1225 = vxpose.xlu0.c.b16.cont [4/8] %v1201, 128
      %1226 = vxpose.xlu0.c.b16.cont [5/8] %v1202, 128
      %1227 = vxpose.xlu0.c.b16.cont [6/8] %v1203, 128
      %1228 = vxpose.xlu0.c.b16.cont [7/8] %v1204, 128
      %1229 = vxpose.xlu0.c.b16.end [8/8] %v1205, 128
      %v1230 = vpop.trf.xlu0
      %v1231 = vpop.trf.xlu0
      %v1232 = vpop.trf.xlu0
      %v1233 = vpop.trf.xlu0
      %v1234 = vpop.trf.xlu0
      %v1235 = vpop.trf.xlu0
      %v1236 = vpop.trf.xlu0
      %v1237 = vpop.trf.xlu0
      %v1254 = vunpack.c.l.b16 %v1206
      %v1255 = vunpack.c.h.b16 %v1206
      %v1256 = vunpack.c.l.b16 %v1207
      %v1257 = vunpack.c.h.b16 %v1207
      %v1258 = vunpack.c.l.b16 %v1208
      %v1259 = vunpack.c.h.b16 %v1208
      %v1260 = vunpack.c.l.b16 %v1209
      %v1261 = vunpack.c.h.b16 %v1209
      %v1262 = vunpack.c.l.b16 %v1210
      %v1263 = vunpack.c.h.b16 %v1210
      %v1264 = vunpack.c.l.b16 %v1211
      %v1265 = vunpack.c.h.b16 %v1211
      %v1266 = vunpack.c.l.b16 %v1212
      %v1267 = vunpack.c.h.b16 %v1212
      %v1268 = vunpack.c.l.b16 %v1213
      %v1269 = vunpack.c.h.b16 %v1213
      %v1270 = vunpack.c.l.b16 %v1214
      %v1271 = vunpack.c.h.b16 %v1214
      %v1272 = vunpack.c.l.b16 %v1215
      %v1273 = vunpack.c.h.b16 %v1215
      %v1274 = vunpack.c.l.b16 %v1216
      %v1275 = vunpack.c.h.b16 %v1216
      %v1276 = vunpack.c.l.b16 %v1217
      %v1277 = vunpack.c.h.b16 %v1217
      %v1278 = vunpack.c.l.b16 %v1218
      %v1279 = vunpack.c.h.b16 %v1218
      %v1280 = vunpack.c.l.b16 %v1219
      %v1281 = vunpack.c.h.b16 %v1219
      %v1282 = vunpack.c.l.b16 %v1220
      %v1283 = vunpack.c.h.b16 %v1220
      %v1284 = vunpack.c.l.b16 %v1221
      %v1285 = vunpack.c.h.b16 %v1221
      %v1286 = vpack.c.b16 %v1256, %v1254
      %v1287 = vpack.c.b16 %v1257, %v1255
      %v1288 = vpack.c.b16 %v1260, %v1258
      %v1289 = vpack.c.b16 %v1261, %v1259
      %v1290 = vpack.c.b16 %v1264, %v1262
      %v1291 = vpack.c.b16 %v1265, %v1263
      %v1292 = vpack.c.b16 %v1268, %v1266
      %v1293 = vpack.c.b16 %v1269, %v1267
      %v1294 = vpack.c.b16 %v1272, %v1270
      %v1295 = vpack.c.b16 %v1273, %v1271
      %v1296 = vpack.c.b16 %v1276, %v1274
      %v1297 = vpack.c.b16 %v1277, %v1275
      %v1298 = vpack.c.b16 %v1280, %v1278
      %v1299 = vpack.c.b16 %v1281, %v1279
      %v1300 = vpack.c.b16 %v1284, %v1282
      %v1301 = vpack.c.b16 %v1285, %v1283
      %1318 = vmatprep.subr.bf16.mxu0 %v1287
      %1319 = vmatpush1.bf16.msra.mxu0 %v1286
      %1320 = vmatprep.subr.bf16.mxu0 %v1289
      %1321 = vmatpush1.bf16.msra.mxu0 %v1288
      %1322 = vmatprep.subr.bf16.mxu0 %v1291
      %1323 = vmatpush1.bf16.msra.mxu0 %v1290
      %1324 = vmatprep.subr.bf16.mxu0 %v1293
      %1325 = vmatpush1.bf16.msra.mxu0 %v1292
      %1326 = vmatprep.subr.bf16.mxu0 %v1295
      %1327 = vmatpush1.bf16.msra.mxu0 %v1294
      %1328 = vmatprep.subr.bf16.mxu0 %v1297
      %1329 = vmatpush1.bf16.msra.mxu0 %v1296
      %1330 = vmatprep.subr.bf16.mxu0 %v1299
      %1331 = vmatpush1.bf16.msra.mxu0 %v1298
      %1332 = vmatprep.subr.bf16.mxu0 %v1301
      %1333 = vmatpush1.bf16.msra.mxu0 %v1300
      %1334 = vmatprep.subr.bf16.mxu0 0
      %1335 = vmatpush1.bf16.msra.mxu0 0
      %1336 = vmatprep.subr.bf16.mxu0 0
      %1337 = vmatpush1.bf16.msra.mxu0 0
      %1338 = vmatprep.subr.bf16.mxu0 0
      %1339 = vmatpush1.bf16.msra.mxu0 0
      %1340 = vmatprep.subr.bf16.mxu0 0
      %1341 = vmatpush1.bf16.msra.mxu0 0
      %1342 = vmatprep.subr.bf16.mxu0 0
      %1343 = vmatpush1.bf16.msra.mxu0 0
      %1344 = vmatprep.subr.bf16.mxu0 0
      %1345 = vmatpush1.bf16.msra.mxu0 0
      %1346 = vmatprep.subr.bf16.mxu0 0
      %1347 = vmatpush1.bf16.msra.mxu0 0
      %1348 = vmatprep.subr.bf16.mxu0 0
      %1349 = vmatpush1.bf16.msra.mxu0 0
      %1350 = vmatprep.mubr.bf16.mxu0 0
      %1351 = vmatmul.mubr.bf16.gmra.mrb[0].mxu0 %v1230
      %v1352 = vpop.f32.mrb[0].mxu0
      %v1353 = vadd.f32 0.0, %v1352
      %v1354 = vpop.f32.mrb[0].mxu0
      %v1355 = vadd.f32 0.0, %v1354
      %v1356 = vpop.f32.mrb[0].mxu0
      %v1357 = vadd.f32 0.0, %v1356
      %v1358 = vpop.f32.mrb[0].mxu0
      %v1359 = vadd.f32 0.0, %v1358
      %1360 = vmatprep.mubr.bf16.mxu0 0
      %1361 = vmatmul.mubr.bf16.gmra.mrb[0].mxu0 %v1231
      %v1362 = vpop.f32.mrb[0].mxu0
      %v1363 = vadd.f32 0.0, %v1362
      %v1364 = vpop.f32.mrb[0].mxu0
      %v1365 = vadd.f32 0.0, %v1364
      %v1366 = vpop.f32.mrb[0].mxu0
      %v1367 = vadd.f32 0.0, %v1366
      %v1368 = vpop.f32.mrb[0].mxu0
      %v1369 = vadd.f32 0.0, %v1368
      %1370 = vmatprep.mubr.bf16.mxu0 0
      %1371 = vmatmul.mubr.bf16.gmra.mrb[0].mxu0 %v1232
      %v1372 = vpop.f32.mrb[0].mxu0
      %v1373 = vadd.f32 0.0, %v1372
      %v1374 = vpop.f32.mrb[0].mxu0
      %v1375 = vadd.f32 0.0, %v1374
      %v1376 = vpop.f32.mrb[0].mxu0
      %v1377 = vadd.f32 0.0, %v1376
      %v1378 = vpop.f32.mrb[0].mxu0
      %v1379 = vadd.f32 0.0, %v1378
      %1380 = vmatprep.mubr.bf16.mxu0 0
      %1381 = vmatmul.mubr.bf16.gmra.mrb[0].mxu0 %v1233
      %v1382 = vpop.f32.mrb[0].mxu0
      %v1383 = vadd.f32 0.0, %v1382
      %v1384 = vpop.f32.mrb[0].mxu0
      %v1385 = vadd.f32 0.0, %v1384
      %v1386 = vpop.f32.mrb[0].mxu0
      %v1387 = vadd.f32 0.0, %v1386
      %v1388 = vpop.f32.mrb[0].mxu0
      %v1389 = vadd.f32 0.0, %v1388
      %1390 = vmatprep.mubr.bf16.mxu0 0
      %1391 = vmatmul.mubr.bf16.gmra.mrb[0].mxu0 %v1234
      %v1392 = vpop.f32.mrb[0].mxu0
      %v1393 = vadd.f32 0.0, %v1392
      %v1394 = vpop.f32.mrb[0].mxu0
      %v1395 = vadd.f32 0.0, %v1394
      %v1396 = vpop.f32.mrb[0].mxu0
      %v1397 = vadd.f32 0.0, %v1396
      %v1398 = vpop.f32.mrb[0].mxu0
      %v1399 = vadd.f32 0.0, %v1398
      %1400 = vmatprep.mubr.bf16.mxu0 0
      %1401 = vmatmul.mubr.bf16.gmra.mrb[0].mxu0 %v1235
      %v1402 = vpop.f32.mrb[0].mxu0
      %v1403 = vadd.f32 0.0, %v1402
      %v1404 = vpop.f32.mrb[0].mxu0
      %v1405 = vadd.f32 0.0, %v1404
      %v1406 = vpop.f32.mrb[0].mxu0
      %v1407 = vadd.f32 0.0, %v1406
      %v1408 = vpop.f32.mrb[0].mxu0
      %v1409 = vadd.f32 0.0, %v1408
      %1410 = vmatprep.mubr.bf16.mxu0 0
      %1411 = vmatmul.mubr.bf16.gmra.mrb[0].mxu0 %v1236
      %v1412 = vpop.f32.mrb[0].mxu0
      %v1413 = vadd.f32 0.0, %v1412
      %v1414 = vpop.f32.mrb[0].mxu0
      %v1415 = vadd.f32 0.0, %v1414
      %v1416 = vpop.f32.mrb[0].mxu0
      %v1417 = vadd.f32 0.0, %v1416
      %v1418 = vpop.f32.mrb[0].mxu0
      %v1419 = vadd.f32 0.0, %v1418
      %1420 = vmatprep.mubr.bf16.mxu0 0
      %1421 = vmatmul.mubr.bf16.gmra.mrb[0].mxu0 %v1237
      %v1422 = vpop.f32.mrb[0].mxu0
      %v1423 = vadd.f32 0.0, %v1422
      %v1424 = vpop.f32.mrb[0].mxu0
      %v1425 = vadd.f32 0.0, %v1424
      %v1426 = vpop.f32.mrb[0].mxu0
      %v1427 = vadd.f32 0.0, %v1426
      %v1428 = vpop.f32.mrb[0].mxu0
      %v1429 = vadd.f32 0.0, %v1428
      %1430 = vdwg.mxu0
      %v1431 = vadd.f32 %v1166, %v1353
      %v1432 = vadd.f32 %v1167, %v1355
      %v1433 = vadd.f32 %v1168, %v1357
      %v1434 = vadd.f32 %v1169, %v1359
      %v1435 = vadd.f32 %v1170, %v1363
      %v1436 = vadd.f32 %v1171, %v1365
      %v1437 = vadd.f32 %v1172, %v1367
      %v1438 = vadd.f32 %v1173, %v1369
      %v1439 = vadd.f32 %v1174, %v1373
      %v1440 = vadd.f32 %v1175, %v1375
      %v1441 = vadd.f32 %v1176, %v1377
      %v1442 = vadd.f32 %v1177, %v1379
      %v1443 = vadd.f32 %v1178, %v1383
      %v1444 = vadd.f32 %v1179, %v1385
      %v1445 = vadd.f32 %v1180, %v1387
      %v1446 = vadd.f32 %v1181, %v1389
      %v1447 = vadd.f32 %v1182, %v1393
      %v1448 = vadd.f32 %v1183, %v1395
      %v1449 = vadd.f32 %v1184, %v1397
      %v1450 = vadd.f32 %v1185, %v1399
      %v1451 = vadd.f32 %v1186, %v1403
      %v1452 = vadd.f32 %v1187, %v1405
      %v1453 = vadd.f32 %v1188, %v1407
      %v1454 = vadd.f32 %v1189, %v1409
      %v1455 = vadd.f32 %v1190, %v1413
      %v1456 = vadd.f32 %v1191, %v1415
      %v1457 = vadd.f32 %v1192, %v1417
      %v1458 = vadd.f32 %v1193, %v1419
      %v1459 = vadd.f32 %v1194, %v1423
      %v1460 = vadd.f32 %v1195, %v1425
      %v1461 = vadd.f32 %v1196, %v1427
      %v1462 = vadd.f32 %v1197, %v1429
      %1463 = vst [vmem:[#allocation2] sm:$0xff] %v1431
      %1464 = vst [vmem:[#allocation2 + $0x8] sm:$0xff] %v1432
      %1465 = vst [vmem:[#allocation2 + $0x10] sm:$0xff] %v1433
      %1466 = vst [vmem:[#allocation2 + $0x18] sm:$0xff] %v1434
      %1467 = vst [vmem:[#allocation2 + $0x20] sm:$0xff] %v1435
      %1468 = vst [vmem:[#allocation2 + $0x28] sm:$0xff] %v1436
      %1469 = vst [vmem:[#allocation2 + $0x30] sm:$0xff] %v1437
      %1470 = vst [vmem:[#allocation2 + $0x38] sm:$0xff] %v1438
      %1471 = vst [vmem:[#allocation2 + $0x40] sm:$0xff] %v1439
      %1472 = vst [vmem:[#allocation2 + $0x48] sm:$0xff] %v1440
      %1473 = vst [vmem:[#allocation2 + $0x50] sm:$0xff] %v1441
      %1474 = vst [vmem:[#allocation2 + $0x58] sm:$0xff] %v1442
      %1475 = vst [vmem:[#allocation2 + $0x60] sm:$0xff] %v1443
      %1476 = vst [vmem:[#allocation2 + $0x68] sm:$0xff] %v1444
      %1477 = vst [vmem:[#allocation2 + $0x70] sm:$0xff] %v1445
      %1478 = vst [vmem:[#allocation2 + $0x78] sm:$0xff] %v1446
      %1479 = vst [vmem:[#allocation2 + $0x80] sm:$0xff] %v1447
      %1480 = vst [vmem:[#allocation2 + $0x88] sm:$0xff] %v1448
      %1481 = vst [vmem:[#allocation2 + $0x90] sm:$0xff] %v1449
      %1482 = vst [vmem:[#allocation2 + $0x98] sm:$0xff] %v1450
      %1483 = vst [vmem:[#allocation2 + $0xa0] sm:$0xff] %v1451
      %1484 = vst [vmem:[#allocation2 + $0xa8] sm:$0xff] %v1452
      %1485 = vst [vmem:[#allocation2 + $0xb0] sm:$0xff] %v1453
      %1486 = vst [vmem:[#allocation2 + $0xb8] sm:$0xff] %v1454
      %1487 = vst [vmem:[#allocation2 + $0xc0] sm:$0xff] %v1455
      %1488 = vst [vmem:[#allocation2 + $0xc8] sm:$0xff] %v1456
      %1489 = vst [vmem:[#allocation2 + $0xd0] sm:$0xff] %v1457
      %1490 = vst [vmem:[#allocation2 + $0xd8] sm:$0xff] %v1458
      %1491 = vst [vmem:[#allocation2 + $0xe0] sm:$0xff] %v1459
      %1492 = vst [vmem:[#allocation2 + $0xe8] sm:$0xff] %v1460
      %1493 = vst [vmem:[#allocation2 + $0xf0] sm:$0xff] %v1461
      %1494 = vst [vmem:[#allocation2 + $0xf8] sm:$0xff] %v1462
      // Predicated region
      $region73: #{up_block_forward.9} parent=67 // pred_check
        %p1495 = pneg %p632
      $region74: #{up_block_forward.9} parent=67 // pred_check_branch
        %1497 = sbr.rel (%p1495) target = $region76
      $region75: #{up_block_forward.9} parent=67 // pred_region
        %v1498 = vld [vmem:[#allocation3] sm:$0x1]
        %v1499 = vld [vmem:[#allocation2] sm:$0xff]
        %v1500 = vld [vmem:[#allocation2 + $0x8] sm:$0xff]
        %v1501 = vld [vmem:[#allocation2 + $0x10] sm:$0xff]
        %v1502 = vld [vmem:[#allocation2 + $0x18] sm:$0xff]
        %v1503 = vld [vmem:[#allocation2 + $0x20] sm:$0xff]
        %v1504 = vld [vmem:[#allocation2 + $0x28] sm:$0xff]
        %v1505 = vld [vmem:[#allocation2 + $0x30] sm:$0xff]
        %v1506 = vld [vmem:[#allocation2 + $0x38] sm:$0xff]
        %v1507 = vld [vmem:[#allocation2 + $0x40] sm:$0xff]
        %v1508 = vld [vmem:[#allocation2 + $0x48] sm:$0xff]
        %v1509 = vld [vmem:[#allocation2 + $0x50] sm:$0xff]
        %v1510 = vld [vmem:[#allocation2 + $0x58] sm:$0xff]
        %v1511 = vld [vmem:[#allocation2 + $0x60] sm:$0xff]
        %v1512 = vld [vmem:[#allocation2 + $0x68] sm:$0xff]
        %v1513 = vld [vmem:[#allocation2 + $0x70] sm:$0xff]
        %v1514 = vld [vmem:[#allocation2 + $0x78] sm:$0xff]
        %v1515 = vld [vmem:[#allocation2 + $0x80] sm:$0xff]
        %v1516 = vld [vmem:[#allocation2 + $0x88] sm:$0xff]
        %v1517 = vld [vmem:[#allocation2 + $0x90] sm:$0xff]
        %v1518 = vld [vmem:[#allocation2 + $0x98] sm:$0xff]
        %v1519 = vld [vmem:[#allocation2 + $0xa0] sm:$0xff]
        %v1520 = vld [vmem:[#allocation2 + $0xa8] sm:$0xff]
        %v1521 = vld [vmem:[#allocation2 + $0xb0] sm:$0xff]
        %v1522 = vld [vmem:[#allocation2 + $0xb8] sm:$0xff]
        %v1523 = vld [vmem:[#allocation2 + $0xc0] sm:$0xff]
        %v1524 = vld [vmem:[#allocation2 + $0xc8] sm:$0xff]
        %v1525 = vld [vmem:[#allocation2 + $0xd0] sm:$0xff]
        %v1526 = vld [vmem:[#allocation2 + $0xd8] sm:$0xff]
        %v1527 = vld [vmem:[#allocation2 + $0xe0] sm:$0xff]
        %v1528 = vld [vmem:[#allocation2 + $0xe8] sm:$0xff]
        %v1529 = vld [vmem:[#allocation2 + $0xf0] sm:$0xff]
        %v1530 = vld [vmem:[#allocation2 + $0xf8] sm:$0xff]
        %v1532 = vlaneseq
        %v1533 = vshrl.u32 %v1532, 7
        %v1534 = vsub.s32 0, %v1533
        %v1535 = vrot.slane %v1498, %v1534
        %1536 = vset.pattern.permute.xlu0 0
        %1537 = vperm.xlu0 %1536, %v1535
        %v1538 = vpop.permute.xlu0 %1537
        %v1540 = vmul.f32 %v1538, %v1499
        %v1541 = vmul.f32 %v1538, %v1501
        %v1542 = vmul.f32 %v1538, %v1503
        %v1543 = vmul.f32 %v1538, %v1505
        %v1544 = vmul.f32 %v1538, %v1507
        %v1545 = vmul.f32 %v1538, %v1509
        %v1546 = vmul.f32 %v1538, %v1511
        %v1547 = vmul.f32 %v1538, %v1513
        %v1548 = vmul.f32 %v1538, %v1515
        %v1549 = vmul.f32 %v1538, %v1517
        %v1550 = vmul.f32 %v1538, %v1519
        %v1551 = vmul.f32 %v1538, %v1521
        %v1552 = vmul.f32 %v1538, %v1523
        %v1553 = vmul.f32 %v1538, %v1525
        %v1554 = vmul.f32 %v1538, %v1527
        %v1555 = vmul.f32 %v1538, %v1529
        %v1556 = vld [vmem:[%s613] sm:$0xff]
        %v1557 = vld [vmem:[%s613 + $0x8] sm:$0xff]
        %v1558 = vld [vmem:[%s613 + $0x10] sm:$0xff]
        %v1559 = vld [vmem:[%s613 + $0x18] sm:$0xff]
        %v1560 = vld [vmem:[%s613 + $0x20] sm:$0xff]
        %v1561 = vld [vmem:[%s613 + $0x28] sm:$0xff]
        %v1562 = vld [vmem:[%s613 + $0x30] sm:$0xff]
        %v1563 = vld [vmem:[%s613 + $0x38] sm:$0xff]
        %v1564 = vld [vmem:[%s613 + $0x40] sm:$0xff]
        %v1565 = vld [vmem:[%s613 + $0x48] sm:$0xff]
        %v1566 = vld [vmem:[%s613 + $0x50] sm:$0xff]
        %v1567 = vld [vmem:[%s613 + $0x58] sm:$0xff]
        %v1568 = vld [vmem:[%s613 + $0x60] sm:$0xff]
        %v1569 = vld [vmem:[%s613 + $0x68] sm:$0xff]
        %v1570 = vld [vmem:[%s613 + $0x70] sm:$0xff]
        %v1571 = vld [vmem:[%s613 + $0x78] sm:$0xff]
        %v1572 = vadd.f32 %v1540, %v1556
        %v1573 = vadd.f32 %v1541, %v1557
        %v1574 = vadd.f32 %v1542, %v1558
        %v1575 = vadd.f32 %v1543, %v1559
        %v1576 = vadd.f32 %v1544, %v1560
        %v1577 = vadd.f32 %v1545, %v1561
        %v1578 = vadd.f32 %v1546, %v1562
        %v1579 = vadd.f32 %v1547, %v1563
        %v1580 = vadd.f32 %v1548, %v1564
        %v1581 = vadd.f32 %v1549, %v1565
        %v1582 = vadd.f32 %v1550, %v1566
        %v1583 = vadd.f32 %v1551, %v1567
        %v1584 = vadd.f32 %v1552, %v1568
        %v1585 = vadd.f32 %v1553, %v1569
        %v1586 = vadd.f32 %v1554, %v1570
        %v1587 = vadd.f32 %v1555, %v1571
        %v1588 = vmul.f32 %v1538, %v1500
        %v1589 = vmul.f32 %v1538, %v1502
        %v1590 = vmul.f32 %v1538, %v1504
        %v1591 = vmul.f32 %v1538, %v1506
        %v1592 = vmul.f32 %v1538, %v1508
        %v1593 = vmul.f32 %v1538, %v1510
        %v1594 = vmul.f32 %v1538, %v1512
        %v1595 = vmul.f32 %v1538, %v1514
        %v1596 = vmul.f32 %v1538, %v1516
        %v1597 = vmul.f32 %v1538, %v1518
        %v1598 = vmul.f32 %v1538, %v1520
        %v1599 = vmul.f32 %v1538, %v1522
        %v1600 = vmul.f32 %v1538, %v1524
        %v1601 = vmul.f32 %v1538, %v1526
        %v1602 = vmul.f32 %v1538, %v1528
        %v1603 = vmul.f32 %v1538, %v1530
        %v1604 = vld [vmem:[%s619] sm:$0xff]
        %v1605 = vld [vmem:[%s619 + $0x8] sm:$0xff]
        %v1606 = vld [vmem:[%s619 + $0x10] sm:$0xff]
        %v1607 = vld [vmem:[%s619 + $0x18] sm:$0xff]
        %v1608 = vld [vmem:[%s619 + $0x20] sm:$0xff]
        %v1609 = vld [vmem:[%s619 + $0x28] sm:$0xff]
        %v1610 = vld [vmem:[%s619 + $0x30] sm:$0xff]
        %v1611 = vld [vmem:[%s619 + $0x38] sm:$0xff]
        %v1612 = vld [vmem:[%s619 + $0x40] sm:$0xff]
        %v1613 = vld [vmem:[%s619 + $0x48] sm:$0xff]
        %v1614 = vld [vmem:[%s619 + $0x50] sm:$0xff]
        %v1615 = vld [vmem:[%s619 + $0x58] sm:$0xff]
        %v1616 = vld [vmem:[%s619 + $0x60] sm:$0xff]
        %v1617 = vld [vmem:[%s619 + $0x68] sm:$0xff]
        %v1618 = vld [vmem:[%s619 + $0x70] sm:$0xff]
        %v1619 = vld [vmem:[%s619 + $0x78] sm:$0xff]
        %v1620 = vadd.f32 %v1588, %v1604
        %v1621 = vadd.f32 %v1589, %v1605
        %v1622 = vadd.f32 %v1590, %v1606
        %v1623 = vadd.f32 %v1591, %v1607
        %v1624 = vadd.f32 %v1592, %v1608
        %v1625 = vadd.f32 %v1593, %v1609
        %v1626 = vadd.f32 %v1594, %v1610
        %v1627 = vadd.f32 %v1595, %v1611
        %v1628 = vadd.f32 %v1596, %v1612
        %v1629 = vadd.f32 %v1597, %v1613
        %v1630 = vadd.f32 %v1598, %v1614
        %v1631 = vadd.f32 %v1599, %v1615
        %v1632 = vadd.f32 %v1600, %v1616
        %v1633 = vadd.f32 %v1601, %v1617
        %v1634 = vadd.f32 %v1602, %v1618
        %v1635 = vadd.f32 %v1603, %v1619
        %v1636 = vpack.c.bf16 %v1573, %v1572
        %v1637 = vpack.c.bf16 %v1575, %v1574
        %v1638 = vpack.c.bf16 %v1577, %v1576
        %v1639 = vpack.c.bf16 %v1579, %v1578
        %v1640 = vpack.c.bf16 %v1581, %v1580
        %v1641 = vpack.c.bf16 %v1583, %v1582
        %v1642 = vpack.c.bf16 %v1585, %v1584
        %v1643 = vpack.c.bf16 %v1587, %v1586
        %v1644 = vld [vmem:[%s7] sm:$0xff]
        %v1645 = vld [vmem:[%s7 + $0x8] sm:$0xff]
        %v1646 = vld [vmem:[%s7 + $0x10] sm:$0xff]
        %v1647 = vld [vmem:[%s7 + $0x18] sm:$0xff]
        %v1648 = vld [vmem:[%s7 + $0x20] sm:$0xff]
        %v1649 = vld [vmem:[%s7 + $0x28] sm:$0xff]
        %v1650 = vld [vmem:[%s7 + $0x30] sm:$0xff]
        %v1651 = vld [vmem:[%s7 + $0x38] sm:$0xff]
        %v1652 = vld [vmem:[%s7 + $0x40] sm:$0xff]
        %v1653 = vld [vmem:[%s7 + $0x48] sm:$0xff]
        %v1654 = vld [vmem:[%s7 + $0x50] sm:$0xff]
        %v1655 = vld [vmem:[%s7 + $0x58] sm:$0xff]
        %v1656 = vld [vmem:[%s7 + $0x60] sm:$0xff]
        %v1657 = vld [vmem:[%s7 + $0x68] sm:$0xff]
        %v1658 = vld [vmem:[%s7 + $0x70] sm:$0xff]
        %v1659 = vld [vmem:[%s7 + $0x78] sm:$0xff]
        %v1660 = vld [vmem:[%s8] ss:$2 sm:$0x3]
        %1662 = vset.pattern.permute.xlu0 0
        %1663 = vperm.xlu0 %1662, %v1620
        %v1664 = vpop.permute.xlu0 %1663
        %1667 = vset.pattern.permute.xlu0 0
        %1668 = vperm.xlu0 %1667, %v1621
        %v1669 = vpop.permute.xlu0 %1668
        %1672 = vset.pattern.permute.xlu0 0
        %1673 = vperm.xlu0 %1672, %v1622
        %v1674 = vpop.permute.xlu0 %1673
        %1677 = vset.pattern.permute.xlu0 0
        %1678 = vperm.xlu0 %1677, %v1623
        %v1679 = vpop.permute.xlu0 %1678
        %1682 = vset.pattern.permute.xlu0 0
        %1683 = vperm.xlu0 %1682, %v1624
        %v1684 = vpop.permute.xlu0 %1683
        %1687 = vset.pattern.permute.xlu0 0
        %1688 = vperm.xlu0 %1687, %v1625
        %v1689 = vpop.permute.xlu0 %1688
        %1692 = vset.pattern.permute.xlu0 0
        %1693 = vperm.xlu0 %1692, %v1626
        %v1694 = vpop.permute.xlu0 %1693
        %1697 = vset.pattern.permute.xlu0 0
        %1698 = vperm.xlu0 %1697, %v1627
        %v1699 = vpop.permute.xlu0 %1698
        %1702 = vset.pattern.permute.xlu0 0
        %1703 = vperm.xlu0 %1702, %v1628
        %v1704 = vpop.permute.xlu0 %1703
        %1707 = vset.pattern.permute.xlu0 0
        %1708 = vperm.xlu0 %1707, %v1629
        %v1709 = vpop.permute.xlu0 %1708
        %1712 = vset.pattern.permute.xlu0 0
        %1713 = vperm.xlu0 %1712, %v1630
        %v1714 = vpop.permute.xlu0 %1713
        %1717 = vset.pattern.permute.xlu0 0
        %1718 = vperm.xlu0 %1717, %v1631
        %v1719 = vpop.permute.xlu0 %1718
        %1722 = vset.pattern.permute.xlu0 0
        %1723 = vperm.xlu0 %1722, %v1632
        %v1724 = vpop.permute.xlu0 %1723
        %1727 = vset.pattern.permute.xlu0 0
        %1728 = vperm.xlu0 %1727, %v1633
        %v1729 = vpop.permute.xlu0 %1728
        %1732 = vset.pattern.permute.xlu0 0
        %1733 = vperm.xlu0 %1732, %v1634
        %v1734 = vpop.permute.xlu0 %1733
        %1737 = vset.pattern.permute.xlu0 0
        %1738 = vperm.xlu0 %1737, %v1635
        %v1739 = vpop.permute.xlu0 %1738
        %v1742 = vlaneseq
        %v1743 = vshrl.u32 %v1742, 7
        %v1744 = vsub.s32 0, %v1743
        %v1745 = vrot.slane %v1660, %v1744
        %v1746 = vlaneseq
        %v1747 = vshrl.u32 %v1746, 7
        %v1748 = vsub.s32 1, %v1747
        %v1749 = vrot.slane %v1660, %v1748
        %v1752 = vmul.f32 %v1664, %v1745
        %v1753 = vmul.f32 %v1664, %v1749
        %v1754 = vmul.f32 %v1669, %v1745
        %v1755 = vmul.f32 %v1669, %v1749
        %v1756 = vmul.f32 %v1674, %v1745
        %v1757 = vmul.f32 %v1674, %v1749
        %v1758 = vmul.f32 %v1679, %v1745
        %v1759 = vmul.f32 %v1679, %v1749
        %v1760 = vmul.f32 %v1684, %v1745
        %v1761 = vmul.f32 %v1684, %v1749
        %v1762 = vmul.f32 %v1689, %v1745
        %v1763 = vmul.f32 %v1689, %v1749
        %v1764 = vmul.f32 %v1694, %v1745
        %v1765 = vmul.f32 %v1694, %v1749
        %v1766 = vmul.f32 %v1699, %v1745
        %v1767 = vmul.f32 %v1699, %v1749
        %v1768 = vmul.f32 %v1704, %v1745
        %v1769 = vmul.f32 %v1704, %v1749
        %v1770 = vmul.f32 %v1709, %v1745
        %v1771 = vmul.f32 %v1709, %v1749
        %v1772 = vmul.f32 %v1714, %v1745
        %v1773 = vmul.f32 %v1714, %v1749
        %v1774 = vmul.f32 %v1719, %v1745
        %v1775 = vmul.f32 %v1719, %v1749
        %v1776 = vmul.f32 %v1724, %v1745
        %v1777 = vmul.f32 %v1724, %v1749
        %v1778 = vmul.f32 %v1729, %v1745
        %v1779 = vmul.f32 %v1729, %v1749
        %v1780 = vmul.f32 %v1734, %v1745
        %v1781 = vmul.f32 %v1734, %v1749
        %v1782 = vmul.f32 %v1739, %v1745
        %v1783 = vmul.f32 %v1739, %v1749
        %v1800 = vunpack.c.l.b16 %v1644
        %v1801 = vunpack.c.h.b16 %v1644
        %v1802 = vunpack.c.l.b16 %v1645
        %v1803 = vunpack.c.h.b16 %v1645
        %v1804 = vunpack.c.l.b16 %v1646
        %v1805 = vunpack.c.h.b16 %v1646
        %v1806 = vunpack.c.l.b16 %v1647
        %v1807 = vunpack.c.h.b16 %v1647
        %v1808 = vunpack.c.l.b16 %v1648
        %v1809 = vunpack.c.h.b16 %v1648
        %v1810 = vunpack.c.l.b16 %v1649
        %v1811 = vunpack.c.h.b16 %v1649
        %v1812 = vunpack.c.l.b16 %v1650
        %v1813 = vunpack.c.h.b16 %v1650
        %v1814 = vunpack.c.l.b16 %v1651
        %v1815 = vunpack.c.h.b16 %v1651
        %v1816 = vunpack.c.l.b16 %v1652
        %v1817 = vunpack.c.h.b16 %v1652
        %v1818 = vunpack.c.l.b16 %v1653
        %v1819 = vunpack.c.h.b16 %v1653
        %v1820 = vunpack.c.l.b16 %v1654
        %v1821 = vunpack.c.h.b16 %v1654
        %v1822 = vunpack.c.l.b16 %v1655
        %v1823 = vunpack.c.h.b16 %v1655
        %v1824 = vunpack.c.l.b16 %v1656
        %v1825 = vunpack.c.h.b16 %v1656
        %v1826 = vunpack.c.l.b16 %v1657
        %v1827 = vunpack.c.h.b16 %v1657
        %v1828 = vunpack.c.l.b16 %v1658
        %v1829 = vunpack.c.h.b16 %v1658
        %v1830 = vunpack.c.l.b16 %v1659
        %v1831 = vunpack.c.h.b16 %v1659
        %v1832 = vpack.c.b16 %v1802, %v1800
        %v1833 = vpack.c.b16 %v1803, %v1801
        %v1834 = vpack.c.b16 %v1806, %v1804
        %v1835 = vpack.c.b16 %v1807, %v1805
        %v1836 = vpack.c.b16 %v1810, %v1808
        %v1837 = vpack.c.b16 %v1811, %v1809
        %v1838 = vpack.c.b16 %v1814, %v1812
        %v1839 = vpack.c.b16 %v1815, %v1813
        %v1840 = vpack.c.b16 %v1818, %v1816
        %v1841 = vpack.c.b16 %v1819, %v1817
        %v1842 = vpack.c.b16 %v1822, %v1820
        %v1843 = vpack.c.b16 %v1823, %v1821
        %v1844 = vpack.c.b16 %v1826, %v1824
        %v1845 = vpack.c.b16 %v1827, %v1825
        %v1846 = vpack.c.b16 %v1830, %v1828
        %v1847 = vpack.c.b16 %v1831, %v1829
        %1864 = vmatprep.subr.bf16.mxu0 %v1833
        %1865 = vmatpush1.bf16.msra.mxu0 %v1832
        %1866 = vmatprep.subr.bf16.mxu0 %v1835
        %1867 = vmatpush1.bf16.msra.mxu0 %v1834
        %1868 = vmatprep.subr.bf16.mxu0 %v1837
        %1869 = vmatpush1.bf16.msra.mxu0 %v1836
        %1870 = vmatprep.subr.bf16.mxu0 %v1839
        %1871 = vmatpush1.bf16.msra.mxu0 %v1838
        %1872 = vmatprep.subr.bf16.mxu0 %v1841
        %1873 = vmatpush1.bf16.msra.mxu0 %v1840
        %1874 = vmatprep.subr.bf16.mxu0 %v1843
        %1875 = vmatpush1.bf16.msra.mxu0 %v1842
        %1876 = vmatprep.subr.bf16.mxu0 %v1845
        %1877 = vmatpush1.bf16.msra.mxu0 %v1844
        %1878 = vmatprep.subr.bf16.mxu0 %v1847
        %1879 = vmatpush1.bf16.msra.mxu0 %v1846
        %1880 = vmatprep.subr.bf16.mxu0 0
        %1881 = vmatpush1.bf16.msra.mxu0 0
        %1882 = vmatprep.subr.bf16.mxu0 0
        %1883 = vmatpush1.bf16.msra.mxu0 0
        %1884 = vmatprep.subr.bf16.mxu0 0
        %1885 = vmatpush1.bf16.msra.mxu0 0
        %1886 = vmatprep.subr.bf16.mxu0 0
        %1887 = vmatpush1.bf16.msra.mxu0 0
        %1888 = vmatprep.subr.bf16.mxu0 0
        %1889 = vmatpush1.bf16.msra.mxu0 0
        %1890 = vmatprep.subr.bf16.mxu0 0
        %1891 = vmatpush1.bf16.msra.mxu0 0
        %1892 = vmatprep.subr.bf16.mxu0 0
        %1893 = vmatpush1.bf16.msra.mxu0 0
        %1894 = vmatprep.subr.bf16.mxu0 0
        %1895 = vmatpush1.bf16.msra.mxu0 0
        %1896 = vmatprep.mubr.bf16.mxu0 0
        %1897 = vmatmul.mubr.bf16.gmra.mrb[0].mxu0 %v1636
        %v1898 = vpop.f32.mrb[0].mxu0
        %v1899 = vadd.f32 %v1752, %v1898
        %v1900 = vpop.f32.mrb[0].mxu0
        %v1901 = vadd.f32 %v1753, %v1900
        %v1902 = vpop.f32.mrb[0].mxu0
        %v1903 = vadd.f32 %v1754, %v1902
        %v1904 = vpop.f32.mrb[0].mxu0
        %v1905 = vadd.f32 %v1755, %v1904
        %1906 = vmatprep.mubr.bf16.mxu0 0
        %1907 = vmatmul.mubr.bf16.gmra.mrb[0].mxu0 %v1637
        %v1908 = vpop.f32.mrb[0].mxu0
        %v1909 = vadd.f32 %v1756, %v1908
        %v1910 = vpop.f32.mrb[0].mxu0
        %v1911 = vadd.f32 %v1757, %v1910
        %v1912 = vpop.f32.mrb[0].mxu0
        %v1913 = vadd.f32 %v1758, %v1912
        %v1914 = vpop.f32.mrb[0].mxu0
        %v1915 = vadd.f32 %v1759, %v1914
        %1916 = vmatprep.mubr.bf16.mxu0 0
        %1917 = vmatmul.mubr.bf16.gmra.mrb[0].mxu0 %v1638
        %v1918 = vpop.f32.mrb[0].mxu0
        %v1919 = vadd.f32 %v1760, %v1918
        %v1920 = vpop.f32.mrb[0].mxu0
        %v1921 = vadd.f32 %v1761, %v1920
        %v1922 = vpop.f32.mrb[0].mxu0
        %v1923 = vadd.f32 %v1762, %v1922
        %v1924 = vpop.f32.mrb[0].mxu0
        %v1925 = vadd.f32 %v1763, %v1924
        %1926 = vmatprep.mubr.bf16.mxu0 0
        %1927 = vmatmul.mubr.bf16.gmra.mrb[0].mxu0 %v1639
        %v1928 = vpop.f32.mrb[0].mxu0
        %v1929 = vadd.f32 %v1764, %v1928
        %v1930 = vpop.f32.mrb[0].mxu0
        %v1931 = vadd.f32 %v1765, %v1930
        %v1932 = vpop.f32.mrb[0].mxu0
        %v1933 = vadd.f32 %v1766, %v1932
        %v1934 = vpop.f32.mrb[0].mxu0
        %v1935 = vadd.f32 %v1767, %v1934
        %1936 = vmatprep.mubr.bf16.mxu0 0
        %1937 = vmatmul.mubr.bf16.gmra.mrb[0].mxu0 %v1640
        %v1938 = vpop.f32.mrb[0].mxu0
        %v1939 = vadd.f32 %v1768, %v1938
        %v1940 = vpop.f32.mrb[0].mxu0
        %v1941 = vadd.f32 %v1769, %v1940
        %v1942 = vpop.f32.mrb[0].mxu0
        %v1943 = vadd.f32 %v1770, %v1942
        %v1944 = vpop.f32.mrb[0].mxu0
        %v1945 = vadd.f32 %v1771, %v1944
        %1946 = vmatprep.mubr.bf16.mxu0 0
        %1947 = vmatmul.mubr.bf16.gmra.mrb[0].mxu0 %v1641
        %v1948 = vpop.f32.mrb[0].mxu0
        %v1949 = vadd.f32 %v1772, %v1948
        %v1950 = vpop.f32.mrb[0].mxu0
        %v1951 = vadd.f32 %v1773, %v1950
        %v1952 = vpop.f32.mrb[0].mxu0
        %v1953 = vadd.f32 %v1774, %v1952
        %v1954 = vpop.f32.mrb[0].mxu0
        %v1955 = vadd.f32 %v1775, %v1954
        %1956 = vmatprep.mubr.bf16.mxu0 0
        %1957 = vmatmul.mubr.bf16.gmra.mrb[0].mxu0 %v1642
        %v1958 = vpop.f32.mrb[0].mxu0
        %v1959 = vadd.f32 %v1776, %v1958
        %v1960 = vpop.f32.mrb[0].mxu0
        %v1961 = vadd.f32 %v1777, %v1960
        %v1962 = vpop.f32.mrb[0].mxu0
        %v1963 = vadd.f32 %v1778, %v1962
        %v1964 = vpop.f32.mrb[0].mxu0
        %v1965 = vadd.f32 %v1779, %v1964
        %1966 = vmatprep.mubr.bf16.mxu0 0
        %1967 = vmatmul.mubr.bf16.gmra.mrb[0].mxu0 %v1643
        %v1968 = vpop.f32.mrb[0].mxu0
        %v1969 = vadd.f32 %v1780, %v1968
        %v1970 = vpop.f32.mrb[0].mxu0
        %v1971 = vadd.f32 %v1781, %v1970
        %v1972 = vpop.f32.mrb[0].mxu0
        %v1973 = vadd.f32 %v1782, %v1972
        %v1974 = vpop.f32.mrb[0].mxu0
        %v1975 = vadd.f32 %v1783, %v1974
        %1976 = vdwg.mxu0
        %s1977 = scalar_lea.vmem %s8, 1
        %v1978 = vld [vmem:[%s1977] ss:$2 sm:$0x3]
        %1979 = vset.pattern.permute.xlu0 1
        %1980 = vperm.xlu0 %1979, %v1620
        %v1981 = vpop.permute.xlu0 %1980
        %1983 = vset.pattern.permute.xlu0 1
        %1984 = vperm.xlu0 %1983, %v1621
        %v1985 = vpop.permute.xlu0 %1984
        %1987 = vset.pattern.permute.xlu0 1
        %1988 = vperm.xlu0 %1987, %v1622
        %v1989 = vpop.permute.xlu0 %1988
        %1991 = vset.pattern.permute.xlu0 1
        %1992 = vperm.xlu0 %1991, %v1623
        %v1993 = vpop.permute.xlu0 %1992
        %1995 = vset.pattern.permute.xlu0 1
        %1996 = vperm.xlu0 %1995, %v1624
        %v1997 = vpop.permute.xlu0 %1996
        %1999 = vset.pattern.permute.xlu0 1
        %2000 = vperm.xlu0 %1999, %v1625
        %v2001 = vpop.permute.xlu0 %2000
        %2003 = vset.pattern.permute.xlu0 1
        %2004 = vperm.xlu0 %2003, %v1626
        %v2005 = vpop.permute.xlu0 %2004
        %2007 = vset.pattern.permute.xlu0 1
        %2008 = vperm.xlu0 %2007, %v1627
        %v2009 = vpop.permute.xlu0 %2008
        %2011 = vset.pattern.permute.xlu0 1
        %2012 = vperm.xlu0 %2011, %v1628
        %v2013 = vpop.permute.xlu0 %2012
        %2015 = vset.pattern.permute.xlu0 1
        %2016 = vperm.xlu0 %2015, %v1629
        %v2017 = vpop.permute.xlu0 %2016
        %2019 = vset.pattern.permute.xlu0 1
        %2020 = vperm.xlu0 %2019, %v1630
        %v2021 = vpop.permute.xlu0 %2020
        %2023 = vset.pattern.permute.xlu0 1
        %2024 = vperm.xlu0 %2023, %v1631
        %v2025 = vpop.permute.xlu0 %2024
        %2027 = vset.pattern.permute.xlu0 1
        %2028 = vperm.xlu0 %2027, %v1632
        %v2029 = vpop.permute.xlu0 %2028
        %2031 = vset.pattern.permute.xlu0 1
        %2032 = vperm.xlu0 %2031, %v1633
        %v2033 = vpop.permute.xlu0 %2032
        %2035 = vset.pattern.permute.xlu0 1
        %2036 = vperm.xlu0 %2035, %v1634
        %v2037 = vpop.permute.xlu0 %2036
        %2039 = vset.pattern.permute.xlu0 1
        %2040 = vperm.xlu0 %2039, %v1635
        %v2041 = vpop.permute.xlu0 %2040
        %v2044 = vlaneseq
        %v2045 = vshrl.u32 %v2044, 7
        %v2046 = vsub.s32 0, %v2045
        %v2047 = vrot.slane %v1978, %v2046
        %v2048 = vlaneseq
        %v2049 = vshrl.u32 %v2048, 7
        %v2050 = vsub.s32 1, %v2049
        %v2051 = vrot.slane %v1978, %v2050
        %v2054 = vmul.f32 %v1981, %v2047
        %v2055 = vmul.f32 %v1981, %v2051
        %v2056 = vmul.f32 %v1985, %v2047
        %v2057 = vmul.f32 %v1985, %v2051
        %v2058 = vmul.f32 %v1989, %v2047
        %v2059 = vmul.f32 %v1989, %v2051
        %v2060 = vmul.f32 %v1993, %v2047
        %v2061 = vmul.f32 %v1993, %v2051
        %v2062 = vmul.f32 %v1997, %v2047
        %v2063 = vmul.f32 %v1997, %v2051
        %v2064 = vmul.f32 %v2001, %v2047
        %v2065 = vmul.f32 %v2001, %v2051
        %v2066 = vmul.f32 %v2005, %v2047
        %v2067 = vmul.f32 %v2005, %v2051
        %v2068 = vmul.f32 %v2009, %v2047
        %v2069 = vmul.f32 %v2009, %v2051
        %v2070 = vmul.f32 %v2013, %v2047
        %v2071 = vmul.f32 %v2013, %v2051
        %v2072 = vmul.f32 %v2017, %v2047
        %v2073 = vmul.f32 %v2017, %v2051
        %v2074 = vmul.f32 %v2021, %v2047
        %v2075 = vmul.f32 %v2021, %v2051
        %v2076 = vmul.f32 %v2025, %v2047
        %v2077 = vmul.f32 %v2025, %v2051
        %v2078 = vmul.f32 %v2029, %v2047
        %v2079 = vmul.f32 %v2029, %v2051
        %v2080 = vmul.f32 %v2033, %v2047
        %v2081 = vmul.f32 %v2033, %v2051
        %v2082 = vmul.f32 %v2037, %v2047
        %v2083 = vmul.f32 %v2037, %v2051
        %v2084 = vmul.f32 %v2041, %v2047
        %v2085 = vmul.f32 %v2041, %v2051
        %v2086 = vadd.f32 %v1899, %v2054
        %v2087 = vadd.f32 %v1901, %v2055
        %v2088 = vadd.f32 %v1903, %v2056
        %v2089 = vadd.f32 %v1905, %v2057
        %v2090 = vadd.f32 %v1909, %v2058
        %v2091 = vadd.f32 %v1911, %v2059
        %v2092 = vadd.f32 %v1913, %v2060
        %v2093 = vadd.f32 %v1915, %v2061
        %v2094 = vadd.f32 %v1919, %v2062
        %v2095 = vadd.f32 %v1921, %v2063
        %v2096 = vadd.f32 %v1923, %v2064
        %v2097 = vadd.f32 %v1925, %v2065
        %v2098 = vadd.f32 %v1929, %v2066
        %v2099 = vadd.f32 %v1931, %v2067
        %v2100 = vadd.f32 %v1933, %v2068
        %v2101 = vadd.f32 %v1935, %v2069
        %v2102 = vadd.f32 %v1939, %v2070
        %v2103 = vadd.f32 %v1941, %v2071
        %v2104 = vadd.f32 %v1943, %v2072
        %v2105 = vadd.f32 %v1945, %v2073
        %v2106 = vadd.f32 %v1949, %v2074
        %v2107 = vadd.f32 %v1951, %v2075
        %v2108 = vadd.f32 %v1953, %v2076
        %v2109 = vadd.f32 %v1955, %v2077
        %v2110 = vadd.f32 %v1959, %v2078
        %v2111 = vadd.f32 %v1961, %v2079
        %v2112 = vadd.f32 %v1963, %v2080
        %v2113 = vadd.f32 %v1965, %v2081
        %v2114 = vadd.f32 %v1969, %v2082
        %v2115 = vadd.f32 %v1971, %v2083
        %v2116 = vadd.f32 %v1973, %v2084
        %v2117 = vadd.f32 %v1975, %v2085
        %v2118 = vld [vmem:[%s9] sm:$0x3]
        %v2120 = vlaneseq
        %v2121 = vshrl.u32 %v2120, 7
        %v2122 = vsub.s32 0, %v2121
        %v2123 = vrot.slane %v2118, %v2122
        %v2124 = vlaneseq
        %v2125 = vshrl.u32 %v2124, 7
        %v2126 = vsub.s32 1, %v2125
        %v2127 = vrot.slane %v2118, %v2126
        %v2130 = vadd.f32 %v2086, %v2123
        %v2131 = vadd.f32 %v2087, %v2127
        %v2132 = vadd.f32 %v2088, %v2123
        %v2133 = vadd.f32 %v2089, %v2127
        %v2134 = vadd.f32 %v2090, %v2123
        %v2135 = vadd.f32 %v2091, %v2127
        %v2136 = vadd.f32 %v2092, %v2123
        %v2137 = vadd.f32 %v2093, %v2127
        %v2138 = vadd.f32 %v2094, %v2123
        %v2139 = vadd.f32 %v2095, %v2127
        %v2140 = vadd.f32 %v2096, %v2123
        %v2141 = vadd.f32 %v2097, %v2127
        %v2142 = vadd.f32 %v2098, %v2123
        %v2143 = vadd.f32 %v2099, %v2127
        %v2144 = vadd.f32 %v2100, %v2123
        %v2145 = vadd.f32 %v2101, %v2127
        %v2146 = vadd.f32 %v2102, %v2123
        %v2147 = vadd.f32 %v2103, %v2127
        %v2148 = vadd.f32 %v2104, %v2123
        %v2149 = vadd.f32 %v2105, %v2127
        %v2150 = vadd.f32 %v2106, %v2123
        %v2151 = vadd.f32 %v2107, %v2127
        %v2152 = vadd.f32 %v2108, %v2123
        %v2153 = vadd.f32 %v2109, %v2127
        %v2154 = vadd.f32 %v2110, %v2123
        %v2155 = vadd.f32 %v2111, %v2127
        %v2156 = vadd.f32 %v2112, %v2123
        %v2157 = vadd.f32 %v2113, %v2127
        %v2158 = vadd.f32 %v2114, %v2123
        %v2159 = vadd.f32 %v2115, %v2127
        %v2160 = vadd.f32 %v2116, %v2123
        %v2161 = vadd.f32 %v2117, %v2127
        %v2162 = vmax.f32 %v2130, 0.0
        %v2163 = vmax.f32 %v2131, 0.0
        %v2164 = vmax.f32 %v2132, 0.0
        %v2165 = vmax.f32 %v2133, 0.0
        %v2166 = vmax.f32 %v2134, 0.0
        %v2167 = vmax.f32 %v2135, 0.0
        %v2168 = vmax.f32 %v2136, 0.0
        %v2169 = vmax.f32 %v2137, 0.0
        %v2170 = vmax.f32 %v2138, 0.0
        %v2171 = vmax.f32 %v2139, 0.0
        %v2172 = vmax.f32 %v2140, 0.0
        %v2173 = vmax.f32 %v2141, 0.0
        %v2174 = vmax.f32 %v2142, 0.0
        %v2175 = vmax.f32 %v2143, 0.0
        %v2176 = vmax.f32 %v2144, 0.0
        %v2177 = vmax.f32 %v2145, 0.0
        %v2178 = vmax.f32 %v2146, 0.0
        %v2179 = vmax.f32 %v2147, 0.0
        %v2180 = vmax.f32 %v2148, 0.0
        %v2181 = vmax.f32 %v2149, 0.0
        %v2182 = vmax.f32 %v2150, 0.0
        %v2183 = vmax.f32 %v2151, 0.0
        %v2184 = vmax.f32 %v2152, 0.0
        %v2185 = vmax.f32 %v2153, 0.0
        %v2186 = vmax.f32 %v2154, 0.0
        %v2187 = vmax.f32 %v2155, 0.0
        %v2188 = vmax.f32 %v2156, 0.0
        %v2189 = vmax.f32 %v2157, 0.0
        %v2190 = vmax.f32 %v2158, 0.0
        %v2191 = vmax.f32 %v2159, 0.0
        %v2192 = vmax.f32 %v2160, 0.0
        %v2193 = vmax.f32 %v2161, 0.0
        %v2194 = vpack.c.bf16 %v2164, %v2162
        %v2195 = vpack.c.bf16 %v2165, %v2163
        %v2196 = vpack.c.bf16 %v2168, %v2166
        %v2197 = vpack.c.bf16 %v2169, %v2167
        %v2198 = vpack.c.bf16 %v2172, %v2170
        %v2199 = vpack.c.bf16 %v2173, %v2171
        %v2200 = vpack.c.bf16 %v2176, %v2174
        %v2201 = vpack.c.bf16 %v2177, %v2175
        %v2202 = vpack.c.bf16 %v2180, %v2178
        %v2203 = vpack.c.bf16 %v2181, %v2179
        %v2204 = vpack.c.bf16 %v2184, %v2182
        %v2205 = vpack.c.bf16 %v2185, %v2183
        %v2206 = vpack.c.bf16 %v2188, %v2186
        %v2207 = vpack.c.bf16 %v2189, %v2187
        %v2208 = vpack.c.bf16 %v2192, %v2190
        %v2209 = vpack.c.bf16 %v2193, %v2191
        %v2210 = vld [vmem:[%s10] sm:$0xf]
        %v2211 = vld [vmem:[%s10 + $0x4] sm:$0xf]
        %v2212 = vld [vmem:[%s10 + $0x8] sm:$0xf]
        %v2213 = vld [vmem:[%s10 + $0xc] sm:$0xf]
        %v2214 = vld [vmem:[%s10 + $0x10] sm:$0xf]
        %v2215 = vld [vmem:[%s10 + $0x14] sm:$0xf]
        %v2216 = vld [vmem:[%s10 + $0x18] sm:$0xf]
        %v2217 = vld [vmem:[%s10 + $0x1c] sm:$0xf]
        %v2218 = vld [vmem:[%s10 + $0x20] sm:$0xf]
        %v2219 = vld [vmem:[%s10 + $0x24] sm:$0xf]
        %v2220 = vld [vmem:[%s10 + $0x28] sm:$0xf]
        %v2221 = vld [vmem:[%s10 + $0x2c] sm:$0xf]
        %v2222 = vld [vmem:[%s10 + $0x30] sm:$0xf]
        %v2223 = vld [vmem:[%s10 + $0x34] sm:$0xf]
        %v2224 = vld [vmem:[%s10 + $0x38] sm:$0xf]
        %v2225 = vld [vmem:[%s10 + $0x3c] sm:$0xf]
        %v2226 = vld [vmem:[%s10 + $0x40] sm:$0xf]
        %v2227 = vld [vmem:[%s10 + $0x44] sm:$0xf]
        %v2228 = vld [vmem:[%s10 + $0x48] sm:$0xf]
        %v2229 = vld [vmem:[%s10 + $0x4c] sm:$0xf]
        %v2230 = vld [vmem:[%s10 + $0x50] sm:$0xf]
        %v2231 = vld [vmem:[%s10 + $0x54] sm:$0xf]
        %v2232 = vld [vmem:[%s10 + $0x58] sm:$0xf]
        %v2233 = vld [vmem:[%s10 + $0x5c] sm:$0xf]
        %v2234 = vld [vmem:[%s10 + $0x60] sm:$0xf]
        %v2235 = vld [vmem:[%s10 + $0x64] sm:$0xf]
        %v2236 = vld [vmem:[%s10 + $0x68] sm:$0xf]
        %v2237 = vld [vmem:[%s10 + $0x6c] sm:$0xf]
        %v2238 = vld [vmem:[%s10 + $0x70] sm:$0xf]
        %v2239 = vld [vmem:[%s10 + $0x74] sm:$0xf]
        %v2240 = vld [vmem:[%s10 + $0x78] sm:$0xf]
        %v2241 = vld [vmem:[%s10 + $0x7c] sm:$0xf]
        %v2242 = vld [vmem:[%s11] sm:$0x1]
        %v2244 = vlaneseq
        %v2245 = vshrl.u32 %v2244, 7
        %v2246 = vsub.s32 0, %v2245
        %v2247 = vrot.slane %v2242, %v2246
        %v2281 = vunpack.c.l.b16 %v2210
        %v2282 = vunpack.c.l.b16 %v2211
        %v2283 = vunpack.c.l.b16 %v2212
        %v2284 = vunpack.c.l.b16 %v2213
        %v2285 = vunpack.c.l.b16 %v2214
        %v2286 = vunpack.c.l.b16 %v2215
        %v2287 = vunpack.c.l.b16 %v2216
        %v2288 = vunpack.c.l.b16 %v2217
        %v2289 = vunpack.c.l.b16 %v2218
        %v2290 = vunpack.c.l.b16 %v2219
        %v2291 = vunpack.c.l.b16 %v2220
        %v2292 = vunpack.c.l.b16 %v2221
        %v2293 = vunpack.c.l.b16 %v2222
        %v2294 = vunpack.c.l.b16 %v2223
        %v2295 = vunpack.c.l.b16 %v2224
        %v2296 = vunpack.c.l.b16 %v2225
        %v2297 = vunpack.c.l.b16 %v2226
        %v2298 = vunpack.c.l.b16 %v2227
        %v2299 = vunpack.c.l.b16 %v2228
        %v2300 = vunpack.c.l.b16 %v2229
        %v2301 = vunpack.c.l.b16 %v2230
        %v2302 = vunpack.c.l.b16 %v2231
        %v2303 = vunpack.c.l.b16 %v2232
        %v2304 = vunpack.c.l.b16 %v2233
        %v2305 = vunpack.c.l.b16 %v2234
        %v2306 = vunpack.c.l.b16 %v2235
        %v2307 = vunpack.c.l.b16 %v2236
        %v2308 = vunpack.c.l.b16 %v2237
        %v2309 = vunpack.c.l.b16 %v2238
        %v2310 = vunpack.c.l.b16 %v2239
        %v2311 = vunpack.c.l.b16 %v2240
        %v2312 = vunpack.c.l.b16 %v2241
        %v2313 = vpack.c.b16 %v2282, %v2281
        %v2314 = vpack.c.b16 %v2284, %v2283
        %v2315 = vpack.c.b16 %v2286, %v2285
        %v2316 = vpack.c.b16 %v2288, %v2287
        %v2317 = vpack.c.b16 %v2290, %v2289
        %v2318 = vpack.c.b16 %v2292, %v2291
        %v2319 = vpack.c.b16 %v2294, %v2293
        %v2320 = vpack.c.b16 %v2296, %v2295
        %v2321 = vpack.c.b16 %v2298, %v2297
        %v2322 = vpack.c.b16 %v2300, %v2299
        %v2323 = vpack.c.b16 %v2302, %v2301
        %v2324 = vpack.c.b16 %v2304, %v2303
        %v2325 = vpack.c.b16 %v2306, %v2305
        %v2326 = vpack.c.b16 %v2308, %v2307
        %v2327 = vpack.c.b16 %v2310, %v2309
        %v2328 = vpack.c.b16 %v2312, %v2311
        %2345 = vmatprep.subr.bf16.mxu0 0
        %2346 = vmatpush1.bf16.msra.mxu0 %v2313
        %2347 = vmatprep.subr.bf16.mxu0 0
        %2348 = vmatpush1.bf16.msra.mxu0 %v2314
        %2349 = vmatprep.subr.bf16.mxu0 0
        %2350 = vmatpush1.bf16.msra.mxu0 %v2315
        %2351 = vmatprep.subr.bf16.mxu0 0
        %2352 = vmatpush1.bf16.msra.mxu0 %v2316
        %2353 = vmatprep.subr.bf16.mxu0 0
        %2354 = vmatpush1.bf16.msra.mxu0 %v2317
        %2355 = vmatprep.subr.bf16.mxu0 0
        %2356 = vmatpush1.bf16.msra.mxu0 %v2318
        %2357 = vmatprep.subr.bf16.mxu0 0
        %2358 = vmatpush1.bf16.msra.mxu0 %v2319
        %2359 = vmatprep.subr.bf16.mxu0 0
        %2360 = vmatpush1.bf16.msra.mxu0 %v2320
        %2361 = vmatprep.subr.bf16.mxu0 0
        %2362 = vmatpush1.bf16.msra.mxu0 %v2321
        %2363 = vmatprep.subr.bf16.mxu0 0
        %2364 = vmatpush1.bf16.msra.mxu0 %v2322
        %2365 = vmatprep.subr.bf16.mxu0 0
        %2366 = vmatpush1.bf16.msra.mxu0 %v2323
        %2367 = vmatprep.subr.bf16.mxu0 0
        %2368 = vmatpush1.bf16.msra.mxu0 %v2324
        %2369 = vmatprep.subr.bf16.mxu0 0
        %2370 = vmatpush1.bf16.msra.mxu0 %v2325
        %2371 = vmatprep.subr.bf16.mxu0 0
        %2372 = vmatpush1.bf16.msra.mxu0 %v2326
        %2373 = vmatprep.subr.bf16.mxu0 0
        %2374 = vmatpush1.bf16.msra.mxu0 %v2327
        %2375 = vmatprep.subr.bf16.mxu0 0
        %2376 = vmatpush1.bf16.msra.mxu0 %v2328
        %2377 = vmatprep.mubr.bf16.mxu0 %v2195
        %2378 = vmatmul.mubr.bf16.gmra.mrb[0].mxu0 %v2194
        %v2379 = vpop.f32.mrb[0].mxu0
        %v2380 = vadd.f32 %v2247, %v2379
        %v2381 = vpop.f32.mrb[0].mxu0
        %v2382 = vpop.f32.mrb[0].mxu0
        %v2383 = vadd.f32 %v2247, %v2382
        %v2384 = vpop.f32.mrb[0].mxu0
        %2385 = vmatprep.mubr.bf16.mxu0 %v2197
        %2386 = vmatmul.mubr.bf16.gmra.mrb[0].mxu0 %v2196
        %v2387 = vpop.f32.mrb[0].mxu0
        %v2388 = vadd.f32 %v2247, %v2387
        %v2389 = vpop.f32.mrb[0].mxu0
        %v2390 = vpop.f32.mrb[0].mxu0
        %v2391 = vadd.f32 %v2247, %v2390
        %v2392 = vpop.f32.mrb[0].mxu0
        %2393 = vmatprep.mubr.bf16.mxu0 %v2199
        %2394 = vmatmul.mubr.bf16.gmra.mrb[0].mxu0 %v2198
        %v2395 = vpop.f32.mrb[0].mxu0
        %v2396 = vadd.f32 %v2247, %v2395
        %v2397 = vpop.f32.mrb[0].mxu0
        %v2398 = vpop.f32.mrb[0].mxu0
        %v2399 = vadd.f32 %v2247, %v2398
        %v2400 = vpop.f32.mrb[0].mxu0
        %2401 = vmatprep.mubr.bf16.mxu0 %v2201
        %2402 = vmatmul.mubr.bf16.gmra.mrb[0].mxu0 %v2200
        %v2403 = vpop.f32.mrb[0].mxu0
        %v2404 = vadd.f32 %v2247, %v2403
        %v2405 = vpop.f32.mrb[0].mxu0
        %v2406 = vpop.f32.mrb[0].mxu0
        %v2407 = vadd.f32 %v2247, %v2406
        %v2408 = vpop.f32.mrb[0].mxu0
        %2409 = vmatprep.mubr.bf16.mxu0 %v2203
        %2410 = vmatmul.mubr.bf16.gmra.mrb[0].mxu0 %v2202
        %v2411 = vpop.f32.mrb[0].mxu0
        %v2412 = vadd.f32 %v2247, %v2411
        %v2413 = vpop.f32.mrb[0].mxu0
        %v2414 = vpop.f32.mrb[0].mxu0
        %v2415 = vadd.f32 %v2247, %v2414
        %v2416 = vpop.f32.mrb[0].mxu0
        %2417 = vmatprep.mubr.bf16.mxu0 %v2205
        %2418 = vmatmul.mubr.bf16.gmra.mrb[0].mxu0 %v2204
        %v2419 = vpop.f32.mrb[0].mxu0
        %v2420 = vadd.f32 %v2247, %v2419
        %v2421 = vpop.f32.mrb[0].mxu0
        %v2422 = vpop.f32.mrb[0].mxu0
        %v2423 = vadd.f32 %v2247, %v2422
        %v2424 = vpop.f32.mrb[0].mxu0
        %2425 = vmatprep.mubr.bf16.mxu0 %v2207
        %2426 = vmatmul.mubr.bf16.gmra.mrb[0].mxu0 %v2206
        %v2427 = vpop.f32.mrb[0].mxu0
        %v2428 = vadd.f32 %v2247, %v2427
        %v2429 = vpop.f32.mrb[0].mxu0
        %v2430 = vpop.f32.mrb[0].mxu0
        %v2431 = vadd.f32 %v2247, %v2430
        %v2432 = vpop.f32.mrb[0].mxu0
        %2433 = vmatprep.mubr.bf16.mxu0 %v2209
        %2434 = vmatmul.mubr.bf16.gmra.mrb[0].mxu0 %v2208
        %v2435 = vpop.f32.mrb[0].mxu0
        %v2436 = vadd.f32 %v2247, %v2435
        %v2437 = vpop.f32.mrb[0].mxu0
        %v2438 = vpop.f32.mrb[0].mxu0
        %v2439 = vadd.f32 %v2247, %v2438
        %v2440 = vpop.f32.mrb[0].mxu0
        %2441 = vdwg.mxu0
        %v2442 = vmax.f32 %v2380, 0.0
        %v2443 = vmax.f32 %v2383, 0.0
        %v2444 = vmax.f32 %v2388, 0.0
        %v2445 = vmax.f32 %v2391, 0.0
        %v2446 = vmax.f32 %v2396, 0.0
        %v2447 = vmax.f32 %v2399, 0.0
        %v2448 = vmax.f32 %v2404, 0.0
        %v2449 = vmax.f32 %v2407, 0.0
        %v2450 = vmax.f32 %v2412, 0.0
        %v2451 = vmax.f32 %v2415, 0.0
        %v2452 = vmax.f32 %v2420, 0.0
        %v2453 = vmax.f32 %v2423, 0.0
        %v2454 = vmax.f32 %v2428, 0.0
        %v2455 = vmax.f32 %v2431, 0.0
        %v2456 = vmax.f32 %v2436, 0.0
        %v2457 = vmax.f32 %v2439, 0.0
        %2458 = vst [vmem:[%s629] sm:$0xff] %v2442
        %2459 = vst [vmem:[%s629 + $0x8] sm:$0xff] %v2443
        %2460 = vst [vmem:[%s629 + $0x10] sm:$0xff] %v2444
        %2461 = vst [vmem:[%s629 + $0x18] sm:$0xff] %v2445
        %2462 = vst [vmem:[%s629 + $0x20] sm:$0xff] %v2446
        %2463 = vst [vmem:[%s629 + $0x28] sm:$0xff] %v2447
        %2464 = vst [vmem:[%s629 + $0x30] sm:$0xff] %v2448
        %2465 = vst [vmem:[%s629 + $0x38] sm:$0xff] %v2449
        %2466 = vst [vmem:[%s629 + $0x40] sm:$0xff] %v2450
        %2467 = vst [vmem:[%s629 + $0x48] sm:$0xff] %v2451
        %2468 = vst [vmem:[%s629 + $0x50] sm:$0xff] %v2452
        %2469 = vst [vmem:[%s629 + $0x58] sm:$0xff] %v2453
        %2470 = vst [vmem:[%s629 + $0x60] sm:$0xff] %v2454
        %2471 = vst [vmem:[%s629 + $0x68] sm:$0xff] %v2455
        %2472 = vst [vmem:[%s629 + $0x70] sm:$0xff] %v2456
        %2473 = vst [vmem:[%s629 + $0x78] sm:$0xff] %v2457
      $region76: #{up_block_forward.9} parent=67 // pred_fallthru
        _
      %s2474 = smul.u32 16, %s31
      %p2475 = scmp.lt.s32.totalorder %s30, 1
      %s2476 = scalar_select %p2475, %s30, 1
      %p2477 = scmp.lt.s32.totalorder %s2474, 15
      %s2478 = scalar_select %p2477, %s2474, 15
      %s2479 = smul.addr %s2476, 16
      %s2480 = sadd.s32 %s2478, %s2479
      %s2481 = smul.addr %s2480, 8
      %s2482 = scalar_lea.vmem %s12, %s2481
      // Predicated region
      $region77: #{up_block_forward.9} parent=67 // pred_check
        %p2483 = pneg %p356
      $region78: #{up_block_forward.9} parent=67 // pred_check_branch
        %2485 = sbr.rel (%p2483) target = $region80
      $region79: #{up_block_forward.9} parent=67 // pred_region
        %s2486 = smul.u32 16, %s31
      $region80: #{up_block_forward.9} parent=67 // pred_fallthru
        _
    $region68: #{up_block_forward.9} parent=5 // pred_fallthru
      _
    %p2487 = scmp.le.s32.totalorder 2, %s20
    // Predicated region
    $region81: #{up_block_forward.9} parent=5 // pred_check
      %p2488 = pneg %p2487
    $region82: #{up_block_forward.9} parent=5 // pred_check_branch
      %2490 = sbr.rel (%p2488) target = $region84
    $region83: #{up_block_forward.9} parent=5 // pred_region
      %s2491 = ssub.s32 %s20, 2
      // Predicated region
      $region85: #{up_block_forward.9} parent=83 // pred_check
        %p2492 = pneg %p362
      $region86: #{up_block_forward.9} parent=83 // pred_check_branch
        %2494 = sbr.rel (%p2492) target = $region88
      $region87: #{up_block_forward.9} parent=83 // pred_region
        %s2495 = smul.u32 16, %s34
        %p2496 = scmp.lt.s32.totalorder %s33, 1
        %s2497 = scalar_select %p2496, %s33, 1
        %p2498 = scmp.lt.s32.totalorder %s2495, 15
        %s2499 = scalar_select %p2498, %s2495, 15
        %s2500 = smul.addr %s2497, 16
        %s2501 = sadd.s32 %s2499, %s2500
        %s2502 = smul.addr %s2501, 8
        %s2503 = scalar_lea.vmem %s12, %s2502
      $region88: #{up_block_forward.9} parent=83 // pred_fallthru
        _
    $region84: #{up_block_forward.9} parent=5 // pred_fallthru
      _
  $region6: #{up_block_forward.9} parent=0 // loop_footer
    %s24 = sadd.s32 1, %s20
  $region7: #{up_block_forward.9} parent=0 // loop_footer_branch
    %19 = sbr.rel target = $region3
  $region8: #{up_block_forward.9} parent=0 // loop_exit
    _

</llo_original>
